<compile_context>
chip_gen: v5e
topology: v5e:2x2
jax: 0.10.0
libtpu: 0.0.40
codegen_flags: <defaults>
</compile_context>

<pallas_src>
import functools

import jax
import jax.numpy as jnp
from jax.experimental import pallas as pl
from jax.experimental.pallas import tpu as pltpu


def _resgdn_kernel(x_ref, w1_ref, b1_ref, g1_ref, bt1_ref,
                   w2_ref, b2_ref, g2_ref, bt2_ref,
                   out_ref, pad_ref, patch_ref, *, H, W, C, K, inv, bb):
    """bb batch images per grid step; all intermediates stay resident in VMEM."""
    HW = H * W
    M = bb * HW
    p = (K - 1) // 2
    Hp, Wp = H + 2 * p, W + 2 * p

    # --- zero ONLY the halo perimeter (interior is fully overwritten below and
    # the halo is never written by anything else in this step). -----------------
    if p > 0:
        pad_ref[:, 0:p, :, :] = jnp.zeros((bb, p, Wp, C), pad_ref.dtype)
        pad_ref[:, p + H:, :, :] = jnp.zeros((bb, p, Wp, C), pad_ref.dtype)
        pad_ref[:, :, 0:p, :] = jnp.zeros((bb, Hp, p, C), pad_ref.dtype)
        pad_ref[:, :, p + W:, :] = jnp.zeros((bb, Hp, p, C), pad_ref.dtype)

    x = x_ref[...]                                          # (bb, H, W, C) f32
    # single f32 -> bf16 cast for the whole conv1 input (pad scratch is bf16)
    pad_ref[:, p:p + H, p:p + W, :] = x.astype(pad_ref.dtype)

    def conv(w_ref, b_ref):
        # Reshape-free im2col: each tap is a direct bf16 slice copy into a
        # 128-lane-aligned column group of the (bb, H, W, K*K*C) patch, then
        # ONE MXU matmul with contraction K*K*C.
        for dy in range(K):
            for dx in range(K):
                col = (dy * K + dx) * C
                patch_ref[:, :, :, col:col + C] = \
                    pad_ref[:, dy:dy + H, dx:dx + W, :]
        patch = patch_ref[...].reshape(M, K * K * C)        # contiguous merge
        acc = jnp.dot(patch, w_ref[...],
                      preferred_element_type=jnp.float32)   # (M, C) f32
        return acc + b_ref[...]

    def gdn(v, g_ref, beta_ref):
        # norm^2 = beta + (v*v) @ gamma ; elementwise stays f32 (v5e-friendly).
        nsq = jnp.dot((v * v).astype(g_ref.dtype), g_ref[...],
                      preferred_element_type=jnp.float32) + beta_ref[...]
        if inv:
            return v * jnp.sqrt(nsq)
        return v * jax.lax.rsqrt(nsq)                       # EUP rsqrt, no divide

    # x1 = GDN1(conv1(x))
    x1 = gdn(conv(w1_ref, b1_ref), g1_ref, bt1_ref)         # (M, C) f32
    # conv2(x1): reuse the padded scratch (halo is still zero); one more cast.
    pad_ref[:, p:p + H, p:p + W, :] = x1.reshape(bb, H, W, C).astype(pad_ref.dtype)
    x2 = conv(w2_ref, b2_ref)
    # out = GDN2(x + x2)  (residual add in f32)
    out = gdn(x.reshape(M, C) + x2, g2_ref, bt2_ref)
    out_ref[...] = out.reshape(bb, H, W, C).astype(out_ref.dtype)


def _pick_batch_block(B, H, W):
    """Fold images so the matmul M = bb*H*W approaches >=512 rows (fills the
    256-deep v6e/v7x MXU, amortizes ~0.35us/step overhead) while keeping >=2
    grid steps so the 'parallel' batch axis can feed both v7x TensorCores."""
    best = 1
    for bb in range(1, B + 1):
        if B % bb:
            continue
        if B >= 2 and B // bb < 2:      # keep at least 2 grid steps
            continue
        if bb * H * W > 4096:           # cap patch-scratch growth
            continue
        best = bb
        if bb * H * W >= 512:
            break
    return best


@functools.partial(jax.jit, static_argnames=("kernel_size", "stride", "padding",
                                             "inv", "batch_block"))
def res_gdn_forward(x_nhwc, w1, b1, gamma1, beta1, w2, b2, gamma2, beta2,
                    *, kernel_size, stride=1, padding=None, inv=False,
                    batch_block=None):
    """Fused ResGDN forward: GDN2(x + conv2(GDN1(conv1(x)))).

    x_nhwc   : (B, H, W, C) float32
    w1, w2   : (k, k, C, C) float32 HWIO conv weights
    b1, b2   : (C,) conv biases
    gamma1/2 : (C, C) GDN gamma laid out (c_in, c_out) (= PyTorch gamma.T)
    beta1/2  : (C,) GDN beta (> 0)
    """
    B, H, W, C = x_nhwc.shape
    K = int(kernel_size)
    if padding is None:
        padding = (K - 1) // 2
    p = int(padding)
    assert stride == 1 and p == (K - 1) // 2, (
        "residual x + conv2(...) requires shape-preserving convs")
    assert w1.shape == (K, K, C, C) and w2.shape == (K, K, C, C)
    assert C % 128 == 0 and W % 8 == 0, "need lane/sublane friendly shapes"

    bb = _pick_batch_block(B, H, W) if batch_block is None else int(batch_block)
    assert B % bb == 0

    # bf16 MXU operands (accumulation stays f32 inside the kernel).
    wf1 = w1.reshape(K * K * C, C).astype(jnp.bfloat16)
    wf2 = w2.reshape(K * K * C, C).astype(jnp.bfloat16)
    g1 = gamma1.astype(jnp.bfloat16)
    g2 = gamma2.astype(jnp.bfloat16)
    b1r = b1.reshape(1, C).astype(jnp.float32)
    b2r = b2.reshape(1, C).astype(jnp.float32)
    bt1 = beta1.reshape(1, C).astype(jnp.float32)
    bt2 = beta2.reshape(1, C).astype(jnp.float32)

    kernel = functools.partial(_resgdn_kernel, H=H, W=W, C=C, K=K, inv=inv, bb=bb)

    def full(shape):  # constant parameter block, identical for every grid step
        return pl.BlockSpec(shape, lambda b: (0,) * len(shape))

    # Explicit VMEM budget: scratch + double-buffered IO + params + f32 temps.
    pad_bytes = bb * (H + 2 * p) * (W + 2 * p) * C * 2
    patch_bytes = bb * H * W * K * K * C * 2
    io_bytes = 2 * 2 * bb * H * W * C * 4
    param_bytes = 2 * (2 * K * K * C * C * 2 + 2 * C * C * 2 + 4 * C * 4)
    temp_bytes = 8 * bb * H * W * C * 4
    vmem_limit = int(1.5 * (pad_bytes + patch_bytes + io_bytes + param_bytes
                            + temp_bytes)) + (2 << 20)
    vmem_limit = max(16 << 20, min(vmem_limit, 64 << 20))   # safe on v5e..v7x

    grid_spec = pltpu.PrefetchScalarGridSpec(
        num_scalar_prefetch=0,
        grid=(B // bb,),
        in_specs=[
            pl.BlockSpec((bb, H, W, C), lambda b: (b, 0, 0, 0)),   # x
            full((K * K * C, C)), full((1, C)),                    # conv1 w, b
            full((C, C)), full((1, C)),                            # gdn1 gamma, beta
            full((K * K * C, C)), full((1, C)),                    # conv2 w, b
            full((C, C)), full((1, C)),                            # gdn2 gamma, beta
        ],
        out_specs=pl.BlockSpec((bb, H, W, C), lambda b: (b, 0, 0, 0)),
        scratch_shapes=[
            pltpu.VMEM((bb, H + 2 * p, W + 2 * p, C), jnp.bfloat16),   # padded act
            pltpu.VMEM((bb, H, W, K * K * C), jnp.bfloat16),           # im2col patch
        ],
    )

    return pl.pallas_call(
        kernel,
        out_shape=jax.ShapeDtypeStruct((B, H, W, C), x_nhwc.dtype),
        grid_spec=grid_spec,
        compiler_params=pltpu.CompilerParams(
            dimension_semantics=("parallel",),
            vmem_limit_bytes=vmem_limit),
    )(x_nhwc, wf1, b1r, g1, bt1, wf2, b2r, g2, bt2)


def res_gdn_reference(x, w1, b1, gamma1, beta1, w2, b2, gamma2, beta2,
                      *, kernel_size, inv=False):
    """Pure-JAX/XLA reference mirroring the PyTorch forward (NHWC) and the
    kernel's dtype policy (bf16 matmul operands, f32 accumulation/elementwise)."""
    pad = (kernel_size - 1) // 2

    def conv(v, w, b):
        out = jax.lax.conv_general_dilated(
            v.astype(jnp.bfloat16), w.astype(jnp.bfloat16),
            window_strides=(1, 1), padding=[(pad, pad), (pad, pad)],
            dimension_numbers=("NHWC", "HWIO", "NHWC"),
            preferred_element_type=jnp.float32)
        return out + b

    def gdn(v, gamma, beta):
        nsq = jnp.einsum("bhwc,cd->bhwd",
                         (v * v).astype(jnp.bfloat16), gamma.astype(jnp.bfloat16),
                         preferred_element_type=jnp.float32) + beta
        return v * jnp.sqrt(nsq) if inv else v * jax.lax.rsqrt(nsq)

    x1 = gdn(conv(x, w1, b1), gamma1, beta1)
    x2 = conv(x1, w2, b2)
    return gdn(x + x2, gamma2, beta2)


if __name__ == "__main__":
    # ResGDN's residual requires in_channel == out_channel and shape-preserving
    # convs; C = 128 is the usual GDN codec width and is exactly one 128-lane
    # vreg on TPU (lane-dense blocks everywhere).
    B, C, H, W = 2, 128, 16, 16
    kernel_size, stride = 3, 1
    padding = (kernel_size - 1) // 2
    inv = False

    key = jax.random.PRNGKey(0)
    kx, kw1, kb1, kg1, kt1, kw2, kb2, kg2, kt2 = jax.random.split(key, 9)

    # Input in the PyTorch NCHW convention, moved to NHWC for the kernel.
    x_nchw = jax.random.normal(kx, (B, C, H, W), dtype=jnp.float32)
    x_nhwc = jnp.transpose(x_nchw, (0, 2, 3, 1))

    def conv_params(kw, kb):
        # Same shapes as nn.Conv2d(C, C, k, stride, padding): OIHW -> HWIO.
        w_oihw = 0.03 * jax.random.normal(
            kw, (C, C, kernel_size, kernel_size), dtype=jnp.float32)
        b = 0.05 * jax.random.normal(kb, (C,), dtype=jnp.float32)
        return jnp.transpose(w_oihw, (2, 3, 1, 0)), b

    def gdn_params(kg, kt):
        # Standard GDN parameter ranges: beta > 0, gamma >= 0, diag-dominant.
        gamma_oi = (0.1 * jnp.eye(C, dtype=jnp.float32)
                    + 0.002 * jnp.abs(jax.random.normal(kg, (C, C), jnp.float32)))
        beta = 0.1 + 0.01 * jnp.abs(jax.random.normal(kt, (C,), jnp.float32))
        return jnp.transpose(gamma_oi), beta        # pass gamma as (c_in, c_out)

    w1, b1 = conv_params(kw1, kb1)
    w2, b2 = conv_params(kw2, kb2)
    gamma1, beta1 = gdn_params(kg1, kt1)
    gamma2, beta2 = gdn_params(kg2, kt2)

    out = res_gdn_forward(x_nhwc, w1, b1, gamma1, beta1, w2, b2, gamma2, beta2,
                          kernel_size=kernel_size, stride=stride,
                          padding=padding, inv=inv)
    out = jax.block_until_ready(out)

    ref = res_gdn_reference(x_nhwc, w1, b1, gamma1, beta1, w2, b2, gamma2, beta2,
                            kernel_size=kernel_size, inv=inv)
    assert out.shape == (B, H, W, C)
    max_err = float(jnp.max(jnp.abs(out - ref)))
    assert jnp.allclose(out, ref, atol=1e-2, rtol=1e-2), f"max abs err {max_err}"
    print("KERNEL_OK")
</pallas_src>

<mosaic_0001>
module attributes {stable_mosaic.version = 11 : i64} {
  func.func @_resgdn_kernel(%arg0: i32, %arg1: memref<1x16x16x128xf32, #tpu.memory_space<vmem>>, %arg2: memref<1152x128xbf16, #tpu.memory_space<vmem>>, %arg3: memref<1x128xf32, #tpu.memory_space<vmem>>, %arg4: memref<128x128xbf16, #tpu.memory_space<vmem>>, %arg5: memref<1x128xf32, #tpu.memory_space<vmem>>, %arg6: memref<1152x128xbf16, #tpu.memory_space<vmem>>, %arg7: memref<1x128xf32, #tpu.memory_space<vmem>>, %arg8: memref<128x128xbf16, #tpu.memory_space<vmem>>, %arg9: memref<1x128xf32, #tpu.memory_space<vmem>>, %arg10: memref<1x16x16x128xf32, #tpu.memory_space<vmem>>, %arg11: memref<1x18x18x128xbf16, #tpu.memory_space<vmem>>, %arg12: memref<1x16x16x1152xbf16, #tpu.memory_space<vmem>>) attributes {dimension_semantics = [#tpu.dimension_semantics<parallel>], iteration_bounds = array<i64: 2>, scalar_prefetch = 0 : i64, scratch_operands = 2 : i64, tpu.core_type = #tpu.core_type<tc>, window_params = [{transform_indices = @transform_0, window_bounds = array<i64: 1, 16, 16, 128>}, {pipeline_mode = #tpu.pipeline_mode<synchronous>, transform_indices = @transform_1, window_bounds = array<i64: 1152, 128>}, {pipeline_mode = #tpu.pipeline_mode<synchronous>, transform_indices = @transform_2, window_bounds = array<i64: 1, 128>}, {pipeline_mode = #tpu.pipeline_mode<synchronous>, transform_indices = @transform_3, window_bounds = array<i64: 128, 128>}, {pipeline_mode = #tpu.pipeline_mode<synchronous>, transform_indices = @transform_4, window_bounds = array<i64: 1, 128>}, {pipeline_mode = #tpu.pipeline_mode<synchronous>, transform_indices = @transform_5, window_bounds = array<i64: 1152, 128>}, {pipeline_mode = #tpu.pipeline_mode<synchronous>, transform_indices = @transform_6, window_bounds = array<i64: 1, 128>}, {pipeline_mode = #tpu.pipeline_mode<synchronous>, transform_indices = @transform_7, window_bounds = array<i64: 128, 128>}, {pipeline_mode = #tpu.pipeline_mode<synchronous>, transform_indices = @transform_8, window_bounds = array<i64: 1, 128>}, {transform_indices = @transform_9, window_bounds = array<i64: 1, 16, 16, 128>}]} {
    %cst = arith.constant 0.000000e+00 : bf16
    %0 = vector.broadcast %cst : bf16 to vector<1x1x18x128xbf16>
    %c0 = arith.constant 0 : index
    %c0_0 = arith.constant 0 : index
    %c0_1 = arith.constant 0 : index
    %c0_2 = arith.constant 0 : index
    %1 = vector.load %arg11[%c0, %c0_0, %c0_1, %c0_2] : memref<1x18x18x128xbf16, #tpu.memory_space<vmem>>, vector<1x1x18x128xbf16>
    tpu.vector_store %arg11[%c0, %c0_0, %c0_1, %c0_2], %0 {strides = array<i32>} : memref<1x18x18x128xbf16, #tpu.memory_space<vmem>>, vector<1x1x18x128xbf16>,
    %cst_3 = arith.constant 0.000000e+00 : bf16
    %2 = vector.broadcast %cst_3 : bf16 to vector<1x1x18x128xbf16>
    %c0_4 = arith.constant 0 : index
    %c17 = arith.constant 17 : index
    %c0_5 = arith.constant 0 : index
    %c0_6 = arith.constant 0 : index
    %3 = vector.load %arg11[%c0_4, %c17, %c0_5, %c0_6] : memref<1x18x18x128xbf16, #tpu.memory_space<vmem>>, vector<1x1x18x128xbf16>
    tpu.vector_store %arg11[%c0_4, %c17, %c0_5, %c0_6], %2 {strides = array<i32>} : memref<1x18x18x128xbf16, #tpu.memory_space<vmem>>, vector<1x1x18x128xbf16>,
    %cst_7 = arith.constant 0.000000e+00 : bf16
    %4 = vector.broadcast %cst_7 : bf16 to vector<1x18x1x128xbf16>
    %c0_8 = arith.constant 0 : index
    %c0_9 = arith.constant 0 : index
    %c0_10 = arith.constant 0 : index
    %c0_11 = arith.constant 0 : index
    %5 = vector.load %arg11[%c0_8, %c0_9, %c0_10, %c0_11] : memref<1x18x18x128xbf16, #tpu.memory_space<vmem>>, vector<1x18x1x128xbf16>
    tpu.vector_store %arg11[%c0_8, %c0_9, %c0_10, %c0_11], %4 {strides = array<i32>} : memref<1x18x18x128xbf16, #tpu.memory_space<vmem>>, vector<1x18x1x128xbf16>,
    %cst_12 = arith.constant 0.000000e+00 : bf16
    %6 = vector.broadcast %cst_12 : bf16 to vector<1x18x1x128xbf16>
    %c0_13 = arith.constant 0 : index
    %c0_14 = arith.constant 0 : index
    %c17_15 = arith.constant 17 : index
    %c0_16 = arith.constant 0 : index
    %7 = vector.load %arg11[%c0_13, %c0_14, %c17_15, %c0_16] : memref<1x18x18x128xbf16, #tpu.memory_space<vmem>>, vector<1x18x1x128xbf16>
    tpu.vector_store %arg11[%c0_13, %c0_14, %c17_15, %c0_16], %6 {strides = array<i32>} : memref<1x18x18x128xbf16, #tpu.memory_space<vmem>>, vector<1x18x1x128xbf16>,
    %c0_17 = arith.constant 0 : index
    %c0_18 = arith.constant 0 : index
    %c0_19 = arith.constant 0 : index
    %c0_20 = arith.constant 0 : index
    %8 = vector.load %arg1[%c0_17, %c0_18, %c0_19, %c0_20] : memref<1x16x16x128xf32, #tpu.memory_space<vmem>>, vector<1x16x16x128xf32>
    %9 = arith.truncf %8 : vector<1x16x16x128xf32> to vector<1x16x16x128xbf16>
    %c0_21 = arith.constant 0 : index
    %c1 = arith.constant 1 : index
    %c1_22 = arith.constant 1 : index
    %c0_23 = arith.constant 0 : index
    %10 = vector.load %arg11[%c0_21, %c1, %c1_22, %c0_23] : memref<1x18x18x128xbf16, #tpu.memory_space<vmem>>, vector<1x16x16x128xbf16>
    tpu.vector_store %arg11[%c0_21, %c1, %c1_22, %c0_23], %9 {strides = array<i32>} : memref<1x18x18x128xbf16, #tpu.memory_space<vmem>>, vector<1x16x16x128xbf16>,
    %c0_24 = arith.constant 0 : index
    %c0_25 = arith.constant 0 : index
    %c0_26 = arith.constant 0 : index
    %c0_27 = arith.constant 0 : index
    %11 = vector.load %arg11[%c0_24, %c0_25, %c0_26, %c0_27] : memref<1x18x18x128xbf16, #tpu.memory_space<vmem>>, vector<1x16x16x128xbf16>
    %c0_28 = arith.constant 0 : index
    %c0_29 = arith.constant 0 : index
    %c0_30 = arith.constant 0 : index
    %c0_31 = arith.constant 0 : index
    %12 = vector.load %arg12[%c0_28, %c0_29, %c0_30, %c0_31] : memref<1x16x16x1152xbf16, #tpu.memory_space<vmem>>, vector<1x16x16x128xbf16>
    tpu.vector_store %arg12[%c0_28, %c0_29, %c0_30, %c0_31], %11 {strides = array<i32>} : memref<1x16x16x1152xbf16, #tpu.memory_space<vmem>>, vector<1x16x16x128xbf16>,
    %c0_32 = arith.constant 0 : index
    %c0_33 = arith.constant 0 : index
    %c1_34 = arith.constant 1 : index
    %c0_35 = arith.constant 0 : index
    %13 = vector.load %arg11[%c0_32, %c0_33, %c1_34, %c0_35] : memref<1x18x18x128xbf16, #tpu.memory_space<vmem>>, vector<1x16x16x128xbf16>
    %c0_36 = arith.constant 0 : index
    %c0_37 = arith.constant 0 : index
    %c0_38 = arith.constant 0 : index
    %c128 = arith.constant 128 : index
    %14 = vector.load %arg12[%c0_36, %c0_37, %c0_38, %c128] : memref<1x16x16x1152xbf16, #tpu.memory_space<vmem>>, vector<1x16x16x128xbf16>
    tpu.vector_store %arg12[%c0_36, %c0_37, %c0_38, %c128], %13 {strides = array<i32>} : memref<1x16x16x1152xbf16, #tpu.memory_space<vmem>>, vector<1x16x16x128xbf16>,
    %c0_39 = arith.constant 0 : index
    %c0_40 = arith.constant 0 : index
    %c2 = arith.constant 2 : index
    %c0_41 = arith.constant 0 : index
    %15 = vector.load %arg11[%c0_39, %c0_40, %c2, %c0_41] : memref<1x18x18x128xbf16, #tpu.memory_space<vmem>>, vector<1x16x16x128xbf16>
    %c0_42 = arith.constant 0 : index
    %c0_43 = arith.constant 0 : index
    %c0_44 = arith.constant 0 : index
    %c256 = arith.constant 256 : index
    %16 = vector.load %arg12[%c0_42, %c0_43, %c0_44, %c256] : memref<1x16x16x1152xbf16, #tpu.memory_space<vmem>>, vector<1x16x16x128xbf16>
    tpu.vector_store %arg12[%c0_42, %c0_43, %c0_44, %c256], %15 {strides = array<i32>} : memref<1x16x16x1152xbf16, #tpu.memory_space<vmem>>, vector<1x16x16x128xbf16>,
    %c0_45 = arith.constant 0 : index
    %c1_46 = arith.constant 1 : index
    %c0_47 = arith.constant 0 : index
    %c0_48 = arith.constant 0 : index
    %17 = vector.load %arg11[%c0_45, %c1_46, %c0_47, %c0_48] : memref<1x18x18x128xbf16, #tpu.memory_space<vmem>>, vector<1x16x16x128xbf16>
    %c0_49 = arith.constant 0 : index
    %c0_50 = arith.constant 0 : index
    %c0_51 = arith.constant 0 : index
    %c384 = arith.constant 384 : index
    %18 = vector.load %arg12[%c0_49, %c0_50, %c0_51, %c384] : memref<1x16x16x1152xbf16, #tpu.memory_space<vmem>>, vector<1x16x16x128xbf16>
    tpu.vector_store %arg12[%c0_49, %c0_50, %c0_51, %c384], %17 {strides = array<i32>} : memref<1x16x16x1152xbf16, #tpu.memory_space<vmem>>, vector<1x16x16x128xbf16>,
    %c0_52 = arith.constant 0 : index
    %c1_53 = arith.constant 1 : index
    %c1_54 = arith.constant 1 : index
    %c0_55 = arith.constant 0 : index
    %19 = vector.load %arg11[%c0_52, %c1_53, %c1_54, %c0_55] : memref<1x18x18x128xbf16, #tpu.memory_space<vmem>>, vector<1x16x16x128xbf16>
    %c0_56 = arith.constant 0 : index
    %c0_57 = arith.constant 0 : index
    %c0_58 = arith.constant 0 : index
    %c512 = arith.constant 512 : index
    %20 = vector.load %arg12[%c0_56, %c0_57, %c0_58, %c512] : memref<1x16x16x1152xbf16, #tpu.memory_space<vmem>>, vector<1x16x16x128xbf16>
    tpu.vector_store %arg12[%c0_56, %c0_57, %c0_58, %c512], %19 {strides = array<i32>} : memref<1x16x16x1152xbf16, #tpu.memory_space<vmem>>, vector<1x16x16x128xbf16>,
    %c0_59 = arith.constant 0 : index
    %c1_60 = arith.constant 1 : index
    %c2_61 = arith.constant 2 : index
    %c0_62 = arith.constant 0 : index
    %21 = vector.load %arg11[%c0_59, %c1_60, %c2_61, %c0_62] : memref<1x18x18x128xbf16, #tpu.memory_space<vmem>>, vector<1x16x16x128xbf16>
    %c0_63 = arith.constant 0 : index
    %c0_64 = arith.constant 0 : index
    %c0_65 = arith.constant 0 : index
    %c640 = arith.constant 640 : index
    %22 = vector.load %arg12[%c0_63, %c0_64, %c0_65, %c640] : memref<1x16x16x1152xbf16, #tpu.memory_space<vmem>>, vector<1x16x16x128xbf16>
    tpu.vector_store %arg12[%c0_63, %c0_64, %c0_65, %c640], %21 {strides = array<i32>} : memref<1x16x16x1152xbf16, #tpu.memory_space<vmem>>, vector<1x16x16x128xbf16>,
    %c0_66 = arith.constant 0 : index
    %c2_67 = arith.constant 2 : index
    %c0_68 = arith.constant 0 : index
    %c0_69 = arith.constant 0 : index
    %23 = vector.load %arg11[%c0_66, %c2_67, %c0_68, %c0_69] : memref<1x18x18x128xbf16, #tpu.memory_space<vmem>>, vector<1x16x16x128xbf16>
    %c0_70 = arith.constant 0 : index
    %c0_71 = arith.constant 0 : index
    %c0_72 = arith.constant 0 : index
    %c768 = arith.constant 768 : index
    %24 = vector.load %arg12[%c0_70, %c0_71, %c0_72, %c768] : memref<1x16x16x1152xbf16, #tpu.memory_space<vmem>>, vector<1x16x16x128xbf16>
    tpu.vector_store %arg12[%c0_70, %c0_71, %c0_72, %c768], %23 {strides = array<i32>} : memref<1x16x16x1152xbf16, #tpu.memory_space<vmem>>, vector<1x16x16x128xbf16>,
    %c0_73 = arith.constant 0 : index
    %c2_74 = arith.constant 2 : index
    %c1_75 = arith.constant 1 : index
    %c0_76 = arith.constant 0 : index
    %25 = vector.load %arg11[%c0_73, %c2_74, %c1_75, %c0_76] : memref<1x18x18x128xbf16, #tpu.memory_space<vmem>>, vector<1x16x16x128xbf16>
    %c0_77 = arith.constant 0 : index
    %c0_78 = arith.constant 0 : index
    %c0_79 = arith.constant 0 : index
    %c896 = arith.constant 896 : index
    %26 = vector.load %arg12[%c0_77, %c0_78, %c0_79, %c896] : memref<1x16x16x1152xbf16, #tpu.memory_space<vmem>>, vector<1x16x16x128xbf16>
    tpu.vector_store %arg12[%c0_77, %c0_78, %c0_79, %c896], %25 {strides = array<i32>} : memref<1x16x16x1152xbf16, #tpu.memory_space<vmem>>, vector<1x16x16x128xbf16>,
    %c0_80 = arith.constant 0 : index
    %c2_81 = arith.constant 2 : index
    %c2_82 = arith.constant 2 : index
    %c0_83 = arith.constant 0 : index
    %27 = vector.load %arg11[%c0_80, %c2_81, %c2_82, %c0_83] : memref<1x18x18x128xbf16, #tpu.memory_space<vmem>>, vector<1x16x16x128xbf16>
    %c0_84 = arith.constant 0 : index
    %c0_85 = arith.constant 0 : index
    %c0_86 = arith.constant 0 : index
    %c1024 = arith.constant 1024 : index
    %28 = vector.load %arg12[%c0_84, %c0_85, %c0_86, %c1024] : memref<1x16x16x1152xbf16, #tpu.memory_space<vmem>>, vector<1x16x16x128xbf16>
    tpu.vector_store %arg12[%c0_84, %c0_85, %c0_86, %c1024], %27 {strides = array<i32>} : memref<1x16x16x1152xbf16, #tpu.memory_space<vmem>>, vector<1x16x16x128xbf16>,
    %c0_87 = arith.constant 0 : index
    %c0_88 = arith.constant 0 : index
    %c0_89 = arith.constant 0 : index
    %c0_90 = arith.constant 0 : index
    %29 = vector.load %arg12[%c0_87, %c0_88, %c0_89, %c0_90] : memref<1x16x16x1152xbf16, #tpu.memory_space<vmem>>, vector<1x16x16x1152xbf16>
    %30 = vector.shape_cast %29 : vector<1x16x16x1152xbf16> to vector<256x1152xbf16>
    %c0_91 = arith.constant 0 : index
    %c0_92 = arith.constant 0 : index
    %31 = vector.load %arg2[%c0_91, %c0_92] : memref<1152x128xbf16, #tpu.memory_space<vmem>>, vector<1152x128xbf16>
    %cst_93 = arith.constant dense<0.000000e+00> : vector<256x128xf32>
    %32 = tpu.matmul %30, %31, %cst_93 {dimension_numbers = #tpu.dot_dimension_numbers<[1], [0], [0], [1], [0, 0, 1, 1], [], []>} : vector<256x1152xbf16>, vector<1152x128xbf16>, vector<256x128xf32> -> vector<256x128xf32>
    %c0_94 = arith.constant 0 : index
    %c0_95 = arith.constant 0 : index
    %33 = vector.load %arg3[%c0_94, %c0_95] : memref<1x128xf32, #tpu.memory_space<vmem>>, vector<1x128xf32>
    %34 = vector.broadcast %33 : vector<1x128xf32> to vector<256x128xf32>
    %35 = arith.addf %32, %34 : vector<256x128xf32>
    %36 = arith.mulf %35, %35 : vector<256x128xf32>
    %37 = arith.truncf %36 : vector<256x128xf32> to vector<256x128xbf16>
    %c0_96 = arith.constant 0 : index
    %c0_97 = arith.constant 0 : index
    %38 = vector.load %arg4[%c0_96, %c0_97] : memref<128x128xbf16, #tpu.memory_space<vmem>>, vector<128x128xbf16>
    %cst_98 = arith.constant dense<0.000000e+00> : vector<256x128xf32>
    %39 = tpu.matmul %37, %38, %cst_98 {dimension_numbers = #tpu.dot_dimension_numbers<[1], [0], [0], [1], [0, 0, 1, 1], [], []>} : vector<256x128xbf16>, vector<128x128xbf16>, vector<256x128xf32> -> vector<256x128xf32>
    %c0_99 = arith.constant 0 : index
    %c0_100 = arith.constant 0 : index
    %40 = vector.load %arg5[%c0_99, %c0_100] : memref<1x128xf32, #tpu.memory_space<vmem>>, vector<1x128xf32>
    %41 = vector.broadcast %40 : vector<1x128xf32> to vector<256x128xf32>
    %42 = arith.addf %39, %41 : vector<256x128xf32>
    %43 = math.rsqrt %42 : vector<256x128xf32>
    %44 = arith.mulf %35, %43 : vector<256x128xf32>
    %45 = vector.shape_cast %44 : vector<256x128xf32> to vector<1x16x16x128xf32>
    %46 = arith.truncf %45 : vector<1x16x16x128xf32> to vector<1x16x16x128xbf16>
    %c0_101 = arith.constant 0 : index
    %c1_102 = arith.constant 1 : index
    %c1_103 = arith.constant 1 : index
    %c0_104 = arith.constant 0 : index
    %47 = vector.load %arg11[%c0_101, %c1_102, %c1_103, %c0_104] : memref<1x18x18x128xbf16, #tpu.memory_space<vmem>>, vector<1x16x16x128xbf16>
    tpu.vector_store %arg11[%c0_101, %c1_102, %c1_103, %c0_104], %46 {strides = array<i32>} : memref<1x18x18x128xbf16, #tpu.memory_space<vmem>>, vector<1x16x16x128xbf16>,
    %c0_105 = arith.constant 0 : index
    %c0_106 = arith.constant 0 : index
    %c0_107 = arith.constant 0 : index
    %c0_108 = arith.constant 0 : index
    %48 = vector.load %arg11[%c0_105, %c0_106, %c0_107, %c0_108] : memref<1x18x18x128xbf16, #tpu.memory_space<vmem>>, vector<1x16x16x128xbf16>
    %c0_109 = arith.constant 0 : index
    %c0_110 = arith.constant 0 : index
    %c0_111 = arith.constant 0 : index
    %c0_112 = arith.constant 0 : index
    %49 = vector.load %arg12[%c0_109, %c0_110, %c0_111, %c0_112] : memref<1x16x16x1152xbf16, #tpu.memory_space<vmem>>, vector<1x16x16x128xbf16>
    tpu.vector_store %arg12[%c0_109, %c0_110, %c0_111, %c0_112], %48 {strides = array<i32>} : memref<1x16x16x1152xbf16, #tpu.memory_space<vmem>>, vector<1x16x16x128xbf16>,
    %c0_113 = arith.constant 0 : index
    %c0_114 = arith.constant 0 : index
    %c1_115 = arith.constant 1 : index
    %c0_116 = arith.constant 0 : index
    %50 = vector.load %arg11[%c0_113, %c0_114, %c1_115, %c0_116] : memref<1x18x18x128xbf16, #tpu.memory_space<vmem>>, vector<1x16x16x128xbf16>
    %c0_117 = arith.constant 0 : index
    %c0_118 = arith.constant 0 : index
    %c0_119 = arith.constant 0 : index
    %c128_120 = arith.constant 128 : index
    %51 = vector.load %arg12[%c0_117, %c0_118, %c0_119, %c128_120] : memref<1x16x16x1152xbf16, #tpu.memory_space<vmem>>, vector<1x16x16x128xbf16>
    tpu.vector_store %arg12[%c0_117, %c0_118, %c0_119, %c128_120], %50 {strides = array<i32>} : memref<1x16x16x1152xbf16, #tpu.memory_space<vmem>>, vector<1x16x16x128xbf16>,
    %c0_121 = arith.constant 0 : index
    %c0_122 = arith.constant 0 : index
    %c2_123 = arith.constant 2 : index
    %c0_124 = arith.constant 0 : index
    %52 = vector.load %arg11[%c0_121, %c0_122, %c2_123, %c0_124] : memref<1x18x18x128xbf16, #tpu.memory_space<vmem>>, vector<1x16x16x128xbf16>
    %c0_125 = arith.constant 0 : index
    %c0_126 = arith.constant 0 : index
    %c0_127 = arith.constant 0 : index
    %c256_128 = arith.constant 256 : index
    %53 = vector.load %arg12[%c0_125, %c0_126, %c0_127, %c256_128] : memref<1x16x16x1152xbf16, #tpu.memory_space<vmem>>, vector<1x16x16x128xbf16>
    tpu.vector_store %arg12[%c0_125, %c0_126, %c0_127, %c256_128], %52 {strides = array<i32>} : memref<1x16x16x1152xbf16, #tpu.memory_space<vmem>>, vector<1x16x16x128xbf16>,
    %c0_129 = arith.constant 0 : index
    %c1_130 = arith.constant 1 : index
    %c0_131 = arith.constant 0 : index
    %c0_132 = arith.constant 0 : index
    %54 = vector.load %arg11[%c0_129, %c1_130, %c0_131, %c0_132] : memref<1x18x18x128xbf16, #tpu.memory_space<vmem>>, vector<1x16x16x128xbf16>
    %c0_133 = arith.constant 0 : index
    %c0_134 = arith.constant 0 : index
    %c0_135 = arith.constant 0 : index
    %c384_136 = arith.constant 384 : index
    %55 = vector.load %arg12[%c0_133, %c0_134, %c0_135, %c384_136] : memref<1x16x16x1152xbf16, #tpu.memory_space<vmem>>, vector<1x16x16x128xbf16>
    tpu.vector_store %arg12[%c0_133, %c0_134, %c0_135, %c384_136], %54 {strides = array<i32>} : memref<1x16x16x1152xbf16, #tpu.memory_space<vmem>>, vector<1x16x16x128xbf16>,
    %c0_137 = arith.constant 0 : index
    %c1_138 = arith.constant 1 : index
    %c1_139 = arith.constant 1 : index
    %c0_140 = arith.constant 0 : index
    %56 = vector.load %arg11[%c0_137, %c1_138, %c1_139, %c0_140] : memref<1x18x18x128xbf16, #tpu.memory_space<vmem>>, vector<1x16x16x128xbf16>
    %c0_141 = arith.constant 0 : index
    %c0_142 = arith.constant 0 : index
    %c0_143 = arith.constant 0 : index
    %c512_144 = arith.constant 512 : index
    %57 = vector.load %arg12[%c0_141, %c0_142, %c0_143, %c512_144] : memref<1x16x16x1152xbf16, #tpu.memory_space<vmem>>, vector<1x16x16x128xbf16>
    tpu.vector_store %arg12[%c0_141, %c0_142, %c0_143, %c512_144], %56 {strides = array<i32>} : memref<1x16x16x1152xbf16, #tpu.memory_space<vmem>>, vector<1x16x16x128xbf16>,
    %c0_145 = arith.constant 0 : index
    %c1_146 = arith.constant 1 : index
    %c2_147 = arith.constant 2 : index
    %c0_148 = arith.constant 0 : index
    %58 = vector.load %arg11[%c0_145, %c1_146, %c2_147, %c0_148] : memref<1x18x18x128xbf16, #tpu.memory_space<vmem>>, vector<1x16x16x128xbf16>
    %c0_149 = arith.constant 0 : index
    %c0_150 = arith.constant 0 : index
    %c0_151 = arith.constant 0 : index
    %c640_152 = arith.constant 640 : index
    %59 = vector.load %arg12[%c0_149, %c0_150, %c0_151, %c640_152] : memref<1x16x16x1152xbf16, #tpu.memory_space<vmem>>, vector<1x16x16x128xbf16>
    tpu.vector_store %arg12[%c0_149, %c0_150, %c0_151, %c640_152], %58 {strides = array<i32>} : memref<1x16x16x1152xbf16, #tpu.memory_space<vmem>>, vector<1x16x16x128xbf16>,
    %c0_153 = arith.constant 0 : index
    %c2_154 = arith.constant 2 : index
    %c0_155 = arith.constant 0 : index
    %c0_156 = arith.constant 0 : index
    %60 = vector.load %arg11[%c0_153, %c2_154, %c0_155, %c0_156] : memref<1x18x18x128xbf16, #tpu.memory_space<vmem>>, vector<1x16x16x128xbf16>
    %c0_157 = arith.constant 0 : index
    %c0_158 = arith.constant 0 : index
    %c0_159 = arith.constant 0 : index
    %c768_160 = arith.constant 768 : index
    %61 = vector.load %arg12[%c0_157, %c0_158, %c0_159, %c768_160] : memref<1x16x16x1152xbf16, #tpu.memory_space<vmem>>, vector<1x16x16x128xbf16>
    tpu.vector_store %arg12[%c0_157, %c0_158, %c0_159, %c768_160], %60 {strides = array<i32>} : memref<1x16x16x1152xbf16, #tpu.memory_space<vmem>>, vector<1x16x16x128xbf16>,
    %c0_161 = arith.constant 0 : index
    %c2_162 = arith.constant 2 : index
    %c1_163 = arith.constant 1 : index
    %c0_164 = arith.constant 0 : index
    %62 = vector.load %arg11[%c0_161, %c2_162, %c1_163, %c0_164] : memref<1x18x18x128xbf16, #tpu.memory_space<vmem>>, vector<1x16x16x128xbf16>
    %c0_165 = arith.constant 0 : index
    %c0_166 = arith.constant 0 : index
    %c0_167 = arith.constant 0 : index
    %c896_168 = arith.constant 896 : index
    %63 = vector.load %arg12[%c0_165, %c0_166, %c0_167, %c896_168] : memref<1x16x16x1152xbf16, #tpu.memory_space<vmem>>, vector<1x16x16x128xbf16>
    tpu.vector_store %arg12[%c0_165, %c0_166, %c0_167, %c896_168], %62 {strides = array<i32>} : memref<1x16x16x1152xbf16, #tpu.memory_space<vmem>>, vector<1x16x16x128xbf16>,
    %c0_169 = arith.constant 0 : index
    %c2_170 = arith.constant 2 : index
    %c2_171 = arith.constant 2 : index
    %c0_172 = arith.constant 0 : index
    %64 = vector.load %arg11[%c0_169, %c2_170, %c2_171, %c0_172] : memref<1x18x18x128xbf16, #tpu.memory_space<vmem>>, vector<1x16x16x128xbf16>
    %c0_173 = arith.constant 0 : index
    %c0_174 = arith.constant 0 : index
    %c0_175 = arith.constant 0 : index
    %c1024_176 = arith.constant 1024 : index
    %65 = vector.load %arg12[%c0_173, %c0_174, %c0_175, %c1024_176] : memref<1x16x16x1152xbf16, #tpu.memory_space<vmem>>, vector<1x16x16x128xbf16>
    tpu.vector_store %arg12[%c0_173, %c0_174, %c0_175, %c1024_176], %64 {strides = array<i32>} : memref<1x16x16x1152xbf16, #tpu.memory_space<vmem>>, vector<1x16x16x128xbf16>,
    %c0_177 = arith.constant 0 : index
    %c0_178 = arith.constant 0 : index
    %c0_179 = arith.constant 0 : index
    %c0_180 = arith.constant 0 : index
    %66 = vector.load %arg12[%c0_177, %c0_178, %c0_179, %c0_180] : memref<1x16x16x1152xbf16, #tpu.memory_space<vmem>>, vector<1x16x16x1152xbf16>
    %67 = vector.shape_cast %66 : vector<1x16x16x1152xbf16> to vector<256x1152xbf16>
    %c0_181 = arith.constant 0 : index
    %c0_182 = arith.constant 0 : index
    %68 = vector.load %arg6[%c0_181, %c0_182] : memref<1152x128xbf16, #tpu.memory_space<vmem>>, vector<1152x128xbf16>
    %cst_183 = arith.constant dense<0.000000e+00> : vector<256x128xf32>
    %69 = tpu.matmul %67, %68, %cst_183 {dimension_numbers = #tpu.dot_dimension_numbers<[1], [0], [0], [1], [0, 0, 1, 1], [], []>} : vector<256x1152xbf16>, vector<1152x128xbf16>, vector<256x128xf32> -> vector<256x128xf32>
    %c0_184 = arith.constant 0 : index
    %c0_185 = arith.constant 0 : index
    %70 = vector.load %arg7[%c0_184, %c0_185] : memref<1x128xf32, #tpu.memory_space<vmem>>, vector<1x128xf32>
    %71 = vector.broadcast %70 : vector<1x128xf32> to vector<256x128xf32>
    %72 = arith.addf %69, %71 : vector<256x128xf32>
    %73 = vector.shape_cast %8 : vector<1x16x16x128xf32> to vector<256x128xf32>
    %74 = arith.addf %73, %72 : vector<256x128xf32>
    %75 = arith.mulf %74, %74 : vector<256x128xf32>
    %76 = arith.truncf %75 : vector<256x128xf32> to vector<256x128xbf16>
    %c0_186 = arith.constant 0 : index
    %c0_187 = arith.constant 0 : index
    %77 = vector.load %arg8[%c0_186, %c0_187] : memref<128x128xbf16, #tpu.memory_space<vmem>>, vector<128x128xbf16>
    %cst_188 = arith.constant dense<0.000000e+00> : vector<256x128xf32>
    %78 = tpu.matmul %76, %77, %cst_188 {dimension_numbers = #tpu.dot_dimension_numbers<[1], [0], [0], [1], [0, 0, 1, 1], [], []>} : vector<256x128xbf16>, vector<128x128xbf16>, vector<256x128xf32> -> vector<256x128xf32>
    %c0_189 = arith.constant 0 : index
    %c0_190 = arith.constant 0 : index
    %79 = vector.load %arg9[%c0_189, %c0_190] : memref<1x128xf32, #tpu.memory_space<vmem>>, vector<1x128xf32>
    %80 = vector.broadcast %79 : vector<1x128xf32> to vector<256x128xf32>
    %81 = arith.addf %78, %80 : vector<256x128xf32>
    %82 = math.rsqrt %81 : vector<256x128xf32>
    %83 = arith.mulf %74, %82 : vector<256x128xf32>
    %84 = vector.shape_cast %83 : vector<256x128xf32> to vector<1x16x16x128xf32>
    %c0_191 = arith.constant 0 : index
    %c0_192 = arith.constant 0 : index
    %c0_193 = arith.constant 0 : index
    %c0_194 = arith.constant 0 : index
    %85 = vector.load %arg10[%c0_191, %c0_192, %c0_193, %c0_194] : memref<1x16x16x128xf32, #tpu.memory_space<vmem>>, vector<1x16x16x128xf32>
    tpu.vector_store %arg10[%c0_191, %c0_192, %c0_193, %c0_194], %84 {strides = array<i32>} : memref<1x16x16x128xf32, #tpu.memory_space<vmem>>, vector<1x16x16x128xf32>,
    return
  }
  func.func @transform_0(%arg0: i32) -> (i32, i32, i32, i32) {
    %c0_i32 = arith.constant 0 : i32
    %c0_i32_0 = arith.constant 0 : i32
    %c0_i32_1 = arith.constant 0 : i32
    %c0_i32_2 = arith.constant 0 : i32
    return %arg0, %c0_i32, %c0_i32_0, %c0_i32_1 : i32, i32, i32, i32
  }
  func.func @transform_1(%arg0: i32) -> (i32, i32) {
    %c0_i32 = arith.constant 0 : i32
    %c0_i32_0 = arith.constant 0 : i32
    %c0_i32_1 = arith.constant 0 : i32
    return %c0_i32, %c0_i32_0 : i32, i32
  }
  func.func @transform_2(%arg0: i32) -> (i32, i32) {
    %c0_i32 = arith.constant 0 : i32
    %c0_i32_0 = arith.constant 0 : i32
    %c0_i32_1 = arith.constant 0 : i32
    return %c0_i32, %c0_i32_0 : i32, i32
  }
  func.func @transform_3(%arg0: i32) -> (i32, i32) {
    %c0_i32 = arith.constant 0 : i32
    %c0_i32_0 = arith.constant 0 : i32
    %c0_i32_1 = arith.constant 0 : i32
    return %c0_i32, %c0_i32_0 : i32, i32
  }
  func.func @transform_4(%arg0: i32) -> (i32, i32) {
    %c0_i32 = arith.constant 0 : i32
    %c0_i32_0 = arith.constant 0 : i32
    %c0_i32_1 = arith.constant 0 : i32
    return %c0_i32, %c0_i32_0 : i32, i32
  }
  func.func @transform_5(%arg0: i32) -> (i32, i32) {
    %c0_i32 = arith.constant 0 : i32
    %c0_i32_0 = arith.constant 0 : i32
    %c0_i32_1 = arith.constant 0 : i32
    return %c0_i32, %c0_i32_0 : i32, i32
  }
  func.func @transform_6(%arg0: i32) -> (i32, i32) {
    %c0_i32 = arith.constant 0 : i32
    %c0_i32_0 = arith.constant 0 : i32
    %c0_i32_1 = arith.constant 0 : i32
    return %c0_i32, %c0_i32_0 : i32, i32
  }
  func.func @transform_7(%arg0: i32) -> (i32, i32) {
    %c0_i32 = arith.constant 0 : i32
    %c0_i32_0 = arith.constant 0 : i32
    %c0_i32_1 = arith.constant 0 : i32
    return %c0_i32, %c0_i32_0 : i32, i32
  }
  func.func @transform_8(%arg0: i32) -> (i32, i32) {
    %c0_i32 = arith.constant 0 : i32
    %c0_i32_0 = arith.constant 0 : i32
    %c0_i32_1 = arith.constant 0 : i32
    return %c0_i32, %c0_i32_0 : i32, i32
  }
  func.func @transform_9(%arg0: i32) -> (i32, i32, i32, i32) {
    %c0_i32 = arith.constant 0 : i32
    %c0_i32_0 = arith.constant 0 : i32
    %c0_i32_1 = arith.constant 0 : i32
    %c0_i32_2 = arith.constant 0 : i32
    return %arg0, %c0_i32, %c0_i32_0, %c0_i32_1 : i32, i32, i32, i32
  }
}

</mosaic_0001>

<llo_original>
// kernel: res_gdn_forward.1
$region0: #{res_gdn_forward.1}
  #allocation0 [shape = 'u32[]', space=smem, size = 0x4, offset = 0x4, fixed_abs, tag = 'smem constant byte address 0x4 - core index']
  #allocation1 [shape = 'u32[72,128]{1,0:T(1,128)}', space=vmem, size = 0x9000, scoped, tag = 'internal scratch']
  #allocation2 [shape = 'bf16[1,18,18,128]{3,2,1,0:T(8,128)(2,1)}', space=vmem, size = 0x1b000, scoped, tag = 'scratch operand']
  #allocation3 [shape = 'bf16[1,16,16,1152]{3,2,1,0:T(8,128)(2,1)}', space=vmem, size = 0x90000, scoped, tag = 'scratch operand']
  %s0 = inlined_call_operand.vmem [shape: f32[2,16,16,128], index: 0, kind: input, shape index: {}]
  %s1 = inlined_call_operand.vmem [shape: bf16[1152,128], index: 1, kind: input, shape index: {}]
  %s2 = inlined_call_operand.vmem [shape: f32[1,128], index: 2, kind: input, shape index: {}]
  %s3 = inlined_call_operand.vmem [shape: bf16[128,128], index: 3, kind: input, shape index: {}]
  %s4 = inlined_call_operand.vmem [shape: f32[1,128], index: 4, kind: input, shape index: {}]
  %s5 = inlined_call_operand.vmem [shape: bf16[1152,128], index: 5, kind: input, shape index: {}]
  %s6 = inlined_call_operand.vmem [shape: f32[1,128], index: 6, kind: input, shape index: {}]
  %s7 = inlined_call_operand.vmem [shape: bf16[128,128], index: 7, kind: input, shape index: {}]
  %s8 = inlined_call_operand.vmem [shape: f32[1,128], index: 8, kind: input, shape index: {}]
  %s9 = inlined_call_operand.hbm [shape: f32[2,16,16,128], index: 9, kind: output, shape index: {}]
  %s10 = sld [smem:[#allocation0]]
  $region69: #{res_gdn_forward.1} parent=0
    _
  %s12 = ssub.s32 1, %s10
  %s13 = scalar_select 0, %s12, %s10
  $region1: #{res_gdn_forward.1} parent=0
    #allocation4 [shape = 'u8[262144]{0}', space=vmem, size = 0x40000, scoped, tag = 'output window, operand 0']
    #allocation5 [shape = 's32[2]{0}', space=sflag, size = 0x8, scoped, tag = 'scoped memory for res_gdn_forward.1']
    %14 = vsyncpa [#allocation5], 0
    %s15 = scalar_lea.sflag [#allocation5], 1
    %16 = vsyncpa %s15, 0
    loop: start=0, step=1, limit=4
    $region2: #{res_gdn_forward.1} parent=1 // loop_pre_header
      _
    $region3: #{res_gdn_forward.1} parent=1 // loop_header
      %s18 = sphi 0, %s22
      %p19 = scmp.ge.s32.totalorder %s18, 4
      %s28 = sphi 0, %s30
      %s31 = sphi 0, %s28
      %s32 = sphi 0, %s31
      %s48 = sphi 0, %s32
      %s52 = sphi 0, %s52
      %s54 = sphi 0, %s52
      %s55 = sphi 0, %s54
      %s69 = sphi 0, %s55
      %s73 = sphi 0, %s73
      %s75 = sphi 0, %s73
      %s76 = sphi 0, %s75
      %s90 = sphi 0, %s76
      %s94 = sphi 0, %s94
      %s96 = sphi 0, %s94
      %s97 = sphi 0, %s96
      %s111 = sphi 0, %s97
      %s115 = sphi 0, %s115
      %s117 = sphi 0, %s115
      %s118 = sphi 0, %s117
      %s132 = sphi 0, %s118
      %s136 = sphi 0, %s136
      %s138 = sphi 0, %s136
      %s139 = sphi 0, %s138
      %s153 = sphi 0, %s139
      %s157 = sphi 0, %s157
      %s159 = sphi 0, %s157
      %s160 = sphi 0, %s159
      %s174 = sphi 0, %s160
      %s178 = sphi 0, %s178
      %s180 = sphi 0, %s178
      %s181 = sphi 0, %s180
      %s195 = sphi 0, %s181
      %s199 = sphi 0, %s199
      %s201 = sphi 0, %s199
      %s202 = sphi 0, %s201
      %s216 = sphi 0, %s202
      %s222 = sphi 0, %s224
      %s225 = sphi 0, %s222
      %s226 = sphi 0, %s225
      %s242 = sphi 0, %s226
    $region4: #{res_gdn_forward.1} parent=1 // loop_header_branch
      %21 = sbr.rel (%p19) target = $region8
    $region5: #{res_gdn_forward.1} parent=1 // loop_body
      %s23 = ssub.s32 %s18, 1
      %s24 = ssub.s32 %s18, 2
      %s25 = sadd.s32 %s18, 1
      %s26 = ssub.s32 %s18, %s25
      %p27 = scmp.eq.s32.totalorder %s26, 0
      %s29 = sadd.s32 %s28, 1
      %s30 = scalar_select %p27, %s28, %s29
      %p33 = pneg %p27
      %p34 = scmp.eq.s32.totalorder %s18, 1
      %p35 = por %p33, %p34
      %p36 = scmp.ne.s32.totalorder %s28, %s31
      %p37 = scmp.eq.s32.totalorder %s18, 0
      %p38 = por %p36, %p37
      %p39 = scmp.ne.s32.totalorder %s28, %s31
      %p40 = scmp.eq.s32.totalorder %s23, 1
      %p41 = por %p39, %p40
      %p42 = scmp.ne.s32.totalorder %s31, %s32
      %p43 = scmp.eq.s32.totalorder %s23, 0
      %p44 = por %p42, %p43
      %p45 = scmp.ne.s32.totalorder %s31, %s32
      %p46 = scmp.eq.s32.totalorder %s24, 1
      %p47 = por %p45, %p46
      %p49 = scmp.ne.s32.totalorder %s32, %s48
      %p50 = scmp.eq.s32.totalorder %s24, 0
      %p51 = por %p49, %p50
      %s53 = sadd.s32 %s52, 1
      %p56 = scmp.eq.s32.totalorder %s18, 1
      %p57 = scmp.ne.s32.totalorder %s52, %s54
      %p58 = scmp.eq.s32.totalorder %s18, 0
      %p59 = por %p57, %p58
      %p60 = scmp.ne.s32.totalorder %s52, %s54
      %p61 = scmp.eq.s32.totalorder %s23, 1
      %p62 = por %p60, %p61
      %p63 = scmp.ne.s32.totalorder %s54, %s55
      %p64 = scmp.eq.s32.totalorder %s23, 0
      %p65 = por %p63, %p64
      %p66 = scmp.ne.s32.totalorder %s54, %s55
      %p67 = scmp.eq.s32.totalorder %s24, 1
      %p68 = por %p66, %p67
      %p70 = scmp.ne.s32.totalorder %s55, %s69
      %p71 = scmp.eq.s32.totalorder %s24, 0
      %p72 = por %p70, %p71
      %s74 = sadd.s32 %s73, 1
      %p77 = scmp.eq.s32.totalorder %s18, 1
      %p78 = scmp.ne.s32.totalorder %s73, %s75
      %p79 = scmp.eq.s32.totalorder %s18, 0
      %p80 = por %p78, %p79
      %p81 = scmp.ne.s32.totalorder %s73, %s75
      %p82 = scmp.eq.s32.totalorder %s23, 1
      %p83 = por %p81, %p82
      %p84 = scmp.ne.s32.totalorder %s75, %s76
      %p85 = scmp.eq.s32.totalorder %s23, 0
      %p86 = por %p84, %p85
      %p87 = scmp.ne.s32.totalorder %s75, %s76
      %p88 = scmp.eq.s32.totalorder %s24, 1
      %p89 = por %p87, %p88
      %p91 = scmp.ne.s32.totalorder %s76, %s90
      %p92 = scmp.eq.s32.totalorder %s24, 0
      %p93 = por %p91, %p92
      %s95 = sadd.s32 %s94, 1
      %p98 = scmp.eq.s32.totalorder %s18, 1
      %p99 = scmp.ne.s32.totalorder %s94, %s96
      %p100 = scmp.eq.s32.totalorder %s18, 0
      %p101 = por %p99, %p100
      %p102 = scmp.ne.s32.totalorder %s94, %s96
      %p103 = scmp.eq.s32.totalorder %s23, 1
      %p104 = por %p102, %p103
      %p105 = scmp.ne.s32.totalorder %s96, %s97
      %p106 = scmp.eq.s32.totalorder %s23, 0
      %p107 = por %p105, %p106
      %p108 = scmp.ne.s32.totalorder %s96, %s97
      %p109 = scmp.eq.s32.totalorder %s24, 1
      %p110 = por %p108, %p109
      %p112 = scmp.ne.s32.totalorder %s97, %s111
      %p113 = scmp.eq.s32.totalorder %s24, 0
      %p114 = por %p112, %p113
      %s116 = sadd.s32 %s115, 1
      %p119 = scmp.eq.s32.totalorder %s18, 1
      %p120 = scmp.ne.s32.totalorder %s115, %s117
      %p121 = scmp.eq.s32.totalorder %s18, 0
      %p122 = por %p120, %p121
      %p123 = scmp.ne.s32.totalorder %s115, %s117
      %p124 = scmp.eq.s32.totalorder %s23, 1
      %p125 = por %p123, %p124
      %p126 = scmp.ne.s32.totalorder %s117, %s118
      %p127 = scmp.eq.s32.totalorder %s23, 0
      %p128 = por %p126, %p127
      %p129 = scmp.ne.s32.totalorder %s117, %s118
      %p130 = scmp.eq.s32.totalorder %s24, 1
      %p131 = por %p129, %p130
      %p133 = scmp.ne.s32.totalorder %s118, %s132
      %p134 = scmp.eq.s32.totalorder %s24, 0
      %p135 = por %p133, %p134
      %s137 = sadd.s32 %s136, 1
      %p140 = scmp.eq.s32.totalorder %s18, 1
      %p141 = scmp.ne.s32.totalorder %s136, %s138
      %p142 = scmp.eq.s32.totalorder %s18, 0
      %p143 = por %p141, %p142
      %p144 = scmp.ne.s32.totalorder %s136, %s138
      %p145 = scmp.eq.s32.totalorder %s23, 1
      %p146 = por %p144, %p145
      %p147 = scmp.ne.s32.totalorder %s138, %s139
      %p148 = scmp.eq.s32.totalorder %s23, 0
      %p149 = por %p147, %p148
      %p150 = scmp.ne.s32.totalorder %s138, %s139
      %p151 = scmp.eq.s32.totalorder %s24, 1
      %p152 = por %p150, %p151
      %p154 = scmp.ne.s32.totalorder %s139, %s153
      %p155 = scmp.eq.s32.totalorder %s24, 0
      %p156 = por %p154, %p155
      %s158 = sadd.s32 %s157, 1
      %p161 = scmp.eq.s32.totalorder %s18, 1
      %p162 = scmp.ne.s32.totalorder %s157, %s159
      %p163 = scmp.eq.s32.totalorder %s18, 0
      %p164 = por %p162, %p163
      %p165 = scmp.ne.s32.totalorder %s157, %s159
      %p166 = scmp.eq.s32.totalorder %s23, 1
      %p167 = por %p165, %p166
      %p168 = scmp.ne.s32.totalorder %s159, %s160
      %p169 = scmp.eq.s32.totalorder %s23, 0
      %p170 = por %p168, %p169
      %p171 = scmp.ne.s32.totalorder %s159, %s160
      %p172 = scmp.eq.s32.totalorder %s24, 1
      %p173 = por %p171, %p172
      %p175 = scmp.ne.s32.totalorder %s160, %s174
      %p176 = scmp.eq.s32.totalorder %s24, 0
      %p177 = por %p175, %p176
      %s179 = sadd.s32 %s178, 1
      %p182 = scmp.eq.s32.totalorder %s18, 1
      %p183 = scmp.ne.s32.totalorder %s178, %s180
      %p184 = scmp.eq.s32.totalorder %s18, 0
      %p185 = por %p183, %p184
      %p186 = scmp.ne.s32.totalorder %s178, %s180
      %p187 = scmp.eq.s32.totalorder %s23, 1
      %p188 = por %p186, %p187
      %p189 = scmp.ne.s32.totalorder %s180, %s181
      %p190 = scmp.eq.s32.totalorder %s23, 0
      %p191 = por %p189, %p190
      %p192 = scmp.ne.s32.totalorder %s180, %s181
      %p193 = scmp.eq.s32.totalorder %s24, 1
      %p194 = por %p192, %p193
      %p196 = scmp.ne.s32.totalorder %s181, %s195
      %p197 = scmp.eq.s32.totalorder %s24, 0
      %p198 = por %p196, %p197
      %s200 = sadd.s32 %s199, 1
      %p203 = scmp.eq.s32.totalorder %s18, 1
      %p204 = scmp.ne.s32.totalorder %s199, %s201
      %p205 = scmp.eq.s32.totalorder %s18, 0
      %p206 = por %p204, %p205
      %p207 = scmp.ne.s32.totalorder %s199, %s201
      %p208 = scmp.eq.s32.totalorder %s23, 1
      %p209 = por %p207, %p208
      %p210 = scmp.ne.s32.totalorder %s201, %s202
      %p211 = scmp.eq.s32.totalorder %s23, 0
      %p212 = por %p210, %p211
      %p213 = scmp.ne.s32.totalorder %s201, %s202
      %p214 = scmp.eq.s32.totalorder %s24, 1
      %p215 = por %p213, %p214
      %p217 = scmp.ne.s32.totalorder %s202, %s216
      %p218 = scmp.eq.s32.totalorder %s24, 0
      %p219 = por %p217, %p218
      %s220 = ssub.s32 %s18, %s25
      %p221 = scmp.eq.s32.totalorder %s220, 0
      %s223 = sadd.s32 %s222, 1
      %s224 = scalar_select %p221, %s222, %s223
      %p227 = pneg %p221
      %p228 = scmp.eq.s32.totalorder %s18, 1
      %p229 = por %p227, %p228
      %p230 = scmp.ne.s32.totalorder %s222, %s225
      %p231 = scmp.eq.s32.totalorder %s18, 0
      %p232 = por %p230, %p231
      %p233 = scmp.ne.s32.totalorder %s222, %s225
      %p234 = scmp.eq.s32.totalorder %s23, 1
      %p235 = por %p233, %p234
      %p236 = scmp.ne.s32.totalorder %s225, %s226
      %p237 = scmp.eq.s32.totalorder %s23, 0
      %p238 = por %p236, %p237
      %p239 = scmp.ne.s32.totalorder %s225, %s226
      %p240 = scmp.eq.s32.totalorder %s24, 1
      %p241 = por %p239, %p240
      %p243 = scmp.ne.s32.totalorder %s226, %s242
      %p244 = scmp.eq.s32.totalorder %s24, 0
      %p245 = por %p243, %p244
      %p246 = scmp.le.s32.totalorder 1, %s18
      %p247 = scmp.lt.s32.totalorder %s18, 3
      %p248 = pnand %p246, %p247
      %p249 = pneg %p248
      // Predicated region
      $region9: #{res_gdn_forward.1} parent=5 // pred_check
        _
      $region10: #{res_gdn_forward.1} parent=5 // pred_check_branch
        %251 = sbr.rel (%p248) target = $region12
      $region11: #{res_gdn_forward.1} parent=5 // pred_region
        %s252 = ssub.s32 %s18, 1
        // Predicated region
        $region13: #{res_gdn_forward.1} parent=11 // pred_check
          %p253 = pneg %p65
        $region14: #{res_gdn_forward.1} parent=11 // pred_check_branch
          %255 = sbr.rel (%p253) target = $region16
        $region15: #{res_gdn_forward.1} parent=11 // pred_region
          _
        $region16: #{res_gdn_forward.1} parent=11 // pred_fallthru
          _
        // Predicated region
        $region17: #{res_gdn_forward.1} parent=11 // pred_check
          %p256 = pneg %p86
        $region18: #{res_gdn_forward.1} parent=11 // pred_check_branch
          %258 = sbr.rel (%p256) target = $region20
        $region19: #{res_gdn_forward.1} parent=11 // pred_region
          _
        $region20: #{res_gdn_forward.1} parent=11 // pred_fallthru
          _
        // Predicated region
        $region21: #{res_gdn_forward.1} parent=11 // pred_check
          %p259 = pneg %p107
        $region22: #{res_gdn_forward.1} parent=11 // pred_check_branch
          %261 = sbr.rel (%p259) target = $region24
        $region23: #{res_gdn_forward.1} parent=11 // pred_region
          _
        $region24: #{res_gdn_forward.1} parent=11 // pred_fallthru
          _
        // Predicated region
        $region25: #{res_gdn_forward.1} parent=11 // pred_check
          %p262 = pneg %p128
        $region26: #{res_gdn_forward.1} parent=11 // pred_check_branch
          %264 = sbr.rel (%p262) target = $region28
        $region27: #{res_gdn_forward.1} parent=11 // pred_region
          _
        $region28: #{res_gdn_forward.1} parent=11 // pred_fallthru
          _
        // Predicated region
        $region29: #{res_gdn_forward.1} parent=11 // pred_check
          %p265 = pneg %p149
        $region30: #{res_gdn_forward.1} parent=11 // pred_check_branch
          %267 = sbr.rel (%p265) target = $region32
        $region31: #{res_gdn_forward.1} parent=11 // pred_region
          _
        $region32: #{res_gdn_forward.1} parent=11 // pred_fallthru
          _
        // Predicated region
        $region33: #{res_gdn_forward.1} parent=11 // pred_check
          %p268 = pneg %p170
        $region34: #{res_gdn_forward.1} parent=11 // pred_check_branch
          %270 = sbr.rel (%p268) target = $region36
        $region35: #{res_gdn_forward.1} parent=11 // pred_region
          _
        $region36: #{res_gdn_forward.1} parent=11 // pred_fallthru
          _
        // Predicated region
        $region37: #{res_gdn_forward.1} parent=11 // pred_check
          %p271 = pneg %p191
        $region38: #{res_gdn_forward.1} parent=11 // pred_check_branch
          %273 = sbr.rel (%p271) target = $region40
        $region39: #{res_gdn_forward.1} parent=11 // pred_region
          _
        $region40: #{res_gdn_forward.1} parent=11 // pred_fallthru
          _
        // Predicated region
        $region41: #{res_gdn_forward.1} parent=11 // pred_check
          %p274 = pneg %p212
        $region42: #{res_gdn_forward.1} parent=11 // pred_check_branch
          %276 = sbr.rel (%p274) target = $region44
        $region43: #{res_gdn_forward.1} parent=11 // pred_region
          _
        $region44: #{res_gdn_forward.1} parent=11 // pred_fallthru
          _
      $region12: #{res_gdn_forward.1} parent=5 // pred_fallthru
        _
      %p277 = scmp.lt.s32.totalorder %s18, 2
      // Predicated region
      $region45: #{res_gdn_forward.1} parent=5 // pred_check
        %p278 = pneg %p277
      $region46: #{res_gdn_forward.1} parent=5 // pred_check_branch
        %280 = sbr.rel (%p278) target = $region48
      $region47: #{res_gdn_forward.1} parent=5 // pred_region
        // Predicated region
        $region49: #{res_gdn_forward.1} parent=47 // pred_check
          %p281 = pneg %p38
        $region50: #{res_gdn_forward.1} parent=47 // pred_check_branch
          %283 = sbr.rel (%p281) target = $region52
        $region51: #{res_gdn_forward.1} parent=47 // pred_region
          %p284 = scmp.lt.s32.totalorder %s18, 1
          %s285 = scalar_select %p284, %s18, 1
          %s286 = smul.addr %s285, 32
          %s287 = smul.addr %s286, 8
          %s288 = scalar_lea.vmem %s0, %s287
        $region52: #{res_gdn_forward.1} parent=47 // pred_fallthru
          _
      $region48: #{res_gdn_forward.1} parent=5 // pred_fallthru
        _
      %p289 = scmp.le.s32.totalorder 1, %s18
      %p290 = scmp.lt.s32.totalorder %s18, 3
      %p291 = pnand %p289, %p290
      %p292 = pneg %p291
      // Predicated region
      $region53: #{res_gdn_forward.1} parent=5 // pred_check
        _
      $region54: #{res_gdn_forward.1} parent=5 // pred_check_branch
        %294 = sbr.rel (%p291) target = $region56
      $region55: #{res_gdn_forward.1} parent=5 // pred_region
        %s295 = ssub.s32 %s18, 1
        %p296 = scmp.lt.s32.totalorder %s23, 1
        %s297 = scalar_select %p296, %s23, 1
        %s298 = smul.addr %s297, 32
        %s299 = smul.addr %s298, 8
        %s300 = scalar_lea.vmem %s0, %s299
        %p301 = pneg %p44
        %p302 = pneg %p41
        %p303 = pneg %p65
        %p304 = pneg %p62
        %p305 = pneg %p86
        %p306 = pneg %p83
        %p307 = pneg %p107
        %p308 = pneg %p104
        %p309 = pneg %p128
        %p310 = pneg %p125
        %p311 = pneg %p149
        %p312 = pneg %p146
        %p313 = pneg %p170
        %p314 = pneg %p167
        %p315 = pneg %p191
        %p316 = pneg %p188
        %p317 = pneg %p212
        %p318 = pneg %p209
        %p319 = pneg %p238
        %p320 = pneg %p235
        %s321 = sand.u32 %s225, 1
        %s322 = scalar_lea.sflag [#allocation5], %s321
        %s323 = sand.u32 %s225, 1
        %s324 = smul.addr %s323, 256
        %s325 = scalar_lea.vmem [#allocation4], %s324
        %p326 = scmp.lt.s32.totalorder %s23, 1
        %s327 = scalar_select %p326, %s23, 1
        %s328 = smul.addr %s327, 32
        %s329 = smul.addr %s328, 8
        %s330 = scalar_lea.vmem %s0, %s329
        %332 = vst [vmem:[#allocation2] sm:$0xf] 0
        %333 = vst [vmem:[#allocation2 + $0x4] sm:$0xf] 0
        %334 = vst [vmem:[#allocation2 + $0x8] sm:$0x1] 0
        %s335 = scalar_lea.vmem [#allocation2], 204
        %336 = vst [vmem:[%s335] sm:$0xf] 0
        %337 = vst [vmem:[%s335 + $0x4] sm:$0xf] 0
        %338 = vst [vmem:[%s335 + $0x8] sm:$0x1] 0
        %vm339 = vcmask 1040384
        %vm340 = vsmask.f32 256
        %vm341 = vmand %vm339, %vm340
        %v342 = vld [vmem:[#allocation2] sm:$0x1]
        %v343 = vsel %vm341, 0, %v342
        %344 = vst [vmem:[#allocation2] sm:$0x1] %v343
        %v345 = vld [vmem:[#allocation2 + $0xc] sm:$0x1]
        %v346 = vsel %vm341, 0, %v345
        %347 = vst [vmem:[#allocation2 + $0xc] sm:$0x1] %v346
        %v348 = vld [vmem:[#allocation2 + $0x18] sm:$0x1]
        %v349 = vsel %vm341, 0, %v348
        %350 = vst [vmem:[#allocation2 + $0x18] sm:$0x1] %v349
        %v351 = vld [vmem:[#allocation2 + $0x24] sm:$0x1]
        %v352 = vsel %vm341, 0, %v351
        %353 = vst [vmem:[#allocation2 + $0x24] sm:$0x1] %v352
        %v354 = vld [vmem:[#allocation2 + $0x30] sm:$0x1]
        %v355 = vsel %vm341, 0, %v354
        %356 = vst [vmem:[#allocation2 + $0x30] sm:$0x1] %v355
        %v357 = vld [vmem:[#allocation2 + $0x3c] sm:$0x1]
        %v358 = vsel %vm341, 0, %v357
        %359 = vst [vmem:[#allocation2 + $0x3c] sm:$0x1] %v358
        %v360 = vld [vmem:[#allocation2 + $0x48] sm:$0x1]
        %v361 = vsel %vm341, 0, %v360
        %362 = vst [vmem:[#allocation2 + $0x48] sm:$0x1] %v361
        %v363 = vld [vmem:[#allocation2 + $0x54] sm:$0x1]
        %v364 = vsel %vm341, 0, %v363
        %365 = vst [vmem:[#allocation2 + $0x54] sm:$0x1] %v364
        %v366 = vld [vmem:[#allocation2 + $0x60] sm:$0x1]
        %v367 = vsel %vm341, 0, %v366
        %368 = vst [vmem:[#allocation2 + $0x60] sm:$0x1] %v367
        %v369 = vld [vmem:[#allocation2 + $0x6c] sm:$0x1]
        %v370 = vsel %vm341, 0, %v369
        %371 = vst [vmem:[#allocation2 + $0x6c] sm:$0x1] %v370
        %v372 = vld [vmem:[#allocation2 + $0x78] sm:$0x1]
        %v373 = vsel %vm341, 0, %v372
        %374 = vst [vmem:[#allocation2 + $0x78] sm:$0x1] %v373
        %v375 = vld [vmem:[#allocation2 + $0x84] sm:$0x1]
        %v376 = vsel %vm341, 0, %v375
        %377 = vst [vmem:[#allocation2 + $0x84] sm:$0x1] %v376
        %v378 = vld [vmem:[#allocation2 + $0x90] sm:$0x1]
        %v379 = vsel %vm341, 0, %v378
        %380 = vst [vmem:[#allocation2 + $0x90] sm:$0x1] %v379
        %v381 = vld [vmem:[#allocation2 + $0x9c] sm:$0x1]
        %v382 = vsel %vm341, 0, %v381
        %383 = vst [vmem:[#allocation2 + $0x9c] sm:$0x1] %v382
        %v384 = vld [vmem:[#allocation2 + $0xa8] sm:$0x1]
        %v385 = vsel %vm341, 0, %v384
        %386 = vst [vmem:[#allocation2 + $0xa8] sm:$0x1] %v385
        %v387 = vld [vmem:[#allocation2 + $0xb4] sm:$0x1]
        %v388 = vsel %vm341, 0, %v387
        %389 = vst [vmem:[#allocation2 + $0xb4] sm:$0x1] %v388
        %v390 = vld [vmem:[#allocation2 + $0xc0] sm:$0x1]
        %v391 = vsel %vm341, 0, %v390
        %392 = vst [vmem:[#allocation2 + $0xc0] sm:$0x1] %v391
        %v393 = vld [vmem:[#allocation2 + $0xcc] sm:$0x1]
        %v394 = vsel %vm341, 0, %v393
        %395 = vst [vmem:[#allocation2 + $0xcc] sm:$0x1] %v394
        %vm396 = vsmask.f32 7938
        %vm397 = vmand %vm339, %vm396
        %v398 = vld [vmem:[#allocation2 + $0x8] sm:$0x1]
        %v399 = vsel %vm397, 0, %v398
        %400 = vst [vmem:[#allocation2 + $0x8] sm:$0x1] %v399
        %v401 = vld [vmem:[#allocation2 + $0x14] sm:$0x1]
        %v402 = vsel %vm397, 0, %v401
        %403 = vst [vmem:[#allocation2 + $0x14] sm:$0x1] %v402
        %v404 = vld [vmem:[#allocation2 + $0x20] sm:$0x1]
        %v405 = vsel %vm397, 0, %v404
        %406 = vst [vmem:[#allocation2 + $0x20] sm:$0x1] %v405
        %v407 = vld [vmem:[#allocation2 + $0x2c] sm:$0x1]
        %v408 = vsel %vm397, 0, %v407
        %409 = vst [vmem:[#allocation2 + $0x2c] sm:$0x1] %v408
        %v410 = vld [vmem:[#allocation2 + $0x38] sm:$0x1]
        %v411 = vsel %vm397, 0, %v410
        %412 = vst [vmem:[#allocation2 + $0x38] sm:$0x1] %v411
        %v413 = vld [vmem:[#allocation2 + $0x44] sm:$0x1]
        %v414 = vsel %vm397, 0, %v413
        %415 = vst [vmem:[#allocation2 + $0x44] sm:$0x1] %v414
        %v416 = vld [vmem:[#allocation2 + $0x50] sm:$0x1]
        %v417 = vsel %vm397, 0, %v416
        %418 = vst [vmem:[#allocation2 + $0x50] sm:$0x1] %v417
        %v419 = vld [vmem:[#allocation2 + $0x5c] sm:$0x1]
        %v420 = vsel %vm397, 0, %v419
        %421 = vst [vmem:[#allocation2 + $0x5c] sm:$0x1] %v420
        %v422 = vld [vmem:[#allocation2 + $0x68] sm:$0x1]
        %v423 = vsel %vm397, 0, %v422
        %424 = vst [vmem:[#allocation2 + $0x68] sm:$0x1] %v423
        %v425 = vld [vmem:[#allocation2 + $0x74] sm:$0x1]
        %v426 = vsel %vm397, 0, %v425
        %427 = vst [vmem:[#allocation2 + $0x74] sm:$0x1] %v426
        %v428 = vld [vmem:[#allocation2 + $0x80] sm:$0x1]
        %v429 = vsel %vm397, 0, %v428
        %430 = vst [vmem:[#allocation2 + $0x80] sm:$0x1] %v429
        %v431 = vld [vmem:[#allocation2 + $0x8c] sm:$0x1]
        %v432 = vsel %vm397, 0, %v431
        %433 = vst [vmem:[#allocation2 + $0x8c] sm:$0x1] %v432
        %v434 = vld [vmem:[#allocation2 + $0x98] sm:$0x1]
        %v435 = vsel %vm397, 0, %v434
        %436 = vst [vmem:[#allocation2 + $0x98] sm:$0x1] %v435
        %v437 = vld [vmem:[#allocation2 + $0xa4] sm:$0x1]
        %v438 = vsel %vm397, 0, %v437
        %439 = vst [vmem:[#allocation2 + $0xa4] sm:$0x1] %v438
        %v440 = vld [vmem:[#allocation2 + $0xb0] sm:$0x1]
        %v441 = vsel %vm397, 0, %v440
        %442 = vst [vmem:[#allocation2 + $0xb0] sm:$0x1] %v441
        %v443 = vld [vmem:[#allocation2 + $0xbc] sm:$0x1]
        %v444 = vsel %vm397, 0, %v443
        %445 = vst [vmem:[#allocation2 + $0xbc] sm:$0x1] %v444
        %v446 = vld [vmem:[#allocation2 + $0xc8] sm:$0x1]
        %v447 = vsel %vm397, 0, %v446
        %448 = vst [vmem:[#allocation2 + $0xc8] sm:$0x1] %v447
        %v449 = vld [vmem:[#allocation2 + $0xd4] sm:$0x1]
        %v450 = vsel %vm397, 0, %v449
        %451 = vst [vmem:[#allocation2 + $0xd4] sm:$0x1] %v450
        %v452 = vld [vmem:[%s330] sm:$0xff]
        %v453 = vld [vmem:[%s330 + $0x8] sm:$0xff]
        %v454 = vld [vmem:[%s330 + $0x10] sm:$0xff]
        %v455 = vld [vmem:[%s330 + $0x18] sm:$0xff]
        %v456 = vld [vmem:[%s330 + $0x20] sm:$0xff]
        %v457 = vld [vmem:[%s330 + $0x28] sm:$0xff]
        %v458 = vld [vmem:[%s330 + $0x30] sm:$0xff]
        %v459 = vld [vmem:[%s330 + $0x38] sm:$0xff]
        %v460 = vld [vmem:[%s330 + $0x40] sm:$0xff]
        %v461 = vld [vmem:[%s330 + $0x48] sm:$0xff]
        %v462 = vld [vmem:[%s330 + $0x50] sm:$0xff]
        %v463 = vld [vmem:[%s330 + $0x58] sm:$0xff]
        %v464 = vld [vmem:[%s330 + $0x60] sm:$0xff]
        %v465 = vld [vmem:[%s330 + $0x68] sm:$0xff]
        %v466 = vld [vmem:[%s330 + $0x70] sm:$0xff]
        %v467 = vld [vmem:[%s330 + $0x78] sm:$0xff]
        %v468 = vld [vmem:[%s330 + $0x80] sm:$0xff]
        %v469 = vld [vmem:[%s330 + $0x88] sm:$0xff]
        %v470 = vld [vmem:[%s330 + $0x90] sm:$0xff]
        %v471 = vld [vmem:[%s330 + $0x98] sm:$0xff]
        %v472 = vld [vmem:[%s330 + $0xa0] sm:$0xff]
        %v473 = vld [vmem:[%s330 + $0xa8] sm:$0xff]
        %v474 = vld [vmem:[%s330 + $0xb0] sm:$0xff]
        %v475 = vld [vmem:[%s330 + $0xb8] sm:$0xff]
        %v476 = vld [vmem:[%s330 + $0xc0] sm:$0xff]
        %v477 = vld [vmem:[%s330 + $0xc8] sm:$0xff]
        %v478 = vld [vmem:[%s330 + $0xd0] sm:$0xff]
        %v479 = vld [vmem:[%s330 + $0xd8] sm:$0xff]
        %v480 = vld [vmem:[%s330 + $0xe0] sm:$0xff]
        %v481 = vld [vmem:[%s330 + $0xe8] sm:$0xff]
        %v482 = vld [vmem:[%s330 + $0xf0] sm:$0xff]
        %v483 = vld [vmem:[%s330 + $0xf8] sm:$0xff]
        %v484 = vpack.c.bf16 %v452, %v452
        %v485 = vpack.c.bf16 %v453, %v453
        %v486 = vpack.c.bf16 %v454, %v454
        %v487 = vpack.c.bf16 %v455, %v455
        %v488 = vpack.c.bf16 %v456, %v456
        %v489 = vpack.c.bf16 %v457, %v457
        %v490 = vpack.c.bf16 %v458, %v458
        %v491 = vpack.c.bf16 %v459, %v459
        %v492 = vpack.c.bf16 %v460, %v460
        %v493 = vpack.c.bf16 %v461, %v461
        %v494 = vpack.c.bf16 %v462, %v462
        %v495 = vpack.c.bf16 %v463, %v463
        %v496 = vpack.c.bf16 %v464, %v464
        %v497 = vpack.c.bf16 %v465, %v465
        %v498 = vpack.c.bf16 %v466, %v466
        %v499 = vpack.c.bf16 %v467, %v467
        %v500 = vpack.c.bf16 %v468, %v468
        %v501 = vpack.c.bf16 %v469, %v469
        %v502 = vpack.c.bf16 %v470, %v470
        %v503 = vpack.c.bf16 %v471, %v471
        %v504 = vpack.c.bf16 %v472, %v472
        %v505 = vpack.c.bf16 %v473, %v473
        %v506 = vpack.c.bf16 %v474, %v474
        %v507 = vpack.c.bf16 %v475, %v475
        %v508 = vpack.c.bf16 %v476, %v476
        %v509 = vpack.c.bf16 %v477, %v477
        %v510 = vpack.c.bf16 %v478, %v478
        %v511 = vpack.c.bf16 %v479, %v479
        %v512 = vpack.c.bf16 %v480, %v480
        %v513 = vpack.c.bf16 %v481, %v481
        %v514 = vpack.c.bf16 %v482, %v482
        %v515 = vpack.c.bf16 %v483, %v483
        %vm516 = vsmask.f32 4368
        %vm517 = vmor %vm340, %vm516
        %v519 = vshrl.u32 %v484, 16
        %v521 = vrot.slane %v519, 7
        %v522 = vshll.u32 %v484, 16
        %v524 = vor.u32 %v521, %v522
        %v525 = vrot.slane %v521, 4
        %v527 = vshrl.u32 %v485, 16
        %v529 = vrot.slane %v527, 7
        %v530 = vshll.u32 %v485, 16
        %v532 = vor.u32 %v529, %v530
        %v533 = vsel %vm517, %v525, %v532
        %v534 = vrot.slane %v529, 4
        %v536 = vshrl.u32 %v486, 16
        %v538 = vrot.slane %v536, 7
        %v539 = vshll.u32 %v486, 16
        %v541 = vor.u32 %v538, %v539
        %v542 = vrot.slane %v538, 4
        %v544 = vshrl.u32 %v487, 16
        %v546 = vrot.slane %v544, 7
        %v547 = vshll.u32 %v487, 16
        %v549 = vor.u32 %v546, %v547
        %v550 = vsel %vm517, %v542, %v549
        %v551 = vrot.slane %v546, 4
        %v553 = vshrl.u32 %v488, 16
        %v555 = vrot.slane %v553, 7
        %v556 = vshll.u32 %v488, 16
        %v558 = vor.u32 %v555, %v556
        %v559 = vrot.slane %v555, 4
        %v561 = vshrl.u32 %v489, 16
        %v563 = vrot.slane %v561, 7
        %v564 = vshll.u32 %v489, 16
        %v566 = vor.u32 %v563, %v564
        %v567 = vsel %vm517, %v559, %v566
        %v568 = vrot.slane %v563, 4
        %v570 = vshrl.u32 %v490, 16
        %v572 = vrot.slane %v570, 7
        %v573 = vshll.u32 %v490, 16
        %v575 = vor.u32 %v572, %v573
        %v576 = vrot.slane %v572, 4
        %v578 = vshrl.u32 %v491, 16
        %v580 = vrot.slane %v578, 7
        %v581 = vshll.u32 %v491, 16
        %v583 = vor.u32 %v580, %v581
        %v584 = vsel %vm517, %v576, %v583
        %v585 = vrot.slane %v580, 4
        %v587 = vshrl.u32 %v492, 16
        %v589 = vrot.slane %v587, 7
        %v590 = vshll.u32 %v492, 16
        %v592 = vor.u32 %v589, %v590
        %v593 = vrot.slane %v589, 4
        %v595 = vshrl.u32 %v493, 16
        %v597 = vrot.slane %v595, 7
        %v598 = vshll.u32 %v493, 16
        %v600 = vor.u32 %v597, %v598
        %v601 = vsel %vm517, %v593, %v600
        %v602 = vrot.slane %v597, 4
        %v604 = vshrl.u32 %v494, 16
        %v606 = vrot.slane %v604, 7
        %v607 = vshll.u32 %v494, 16
        %v609 = vor.u32 %v606, %v607
        %v610 = vrot.slane %v606, 4
        %v612 = vshrl.u32 %v495, 16
        %v614 = vrot.slane %v612, 7
        %v615 = vshll.u32 %v495, 16
        %v617 = vor.u32 %v614, %v615
        %v618 = vsel %vm517, %v610, %v617
        %v619 = vrot.slane %v614, 4
        %v621 = vshrl.u32 %v496, 16
        %v623 = vrot.slane %v621, 7
        %v624 = vshll.u32 %v496, 16
        %v626 = vor.u32 %v623, %v624
        %v627 = vrot.slane %v623, 4
        %v629 = vshrl.u32 %v497, 16
        %v631 = vrot.slane %v629, 7
        %v632 = vshll.u32 %v497, 16
        %v634 = vor.u32 %v631, %v632
        %v635 = vsel %vm517, %v627, %v634
        %v636 = vrot.slane %v631, 4
        %v638 = vshrl.u32 %v498, 16
        %v640 = vrot.slane %v638, 7
        %v641 = vshll.u32 %v498, 16
        %v643 = vor.u32 %v640, %v641
        %v644 = vrot.slane %v640, 4
        %v646 = vshrl.u32 %v499, 16
        %v648 = vrot.slane %v646, 7
        %v649 = vshll.u32 %v499, 16
        %v651 = vor.u32 %v648, %v649
        %v652 = vsel %vm517, %v644, %v651
        %v653 = vrot.slane %v648, 4
        %v655 = vshrl.u32 %v500, 16
        %v657 = vrot.slane %v655, 7
        %v658 = vshll.u32 %v500, 16
        %v660 = vor.u32 %v657, %v658
        %v661 = vrot.slane %v657, 4
        %v663 = vshrl.u32 %v501, 16
        %v665 = vrot.slane %v663, 7
        %v666 = vshll.u32 %v501, 16
        %v668 = vor.u32 %v665, %v666
        %v669 = vsel %vm517, %v661, %v668
        %v670 = vrot.slane %v665, 4
        %v672 = vshrl.u32 %v502, 16
        %v674 = vrot.slane %v672, 7
        %v675 = vshll.u32 %v502, 16
        %v677 = vor.u32 %v674, %v675
        %v678 = vrot.slane %v674, 4
        %v680 = vshrl.u32 %v503, 16
        %v682 = vrot.slane %v680, 7
        %v683 = vshll.u32 %v503, 16
        %v685 = vor.u32 %v682, %v683
        %v686 = vsel %vm517, %v678, %v685
        %v687 = vrot.slane %v682, 4
        %v689 = vshrl.u32 %v504, 16
        %v691 = vrot.slane %v689, 7
        %v692 = vshll.u32 %v504, 16
        %v694 = vor.u32 %v691, %v692
        %v695 = vrot.slane %v691, 4
        %v697 = vshrl.u32 %v505, 16
        %v699 = vrot.slane %v697, 7
        %v700 = vshll.u32 %v505, 16
        %v702 = vor.u32 %v699, %v700
        %v703 = vsel %vm517, %v695, %v702
        %v704 = vrot.slane %v699, 4
        %v706 = vshrl.u32 %v506, 16
        %v708 = vrot.slane %v706, 7
        %v709 = vshll.u32 %v506, 16
        %v711 = vor.u32 %v708, %v709
        %v712 = vrot.slane %v708, 4
        %v714 = vshrl.u32 %v507, 16
        %v716 = vrot.slane %v714, 7
        %v717 = vshll.u32 %v507, 16
        %v719 = vor.u32 %v716, %v717
        %v720 = vsel %vm517, %v712, %v719
        %v721 = vrot.slane %v716, 4
        %v723 = vshrl.u32 %v508, 16
        %v725 = vrot.slane %v723, 7
        %v726 = vshll.u32 %v508, 16
        %v728 = vor.u32 %v725, %v726
        %v729 = vrot.slane %v725, 4
        %v731 = vshrl.u32 %v509, 16
        %v733 = vrot.slane %v731, 7
        %v734 = vshll.u32 %v509, 16
        %v736 = vor.u32 %v733, %v734
        %v737 = vsel %vm517, %v729, %v736
        %v738 = vrot.slane %v733, 4
        %v740 = vshrl.u32 %v510, 16
        %v742 = vrot.slane %v740, 7
        %v743 = vshll.u32 %v510, 16
        %v745 = vor.u32 %v742, %v743
        %v746 = vrot.slane %v742, 4
        %v748 = vshrl.u32 %v511, 16
        %v750 = vrot.slane %v748, 7
        %v751 = vshll.u32 %v511, 16
        %v753 = vor.u32 %v750, %v751
        %v754 = vsel %vm517, %v746, %v753
        %v755 = vrot.slane %v750, 4
        %v757 = vshrl.u32 %v512, 16
        %v759 = vrot.slane %v757, 7
        %v760 = vshll.u32 %v512, 16
        %v762 = vor.u32 %v759, %v760
        %v763 = vrot.slane %v759, 4
        %v765 = vshrl.u32 %v513, 16
        %v767 = vrot.slane %v765, 7
        %v768 = vshll.u32 %v513, 16
        %v770 = vor.u32 %v767, %v768
        %v771 = vsel %vm517, %v763, %v770
        %v772 = vrot.slane %v767, 4
        %v774 = vshrl.u32 %v514, 16
        %v776 = vrot.slane %v774, 7
        %v777 = vshll.u32 %v514, 16
        %v779 = vor.u32 %v776, %v777
        %v780 = vrot.slane %v776, 4
        %v782 = vshrl.u32 %v515, 16
        %v784 = vrot.slane %v782, 7
        %v785 = vshll.u32 %v515, 16
        %v787 = vor.u32 %v784, %v785
        %v788 = vsel %vm517, %v780, %v787
        %v789 = vrot.slane %v784, 4
        %s838 = scalar_lea.vmem [#allocation2], 12
        %vm839 = vcmask 1043456
        %vm840 = vmand %vm839, %vm396
        %v841 = vld [vmem:[%s838] sm:$0xf]
        %v842 = vsel %vm840, %v524, %v841
        %843 = vst [vmem:[%s838] sm:$0xf] %v842
        %844 = vst [vmem:[%s838 + $0x4] sm:$0xf] %v533
        %v845 = vld [vmem:[%s838 + $0x8] sm:$0x1]
        %v846 = vsel %vm341, %v534, %v845
        %847 = vst [vmem:[%s838 + $0x8] sm:$0x1] %v846
        %v848 = vld [vmem:[%s838 + $0xc] sm:$0xf]
        %v849 = vsel %vm840, %v541, %v848
        %850 = vst [vmem:[%s838 + $0xc] sm:$0xf] %v849
        %851 = vst [vmem:[%s838 + $0x10] sm:$0xf] %v550
        %v852 = vld [vmem:[%s838 + $0x14] sm:$0x1]
        %v853 = vsel %vm341, %v551, %v852
        %854 = vst [vmem:[%s838 + $0x14] sm:$0x1] %v853
        %v855 = vld [vmem:[%s838 + $0x18] sm:$0xf]
        %v856 = vsel %vm840, %v558, %v855
        %857 = vst [vmem:[%s838 + $0x18] sm:$0xf] %v856
        %858 = vst [vmem:[%s838 + $0x1c] sm:$0xf] %v567
        %v859 = vld [vmem:[%s838 + $0x20] sm:$0x1]
        %v860 = vsel %vm341, %v568, %v859
        %861 = vst [vmem:[%s838 + $0x20] sm:$0x1] %v860
        %v862 = vld [vmem:[%s838 + $0x24] sm:$0xf]
        %v863 = vsel %vm840, %v575, %v862
        %864 = vst [vmem:[%s838 + $0x24] sm:$0xf] %v863
        %865 = vst [vmem:[%s838 + $0x28] sm:$0xf] %v584
        %v866 = vld [vmem:[%s838 + $0x2c] sm:$0x1]
        %v867 = vsel %vm341, %v585, %v866
        %868 = vst [vmem:[%s838 + $0x2c] sm:$0x1] %v867
        %v869 = vld [vmem:[%s838 + $0x30] sm:$0xf]
        %v870 = vsel %vm840, %v592, %v869
        %871 = vst [vmem:[%s838 + $0x30] sm:$0xf] %v870
        %872 = vst [vmem:[%s838 + $0x34] sm:$0xf] %v601
        %v873 = vld [vmem:[%s838 + $0x38] sm:$0x1]
        %v874 = vsel %vm341, %v602, %v873
        %875 = vst [vmem:[%s838 + $0x38] sm:$0x1] %v874
        %v876 = vld [vmem:[%s838 + $0x3c] sm:$0xf]
        %v877 = vsel %vm840, %v609, %v876
        %878 = vst [vmem:[%s838 + $0x3c] sm:$0xf] %v877
        %879 = vst [vmem:[%s838 + $0x40] sm:$0xf] %v618
        %v880 = vld [vmem:[%s838 + $0x44] sm:$0x1]
        %v881 = vsel %vm341, %v619, %v880
        %882 = vst [vmem:[%s838 + $0x44] sm:$0x1] %v881
        %v883 = vld [vmem:[%s838 + $0x48] sm:$0xf]
        %v884 = vsel %vm840, %v626, %v883
        %885 = vst [vmem:[%s838 + $0x48] sm:$0xf] %v884
        %886 = vst [vmem:[%s838 + $0x4c] sm:$0xf] %v635
        %v887 = vld [vmem:[%s838 + $0x50] sm:$0x1]
        %v888 = vsel %vm341, %v636, %v887
        %889 = vst [vmem:[%s838 + $0x50] sm:$0x1] %v888
        %v890 = vld [vmem:[%s838 + $0x54] sm:$0xf]
        %v891 = vsel %vm840, %v643, %v890
        %892 = vst [vmem:[%s838 + $0x54] sm:$0xf] %v891
        %893 = vst [vmem:[%s838 + $0x58] sm:$0xf] %v652
        %v894 = vld [vmem:[%s838 + $0x5c] sm:$0x1]
        %v895 = vsel %vm341, %v653, %v894
        %896 = vst [vmem:[%s838 + $0x5c] sm:$0x1] %v895
        %v897 = vld [vmem:[%s838 + $0x60] sm:$0xf]
        %v898 = vsel %vm840, %v660, %v897
        %899 = vst [vmem:[%s838 + $0x60] sm:$0xf] %v898
        %900 = vst [vmem:[%s838 + $0x64] sm:$0xf] %v669
        %v901 = vld [vmem:[%s838 + $0x68] sm:$0x1]
        %v902 = vsel %vm341, %v670, %v901
        %903 = vst [vmem:[%s838 + $0x68] sm:$0x1] %v902
        %v904 = vld [vmem:[%s838 + $0x6c] sm:$0xf]
        %v905 = vsel %vm840, %v677, %v904
        %906 = vst [vmem:[%s838 + $0x6c] sm:$0xf] %v905
        %907 = vst [vmem:[%s838 + $0x70] sm:$0xf] %v686
        %v908 = vld [vmem:[%s838 + $0x74] sm:$0x1]
        %v909 = vsel %vm341, %v687, %v908
        %910 = vst [vmem:[%s838 + $0x74] sm:$0x1] %v909
        %v911 = vld [vmem:[%s838 + $0x78] sm:$0xf]
        %v912 = vsel %vm840, %v694, %v911
        %913 = vst [vmem:[%s838 + $0x78] sm:$0xf] %v912
        %914 = vst [vmem:[%s838 + $0x7c] sm:$0xf] %v703
        %v915 = vld [vmem:[%s838 + $0x80] sm:$0x1]
        %v916 = vsel %vm341, %v704, %v915
        %917 = vst [vmem:[%s838 + $0x80] sm:$0x1] %v916
        %v918 = vld [vmem:[%s838 + $0x84] sm:$0xf]
        %v919 = vsel %vm840, %v711, %v918
        %920 = vst [vmem:[%s838 + $0x84] sm:$0xf] %v919
        %921 = vst [vmem:[%s838 + $0x88] sm:$0xf] %v720
        %v922 = vld [vmem:[%s838 + $0x8c] sm:$0x1]
        %v923 = vsel %vm341, %v721, %v922
        %924 = vst [vmem:[%s838 + $0x8c] sm:$0x1] %v923
        %v925 = vld [vmem:[%s838 + $0x90] sm:$0xf]
        %v926 = vsel %vm840, %v728, %v925
        %927 = vst [vmem:[%s838 + $0x90] sm:$0xf] %v926
        %928 = vst [vmem:[%s838 + $0x94] sm:$0xf] %v737
        %v929 = vld [vmem:[%s838 + $0x98] sm:$0x1]
        %v930 = vsel %vm341, %v738, %v929
        %931 = vst [vmem:[%s838 + $0x98] sm:$0x1] %v930
        %v932 = vld [vmem:[%s838 + $0x9c] sm:$0xf]
        %v933 = vsel %vm840, %v745, %v932
        %934 = vst [vmem:[%s838 + $0x9c] sm:$0xf] %v933
        %935 = vst [vmem:[%s838 + $0xa0] sm:$0xf] %v754
        %v936 = vld [vmem:[%s838 + $0xa4] sm:$0x1]
        %v937 = vsel %vm341, %v755, %v936
        %938 = vst [vmem:[%s838 + $0xa4] sm:$0x1] %v937
        %v939 = vld [vmem:[%s838 + $0xa8] sm:$0xf]
        %v940 = vsel %vm840, %v762, %v939
        %941 = vst [vmem:[%s838 + $0xa8] sm:$0xf] %v940
        %942 = vst [vmem:[%s838 + $0xac] sm:$0xf] %v771
        %v943 = vld [vmem:[%s838 + $0xb0] sm:$0x1]
        %v944 = vsel %vm341, %v772, %v943
        %945 = vst [vmem:[%s838 + $0xb0] sm:$0x1] %v944
        %v946 = vld [vmem:[%s838 + $0xb4] sm:$0xf]
        %v947 = vsel %vm840, %v779, %v946
        %948 = vst [vmem:[%s838 + $0xb4] sm:$0xf] %v947
        %949 = vst [vmem:[%s838 + $0xb8] sm:$0xf] %v788
        %v950 = vld [vmem:[%s838 + $0xbc] sm:$0x1]
        %v951 = vsel %vm341, %v789, %v950
        %952 = vst [vmem:[%s838 + $0xbc] sm:$0x1] %v951
        %v953 = vld [vmem:[#allocation2] sm:$0xf]
        %v954 = vld [vmem:[#allocation2 + $0x4] sm:$0xf]
        %v955 = vld [vmem:[#allocation2 + $0xc] sm:$0xf]
        %v956 = vld [vmem:[#allocation2 + $0x10] sm:$0xf]
        %v957 = vld [vmem:[#allocation2 + $0x18] sm:$0xf]
        %v958 = vld [vmem:[#allocation2 + $0x1c] sm:$0xf]
        %v959 = vld [vmem:[#allocation2 + $0x24] sm:$0xf]
        %v960 = vld [vmem:[#allocation2 + $0x28] sm:$0xf]
        %v961 = vld [vmem:[#allocation2 + $0x30] sm:$0xf]
        %v962 = vld [vmem:[#allocation2 + $0x34] sm:$0xf]
        %v963 = vld [vmem:[#allocation2 + $0x3c] sm:$0xf]
        %v964 = vld [vmem:[#allocation2 + $0x40] sm:$0xf]
        %v965 = vld [vmem:[#allocation2 + $0x48] sm:$0xf]
        %v966 = vld [vmem:[#allocation2 + $0x4c] sm:$0xf]
        %v967 = vld [vmem:[#allocation2 + $0x54] sm:$0xf]
        %v968 = vld [vmem:[#allocation2 + $0x58] sm:$0xf]
        %v969 = vld [vmem:[#allocation2 + $0x60] sm:$0xf]
        %v970 = vld [vmem:[#allocation2 + $0x64] sm:$0xf]
        %v971 = vld [vmem:[#allocation2 + $0x6c] sm:$0xf]
        %v972 = vld [vmem:[#allocation2 + $0x70] sm:$0xf]
        %v973 = vld [vmem:[#allocation2 + $0x78] sm:$0xf]
        %v974 = vld [vmem:[#allocation2 + $0x7c] sm:$0xf]
        %v975 = vld [vmem:[#allocation2 + $0x84] sm:$0xf]
        %v976 = vld [vmem:[#allocation2 + $0x88] sm:$0xf]
        %v977 = vld [vmem:[#allocation2 + $0x90] sm:$0xf]
        %v978 = vld [vmem:[#allocation2 + $0x94] sm:$0xf]
        %v979 = vld [vmem:[#allocation2 + $0x9c] sm:$0xf]
        %v980 = vld [vmem:[#allocation2 + $0xa0] sm:$0xf]
        %v981 = vld [vmem:[#allocation2 + $0xa8] sm:$0xf]
        %v982 = vld [vmem:[#allocation2 + $0xac] sm:$0xf]
        %v983 = vld [vmem:[#allocation2 + $0xb4] sm:$0xf]
        %v984 = vld [vmem:[#allocation2 + $0xb8] sm:$0xf]
        %985 = vst [vmem:[#allocation3] sm:$0xf] %v953
        %986 = vst [vmem:[#allocation3 + $0x24] sm:$0xf] %v954
        %987 = vst [vmem:[#allocation3 + $0x48] sm:$0xf] %v955
        %988 = vst [vmem:[#allocation3 + $0x6c] sm:$0xf] %v956
        %989 = vst [vmem:[#allocation3 + $0x90] sm:$0xf] %v957
        %990 = vst [vmem:[#allocation3 + $0xb4] sm:$0xf] %v958
        %991 = vst [vmem:[#allocation3 + $0xd8] sm:$0xf] %v959
        %992 = vst [vmem:[#allocation3 + $0xfc] sm:$0xf] %v960
        %993 = vst [vmem:[#allocation3 + $0x120] sm:$0xf] %v961
        %994 = vst [vmem:[#allocation3 + $0x144] sm:$0xf] %v962
        %995 = vst [vmem:[#allocation3 + $0x168] sm:$0xf] %v963
        %996 = vst [vmem:[#allocation3 + $0x18c] sm:$0xf] %v964
        %997 = vst [vmem:[#allocation3 + $0x1b0] sm:$0xf] %v965
        %998 = vst [vmem:[#allocation3 + $0x1d4] sm:$0xf] %v966
        %999 = vst [vmem:[#allocation3 + $0x1f8] sm:$0xf] %v967
        %1000 = vst [vmem:[#allocation3 + $0x21c] sm:$0xf] %v968
        %1001 = vst [vmem:[#allocation3 + $0x240] sm:$0xf] %v969
        %1002 = vst [vmem:[#allocation3 + $0x264] sm:$0xf] %v970
        %1003 = vst [vmem:[#allocation3 + $0x288] sm:$0xf] %v971
        %1004 = vst [vmem:[#allocation3 + $0x2ac] sm:$0xf] %v972
        %1005 = vst [vmem:[#allocation3 + $0x2d0] sm:$0xf] %v973
        %1006 = vst [vmem:[#allocation3 + $0x2f4] sm:$0xf] %v974
        %1007 = vst [vmem:[#allocation3 + $0x318] sm:$0xf] %v975
        %1008 = vst [vmem:[#allocation3 + $0x33c] sm:$0xf] %v976
        %1009 = vst [vmem:[#allocation3 + $0x360] sm:$0xf] %v977
        %1010 = vst [vmem:[#allocation3 + $0x384] sm:$0xf] %v978
        %1011 = vst [vmem:[#allocation3 + $0x3a8] sm:$0xf] %v979
        %1012 = vst [vmem:[#allocation3 + $0x3cc] sm:$0xf] %v980
        %1013 = vst [vmem:[#allocation3 + $0x3f0] sm:$0xf] %v981
        %1014 = vst [vmem:[#allocation3 + $0x414] sm:$0xf] %v982
        %1015 = vst [vmem:[#allocation3 + $0x438] sm:$0xf] %v983
        %1016 = vst [vmem:[#allocation3 + $0x45c] sm:$0xf] %v984
        %v1017 = vld [vmem:[#allocation2] sm:$0xf]
        %v1018 = vld [vmem:[#allocation2 + $0x4] sm:$0xf]
        %v1019 = vld [vmem:[#allocation2 + $0x8] sm:$0x1]
        %v1020 = vld [vmem:[#allocation2 + $0xc] sm:$0xf]
        %v1021 = vld [vmem:[#allocation2 + $0x10] sm:$0xf]
        %v1022 = vld [vmem:[#allocation2 + $0x14] sm:$0x1]
        %v1023 = vld [vmem:[#allocation2 + $0x18] sm:$0xf]
        %v1024 = vld [vmem:[#allocation2 + $0x1c] sm:$0xf]
        %v1025 = vld [vmem:[#allocation2 + $0x20] sm:$0x1]
        %v1026 = vld [vmem:[#allocation2 + $0x24] sm:$0xf]
        %v1027 = vld [vmem:[#allocation2 + $0x28] sm:$0xf]
        %v1028 = vld [vmem:[#allocation2 + $0x2c] sm:$0x1]
        %v1029 = vld [vmem:[#allocation2 + $0x30] sm:$0xf]
        %v1030 = vld [vmem:[#allocation2 + $0x34] sm:$0xf]
        %v1031 = vld [vmem:[#allocation2 + $0x38] sm:$0x1]
        %v1032 = vld [vmem:[#allocation2 + $0x3c] sm:$0xf]
        %v1033 = vld [vmem:[#allocation2 + $0x40] sm:$0xf]
        %v1034 = vld [vmem:[#allocation2 + $0x44] sm:$0x1]
        %v1035 = vld [vmem:[#allocation2 + $0x48] sm:$0xf]
        %v1036 = vld [vmem:[#allocation2 + $0x4c] sm:$0xf]
        %v1037 = vld [vmem:[#allocation2 + $0x50] sm:$0x1]
        %v1038 = vld [vmem:[#allocation2 + $0x54] sm:$0xf]
        %v1039 = vld [vmem:[#allocation2 + $0x58] sm:$0xf]
        %v1040 = vld [vmem:[#allocation2 + $0x5c] sm:$0x1]
        %v1041 = vld [vmem:[#allocation2 + $0x60] sm:$0xf]
        %v1042 = vld [vmem:[#allocation2 + $0x64] sm:$0xf]
        %v1043 = vld [vmem:[#allocation2 + $0x68] sm:$0x1]
        %v1044 = vld [vmem:[#allocation2 + $0x6c] sm:$0xf]
        %v1045 = vld [vmem:[#allocation2 + $0x70] sm:$0xf]
        %v1046 = vld [vmem:[#allocation2 + $0x74] sm:$0x1]
        %v1047 = vld [vmem:[#allocation2 + $0x78] sm:$0xf]
        %v1048 = vld [vmem:[#allocation2 + $0x7c] sm:$0xf]
        %v1049 = vld [vmem:[#allocation2 + $0x80] sm:$0x1]
        %v1050 = vld [vmem:[#allocation2 + $0x84] sm:$0xf]
        %v1051 = vld [vmem:[#allocation2 + $0x88] sm:$0xf]
        %v1052 = vld [vmem:[#allocation2 + $0x8c] sm:$0x1]
        %v1053 = vld [vmem:[#allocation2 + $0x90] sm:$0xf]
        %v1054 = vld [vmem:[#allocation2 + $0x94] sm:$0xf]
        %v1055 = vld [vmem:[#allocation2 + $0x98] sm:$0x1]
        %v1056 = vld [vmem:[#allocation2 + $0x9c] sm:$0xf]
        %v1057 = vld [vmem:[#allocation2 + $0xa0] sm:$0xf]
        %v1058 = vld [vmem:[#allocation2 + $0xa4] sm:$0x1]
        %v1059 = vld [vmem:[#allocation2 + $0xa8] sm:$0xf]
        %v1060 = vld [vmem:[#allocation2 + $0xac] sm:$0xf]
        %v1061 = vld [vmem:[#allocation2 + $0xb0] sm:$0x1]
        %v1062 = vld [vmem:[#allocation2 + $0xb4] sm:$0xf]
        %v1063 = vld [vmem:[#allocation2 + $0xb8] sm:$0xf]
        %v1064 = vld [vmem:[#allocation2 + $0xbc] sm:$0x1]
        %vm1065 = vsmask.f32 3328
        %vm1066 = vsmask.f32 7440
        %vm1067 = vmor %vm1065, %vm1066
        %v1069 = vshrl.u32 %v1017, 16
        %v1071 = vrot.slane %v1069, 4
        %v1072 = vshll.u32 %v1017, 16
        %v1074 = vrot.slane %v1072, 5
        %v1075 = vor.u32 %v1071, %v1074
        %v1076 = vrot.slane %v1075, 4
        %v1078 = vshll.u32 %v1018, 16
        %v1080 = vrot.slane %v1078, 5
        %v1081 = vsel %vm1067, %v1076, %v1080
        %v1082 = vshrl.u32 %v1018, 16
        %v1084 = vrot.slane %v1082, 4
        %v1085 = vor.u32 %v1084, %v1080
        %v1086 = vrot.slane %v1085, 4
        %v1088 = vshll.u32 %v1019, 16
        %v1090 = vrot.slane %v1088, 5
        %v1091 = vsel %vm1067, %v1086, %v1090
        %v1093 = vshrl.u32 %v1020, 16
        %v1095 = vrot.slane %v1093, 4
        %v1096 = vshll.u32 %v1020, 16
        %v1098 = vrot.slane %v1096, 5
        %v1099 = vor.u32 %v1095, %v1098
        %v1100 = vrot.slane %v1099, 4
        %v1102 = vshll.u32 %v1021, 16
        %v1104 = vrot.slane %v1102, 5
        %v1105 = vsel %vm1067, %v1100, %v1104
        %v1106 = vshrl.u32 %v1021, 16
        %v1108 = vrot.slane %v1106, 4
        %v1109 = vor.u32 %v1108, %v1104
        %v1110 = vrot.slane %v1109, 4
        %v1112 = vshll.u32 %v1022, 16
        %v1114 = vrot.slane %v1112, 5
        %v1115 = vsel %vm1067, %v1110, %v1114
        %v1117 = vshrl.u32 %v1023, 16
        %v1119 = vrot.slane %v1117, 4
        %v1120 = vshll.u32 %v1023, 16
        %v1122 = vrot.slane %v1120, 5
        %v1123 = vor.u32 %v1119, %v1122
        %v1124 = vrot.slane %v1123, 4
        %v1126 = vshll.u32 %v1024, 16
        %v1128 = vrot.slane %v1126, 5
        %v1129 = vsel %vm1067, %v1124, %v1128
        %v1130 = vshrl.u32 %v1024, 16
        %v1132 = vrot.slane %v1130, 4
        %v1133 = vor.u32 %v1132, %v1128
        %v1134 = vrot.slane %v1133, 4
        %v1136 = vshll.u32 %v1025, 16
        %v1138 = vrot.slane %v1136, 5
        %v1139 = vsel %vm1067, %v1134, %v1138
        %v1141 = vshrl.u32 %v1026, 16
        %v1143 = vrot.slane %v1141, 4
        %v1144 = vshll.u32 %v1026, 16
        %v1146 = vrot.slane %v1144, 5
        %v1147 = vor.u32 %v1143, %v1146
        %v1148 = vrot.slane %v1147, 4
        %v1150 = vshll.u32 %v1027, 16
        %v1152 = vrot.slane %v1150, 5
        %v1153 = vsel %vm1067, %v1148, %v1152
        %v1154 = vshrl.u32 %v1027, 16
        %v1156 = vrot.slane %v1154, 4
        %v1157 = vor.u32 %v1156, %v1152
        %v1158 = vrot.slane %v1157, 4
        %v1160 = vshll.u32 %v1028, 16
        %v1162 = vrot.slane %v1160, 5
        %v1163 = vsel %vm1067, %v1158, %v1162
        %v1165 = vshrl.u32 %v1029, 16
        %v1167 = vrot.slane %v1165, 4
        %v1168 = vshll.u32 %v1029, 16
        %v1170 = vrot.slane %v1168, 5
        %v1171 = vor.u32 %v1167, %v1170
        %v1172 = vrot.slane %v1171, 4
        %v1174 = vshll.u32 %v1030, 16
        %v1176 = vrot.slane %v1174, 5
        %v1177 = vsel %vm1067, %v1172, %v1176
        %v1178 = vshrl.u32 %v1030, 16
        %v1180 = vrot.slane %v1178, 4
        %v1181 = vor.u32 %v1180, %v1176
        %v1182 = vrot.slane %v1181, 4
        %v1184 = vshll.u32 %v1031, 16
        %v1186 = vrot.slane %v1184, 5
        %v1187 = vsel %vm1067, %v1182, %v1186
        %v1189 = vshrl.u32 %v1032, 16
        %v1191 = vrot.slane %v1189, 4
        %v1192 = vshll.u32 %v1032, 16
        %v1194 = vrot.slane %v1192, 5
        %v1195 = vor.u32 %v1191, %v1194
        %v1196 = vrot.slane %v1195, 4
        %v1198 = vshll.u32 %v1033, 16
        %v1200 = vrot.slane %v1198, 5
        %v1201 = vsel %vm1067, %v1196, %v1200
        %v1202 = vshrl.u32 %v1033, 16
        %v1204 = vrot.slane %v1202, 4
        %v1205 = vor.u32 %v1204, %v1200
        %v1206 = vrot.slane %v1205, 4
        %v1208 = vshll.u32 %v1034, 16
        %v1210 = vrot.slane %v1208, 5
        %v1211 = vsel %vm1067, %v1206, %v1210
        %v1213 = vshrl.u32 %v1035, 16
        %v1215 = vrot.slane %v1213, 4
        %v1216 = vshll.u32 %v1035, 16
        %v1218 = vrot.slane %v1216, 5
        %v1219 = vor.u32 %v1215, %v1218
        %v1220 = vrot.slane %v1219, 4
        %v1222 = vshll.u32 %v1036, 16
        %v1224 = vrot.slane %v1222, 5
        %v1225 = vsel %vm1067, %v1220, %v1224
        %v1226 = vshrl.u32 %v1036, 16
        %v1228 = vrot.slane %v1226, 4
        %v1229 = vor.u32 %v1228, %v1224
        %v1230 = vrot.slane %v1229, 4
        %v1232 = vshll.u32 %v1037, 16
        %v1234 = vrot.slane %v1232, 5
        %v1235 = vsel %vm1067, %v1230, %v1234
        %v1237 = vshrl.u32 %v1038, 16
        %v1239 = vrot.slane %v1237, 4
        %v1240 = vshll.u32 %v1038, 16
        %v1242 = vrot.slane %v1240, 5
        %v1243 = vor.u32 %v1239, %v1242
        %v1244 = vrot.slane %v1243, 4
        %v1246 = vshll.u32 %v1039, 16
        %v1248 = vrot.slane %v1246, 5
        %v1249 = vsel %vm1067, %v1244, %v1248
        %v1250 = vshrl.u32 %v1039, 16
        %v1252 = vrot.slane %v1250, 4
        %v1253 = vor.u32 %v1252, %v1248
        %v1254 = vrot.slane %v1253, 4
        %v1256 = vshll.u32 %v1040, 16
        %v1258 = vrot.slane %v1256, 5
        %v1259 = vsel %vm1067, %v1254, %v1258
        %v1261 = vshrl.u32 %v1041, 16
        %v1263 = vrot.slane %v1261, 4
        %v1264 = vshll.u32 %v1041, 16
        %v1266 = vrot.slane %v1264, 5
        %v1267 = vor.u32 %v1263, %v1266
        %v1268 = vrot.slane %v1267, 4
        %v1270 = vshll.u32 %v1042, 16
        %v1272 = vrot.slane %v1270, 5
        %v1273 = vsel %vm1067, %v1268, %v1272
        %v1274 = vshrl.u32 %v1042, 16
        %v1276 = vrot.slane %v1274, 4
        %v1277 = vor.u32 %v1276, %v1272
        %v1278 = vrot.slane %v1277, 4
        %v1280 = vshll.u32 %v1043, 16
        %v1282 = vrot.slane %v1280, 5
        %v1283 = vsel %vm1067, %v1278, %v1282
        %v1285 = vshrl.u32 %v1044, 16
        %v1287 = vrot.slane %v1285, 4
        %v1288 = vshll.u32 %v1044, 16
        %v1290 = vrot.slane %v1288, 5
        %v1291 = vor.u32 %v1287, %v1290
        %v1292 = vrot.slane %v1291, 4
        %v1294 = vshll.u32 %v1045, 16
        %v1296 = vrot.slane %v1294, 5
        %v1297 = vsel %vm1067, %v1292, %v1296
        %v1298 = vshrl.u32 %v1045, 16
        %v1300 = vrot.slane %v1298, 4
        %v1301 = vor.u32 %v1300, %v1296
        %v1302 = vrot.slane %v1301, 4
        %v1304 = vshll.u32 %v1046, 16
        %v1306 = vrot.slane %v1304, 5
        %v1307 = vsel %vm1067, %v1302, %v1306
        %v1309 = vshrl.u32 %v1047, 16
        %v1311 = vrot.slane %v1309, 4
        %v1312 = vshll.u32 %v1047, 16
        %v1314 = vrot.slane %v1312, 5
        %v1315 = vor.u32 %v1311, %v1314
        %v1316 = vrot.slane %v1315, 4
        %v1318 = vshll.u32 %v1048, 16
        %v1320 = vrot.slane %v1318, 5
        %v1321 = vsel %vm1067, %v1316, %v1320
        %v1322 = vshrl.u32 %v1048, 16
        %v1324 = vrot.slane %v1322, 4
        %v1325 = vor.u32 %v1324, %v1320
        %v1326 = vrot.slane %v1325, 4
        %v1328 = vshll.u32 %v1049, 16
        %v1330 = vrot.slane %v1328, 5
        %v1331 = vsel %vm1067, %v1326, %v1330
        %v1333 = vshrl.u32 %v1050, 16
        %v1335 = vrot.slane %v1333, 4
        %v1336 = vshll.u32 %v1050, 16
        %v1338 = vrot.slane %v1336, 5
        %v1339 = vor.u32 %v1335, %v1338
        %v1340 = vrot.slane %v1339, 4
        %v1342 = vshll.u32 %v1051, 16
        %v1344 = vrot.slane %v1342, 5
        %v1345 = vsel %vm1067, %v1340, %v1344
        %v1346 = vshrl.u32 %v1051, 16
        %v1348 = vrot.slane %v1346, 4
        %v1349 = vor.u32 %v1348, %v1344
        %v1350 = vrot.slane %v1349, 4
        %v1352 = vshll.u32 %v1052, 16
        %v1354 = vrot.slane %v1352, 5
        %v1355 = vsel %vm1067, %v1350, %v1354
        %v1357 = vshrl.u32 %v1053, 16
        %v1359 = vrot.slane %v1357, 4
        %v1360 = vshll.u32 %v1053, 16
        %v1362 = vrot.slane %v1360, 5
        %v1363 = vor.u32 %v1359, %v1362
        %v1364 = vrot.slane %v1363, 4
        %v1366 = vshll.u32 %v1054, 16
        %v1368 = vrot.slane %v1366, 5
        %v1369 = vsel %vm1067, %v1364, %v1368
        %v1370 = vshrl.u32 %v1054, 16
        %v1372 = vrot.slane %v1370, 4
        %v1373 = vor.u32 %v1372, %v1368
        %v1374 = vrot.slane %v1373, 4
        %v1376 = vshll.u32 %v1055, 16
        %v1378 = vrot.slane %v1376, 5
        %v1379 = vsel %vm1067, %v1374, %v1378
        %v1381 = vshrl.u32 %v1056, 16
        %v1383 = vrot.slane %v1381, 4
        %v1384 = vshll.u32 %v1056, 16
        %v1386 = vrot.slane %v1384, 5
        %v1387 = vor.u32 %v1383, %v1386
        %v1388 = vrot.slane %v1387, 4
        %v1390 = vshll.u32 %v1057, 16
        %v1392 = vrot.slane %v1390, 5
        %v1393 = vsel %vm1067, %v1388, %v1392
        %v1394 = vshrl.u32 %v1057, 16
        %v1396 = vrot.slane %v1394, 4
        %v1397 = vor.u32 %v1396, %v1392
        %v1398 = vrot.slane %v1397, 4
        %v1400 = vshll.u32 %v1058, 16
        %v1402 = vrot.slane %v1400, 5
        %v1403 = vsel %vm1067, %v1398, %v1402
        %v1405 = vshrl.u32 %v1059, 16
        %v1407 = vrot.slane %v1405, 4
        %v1408 = vshll.u32 %v1059, 16
        %v1410 = vrot.slane %v1408, 5
        %v1411 = vor.u32 %v1407, %v1410
        %v1412 = vrot.slane %v1411, 4
        %v1414 = vshll.u32 %v1060, 16
        %v1416 = vrot.slane %v1414, 5
        %v1417 = vsel %vm1067, %v1412, %v1416
        %v1418 = vshrl.u32 %v1060, 16
        %v1420 = vrot.slane %v1418, 4
        %v1421 = vor.u32 %v1420, %v1416
        %v1422 = vrot.slane %v1421, 4
        %v1424 = vshll.u32 %v1061, 16
        %v1426 = vrot.slane %v1424, 5
        %v1427 = vsel %vm1067, %v1422, %v1426
        %v1429 = vshrl.u32 %v1062, 16
        %v1431 = vrot.slane %v1429, 4
        %v1432 = vshll.u32 %v1062, 16
        %v1434 = vrot.slane %v1432, 5
        %v1435 = vor.u32 %v1431, %v1434
        %v1436 = vrot.slane %v1435, 4
        %v1438 = vshll.u32 %v1063, 16
        %v1440 = vrot.slane %v1438, 5
        %v1441 = vsel %vm1067, %v1436, %v1440
        %v1442 = vshrl.u32 %v1063, 16
        %v1444 = vrot.slane %v1442, 4
        %v1445 = vor.u32 %v1444, %v1440
        %v1446 = vrot.slane %v1445, 4
        %v1448 = vshll.u32 %v1064, 16
        %v1450 = vrot.slane %v1448, 5
        %v1451 = vsel %vm1067, %v1446, %v1450
        %1484 = vst [vmem:[#allocation3 + $0x4] sm:$0xf] %v1081
        %1485 = vst [vmem:[#allocation3 + $0x28] sm:$0xf] %v1091
        %1486 = vst [vmem:[#allocation3 + $0x4c] sm:$0xf] %v1105
        %1487 = vst [vmem:[#allocation3 + $0x70] sm:$0xf] %v1115
        %1488 = vst [vmem:[#allocation3 + $0x94] sm:$0xf] %v1129
        %1489 = vst [vmem:[#allocation3 + $0xb8] sm:$0xf] %v1139
        %1490 = vst [vmem:[#allocation3 + $0xdc] sm:$0xf] %v1153
        %1491 = vst [vmem:[#allocation3 + $0x100] sm:$0xf] %v1163
        %1492 = vst [vmem:[#allocation3 + $0x124] sm:$0xf] %v1177
        %1493 = vst [vmem:[#allocation3 + $0x148] sm:$0xf] %v1187
        %1494 = vst [vmem:[#allocation3 + $0x16c] sm:$0xf] %v1201
        %1495 = vst [vmem:[#allocation3 + $0x190] sm:$0xf] %v1211
        %1496 = vst [vmem:[#allocation3 + $0x1b4] sm:$0xf] %v1225
        %1497 = vst [vmem:[#allocation3 + $0x1d8] sm:$0xf] %v1235
        %1498 = vst [vmem:[#allocation3 + $0x1fc] sm:$0xf] %v1249
        %1499 = vst [vmem:[#allocation3 + $0x220] sm:$0xf] %v1259
        %1500 = vst [vmem:[#allocation3 + $0x244] sm:$0xf] %v1273
        %1501 = vst [vmem:[#allocation3 + $0x268] sm:$0xf] %v1283
        %1502 = vst [vmem:[#allocation3 + $0x28c] sm:$0xf] %v1297
        %1503 = vst [vmem:[#allocation3 + $0x2b0] sm:$0xf] %v1307
        %1504 = vst [vmem:[#allocation3 + $0x2d4] sm:$0xf] %v1321
        %1505 = vst [vmem:[#allocation3 + $0x2f8] sm:$0xf] %v1331
        %1506 = vst [vmem:[#allocation3 + $0x31c] sm:$0xf] %v1345
        %1507 = vst [vmem:[#allocation3 + $0x340] sm:$0xf] %v1355
        %1508 = vst [vmem:[#allocation3 + $0x364] sm:$0xf] %v1369
        %1509 = vst [vmem:[#allocation3 + $0x388] sm:$0xf] %v1379
        %1510 = vst [vmem:[#allocation3 + $0x3ac] sm:$0xf] %v1393
        %1511 = vst [vmem:[#allocation3 + $0x3d0] sm:$0xf] %v1403
        %1512 = vst [vmem:[#allocation3 + $0x3f4] sm:$0xf] %v1417
        %1513 = vst [vmem:[#allocation3 + $0x418] sm:$0xf] %v1427
        %1514 = vst [vmem:[#allocation3 + $0x43c] sm:$0xf] %v1441
        %1515 = vst [vmem:[#allocation3 + $0x460] sm:$0xf] %v1451
        %v1516 = vld [vmem:[#allocation2] sm:$0xe]
        %v1517 = vld [vmem:[#allocation2 + $0x4] sm:$0xf]
        %v1518 = vld [vmem:[#allocation2 + $0x8] sm:$0x1]
        %v1519 = vld [vmem:[#allocation2 + $0xc] sm:$0xe]
        %v1520 = vld [vmem:[#allocation2 + $0x10] sm:$0xf]
        %v1521 = vld [vmem:[#allocation2 + $0x14] sm:$0x1]
        %v1522 = vld [vmem:[#allocation2 + $0x18] sm:$0xe]
        %v1523 = vld [vmem:[#allocation2 + $0x1c] sm:$0xf]
        %v1524 = vld [vmem:[#allocation2 + $0x20] sm:$0x1]
        %v1525 = vld [vmem:[#allocation2 + $0x24] sm:$0xe]
        %v1526 = vld [vmem:[#allocation2 + $0x28] sm:$0xf]
        %v1527 = vld [vmem:[#allocation2 + $0x2c] sm:$0x1]
        %v1528 = vld [vmem:[#allocation2 + $0x30] sm:$0xe]
        %v1529 = vld [vmem:[#allocation2 + $0x34] sm:$0xf]
        %v1530 = vld [vmem:[#allocation2 + $0x38] sm:$0x1]
        %v1531 = vld [vmem:[#allocation2 + $0x3c] sm:$0xe]
        %v1532 = vld [vmem:[#allocation2 + $0x40] sm:$0xf]
        %v1533 = vld [vmem:[#allocation2 + $0x44] sm:$0x1]
        %v1534 = vld [vmem:[#allocation2 + $0x48] sm:$0xe]
        %v1535 = vld [vmem:[#allocation2 + $0x4c] sm:$0xf]
        %v1536 = vld [vmem:[#allocation2 + $0x50] sm:$0x1]
        %v1537 = vld [vmem:[#allocation2 + $0x54] sm:$0xe]
        %v1538 = vld [vmem:[#allocation2 + $0x58] sm:$0xf]
        %v1539 = vld [vmem:[#allocation2 + $0x5c] sm:$0x1]
        %v1540 = vld [vmem:[#allocation2 + $0x60] sm:$0xe]
        %v1541 = vld [vmem:[#allocation2 + $0x64] sm:$0xf]
        %v1542 = vld [vmem:[#allocation2 + $0x68] sm:$0x1]
        %v1543 = vld [vmem:[#allocation2 + $0x6c] sm:$0xe]
        %v1544 = vld [vmem:[#allocation2 + $0x70] sm:$0xf]
        %v1545 = vld [vmem:[#allocation2 + $0x74] sm:$0x1]
        %v1546 = vld [vmem:[#allocation2 + $0x78] sm:$0xe]
        %v1547 = vld [vmem:[#allocation2 + $0x7c] sm:$0xf]
        %v1548 = vld [vmem:[#allocation2 + $0x80] sm:$0x1]
        %v1549 = vld [vmem:[#allocation2 + $0x84] sm:$0xe]
        %v1550 = vld [vmem:[#allocation2 + $0x88] sm:$0xf]
        %v1551 = vld [vmem:[#allocation2 + $0x8c] sm:$0x1]
        %v1552 = vld [vmem:[#allocation2 + $0x90] sm:$0xe]
        %v1553 = vld [vmem:[#allocation2 + $0x94] sm:$0xf]
        %v1554 = vld [vmem:[#allocation2 + $0x98] sm:$0x1]
        %v1555 = vld [vmem:[#allocation2 + $0x9c] sm:$0xe]
        %v1556 = vld [vmem:[#allocation2 + $0xa0] sm:$0xf]
        %v1557 = vld [vmem:[#allocation2 + $0xa4] sm:$0x1]
        %v1558 = vld [vmem:[#allocation2 + $0xa8] sm:$0xe]
        %v1559 = vld [vmem:[#allocation2 + $0xac] sm:$0xf]
        %v1560 = vld [vmem:[#allocation2 + $0xb0] sm:$0x1]
        %v1561 = vld [vmem:[#allocation2 + $0xb4] sm:$0xe]
        %v1562 = vld [vmem:[#allocation2 + $0xb8] sm:$0xf]
        %v1563 = vld [vmem:[#allocation2 + $0xbc] sm:$0x1]
        %vm1612 = vcmask 1042432
        %vm1613 = vcmask 1046532
        %vm1614 = vmor %vm1612, %vm1613
        %v1615 = vrot.slane %v1516, 5
        %v1616 = vrot.slane %v1615, 4
        %v1617 = vrot.slane %v1517, 5
        %v1618 = vsel %vm1614, %v1616, %v1617
        %v1619 = vrot.slane %v1617, 4
        %v1620 = vrot.slane %v1518, 5
        %v1621 = vsel %vm1614, %v1619, %v1620
        %v1622 = vrot.slane %v1519, 5
        %v1623 = vrot.slane %v1622, 4
        %v1624 = vrot.slane %v1520, 5
        %v1625 = vsel %vm1614, %v1623, %v1624
        %v1626 = vrot.slane %v1624, 4
        %v1627 = vrot.slane %v1521, 5
        %v1628 = vsel %vm1614, %v1626, %v1627
        %v1629 = vrot.slane %v1522, 5
        %v1630 = vrot.slane %v1629, 4
        %v1631 = vrot.slane %v1523, 5
        %v1632 = vsel %vm1614, %v1630, %v1631
        %v1633 = vrot.slane %v1631, 4
        %v1634 = vrot.slane %v1524, 5
        %v1635 = vsel %vm1614, %v1633, %v1634
        %v1636 = vrot.slane %v1525, 5
        %v1637 = vrot.slane %v1636, 4
        %v1638 = vrot.slane %v1526, 5
        %v1639 = vsel %vm1614, %v1637, %v1638
        %v1640 = vrot.slane %v1638, 4
        %v1641 = vrot.slane %v1527, 5
        %v1642 = vsel %vm1614, %v1640, %v1641
        %v1643 = vrot.slane %v1528, 5
        %v1644 = vrot.slane %v1643, 4
        %v1645 = vrot.slane %v1529, 5
        %v1646 = vsel %vm1614, %v1644, %v1645
        %v1647 = vrot.slane %v1645, 4
        %v1648 = vrot.slane %v1530, 5
        %v1649 = vsel %vm1614, %v1647, %v1648
        %v1650 = vrot.slane %v1531, 5
        %v1651 = vrot.slane %v1650, 4
        %v1652 = vrot.slane %v1532, 5
        %v1653 = vsel %vm1614, %v1651, %v1652
        %v1654 = vrot.slane %v1652, 4
        %v1655 = vrot.slane %v1533, 5
        %v1656 = vsel %vm1614, %v1654, %v1655
        %v1657 = vrot.slane %v1534, 5
        %v1658 = vrot.slane %v1657, 4
        %v1659 = vrot.slane %v1535, 5
        %v1660 = vsel %vm1614, %v1658, %v1659
        %v1661 = vrot.slane %v1659, 4
        %v1662 = vrot.slane %v1536, 5
        %v1663 = vsel %vm1614, %v1661, %v1662
        %v1664 = vrot.slane %v1537, 5
        %v1665 = vrot.slane %v1664, 4
        %v1666 = vrot.slane %v1538, 5
        %v1667 = vsel %vm1614, %v1665, %v1666
        %v1668 = vrot.slane %v1666, 4
        %v1669 = vrot.slane %v1539, 5
        %v1670 = vsel %vm1614, %v1668, %v1669
        %v1671 = vrot.slane %v1540, 5
        %v1672 = vrot.slane %v1671, 4
        %v1673 = vrot.slane %v1541, 5
        %v1674 = vsel %vm1614, %v1672, %v1673
        %v1675 = vrot.slane %v1673, 4
        %v1676 = vrot.slane %v1542, 5
        %v1677 = vsel %vm1614, %v1675, %v1676
        %v1678 = vrot.slane %v1543, 5
        %v1679 = vrot.slane %v1678, 4
        %v1680 = vrot.slane %v1544, 5
        %v1681 = vsel %vm1614, %v1679, %v1680
        %v1682 = vrot.slane %v1680, 4
        %v1683 = vrot.slane %v1545, 5
        %v1684 = vsel %vm1614, %v1682, %v1683
        %v1685 = vrot.slane %v1546, 5
        %v1686 = vrot.slane %v1685, 4
        %v1687 = vrot.slane %v1547, 5
        %v1688 = vsel %vm1614, %v1686, %v1687
        %v1689 = vrot.slane %v1687, 4
        %v1690 = vrot.slane %v1548, 5
        %v1691 = vsel %vm1614, %v1689, %v1690
        %v1692 = vrot.slane %v1549, 5
        %v1693 = vrot.slane %v1692, 4
        %v1694 = vrot.slane %v1550, 5
        %v1695 = vsel %vm1614, %v1693, %v1694
        %v1696 = vrot.slane %v1694, 4
        %v1697 = vrot.slane %v1551, 5
        %v1698 = vsel %vm1614, %v1696, %v1697
        %v1699 = vrot.slane %v1552, 5
        %v1700 = vrot.slane %v1699, 4
        %v1701 = vrot.slane %v1553, 5
        %v1702 = vsel %vm1614, %v1700, %v1701
        %v1703 = vrot.slane %v1701, 4
        %v1704 = vrot.slane %v1554, 5
        %v1705 = vsel %vm1614, %v1703, %v1704
        %v1706 = vrot.slane %v1555, 5
        %v1707 = vrot.slane %v1706, 4
        %v1708 = vrot.slane %v1556, 5
        %v1709 = vsel %vm1614, %v1707, %v1708
        %v1710 = vrot.slane %v1708, 4
        %v1711 = vrot.slane %v1557, 5
        %v1712 = vsel %vm1614, %v1710, %v1711
        %v1713 = vrot.slane %v1558, 5
        %v1714 = vrot.slane %v1713, 4
        %v1715 = vrot.slane %v1559, 5
        %v1716 = vsel %vm1614, %v1714, %v1715
        %v1717 = vrot.slane %v1715, 4
        %v1718 = vrot.slane %v1560, 5
        %v1719 = vsel %vm1614, %v1717, %v1718
        %v1720 = vrot.slane %v1561, 5
        %v1721 = vrot.slane %v1720, 4
        %v1722 = vrot.slane %v1562, 5
        %v1723 = vsel %vm1614, %v1721, %v1722
        %v1724 = vrot.slane %v1722, 4
        %v1725 = vrot.slane %v1563, 5
        %v1726 = vsel %vm1614, %v1724, %v1725
        %1759 = vst [vmem:[#allocation3 + $0x8] sm:$0xf] %v1618
        %1760 = vst [vmem:[#allocation3 + $0x2c] sm:$0xf] %v1621
        %1761 = vst [vmem:[#allocation3 + $0x50] sm:$0xf] %v1625
        %1762 = vst [vmem:[#allocation3 + $0x74] sm:$0xf] %v1628
        %1763 = vst [vmem:[#allocation3 + $0x98] sm:$0xf] %v1632
        %1764 = vst [vmem:[#allocation3 + $0xbc] sm:$0xf] %v1635
        %1765 = vst [vmem:[#allocation3 + $0xe0] sm:$0xf] %v1639
        %1766 = vst [vmem:[#allocation3 + $0x104] sm:$0xf] %v1642
        %1767 = vst [vmem:[#allocation3 + $0x128] sm:$0xf] %v1646
        %1768 = vst [vmem:[#allocation3 + $0x14c] sm:$0xf] %v1649
        %1769 = vst [vmem:[#allocation3 + $0x170] sm:$0xf] %v1653
        %1770 = vst [vmem:[#allocation3 + $0x194] sm:$0xf] %v1656
        %1771 = vst [vmem:[#allocation3 + $0x1b8] sm:$0xf] %v1660
        %1772 = vst [vmem:[#allocation3 + $0x1dc] sm:$0xf] %v1663
        %1773 = vst [vmem:[#allocation3 + $0x200] sm:$0xf] %v1667
        %1774 = vst [vmem:[#allocation3 + $0x224] sm:$0xf] %v1670
        %1775 = vst [vmem:[#allocation3 + $0x248] sm:$0xf] %v1674
        %1776 = vst [vmem:[#allocation3 + $0x26c] sm:$0xf] %v1677
        %1777 = vst [vmem:[#allocation3 + $0x290] sm:$0xf] %v1681
        %1778 = vst [vmem:[#allocation3 + $0x2b4] sm:$0xf] %v1684
        %1779 = vst [vmem:[#allocation3 + $0x2d8] sm:$0xf] %v1688
        %1780 = vst [vmem:[#allocation3 + $0x2fc] sm:$0xf] %v1691
        %1781 = vst [vmem:[#allocation3 + $0x320] sm:$0xf] %v1695
        %1782 = vst [vmem:[#allocation3 + $0x344] sm:$0xf] %v1698
        %1783 = vst [vmem:[#allocation3 + $0x368] sm:$0xf] %v1702
        %1784 = vst [vmem:[#allocation3 + $0x38c] sm:$0xf] %v1705
        %1785 = vst [vmem:[#allocation3 + $0x3b0] sm:$0xf] %v1709
        %1786 = vst [vmem:[#allocation3 + $0x3d4] sm:$0xf] %v1712
        %1787 = vst [vmem:[#allocation3 + $0x3f8] sm:$0xf] %v1716
        %1788 = vst [vmem:[#allocation3 + $0x41c] sm:$0xf] %v1719
        %1789 = vst [vmem:[#allocation3 + $0x440] sm:$0xf] %v1723
        %1790 = vst [vmem:[#allocation3 + $0x464] sm:$0xf] %v1726
        %v1791 = vld [vmem:[%s838] sm:$0xf]
        %v1792 = vld [vmem:[%s838 + $0x4] sm:$0xf]
        %v1793 = vld [vmem:[%s838 + $0xc] sm:$0xf]
        %v1794 = vld [vmem:[%s838 + $0x10] sm:$0xf]
        %v1795 = vld [vmem:[%s838 + $0x18] sm:$0xf]
        %v1796 = vld [vmem:[%s838 + $0x1c] sm:$0xf]
        %v1797 = vld [vmem:[%s838 + $0x24] sm:$0xf]
        %v1798 = vld [vmem:[%s838 + $0x28] sm:$0xf]
        %v1799 = vld [vmem:[%s838 + $0x30] sm:$0xf]
        %v1800 = vld [vmem:[%s838 + $0x34] sm:$0xf]
        %v1801 = vld [vmem:[%s838 + $0x3c] sm:$0xf]
        %v1802 = vld [vmem:[%s838 + $0x40] sm:$0xf]
        %v1803 = vld [vmem:[%s838 + $0x48] sm:$0xf]
        %v1804 = vld [vmem:[%s838 + $0x4c] sm:$0xf]
        %v1805 = vld [vmem:[%s838 + $0x54] sm:$0xf]
        %v1806 = vld [vmem:[%s838 + $0x58] sm:$0xf]
        %v1807 = vld [vmem:[%s838 + $0x60] sm:$0xf]
        %v1808 = vld [vmem:[%s838 + $0x64] sm:$0xf]
        %v1809 = vld [vmem:[%s838 + $0x6c] sm:$0xf]
        %v1810 = vld [vmem:[%s838 + $0x70] sm:$0xf]
        %v1811 = vld [vmem:[%s838 + $0x78] sm:$0xf]
        %v1812 = vld [vmem:[%s838 + $0x7c] sm:$0xf]
        %v1813 = vld [vmem:[%s838 + $0x84] sm:$0xf]
        %v1814 = vld [vmem:[%s838 + $0x88] sm:$0xf]
        %v1815 = vld [vmem:[%s838 + $0x90] sm:$0xf]
        %v1816 = vld [vmem:[%s838 + $0x94] sm:$0xf]
        %v1817 = vld [vmem:[%s838 + $0x9c] sm:$0xf]
        %v1818 = vld [vmem:[%s838 + $0xa0] sm:$0xf]
        %v1819 = vld [vmem:[%s838 + $0xa8] sm:$0xf]
        %v1820 = vld [vmem:[%s838 + $0xac] sm:$0xf]
        %v1821 = vld [vmem:[%s838 + $0xb4] sm:$0xf]
        %v1822 = vld [vmem:[%s838 + $0xb8] sm:$0xf]
        %1823 = vst [vmem:[#allocation3 + $0xc] sm:$0xf] %v1791
        %1824 = vst [vmem:[#allocation3 + $0x30] sm:$0xf] %v1792
        %1825 = vst [vmem:[#allocation3 + $0x54] sm:$0xf] %v1793
        %1826 = vst [vmem:[#allocation3 + $0x78] sm:$0xf] %v1794
        %1827 = vst [vmem:[#allocation3 + $0x9c] sm:$0xf] %v1795
        %1828 = vst [vmem:[#allocation3 + $0xc0] sm:$0xf] %v1796
        %1829 = vst [vmem:[#allocation3 + $0xe4] sm:$0xf] %v1797
        %1830 = vst [vmem:[#allocation3 + $0x108] sm:$0xf] %v1798
        %1831 = vst [vmem:[#allocation3 + $0x12c] sm:$0xf] %v1799
        %1832 = vst [vmem:[#allocation3 + $0x150] sm:$0xf] %v1800
        %1833 = vst [vmem:[#allocation3 + $0x174] sm:$0xf] %v1801
        %1834 = vst [vmem:[#allocation3 + $0x198] sm:$0xf] %v1802
        %1835 = vst [vmem:[#allocation3 + $0x1bc] sm:$0xf] %v1803
        %1836 = vst [vmem:[#allocation3 + $0x1e0] sm:$0xf] %v1804
        %1837 = vst [vmem:[#allocation3 + $0x204] sm:$0xf] %v1805
        %1838 = vst [vmem:[#allocation3 + $0x228] sm:$0xf] %v1806
        %1839 = vst [vmem:[#allocation3 + $0x24c] sm:$0xf] %v1807
        %1840 = vst [vmem:[#allocation3 + $0x270] sm:$0xf] %v1808
        %1841 = vst [vmem:[#allocation3 + $0x294] sm:$0xf] %v1809
        %1842 = vst [vmem:[#allocation3 + $0x2b8] sm:$0xf] %v1810
        %1843 = vst [vmem:[#allocation3 + $0x2dc] sm:$0xf] %v1811
        %1844 = vst [vmem:[#allocation3 + $0x300] sm:$0xf] %v1812
        %1845 = vst [vmem:[#allocation3 + $0x324] sm:$0xf] %v1813
        %1846 = vst [vmem:[#allocation3 + $0x348] sm:$0xf] %v1814
        %1847 = vst [vmem:[#allocation3 + $0x36c] sm:$0xf] %v1815
        %1848 = vst [vmem:[#allocation3 + $0x390] sm:$0xf] %v1816
        %1849 = vst [vmem:[#allocation3 + $0x3b4] sm:$0xf] %v1817
        %1850 = vst [vmem:[#allocation3 + $0x3d8] sm:$0xf] %v1818
        %1851 = vst [vmem:[#allocation3 + $0x3fc] sm:$0xf] %v1819
        %1852 = vst [vmem:[#allocation3 + $0x420] sm:$0xf] %v1820
        %1853 = vst [vmem:[#allocation3 + $0x444] sm:$0xf] %v1821
        %1854 = vst [vmem:[#allocation3 + $0x468] sm:$0xf] %v1822
        %v1855 = vld [vmem:[%s838] sm:$0xf]
        %v1856 = vld [vmem:[%s838 + $0x4] sm:$0xf]
        %v1857 = vld [vmem:[%s838 + $0x8] sm:$0x1]
        %v1858 = vld [vmem:[%s838 + $0xc] sm:$0xf]
        %v1859 = vld [vmem:[%s838 + $0x10] sm:$0xf]
        %v1860 = vld [vmem:[%s838 + $0x14] sm:$0x1]
        %v1861 = vld [vmem:[%s838 + $0x18] sm:$0xf]
        %v1862 = vld [vmem:[%s838 + $0x1c] sm:$0xf]
        %v1863 = vld [vmem:[%s838 + $0x20] sm:$0x1]
        %v1864 = vld [vmem:[%s838 + $0x24] sm:$0xf]
        %v1865 = vld [vmem:[%s838 + $0x28] sm:$0xf]
        %v1866 = vld [vmem:[%s838 + $0x2c] sm:$0x1]
        %v1867 = vld [vmem:[%s838 + $0x30] sm:$0xf]
        %v1868 = vld [vmem:[%s838 + $0x34] sm:$0xf]
        %v1869 = vld [vmem:[%s838 + $0x38] sm:$0x1]
        %v1870 = vld [vmem:[%s838 + $0x3c] sm:$0xf]
        %v1871 = vld [vmem:[%s838 + $0x40] sm:$0xf]
        %v1872 = vld [vmem:[%s838 + $0x44] sm:$0x1]
        %v1873 = vld [vmem:[%s838 + $0x48] sm:$0xf]
        %v1874 = vld [vmem:[%s838 + $0x4c] sm:$0xf]
        %v1875 = vld [vmem:[%s838 + $0x50] sm:$0x1]
        %v1876 = vld [vmem:[%s838 + $0x54] sm:$0xf]
        %v1877 = vld [vmem:[%s838 + $0x58] sm:$0xf]
        %v1878 = vld [vmem:[%s838 + $0x5c] sm:$0x1]
        %v1879 = vld [vmem:[%s838 + $0x60] sm:$0xf]
        %v1880 = vld [vmem:[%s838 + $0x64] sm:$0xf]
        %v1881 = vld [vmem:[%s838 + $0x68] sm:$0x1]
        %v1882 = vld [vmem:[%s838 + $0x6c] sm:$0xf]
        %v1883 = vld [vmem:[%s838 + $0x70] sm:$0xf]
        %v1884 = vld [vmem:[%s838 + $0x74] sm:$0x1]
        %v1885 = vld [vmem:[%s838 + $0x78] sm:$0xf]
        %v1886 = vld [vmem:[%s838 + $0x7c] sm:$0xf]
        %v1887 = vld [vmem:[%s838 + $0x80] sm:$0x1]
        %v1888 = vld [vmem:[%s838 + $0x84] sm:$0xf]
        %v1889 = vld [vmem:[%s838 + $0x88] sm:$0xf]
        %v1890 = vld [vmem:[%s838 + $0x8c] sm:$0x1]
        %v1891 = vld [vmem:[%s838 + $0x90] sm:$0xf]
        %v1892 = vld [vmem:[%s838 + $0x94] sm:$0xf]
        %v1893 = vld [vmem:[%s838 + $0x98] sm:$0x1]
        %v1894 = vld [vmem:[%s838 + $0x9c] sm:$0xf]
        %v1895 = vld [vmem:[%s838 + $0xa0] sm:$0xf]
        %v1896 = vld [vmem:[%s838 + $0xa4] sm:$0x1]
        %v1897 = vld [vmem:[%s838 + $0xa8] sm:$0xf]
        %v1898 = vld [vmem:[%s838 + $0xac] sm:$0xf]
        %v1899 = vld [vmem:[%s838 + $0xb0] sm:$0x1]
        %v1900 = vld [vmem:[%s838 + $0xb4] sm:$0xf]
        %v1901 = vld [vmem:[%s838 + $0xb8] sm:$0xf]
        %v1902 = vld [vmem:[%s838 + $0xbc] sm:$0x1]
        %v1904 = vshrl.u32 %v1855, 16
        %v1906 = vrot.slane %v1904, 4
        %v1907 = vshll.u32 %v1855, 16
        %v1909 = vrot.slane %v1907, 5
        %v1910 = vor.u32 %v1906, %v1909
        %v1911 = vrot.slane %v1910, 4
        %v1913 = vshll.u32 %v1856, 16
        %v1915 = vrot.slane %v1913, 5
        %v1916 = vsel %vm1067, %v1911, %v1915
        %v1917 = vshrl.u32 %v1856, 16
        %v1919 = vrot.slane %v1917, 4
        %v1920 = vor.u32 %v1919, %v1915
        %v1921 = vrot.slane %v1920, 4
        %v1923 = vshll.u32 %v1857, 16
        %v1925 = vrot.slane %v1923, 5
        %v1926 = vsel %vm1067, %v1921, %v1925
        %v1928 = vshrl.u32 %v1858, 16
        %v1930 = vrot.slane %v1928, 4
        %v1931 = vshll.u32 %v1858, 16
        %v1933 = vrot.slane %v1931, 5
        %v1934 = vor.u32 %v1930, %v1933
        %v1935 = vrot.slane %v1934, 4
        %v1937 = vshll.u32 %v1859, 16
        %v1939 = vrot.slane %v1937, 5
        %v1940 = vsel %vm1067, %v1935, %v1939
        %v1941 = vshrl.u32 %v1859, 16
        %v1943 = vrot.slane %v1941, 4
        %v1944 = vor.u32 %v1943, %v1939
        %v1945 = vrot.slane %v1944, 4
        %v1947 = vshll.u32 %v1860, 16
        %v1949 = vrot.slane %v1947, 5
        %v1950 = vsel %vm1067, %v1945, %v1949
        %v1952 = vshrl.u32 %v1861, 16
        %v1954 = vrot.slane %v1952, 4
        %v1955 = vshll.u32 %v1861, 16
        %v1957 = vrot.slane %v1955, 5
        %v1958 = vor.u32 %v1954, %v1957
        %v1959 = vrot.slane %v1958, 4
        %v1961 = vshll.u32 %v1862, 16
        %v1963 = vrot.slane %v1961, 5
        %v1964 = vsel %vm1067, %v1959, %v1963
        %v1965 = vshrl.u32 %v1862, 16
        %v1967 = vrot.slane %v1965, 4
        %v1968 = vor.u32 %v1967, %v1963
        %v1969 = vrot.slane %v1968, 4
        %v1971 = vshll.u32 %v1863, 16
        %v1973 = vrot.slane %v1971, 5
        %v1974 = vsel %vm1067, %v1969, %v1973
        %v1976 = vshrl.u32 %v1864, 16
        %v1978 = vrot.slane %v1976, 4
        %v1979 = vshll.u32 %v1864, 16
        %v1981 = vrot.slane %v1979, 5
        %v1982 = vor.u32 %v1978, %v1981
        %v1983 = vrot.slane %v1982, 4
        %v1985 = vshll.u32 %v1865, 16
        %v1987 = vrot.slane %v1985, 5
        %v1988 = vsel %vm1067, %v1983, %v1987
        %v1989 = vshrl.u32 %v1865, 16
        %v1991 = vrot.slane %v1989, 4
        %v1992 = vor.u32 %v1991, %v1987
        %v1993 = vrot.slane %v1992, 4
        %v1995 = vshll.u32 %v1866, 16
        %v1997 = vrot.slane %v1995, 5
        %v1998 = vsel %vm1067, %v1993, %v1997
        %v2000 = vshrl.u32 %v1867, 16
        %v2002 = vrot.slane %v2000, 4
        %v2003 = vshll.u32 %v1867, 16
        %v2005 = vrot.slane %v2003, 5
        %v2006 = vor.u32 %v2002, %v2005
        %v2007 = vrot.slane %v2006, 4
        %v2009 = vshll.u32 %v1868, 16
        %v2011 = vrot.slane %v2009, 5
        %v2012 = vsel %vm1067, %v2007, %v2011
        %v2013 = vshrl.u32 %v1868, 16
        %v2015 = vrot.slane %v2013, 4
        %v2016 = vor.u32 %v2015, %v2011
        %v2017 = vrot.slane %v2016, 4
        %v2019 = vshll.u32 %v1869, 16
        %v2021 = vrot.slane %v2019, 5
        %v2022 = vsel %vm1067, %v2017, %v2021
        %v2024 = vshrl.u32 %v1870, 16
        %v2026 = vrot.slane %v2024, 4
        %v2027 = vshll.u32 %v1870, 16
        %v2029 = vrot.slane %v2027, 5
        %v2030 = vor.u32 %v2026, %v2029
        %v2031 = vrot.slane %v2030, 4
        %v2033 = vshll.u32 %v1871, 16
        %v2035 = vrot.slane %v2033, 5
        %v2036 = vsel %vm1067, %v2031, %v2035
        %v2037 = vshrl.u32 %v1871, 16
        %v2039 = vrot.slane %v2037, 4
        %v2040 = vor.u32 %v2039, %v2035
        %v2041 = vrot.slane %v2040, 4
        %v2043 = vshll.u32 %v1872, 16
        %v2045 = vrot.slane %v2043, 5
        %v2046 = vsel %vm1067, %v2041, %v2045
        %v2048 = vshrl.u32 %v1873, 16
        %v2050 = vrot.slane %v2048, 4
        %v2051 = vshll.u32 %v1873, 16
        %v2053 = vrot.slane %v2051, 5
        %v2054 = vor.u32 %v2050, %v2053
        %v2055 = vrot.slane %v2054, 4
        %v2057 = vshll.u32 %v1874, 16
        %v2059 = vrot.slane %v2057, 5
        %v2060 = vsel %vm1067, %v2055, %v2059
        %v2061 = vshrl.u32 %v1874, 16
        %v2063 = vrot.slane %v2061, 4
        %v2064 = vor.u32 %v2063, %v2059
        %v2065 = vrot.slane %v2064, 4
        %v2067 = vshll.u32 %v1875, 16
        %v2069 = vrot.slane %v2067, 5
        %v2070 = vsel %vm1067, %v2065, %v2069
        %v2072 = vshrl.u32 %v1876, 16
        %v2074 = vrot.slane %v2072, 4
        %v2075 = vshll.u32 %v1876, 16
        %v2077 = vrot.slane %v2075, 5
        %v2078 = vor.u32 %v2074, %v2077
        %v2079 = vrot.slane %v2078, 4
        %v2081 = vshll.u32 %v1877, 16
        %v2083 = vrot.slane %v2081, 5
        %v2084 = vsel %vm1067, %v2079, %v2083
        %v2085 = vshrl.u32 %v1877, 16
        %v2087 = vrot.slane %v2085, 4
        %v2088 = vor.u32 %v2087, %v2083
        %v2089 = vrot.slane %v2088, 4
        %v2091 = vshll.u32 %v1878, 16
        %v2093 = vrot.slane %v2091, 5
        %v2094 = vsel %vm1067, %v2089, %v2093
        %v2096 = vshrl.u32 %v1879, 16
        %v2098 = vrot.slane %v2096, 4
        %v2099 = vshll.u32 %v1879, 16
        %v2101 = vrot.slane %v2099, 5
        %v2102 = vor.u32 %v2098, %v2101
        %v2103 = vrot.slane %v2102, 4
        %v2105 = vshll.u32 %v1880, 16
        %v2107 = vrot.slane %v2105, 5
        %v2108 = vsel %vm1067, %v2103, %v2107
        %v2109 = vshrl.u32 %v1880, 16
        %v2111 = vrot.slane %v2109, 4
        %v2112 = vor.u32 %v2111, %v2107
        %v2113 = vrot.slane %v2112, 4
        %v2115 = vshll.u32 %v1881, 16
        %v2117 = vrot.slane %v2115, 5
        %v2118 = vsel %vm1067, %v2113, %v2117
        %v2120 = vshrl.u32 %v1882, 16
        %v2122 = vrot.slane %v2120, 4
        %v2123 = vshll.u32 %v1882, 16
        %v2125 = vrot.slane %v2123, 5
        %v2126 = vor.u32 %v2122, %v2125
        %v2127 = vrot.slane %v2126, 4
        %v2129 = vshll.u32 %v1883, 16
        %v2131 = vrot.slane %v2129, 5
        %v2132 = vsel %vm1067, %v2127, %v2131
        %v2133 = vshrl.u32 %v1883, 16
        %v2135 = vrot.slane %v2133, 4
        %v2136 = vor.u32 %v2135, %v2131
        %v2137 = vrot.slane %v2136, 4
        %v2139 = vshll.u32 %v1884, 16
        %v2141 = vrot.slane %v2139, 5
        %v2142 = vsel %vm1067, %v2137, %v2141
        %v2144 = vshrl.u32 %v1885, 16
        %v2146 = vrot.slane %v2144, 4
        %v2147 = vshll.u32 %v1885, 16
        %v2149 = vrot.slane %v2147, 5
        %v2150 = vor.u32 %v2146, %v2149
        %v2151 = vrot.slane %v2150, 4
        %v2153 = vshll.u32 %v1886, 16
        %v2155 = vrot.slane %v2153, 5
        %v2156 = vsel %vm1067, %v2151, %v2155
        %v2157 = vshrl.u32 %v1886, 16
        %v2159 = vrot.slane %v2157, 4
        %v2160 = vor.u32 %v2159, %v2155
        %v2161 = vrot.slane %v2160, 4
        %v2163 = vshll.u32 %v1887, 16
        %v2165 = vrot.slane %v2163, 5
        %v2166 = vsel %vm1067, %v2161, %v2165
        %v2168 = vshrl.u32 %v1888, 16
        %v2170 = vrot.slane %v2168, 4
        %v2171 = vshll.u32 %v1888, 16
        %v2173 = vrot.slane %v2171, 5
        %v2174 = vor.u32 %v2170, %v2173
        %v2175 = vrot.slane %v2174, 4
        %v2177 = vshll.u32 %v1889, 16
        %v2179 = vrot.slane %v2177, 5
        %v2180 = vsel %vm1067, %v2175, %v2179
        %v2181 = vshrl.u32 %v1889, 16
        %v2183 = vrot.slane %v2181, 4
        %v2184 = vor.u32 %v2183, %v2179
        %v2185 = vrot.slane %v2184, 4
        %v2187 = vshll.u32 %v1890, 16
        %v2189 = vrot.slane %v2187, 5
        %v2190 = vsel %vm1067, %v2185, %v2189
        %v2192 = vshrl.u32 %v1891, 16
        %v2194 = vrot.slane %v2192, 4
        %v2195 = vshll.u32 %v1891, 16
        %v2197 = vrot.slane %v2195, 5
        %v2198 = vor.u32 %v2194, %v2197
        %v2199 = vrot.slane %v2198, 4
        %v2201 = vshll.u32 %v1892, 16
        %v2203 = vrot.slane %v2201, 5
        %v2204 = vsel %vm1067, %v2199, %v2203
        %v2205 = vshrl.u32 %v1892, 16
        %v2207 = vrot.slane %v2205, 4
        %v2208 = vor.u32 %v2207, %v2203
        %v2209 = vrot.slane %v2208, 4
        %v2211 = vshll.u32 %v1893, 16
        %v2213 = vrot.slane %v2211, 5
        %v2214 = vsel %vm1067, %v2209, %v2213
        %v2216 = vshrl.u32 %v1894, 16
        %v2218 = vrot.slane %v2216, 4
        %v2219 = vshll.u32 %v1894, 16
        %v2221 = vrot.slane %v2219, 5
        %v2222 = vor.u32 %v2218, %v2221
        %v2223 = vrot.slane %v2222, 4
        %v2225 = vshll.u32 %v1895, 16
        %v2227 = vrot.slane %v2225, 5
        %v2228 = vsel %vm1067, %v2223, %v2227
        %v2229 = vshrl.u32 %v1895, 16
        %v2231 = vrot.slane %v2229, 4
        %v2232 = vor.u32 %v2231, %v2227
        %v2233 = vrot.slane %v2232, 4
        %v2235 = vshll.u32 %v1896, 16
        %v2237 = vrot.slane %v2235, 5
        %v2238 = vsel %vm1067, %v2233, %v2237
        %v2240 = vshrl.u32 %v1897, 16
        %v2242 = vrot.slane %v2240, 4
        %v2243 = vshll.u32 %v1897, 16
        %v2245 = vrot.slane %v2243, 5
        %v2246 = vor.u32 %v2242, %v2245
        %v2247 = vrot.slane %v2246, 4
        %v2249 = vshll.u32 %v1898, 16
        %v2251 = vrot.slane %v2249, 5
        %v2252 = vsel %vm1067, %v2247, %v2251
        %v2253 = vshrl.u32 %v1898, 16
        %v2255 = vrot.slane %v2253, 4
        %v2256 = vor.u32 %v2255, %v2251
        %v2257 = vrot.slane %v2256, 4
        %v2259 = vshll.u32 %v1899, 16
        %v2261 = vrot.slane %v2259, 5
        %v2262 = vsel %vm1067, %v2257, %v2261
        %v2264 = vshrl.u32 %v1900, 16
        %v2266 = vrot.slane %v2264, 4
        %v2267 = vshll.u32 %v1900, 16
        %v2269 = vrot.slane %v2267, 5
        %v2270 = vor.u32 %v2266, %v2269
        %v2271 = vrot.slane %v2270, 4
        %v2273 = vshll.u32 %v1901, 16
        %v2275 = vrot.slane %v2273, 5
        %v2276 = vsel %vm1067, %v2271, %v2275
        %v2277 = vshrl.u32 %v1901, 16
        %v2279 = vrot.slane %v2277, 4
        %v2280 = vor.u32 %v2279, %v2275
        %v2281 = vrot.slane %v2280, 4
        %v2283 = vshll.u32 %v1902, 16
        %v2285 = vrot.slane %v2283, 5
        %v2286 = vsel %vm1067, %v2281, %v2285
        %2319 = vst [vmem:[#allocation3 + $0x10] sm:$0xf] %v1916
        %2320 = vst [vmem:[#allocation3 + $0x34] sm:$0xf] %v1926
        %2321 = vst [vmem:[#allocation3 + $0x58] sm:$0xf] %v1940
        %2322 = vst [vmem:[#allocation3 + $0x7c] sm:$0xf] %v1950
        %2323 = vst [vmem:[#allocation3 + $0xa0] sm:$0xf] %v1964
        %2324 = vst [vmem:[#allocation3 + $0xc4] sm:$0xf] %v1974
        %2325 = vst [vmem:[#allocation3 + $0xe8] sm:$0xf] %v1988
        %2326 = vst [vmem:[#allocation3 + $0x10c] sm:$0xf] %v1998
        %2327 = vst [vmem:[#allocation3 + $0x130] sm:$0xf] %v2012
        %2328 = vst [vmem:[#allocation3 + $0x154] sm:$0xf] %v2022
        %2329 = vst [vmem:[#allocation3 + $0x178] sm:$0xf] %v2036
        %2330 = vst [vmem:[#allocation3 + $0x19c] sm:$0xf] %v2046
        %2331 = vst [vmem:[#allocation3 + $0x1c0] sm:$0xf] %v2060
        %2332 = vst [vmem:[#allocation3 + $0x1e4] sm:$0xf] %v2070
        %2333 = vst [vmem:[#allocation3 + $0x208] sm:$0xf] %v2084
        %2334 = vst [vmem:[#allocation3 + $0x22c] sm:$0xf] %v2094
        %2335 = vst [vmem:[#allocation3 + $0x250] sm:$0xf] %v2108
        %2336 = vst [vmem:[#allocation3 + $0x274] sm:$0xf] %v2118
        %2337 = vst [vmem:[#allocation3 + $0x298] sm:$0xf] %v2132
        %2338 = vst [vmem:[#allocation3 + $0x2bc] sm:$0xf] %v2142
        %2339 = vst [vmem:[#allocation3 + $0x2e0] sm:$0xf] %v2156
        %2340 = vst [vmem:[#allocation3 + $0x304] sm:$0xf] %v2166
        %2341 = vst [vmem:[#allocation3 + $0x328] sm:$0xf] %v2180
        %2342 = vst [vmem:[#allocation3 + $0x34c] sm:$0xf] %v2190
        %2343 = vst [vmem:[#allocation3 + $0x370] sm:$0xf] %v2204
        %2344 = vst [vmem:[#allocation3 + $0x394] sm:$0xf] %v2214
        %2345 = vst [vmem:[#allocation3 + $0x3b8] sm:$0xf] %v2228
        %2346 = vst [vmem:[#allocation3 + $0x3dc] sm:$0xf] %v2238
        %2347 = vst [vmem:[#allocation3 + $0x400] sm:$0xf] %v2252
        %2348 = vst [vmem:[#allocation3 + $0x424] sm:$0xf] %v2262
        %2349 = vst [vmem:[#allocation3 + $0x448] sm:$0xf] %v2276
        %2350 = vst [vmem:[#allocation3 + $0x46c] sm:$0xf] %v2286
        %v2351 = vld [vmem:[%s838] sm:$0xe]
        %v2352 = vld [vmem:[%s838 + $0x4] sm:$0xf]
        %v2353 = vld [vmem:[%s838 + $0x8] sm:$0x1]
        %v2354 = vld [vmem:[%s838 + $0xc] sm:$0xe]
        %v2355 = vld [vmem:[%s838 + $0x10] sm:$0xf]
        %v2356 = vld [vmem:[%s838 + $0x14] sm:$0x1]
        %v2357 = vld [vmem:[%s838 + $0x18] sm:$0xe]
        %v2358 = vld [vmem:[%s838 + $0x1c] sm:$0xf]
        %v2359 = vld [vmem:[%s838 + $0x20] sm:$0x1]
        %v2360 = vld [vmem:[%s838 + $0x24] sm:$0xe]
        %v2361 = vld [vmem:[%s838 + $0x28] sm:$0xf]
        %v2362 = vld [vmem:[%s838 + $0x2c] sm:$0x1]
        %v2363 = vld [vmem:[%s838 + $0x30] sm:$0xe]
        %v2364 = vld [vmem:[%s838 + $0x34] sm:$0xf]
        %v2365 = vld [vmem:[%s838 + $0x38] sm:$0x1]
        %v2366 = vld [vmem:[%s838 + $0x3c] sm:$0xe]
        %v2367 = vld [vmem:[%s838 + $0x40] sm:$0xf]
        %v2368 = vld [vmem:[%s838 + $0x44] sm:$0x1]
        %v2369 = vld [vmem:[%s838 + $0x48] sm:$0xe]
        %v2370 = vld [vmem:[%s838 + $0x4c] sm:$0xf]
        %v2371 = vld [vmem:[%s838 + $0x50] sm:$0x1]
        %v2372 = vld [vmem:[%s838 + $0x54] sm:$0xe]
        %v2373 = vld [vmem:[%s838 + $0x58] sm:$0xf]
        %v2374 = vld [vmem:[%s838 + $0x5c] sm:$0x1]
        %v2375 = vld [vmem:[%s838 + $0x60] sm:$0xe]
        %v2376 = vld [vmem:[%s838 + $0x64] sm:$0xf]
        %v2377 = vld [vmem:[%s838 + $0x68] sm:$0x1]
        %v2378 = vld [vmem:[%s838 + $0x6c] sm:$0xe]
        %v2379 = vld [vmem:[%s838 + $0x70] sm:$0xf]
        %v2380 = vld [vmem:[%s838 + $0x74] sm:$0x1]
        %v2381 = vld [vmem:[%s838 + $0x78] sm:$0xe]
        %v2382 = vld [vmem:[%s838 + $0x7c] sm:$0xf]
        %v2383 = vld [vmem:[%s838 + $0x80] sm:$0x1]
        %v2384 = vld [vmem:[%s838 + $0x84] sm:$0xe]
        %v2385 = vld [vmem:[%s838 + $0x88] sm:$0xf]
        %v2386 = vld [vmem:[%s838 + $0x8c] sm:$0x1]
        %v2387 = vld [vmem:[%s838 + $0x90] sm:$0xe]
        %v2388 = vld [vmem:[%s838 + $0x94] sm:$0xf]
        %v2389 = vld [vmem:[%s838 + $0x98] sm:$0x1]
        %v2390 = vld [vmem:[%s838 + $0x9c] sm:$0xe]
        %v2391 = vld [vmem:[%s838 + $0xa0] sm:$0xf]
        %v2392 = vld [vmem:[%s838 + $0xa4] sm:$0x1]
        %v2393 = vld [vmem:[%s838 + $0xa8] sm:$0xe]
        %v2394 = vld [vmem:[%s838 + $0xac] sm:$0xf]
        %v2395 = vld [vmem:[%s838 + $0xb0] sm:$0x1]
        %v2396 = vld [vmem:[%s838 + $0xb4] sm:$0xe]
        %v2397 = vld [vmem:[%s838 + $0xb8] sm:$0xf]
        %v2398 = vld [vmem:[%s838 + $0xbc] sm:$0x1]
        %v2447 = vrot.slane %v2351, 5
        %v2448 = vrot.slane %v2447, 4
        %v2449 = vrot.slane %v2352, 5
        %v2450 = vsel %vm1614, %v2448, %v2449
        %v2451 = vrot.slane %v2449, 4
        %v2452 = vrot.slane %v2353, 5
        %v2453 = vsel %vm1614, %v2451, %v2452
        %v2454 = vrot.slane %v2354, 5
        %v2455 = vrot.slane %v2454, 4
        %v2456 = vrot.slane %v2355, 5
        %v2457 = vsel %vm1614, %v2455, %v2456
        %v2458 = vrot.slane %v2456, 4
        %v2459 = vrot.slane %v2356, 5
        %v2460 = vsel %vm1614, %v2458, %v2459
        %v2461 = vrot.slane %v2357, 5
        %v2462 = vrot.slane %v2461, 4
        %v2463 = vrot.slane %v2358, 5
        %v2464 = vsel %vm1614, %v2462, %v2463
        %v2465 = vrot.slane %v2463, 4
        %v2466 = vrot.slane %v2359, 5
        %v2467 = vsel %vm1614, %v2465, %v2466
        %v2468 = vrot.slane %v2360, 5
        %v2469 = vrot.slane %v2468, 4
        %v2470 = vrot.slane %v2361, 5
        %v2471 = vsel %vm1614, %v2469, %v2470
        %v2472 = vrot.slane %v2470, 4
        %v2473 = vrot.slane %v2362, 5
        %v2474 = vsel %vm1614, %v2472, %v2473
        %v2475 = vrot.slane %v2363, 5
        %v2476 = vrot.slane %v2475, 4
        %v2477 = vrot.slane %v2364, 5
        %v2478 = vsel %vm1614, %v2476, %v2477
        %v2479 = vrot.slane %v2477, 4
        %v2480 = vrot.slane %v2365, 5
        %v2481 = vsel %vm1614, %v2479, %v2480
        %v2482 = vrot.slane %v2366, 5
        %v2483 = vrot.slane %v2482, 4
        %v2484 = vrot.slane %v2367, 5
        %v2485 = vsel %vm1614, %v2483, %v2484
        %v2486 = vrot.slane %v2484, 4
        %v2487 = vrot.slane %v2368, 5
        %v2488 = vsel %vm1614, %v2486, %v2487
        %v2489 = vrot.slane %v2369, 5
        %v2490 = vrot.slane %v2489, 4
        %v2491 = vrot.slane %v2370, 5
        %v2492 = vsel %vm1614, %v2490, %v2491
        %v2493 = vrot.slane %v2491, 4
        %v2494 = vrot.slane %v2371, 5
        %v2495 = vsel %vm1614, %v2493, %v2494
        %v2496 = vrot.slane %v2372, 5
        %v2497 = vrot.slane %v2496, 4
        %v2498 = vrot.slane %v2373, 5
        %v2499 = vsel %vm1614, %v2497, %v2498
        %v2500 = vrot.slane %v2498, 4
        %v2501 = vrot.slane %v2374, 5
        %v2502 = vsel %vm1614, %v2500, %v2501
        %v2503 = vrot.slane %v2375, 5
        %v2504 = vrot.slane %v2503, 4
        %v2505 = vrot.slane %v2376, 5
        %v2506 = vsel %vm1614, %v2504, %v2505
        %v2507 = vrot.slane %v2505, 4
        %v2508 = vrot.slane %v2377, 5
        %v2509 = vsel %vm1614, %v2507, %v2508
        %v2510 = vrot.slane %v2378, 5
        %v2511 = vrot.slane %v2510, 4
        %v2512 = vrot.slane %v2379, 5
        %v2513 = vsel %vm1614, %v2511, %v2512
        %v2514 = vrot.slane %v2512, 4
        %v2515 = vrot.slane %v2380, 5
        %v2516 = vsel %vm1614, %v2514, %v2515
        %v2517 = vrot.slane %v2381, 5
        %v2518 = vrot.slane %v2517, 4
        %v2519 = vrot.slane %v2382, 5
        %v2520 = vsel %vm1614, %v2518, %v2519
        %v2521 = vrot.slane %v2519, 4
        %v2522 = vrot.slane %v2383, 5
        %v2523 = vsel %vm1614, %v2521, %v2522
        %v2524 = vrot.slane %v2384, 5
        %v2525 = vrot.slane %v2524, 4
        %v2526 = vrot.slane %v2385, 5
        %v2527 = vsel %vm1614, %v2525, %v2526
        %v2528 = vrot.slane %v2526, 4
        %v2529 = vrot.slane %v2386, 5
        %v2530 = vsel %vm1614, %v2528, %v2529
        %v2531 = vrot.slane %v2387, 5
        %v2532 = vrot.slane %v2531, 4
        %v2533 = vrot.slane %v2388, 5
        %v2534 = vsel %vm1614, %v2532, %v2533
        %v2535 = vrot.slane %v2533, 4
        %v2536 = vrot.slane %v2389, 5
        %v2537 = vsel %vm1614, %v2535, %v2536
        %v2538 = vrot.slane %v2390, 5
        %v2539 = vrot.slane %v2538, 4
        %v2540 = vrot.slane %v2391, 5
        %v2541 = vsel %vm1614, %v2539, %v2540
        %v2542 = vrot.slane %v2540, 4
        %v2543 = vrot.slane %v2392, 5
        %v2544 = vsel %vm1614, %v2542, %v2543
        %v2545 = vrot.slane %v2393, 5
        %v2546 = vrot.slane %v2545, 4
        %v2547 = vrot.slane %v2394, 5
        %v2548 = vsel %vm1614, %v2546, %v2547
        %v2549 = vrot.slane %v2547, 4
        %v2550 = vrot.slane %v2395, 5
        %v2551 = vsel %vm1614, %v2549, %v2550
        %v2552 = vrot.slane %v2396, 5
        %v2553 = vrot.slane %v2552, 4
        %v2554 = vrot.slane %v2397, 5
        %v2555 = vsel %vm1614, %v2553, %v2554
        %v2556 = vrot.slane %v2554, 4
        %v2557 = vrot.slane %v2398, 5
        %v2558 = vsel %vm1614, %v2556, %v2557
        %2591 = vst [vmem:[#allocation3 + $0x14] sm:$0xf] %v2450
        %2592 = vst [vmem:[#allocation3 + $0x38] sm:$0xf] %v2453
        %2593 = vst [vmem:[#allocation3 + $0x5c] sm:$0xf] %v2457
        %2594 = vst [vmem:[#allocation3 + $0x80] sm:$0xf] %v2460
        %2595 = vst [vmem:[#allocation3 + $0xa4] sm:$0xf] %v2464
        %2596 = vst [vmem:[#allocation3 + $0xc8] sm:$0xf] %v2467
        %2597 = vst [vmem:[#allocation3 + $0xec] sm:$0xf] %v2471
        %2598 = vst [vmem:[#allocation3 + $0x110] sm:$0xf] %v2474
        %2599 = vst [vmem:[#allocation3 + $0x134] sm:$0xf] %v2478
        %2600 = vst [vmem:[#allocation3 + $0x158] sm:$0xf] %v2481
        %2601 = vst [vmem:[#allocation3 + $0x17c] sm:$0xf] %v2485
        %2602 = vst [vmem:[#allocation3 + $0x1a0] sm:$0xf] %v2488
        %2603 = vst [vmem:[#allocation3 + $0x1c4] sm:$0xf] %v2492
        %2604 = vst [vmem:[#allocation3 + $0x1e8] sm:$0xf] %v2495
        %2605 = vst [vmem:[#allocation3 + $0x20c] sm:$0xf] %v2499
        %2606 = vst [vmem:[#allocation3 + $0x230] sm:$0xf] %v2502
        %2607 = vst [vmem:[#allocation3 + $0x254] sm:$0xf] %v2506
        %2608 = vst [vmem:[#allocation3 + $0x278] sm:$0xf] %v2509
        %2609 = vst [vmem:[#allocation3 + $0x29c] sm:$0xf] %v2513
        %2610 = vst [vmem:[#allocation3 + $0x2c0] sm:$0xf] %v2516
        %2611 = vst [vmem:[#allocation3 + $0x2e4] sm:$0xf] %v2520
        %2612 = vst [vmem:[#allocation3 + $0x308] sm:$0xf] %v2523
        %2613 = vst [vmem:[#allocation3 + $0x32c] sm:$0xf] %v2527
        %2614 = vst [vmem:[#allocation3 + $0x350] sm:$0xf] %v2530
        %2615 = vst [vmem:[#allocation3 + $0x374] sm:$0xf] %v2534
        %2616 = vst [vmem:[#allocation3 + $0x398] sm:$0xf] %v2537
        %2617 = vst [vmem:[#allocation3 + $0x3bc] sm:$0xf] %v2541
        %2618 = vst [vmem:[#allocation3 + $0x3e0] sm:$0xf] %v2544
        %2619 = vst [vmem:[#allocation3 + $0x404] sm:$0xf] %v2548
        %2620 = vst [vmem:[#allocation3 + $0x428] sm:$0xf] %v2551
        %2621 = vst [vmem:[#allocation3 + $0x44c] sm:$0xf] %v2555
        %2622 = vst [vmem:[#allocation3 + $0x470] sm:$0xf] %v2558
        %s2623 = scalar_lea.vmem [#allocation2], 24
        %v2624 = vld [vmem:[%s2623] sm:$0xf]
        %v2625 = vld [vmem:[%s2623 + $0x4] sm:$0xf]
        %v2626 = vld [vmem:[%s2623 + $0xc] sm:$0xf]
        %v2627 = vld [vmem:[%s2623 + $0x10] sm:$0xf]
        %v2628 = vld [vmem:[%s2623 + $0x18] sm:$0xf]
        %v2629 = vld [vmem:[%s2623 + $0x1c] sm:$0xf]
        %v2630 = vld [vmem:[%s2623 + $0x24] sm:$0xf]
        %v2631 = vld [vmem:[%s2623 + $0x28] sm:$0xf]
        %v2632 = vld [vmem:[%s2623 + $0x30] sm:$0xf]
        %v2633 = vld [vmem:[%s2623 + $0x34] sm:$0xf]
        %v2634 = vld [vmem:[%s2623 + $0x3c] sm:$0xf]
        %v2635 = vld [vmem:[%s2623 + $0x40] sm:$0xf]
        %v2636 = vld [vmem:[%s2623 + $0x48] sm:$0xf]
        %v2637 = vld [vmem:[%s2623 + $0x4c] sm:$0xf]
        %v2638 = vld [vmem:[%s2623 + $0x54] sm:$0xf]
        %v2639 = vld [vmem:[%s2623 + $0x58] sm:$0xf]
        %v2640 = vld [vmem:[%s2623 + $0x60] sm:$0xf]
        %v2641 = vld [vmem:[%s2623 + $0x64] sm:$0xf]
        %v2642 = vld [vmem:[%s2623 + $0x6c] sm:$0xf]
        %v2643 = vld [vmem:[%s2623 + $0x70] sm:$0xf]
        %v2644 = vld [vmem:[%s2623 + $0x78] sm:$0xf]
        %v2645 = vld [vmem:[%s2623 + $0x7c] sm:$0xf]
        %v2646 = vld [vmem:[%s2623 + $0x84] sm:$0xf]
        %v2647 = vld [vmem:[%s2623 + $0x88] sm:$0xf]
        %v2648 = vld [vmem:[%s2623 + $0x90] sm:$0xf]
        %v2649 = vld [vmem:[%s2623 + $0x94] sm:$0xf]
        %v2650 = vld [vmem:[%s2623 + $0x9c] sm:$0xf]
        %v2651 = vld [vmem:[%s2623 + $0xa0] sm:$0xf]
        %v2652 = vld [vmem:[%s2623 + $0xa8] sm:$0xf]
        %v2653 = vld [vmem:[%s2623 + $0xac] sm:$0xf]
        %v2654 = vld [vmem:[%s2623 + $0xb4] sm:$0xf]
        %v2655 = vld [vmem:[%s2623 + $0xb8] sm:$0xf]
        %2656 = vst [vmem:[#allocation3 + $0x18] sm:$0xf] %v2624
        %2657 = vst [vmem:[#allocation3 + $0x3c] sm:$0xf] %v2625
        %2658 = vst [vmem:[#allocation3 + $0x60] sm:$0xf] %v2626
        %2659 = vst [vmem:[#allocation3 + $0x84] sm:$0xf] %v2627
        %2660 = vst [vmem:[#allocation3 + $0xa8] sm:$0xf] %v2628
        %2661 = vst [vmem:[#allocation3 + $0xcc] sm:$0xf] %v2629
        %2662 = vst [vmem:[#allocation3 + $0xf0] sm:$0xf] %v2630
        %2663 = vst [vmem:[#allocation3 + $0x114] sm:$0xf] %v2631
        %2664 = vst [vmem:[#allocation3 + $0x138] sm:$0xf] %v2632
        %2665 = vst [vmem:[#allocation3 + $0x15c] sm:$0xf] %v2633
        %2666 = vst [vmem:[#allocation3 + $0x180] sm:$0xf] %v2634
        %2667 = vst [vmem:[#allocation3 + $0x1a4] sm:$0xf] %v2635
        %2668 = vst [vmem:[#allocation3 + $0x1c8] sm:$0xf] %v2636
        %2669 = vst [vmem:[#allocation3 + $0x1ec] sm:$0xf] %v2637
        %2670 = vst [vmem:[#allocation3 + $0x210] sm:$0xf] %v2638
        %2671 = vst [vmem:[#allocation3 + $0x234] sm:$0xf] %v2639
        %2672 = vst [vmem:[#allocation3 + $0x258] sm:$0xf] %v2640
        %2673 = vst [vmem:[#allocation3 + $0x27c] sm:$0xf] %v2641
        %2674 = vst [vmem:[#allocation3 + $0x2a0] sm:$0xf] %v2642
        %2675 = vst [vmem:[#allocation3 + $0x2c4] sm:$0xf] %v2643
        %2676 = vst [vmem:[#allocation3 + $0x2e8] sm:$0xf] %v2644
        %2677 = vst [vmem:[#allocation3 + $0x30c] sm:$0xf] %v2645
        %2678 = vst [vmem:[#allocation3 + $0x330] sm:$0xf] %v2646
        %2679 = vst [vmem:[#allocation3 + $0x354] sm:$0xf] %v2647
        %2680 = vst [vmem:[#allocation3 + $0x378] sm:$0xf] %v2648
        %2681 = vst [vmem:[#allocation3 + $0x39c] sm:$0xf] %v2649
        %2682 = vst [vmem:[#allocation3 + $0x3c0] sm:$0xf] %v2650
        %2683 = vst [vmem:[#allocation3 + $0x3e4] sm:$0xf] %v2651
        %2684 = vst [vmem:[#allocation3 + $0x408] sm:$0xf] %v2652
        %2685 = vst [vmem:[#allocation3 + $0x42c] sm:$0xf] %v2653
        %2686 = vst [vmem:[#allocation3 + $0x450] sm:$0xf] %v2654
        %2687 = vst [vmem:[#allocation3 + $0x474] sm:$0xf] %v2655
        %v2688 = vld [vmem:[%s2623] sm:$0xf]
        %v2689 = vld [vmem:[%s2623 + $0x4] sm:$0xf]
        %v2690 = vld [vmem:[%s2623 + $0x8] sm:$0x1]
        %v2691 = vld [vmem:[%s2623 + $0xc] sm:$0xf]
        %v2692 = vld [vmem:[%s2623 + $0x10] sm:$0xf]
        %v2693 = vld [vmem:[%s2623 + $0x14] sm:$0x1]
        %v2694 = vld [vmem:[%s2623 + $0x18] sm:$0xf]
        %v2695 = vld [vmem:[%s2623 + $0x1c] sm:$0xf]
        %v2696 = vld [vmem:[%s2623 + $0x20] sm:$0x1]
        %v2697 = vld [vmem:[%s2623 + $0x24] sm:$0xf]
        %v2698 = vld [vmem:[%s2623 + $0x28] sm:$0xf]
        %v2699 = vld [vmem:[%s2623 + $0x2c] sm:$0x1]
        %v2700 = vld [vmem:[%s2623 + $0x30] sm:$0xf]
        %v2701 = vld [vmem:[%s2623 + $0x34] sm:$0xf]
        %v2702 = vld [vmem:[%s2623 + $0x38] sm:$0x1]
        %v2703 = vld [vmem:[%s2623 + $0x3c] sm:$0xf]
        %v2704 = vld [vmem:[%s2623 + $0x40] sm:$0xf]
        %v2705 = vld [vmem:[%s2623 + $0x44] sm:$0x1]
        %v2706 = vld [vmem:[%s2623 + $0x48] sm:$0xf]
        %v2707 = vld [vmem:[%s2623 + $0x4c] sm:$0xf]
        %v2708 = vld [vmem:[%s2623 + $0x50] sm:$0x1]
        %v2709 = vld [vmem:[%s2623 + $0x54] sm:$0xf]
        %v2710 = vld [vmem:[%s2623 + $0x58] sm:$0xf]
        %v2711 = vld [vmem:[%s2623 + $0x5c] sm:$0x1]
        %v2712 = vld [vmem:[%s2623 + $0x60] sm:$0xf]
        %v2713 = vld [vmem:[%s2623 + $0x64] sm:$0xf]
        %v2714 = vld [vmem:[%s2623 + $0x68] sm:$0x1]
        %v2715 = vld [vmem:[%s2623 + $0x6c] sm:$0xf]
        %v2716 = vld [vmem:[%s2623 + $0x70] sm:$0xf]
        %v2717 = vld [vmem:[%s2623 + $0x74] sm:$0x1]
        %v2718 = vld [vmem:[%s2623 + $0x78] sm:$0xf]
        %v2719 = vld [vmem:[%s2623 + $0x7c] sm:$0xf]
        %v2720 = vld [vmem:[%s2623 + $0x80] sm:$0x1]
        %v2721 = vld [vmem:[%s2623 + $0x84] sm:$0xf]
        %v2722 = vld [vmem:[%s2623 + $0x88] sm:$0xf]
        %v2723 = vld [vmem:[%s2623 + $0x8c] sm:$0x1]
        %v2724 = vld [vmem:[%s2623 + $0x90] sm:$0xf]
        %v2725 = vld [vmem:[%s2623 + $0x94] sm:$0xf]
        %v2726 = vld [vmem:[%s2623 + $0x98] sm:$0x1]
        %v2727 = vld [vmem:[%s2623 + $0x9c] sm:$0xf]
        %v2728 = vld [vmem:[%s2623 + $0xa0] sm:$0xf]
        %v2729 = vld [vmem:[%s2623 + $0xa4] sm:$0x1]
        %v2730 = vld [vmem:[%s2623 + $0xa8] sm:$0xf]
        %v2731 = vld [vmem:[%s2623 + $0xac] sm:$0xf]
        %v2732 = vld [vmem:[%s2623 + $0xb0] sm:$0x1]
        %v2733 = vld [vmem:[%s2623 + $0xb4] sm:$0xf]
        %v2734 = vld [vmem:[%s2623 + $0xb8] sm:$0xf]
        %v2735 = vld [vmem:[%s2623 + $0xbc] sm:$0x1]
        %v2737 = vshrl.u32 %v2688, 16
        %v2739 = vrot.slane %v2737, 4
        %v2740 = vshll.u32 %v2688, 16
        %v2742 = vrot.slane %v2740, 5
        %v2743 = vor.u32 %v2739, %v2742
        %v2744 = vrot.slane %v2743, 4
        %v2746 = vshll.u32 %v2689, 16
        %v2748 = vrot.slane %v2746, 5
        %v2749 = vsel %vm1067, %v2744, %v2748
        %v2750 = vshrl.u32 %v2689, 16
        %v2752 = vrot.slane %v2750, 4
        %v2753 = vor.u32 %v2752, %v2748
        %v2754 = vrot.slane %v2753, 4
        %v2756 = vshll.u32 %v2690, 16
        %v2758 = vrot.slane %v2756, 5
        %v2759 = vsel %vm1067, %v2754, %v2758
        %v2761 = vshrl.u32 %v2691, 16
        %v2763 = vrot.slane %v2761, 4
        %v2764 = vshll.u32 %v2691, 16
        %v2766 = vrot.slane %v2764, 5
        %v2767 = vor.u32 %v2763, %v2766
        %v2768 = vrot.slane %v2767, 4
        %v2770 = vshll.u32 %v2692, 16
        %v2772 = vrot.slane %v2770, 5
        %v2773 = vsel %vm1067, %v2768, %v2772
        %v2774 = vshrl.u32 %v2692, 16
        %v2776 = vrot.slane %v2774, 4
        %v2777 = vor.u32 %v2776, %v2772
        %v2778 = vrot.slane %v2777, 4
        %v2780 = vshll.u32 %v2693, 16
        %v2782 = vrot.slane %v2780, 5
        %v2783 = vsel %vm1067, %v2778, %v2782
        %v2785 = vshrl.u32 %v2694, 16
        %v2787 = vrot.slane %v2785, 4
        %v2788 = vshll.u32 %v2694, 16
        %v2790 = vrot.slane %v2788, 5
        %v2791 = vor.u32 %v2787, %v2790
        %v2792 = vrot.slane %v2791, 4
        %v2794 = vshll.u32 %v2695, 16
        %v2796 = vrot.slane %v2794, 5
        %v2797 = vsel %vm1067, %v2792, %v2796
        %v2798 = vshrl.u32 %v2695, 16
        %v2800 = vrot.slane %v2798, 4
        %v2801 = vor.u32 %v2800, %v2796
        %v2802 = vrot.slane %v2801, 4
        %v2804 = vshll.u32 %v2696, 16
        %v2806 = vrot.slane %v2804, 5
        %v2807 = vsel %vm1067, %v2802, %v2806
        %v2809 = vshrl.u32 %v2697, 16
        %v2811 = vrot.slane %v2809, 4
        %v2812 = vshll.u32 %v2697, 16
        %v2814 = vrot.slane %v2812, 5
        %v2815 = vor.u32 %v2811, %v2814
        %v2816 = vrot.slane %v2815, 4
        %v2818 = vshll.u32 %v2698, 16
        %v2820 = vrot.slane %v2818, 5
        %v2821 = vsel %vm1067, %v2816, %v2820
        %v2822 = vshrl.u32 %v2698, 16
        %v2824 = vrot.slane %v2822, 4
        %v2825 = vor.u32 %v2824, %v2820
        %v2826 = vrot.slane %v2825, 4
        %v2828 = vshll.u32 %v2699, 16
        %v2830 = vrot.slane %v2828, 5
        %v2831 = vsel %vm1067, %v2826, %v2830
        %v2833 = vshrl.u32 %v2700, 16
        %v2835 = vrot.slane %v2833, 4
        %v2836 = vshll.u32 %v2700, 16
        %v2838 = vrot.slane %v2836, 5
        %v2839 = vor.u32 %v2835, %v2838
        %v2840 = vrot.slane %v2839, 4
        %v2842 = vshll.u32 %v2701, 16
        %v2844 = vrot.slane %v2842, 5
        %v2845 = vsel %vm1067, %v2840, %v2844
        %v2846 = vshrl.u32 %v2701, 16
        %v2848 = vrot.slane %v2846, 4
        %v2849 = vor.u32 %v2848, %v2844
        %v2850 = vrot.slane %v2849, 4
        %v2852 = vshll.u32 %v2702, 16
        %v2854 = vrot.slane %v2852, 5
        %v2855 = vsel %vm1067, %v2850, %v2854
        %v2857 = vshrl.u32 %v2703, 16
        %v2859 = vrot.slane %v2857, 4
        %v2860 = vshll.u32 %v2703, 16
        %v2862 = vrot.slane %v2860, 5
        %v2863 = vor.u32 %v2859, %v2862
        %v2864 = vrot.slane %v2863, 4
        %v2866 = vshll.u32 %v2704, 16
        %v2868 = vrot.slane %v2866, 5
        %v2869 = vsel %vm1067, %v2864, %v2868
        %v2870 = vshrl.u32 %v2704, 16
        %v2872 = vrot.slane %v2870, 4
        %v2873 = vor.u32 %v2872, %v2868
        %v2874 = vrot.slane %v2873, 4
        %v2876 = vshll.u32 %v2705, 16
        %v2878 = vrot.slane %v2876, 5
        %v2879 = vsel %vm1067, %v2874, %v2878
        %v2881 = vshrl.u32 %v2706, 16
        %v2883 = vrot.slane %v2881, 4
        %v2884 = vshll.u32 %v2706, 16
        %v2886 = vrot.slane %v2884, 5
        %v2887 = vor.u32 %v2883, %v2886
        %v2888 = vrot.slane %v2887, 4
        %v2890 = vshll.u32 %v2707, 16
        %v2892 = vrot.slane %v2890, 5
        %v2893 = vsel %vm1067, %v2888, %v2892
        %v2894 = vshrl.u32 %v2707, 16
        %v2896 = vrot.slane %v2894, 4
        %v2897 = vor.u32 %v2896, %v2892
        %v2898 = vrot.slane %v2897, 4
        %v2900 = vshll.u32 %v2708, 16
        %v2902 = vrot.slane %v2900, 5
        %v2903 = vsel %vm1067, %v2898, %v2902
        %v2905 = vshrl.u32 %v2709, 16
        %v2907 = vrot.slane %v2905, 4
        %v2908 = vshll.u32 %v2709, 16
        %v2910 = vrot.slane %v2908, 5
        %v2911 = vor.u32 %v2907, %v2910
        %v2912 = vrot.slane %v2911, 4
        %v2914 = vshll.u32 %v2710, 16
        %v2916 = vrot.slane %v2914, 5
        %v2917 = vsel %vm1067, %v2912, %v2916
        %v2918 = vshrl.u32 %v2710, 16
        %v2920 = vrot.slane %v2918, 4
        %v2921 = vor.u32 %v2920, %v2916
        %v2922 = vrot.slane %v2921, 4
        %v2924 = vshll.u32 %v2711, 16
        %v2926 = vrot.slane %v2924, 5
        %v2927 = vsel %vm1067, %v2922, %v2926
        %v2929 = vshrl.u32 %v2712, 16
        %v2931 = vrot.slane %v2929, 4
        %v2932 = vshll.u32 %v2712, 16
        %v2934 = vrot.slane %v2932, 5
        %v2935 = vor.u32 %v2931, %v2934
        %v2936 = vrot.slane %v2935, 4
        %v2938 = vshll.u32 %v2713, 16
        %v2940 = vrot.slane %v2938, 5
        %v2941 = vsel %vm1067, %v2936, %v2940
        %v2942 = vshrl.u32 %v2713, 16
        %v2944 = vrot.slane %v2942, 4
        %v2945 = vor.u32 %v2944, %v2940
        %v2946 = vrot.slane %v2945, 4
        %v2948 = vshll.u32 %v2714, 16
        %v2950 = vrot.slane %v2948, 5
        %v2951 = vsel %vm1067, %v2946, %v2950
        %v2953 = vshrl.u32 %v2715, 16
        %v2955 = vrot.slane %v2953, 4
        %v2956 = vshll.u32 %v2715, 16
        %v2958 = vrot.slane %v2956, 5
        %v2959 = vor.u32 %v2955, %v2958
        %v2960 = vrot.slane %v2959, 4
        %v2962 = vshll.u32 %v2716, 16
        %v2964 = vrot.slane %v2962, 5
        %v2965 = vsel %vm1067, %v2960, %v2964
        %v2966 = vshrl.u32 %v2716, 16
        %v2968 = vrot.slane %v2966, 4
        %v2969 = vor.u32 %v2968, %v2964
        %v2970 = vrot.slane %v2969, 4
        %v2972 = vshll.u32 %v2717, 16
        %v2974 = vrot.slane %v2972, 5
        %v2975 = vsel %vm1067, %v2970, %v2974
        %v2977 = vshrl.u32 %v2718, 16
        %v2979 = vrot.slane %v2977, 4
        %v2980 = vshll.u32 %v2718, 16
        %v2982 = vrot.slane %v2980, 5
        %v2983 = vor.u32 %v2979, %v2982
        %v2984 = vrot.slane %v2983, 4
        %v2986 = vshll.u32 %v2719, 16
        %v2988 = vrot.slane %v2986, 5
        %v2989 = vsel %vm1067, %v2984, %v2988
        %v2990 = vshrl.u32 %v2719, 16
        %v2992 = vrot.slane %v2990, 4
        %v2993 = vor.u32 %v2992, %v2988
        %v2994 = vrot.slane %v2993, 4
        %v2996 = vshll.u32 %v2720, 16
        %v2998 = vrot.slane %v2996, 5
        %v2999 = vsel %vm1067, %v2994, %v2998
        %v3001 = vshrl.u32 %v2721, 16
        %v3003 = vrot.slane %v3001, 4
        %v3004 = vshll.u32 %v2721, 16
        %v3006 = vrot.slane %v3004, 5
        %v3007 = vor.u32 %v3003, %v3006
        %v3008 = vrot.slane %v3007, 4
        %v3010 = vshll.u32 %v2722, 16
        %v3012 = vrot.slane %v3010, 5
        %v3013 = vsel %vm1067, %v3008, %v3012
        %v3014 = vshrl.u32 %v2722, 16
        %v3016 = vrot.slane %v3014, 4
        %v3017 = vor.u32 %v3016, %v3012
        %v3018 = vrot.slane %v3017, 4
        %v3020 = vshll.u32 %v2723, 16
        %v3022 = vrot.slane %v3020, 5
        %v3023 = vsel %vm1067, %v3018, %v3022
        %v3025 = vshrl.u32 %v2724, 16
        %v3027 = vrot.slane %v3025, 4
        %v3028 = vshll.u32 %v2724, 16
        %v3030 = vrot.slane %v3028, 5
        %v3031 = vor.u32 %v3027, %v3030
        %v3032 = vrot.slane %v3031, 4
        %v3034 = vshll.u32 %v2725, 16
        %v3036 = vrot.slane %v3034, 5
        %v3037 = vsel %vm1067, %v3032, %v3036
        %v3038 = vshrl.u32 %v2725, 16
        %v3040 = vrot.slane %v3038, 4
        %v3041 = vor.u32 %v3040, %v3036
        %v3042 = vrot.slane %v3041, 4
        %v3044 = vshll.u32 %v2726, 16
        %v3046 = vrot.slane %v3044, 5
        %v3047 = vsel %vm1067, %v3042, %v3046
        %v3049 = vshrl.u32 %v2727, 16
        %v3051 = vrot.slane %v3049, 4
        %v3052 = vshll.u32 %v2727, 16
        %v3054 = vrot.slane %v3052, 5
        %v3055 = vor.u32 %v3051, %v3054
        %v3056 = vrot.slane %v3055, 4
        %v3058 = vshll.u32 %v2728, 16
        %v3060 = vrot.slane %v3058, 5
        %v3061 = vsel %vm1067, %v3056, %v3060
        %v3062 = vshrl.u32 %v2728, 16
        %v3064 = vrot.slane %v3062, 4
        %v3065 = vor.u32 %v3064, %v3060
        %v3066 = vrot.slane %v3065, 4
        %v3068 = vshll.u32 %v2729, 16
        %v3070 = vrot.slane %v3068, 5
        %v3071 = vsel %vm1067, %v3066, %v3070
        %v3073 = vshrl.u32 %v2730, 16
        %v3075 = vrot.slane %v3073, 4
        %v3076 = vshll.u32 %v2730, 16
        %v3078 = vrot.slane %v3076, 5
        %v3079 = vor.u32 %v3075, %v3078
        %v3080 = vrot.slane %v3079, 4
        %v3082 = vshll.u32 %v2731, 16
        %v3084 = vrot.slane %v3082, 5
        %v3085 = vsel %vm1067, %v3080, %v3084
        %v3086 = vshrl.u32 %v2731, 16
        %v3088 = vrot.slane %v3086, 4
        %v3089 = vor.u32 %v3088, %v3084
        %v3090 = vrot.slane %v3089, 4
        %v3092 = vshll.u32 %v2732, 16
        %v3094 = vrot.slane %v3092, 5
        %v3095 = vsel %vm1067, %v3090, %v3094
        %v3097 = vshrl.u32 %v2733, 16
        %v3099 = vrot.slane %v3097, 4
        %v3100 = vshll.u32 %v2733, 16
        %v3102 = vrot.slane %v3100, 5
        %v3103 = vor.u32 %v3099, %v3102
        %v3104 = vrot.slane %v3103, 4
        %v3106 = vshll.u32 %v2734, 16
        %v3108 = vrot.slane %v3106, 5
        %v3109 = vsel %vm1067, %v3104, %v3108
        %v3110 = vshrl.u32 %v2734, 16
        %v3112 = vrot.slane %v3110, 4
        %v3113 = vor.u32 %v3112, %v3108
        %v3114 = vrot.slane %v3113, 4
        %v3116 = vshll.u32 %v2735, 16
        %v3118 = vrot.slane %v3116, 5
        %v3119 = vsel %vm1067, %v3114, %v3118
        %3152 = vst [vmem:[#allocation3 + $0x1c] sm:$0xf] %v2749
        %3153 = vst [vmem:[#allocation3 + $0x40] sm:$0xf] %v2759
        %3154 = vst [vmem:[#allocation3 + $0x64] sm:$0xf] %v2773
        %3155 = vst [vmem:[#allocation3 + $0x88] sm:$0xf] %v2783
        %3156 = vst [vmem:[#allocation3 + $0xac] sm:$0xf] %v2797
        %3157 = vst [vmem:[#allocation3 + $0xd0] sm:$0xf] %v2807
        %3158 = vst [vmem:[#allocation3 + $0xf4] sm:$0xf] %v2821
        %3159 = vst [vmem:[#allocation3 + $0x118] sm:$0xf] %v2831
        %3160 = vst [vmem:[#allocation3 + $0x13c] sm:$0xf] %v2845
        %3161 = vst [vmem:[#allocation3 + $0x160] sm:$0xf] %v2855
        %3162 = vst [vmem:[#allocation3 + $0x184] sm:$0xf] %v2869
        %3163 = vst [vmem:[#allocation3 + $0x1a8] sm:$0xf] %v2879
        %3164 = vst [vmem:[#allocation3 + $0x1cc] sm:$0xf] %v2893
        %3165 = vst [vmem:[#allocation3 + $0x1f0] sm:$0xf] %v2903
        %3166 = vst [vmem:[#allocation3 + $0x214] sm:$0xf] %v2917
        %3167 = vst [vmem:[#allocation3 + $0x238] sm:$0xf] %v2927
        %3168 = vst [vmem:[#allocation3 + $0x25c] sm:$0xf] %v2941
        %3169 = vst [vmem:[#allocation3 + $0x280] sm:$0xf] %v2951
        %3170 = vst [vmem:[#allocation3 + $0x2a4] sm:$0xf] %v2965
        %3171 = vst [vmem:[#allocation3 + $0x2c8] sm:$0xf] %v2975
        %3172 = vst [vmem:[#allocation3 + $0x2ec] sm:$0xf] %v2989
        %3173 = vst [vmem:[#allocation3 + $0x310] sm:$0xf] %v2999
        %3174 = vst [vmem:[#allocation3 + $0x334] sm:$0xf] %v3013
        %3175 = vst [vmem:[#allocation3 + $0x358] sm:$0xf] %v3023
        %3176 = vst [vmem:[#allocation3 + $0x37c] sm:$0xf] %v3037
        %3177 = vst [vmem:[#allocation3 + $0x3a0] sm:$0xf] %v3047
        %3178 = vst [vmem:[#allocation3 + $0x3c4] sm:$0xf] %v3061
        %3179 = vst [vmem:[#allocation3 + $0x3e8] sm:$0xf] %v3071
        %3180 = vst [vmem:[#allocation3 + $0x40c] sm:$0xf] %v3085
        %3181 = vst [vmem:[#allocation3 + $0x430] sm:$0xf] %v3095
        %3182 = vst [vmem:[#allocation3 + $0x454] sm:$0xf] %v3109
        %3183 = vst [vmem:[#allocation3 + $0x478] sm:$0xf] %v3119
        %v3184 = vld [vmem:[%s2623] sm:$0xe]
        %v3185 = vld [vmem:[%s2623 + $0x4] sm:$0xf]
        %v3186 = vld [vmem:[%s2623 + $0x8] sm:$0x1]
        %v3187 = vld [vmem:[%s2623 + $0xc] sm:$0xe]
        %v3188 = vld [vmem:[%s2623 + $0x10] sm:$0xf]
        %v3189 = vld [vmem:[%s2623 + $0x14] sm:$0x1]
        %v3190 = vld [vmem:[%s2623 + $0x18] sm:$0xe]
        %v3191 = vld [vmem:[%s2623 + $0x1c] sm:$0xf]
        %v3192 = vld [vmem:[%s2623 + $0x20] sm:$0x1]
        %v3193 = vld [vmem:[%s2623 + $0x24] sm:$0xe]
        %v3194 = vld [vmem:[%s2623 + $0x28] sm:$0xf]
        %v3195 = vld [vmem:[%s2623 + $0x2c] sm:$0x1]
        %v3196 = vld [vmem:[%s2623 + $0x30] sm:$0xe]
        %v3197 = vld [vmem:[%s2623 + $0x34] sm:$0xf]
        %v3198 = vld [vmem:[%s2623 + $0x38] sm:$0x1]
        %v3199 = vld [vmem:[%s2623 + $0x3c] sm:$0xe]
        %v3200 = vld [vmem:[%s2623 + $0x40] sm:$0xf]
        %v3201 = vld [vmem:[%s2623 + $0x44] sm:$0x1]
        %v3202 = vld [vmem:[%s2623 + $0x48] sm:$0xe]
        %v3203 = vld [vmem:[%s2623 + $0x4c] sm:$0xf]
        %v3204 = vld [vmem:[%s2623 + $0x50] sm:$0x1]
        %v3205 = vld [vmem:[%s2623 + $0x54] sm:$0xe]
        %v3206 = vld [vmem:[%s2623 + $0x58] sm:$0xf]
        %v3207 = vld [vmem:[%s2623 + $0x5c] sm:$0x1]
        %v3208 = vld [vmem:[%s2623 + $0x60] sm:$0xe]
        %v3209 = vld [vmem:[%s2623 + $0x64] sm:$0xf]
        %v3210 = vld [vmem:[%s2623 + $0x68] sm:$0x1]
        %v3211 = vld [vmem:[%s2623 + $0x6c] sm:$0xe]
        %v3212 = vld [vmem:[%s2623 + $0x70] sm:$0xf]
        %v3213 = vld [vmem:[%s2623 + $0x74] sm:$0x1]
        %v3214 = vld [vmem:[%s2623 + $0x78] sm:$0xe]
        %v3215 = vld [vmem:[%s2623 + $0x7c] sm:$0xf]
        %v3216 = vld [vmem:[%s2623 + $0x80] sm:$0x1]
        %v3217 = vld [vmem:[%s2623 + $0x84] sm:$0xe]
        %v3218 = vld [vmem:[%s2623 + $0x88] sm:$0xf]
        %v3219 = vld [vmem:[%s2623 + $0x8c] sm:$0x1]
        %v3220 = vld [vmem:[%s2623 + $0x90] sm:$0xe]
        %v3221 = vld [vmem:[%s2623 + $0x94] sm:$0xf]
        %v3222 = vld [vmem:[%s2623 + $0x98] sm:$0x1]
        %v3223 = vld [vmem:[%s2623 + $0x9c] sm:$0xe]
        %v3224 = vld [vmem:[%s2623 + $0xa0] sm:$0xf]
        %v3225 = vld [vmem:[%s2623 + $0xa4] sm:$0x1]
        %v3226 = vld [vmem:[%s2623 + $0xa8] sm:$0xe]
        %v3227 = vld [vmem:[%s2623 + $0xac] sm:$0xf]
        %v3228 = vld [vmem:[%s2623 + $0xb0] sm:$0x1]
        %v3229 = vld [vmem:[%s2623 + $0xb4] sm:$0xe]
        %v3230 = vld [vmem:[%s2623 + $0xb8] sm:$0xf]
        %v3231 = vld [vmem:[%s2623 + $0xbc] sm:$0x1]
        %v3280 = vrot.slane %v3184, 5
        %v3281 = vrot.slane %v3280, 4
        %v3282 = vrot.slane %v3185, 5
        %v3283 = vsel %vm1614, %v3281, %v3282
        %v3284 = vrot.slane %v3282, 4
        %v3285 = vrot.slane %v3186, 5
        %v3286 = vsel %vm1614, %v3284, %v3285
        %v3287 = vrot.slane %v3187, 5
        %v3288 = vrot.slane %v3287, 4
        %v3289 = vrot.slane %v3188, 5
        %v3290 = vsel %vm1614, %v3288, %v3289
        %v3291 = vrot.slane %v3289, 4
        %v3292 = vrot.slane %v3189, 5
        %v3293 = vsel %vm1614, %v3291, %v3292
        %v3294 = vrot.slane %v3190, 5
        %v3295 = vrot.slane %v3294, 4
        %v3296 = vrot.slane %v3191, 5
        %v3297 = vsel %vm1614, %v3295, %v3296
        %v3298 = vrot.slane %v3296, 4
        %v3299 = vrot.slane %v3192, 5
        %v3300 = vsel %vm1614, %v3298, %v3299
        %v3301 = vrot.slane %v3193, 5
        %v3302 = vrot.slane %v3301, 4
        %v3303 = vrot.slane %v3194, 5
        %v3304 = vsel %vm1614, %v3302, %v3303
        %v3305 = vrot.slane %v3303, 4
        %v3306 = vrot.slane %v3195, 5
        %v3307 = vsel %vm1614, %v3305, %v3306
        %v3308 = vrot.slane %v3196, 5
        %v3309 = vrot.slane %v3308, 4
        %v3310 = vrot.slane %v3197, 5
        %v3311 = vsel %vm1614, %v3309, %v3310
        %v3312 = vrot.slane %v3310, 4
        %v3313 = vrot.slane %v3198, 5
        %v3314 = vsel %vm1614, %v3312, %v3313
        %v3315 = vrot.slane %v3199, 5
        %v3316 = vrot.slane %v3315, 4
        %v3317 = vrot.slane %v3200, 5
        %v3318 = vsel %vm1614, %v3316, %v3317
        %v3319 = vrot.slane %v3317, 4
        %v3320 = vrot.slane %v3201, 5
        %v3321 = vsel %vm1614, %v3319, %v3320
        %v3322 = vrot.slane %v3202, 5
        %v3323 = vrot.slane %v3322, 4
        %v3324 = vrot.slane %v3203, 5
        %v3325 = vsel %vm1614, %v3323, %v3324
        %v3326 = vrot.slane %v3324, 4
        %v3327 = vrot.slane %v3204, 5
        %v3328 = vsel %vm1614, %v3326, %v3327
        %v3329 = vrot.slane %v3205, 5
        %v3330 = vrot.slane %v3329, 4
        %v3331 = vrot.slane %v3206, 5
        %v3332 = vsel %vm1614, %v3330, %v3331
        %v3333 = vrot.slane %v3331, 4
        %v3334 = vrot.slane %v3207, 5
        %v3335 = vsel %vm1614, %v3333, %v3334
        %v3336 = vrot.slane %v3208, 5
        %v3337 = vrot.slane %v3336, 4
        %v3338 = vrot.slane %v3209, 5
        %v3339 = vsel %vm1614, %v3337, %v3338
        %v3340 = vrot.slane %v3338, 4
        %v3341 = vrot.slane %v3210, 5
        %v3342 = vsel %vm1614, %v3340, %v3341
        %v3343 = vrot.slane %v3211, 5
        %v3344 = vrot.slane %v3343, 4
        %v3345 = vrot.slane %v3212, 5
        %v3346 = vsel %vm1614, %v3344, %v3345
        %v3347 = vrot.slane %v3345, 4
        %v3348 = vrot.slane %v3213, 5
        %v3349 = vsel %vm1614, %v3347, %v3348
        %v3350 = vrot.slane %v3214, 5
        %v3351 = vrot.slane %v3350, 4
        %v3352 = vrot.slane %v3215, 5
        %v3353 = vsel %vm1614, %v3351, %v3352
        %v3354 = vrot.slane %v3352, 4
        %v3355 = vrot.slane %v3216, 5
        %v3356 = vsel %vm1614, %v3354, %v3355
        %v3357 = vrot.slane %v3217, 5
        %v3358 = vrot.slane %v3357, 4
        %v3359 = vrot.slane %v3218, 5
        %v3360 = vsel %vm1614, %v3358, %v3359
        %v3361 = vrot.slane %v3359, 4
        %v3362 = vrot.slane %v3219, 5
        %v3363 = vsel %vm1614, %v3361, %v3362
        %v3364 = vrot.slane %v3220, 5
        %v3365 = vrot.slane %v3364, 4
        %v3366 = vrot.slane %v3221, 5
        %v3367 = vsel %vm1614, %v3365, %v3366
        %v3368 = vrot.slane %v3366, 4
        %v3369 = vrot.slane %v3222, 5
        %v3370 = vsel %vm1614, %v3368, %v3369
        %v3371 = vrot.slane %v3223, 5
        %v3372 = vrot.slane %v3371, 4
        %v3373 = vrot.slane %v3224, 5
        %v3374 = vsel %vm1614, %v3372, %v3373
        %v3375 = vrot.slane %v3373, 4
        %v3376 = vrot.slane %v3225, 5
        %v3377 = vsel %vm1614, %v3375, %v3376
        %v3378 = vrot.slane %v3226, 5
        %v3379 = vrot.slane %v3378, 4
        %v3380 = vrot.slane %v3227, 5
        %v3381 = vsel %vm1614, %v3379, %v3380
        %v3382 = vrot.slane %v3380, 4
        %v3383 = vrot.slane %v3228, 5
        %v3384 = vsel %vm1614, %v3382, %v3383
        %v3385 = vrot.slane %v3229, 5
        %v3386 = vrot.slane %v3385, 4
        %v3387 = vrot.slane %v3230, 5
        %v3388 = vsel %vm1614, %v3386, %v3387
        %v3389 = vrot.slane %v3387, 4
        %v3390 = vrot.slane %v3231, 5
        %v3391 = vsel %vm1614, %v3389, %v3390
        %3424 = vst [vmem:[#allocation3 + $0x20] sm:$0xf] %v3283
        %3425 = vst [vmem:[#allocation3 + $0x44] sm:$0xf] %v3286
        %3426 = vst [vmem:[#allocation3 + $0x68] sm:$0xf] %v3290
        %3427 = vst [vmem:[#allocation3 + $0x8c] sm:$0xf] %v3293
        %3428 = vst [vmem:[#allocation3 + $0xb0] sm:$0xf] %v3297
        %3429 = vst [vmem:[#allocation3 + $0xd4] sm:$0xf] %v3300
        %3430 = vst [vmem:[#allocation3 + $0xf8] sm:$0xf] %v3304
        %3431 = vst [vmem:[#allocation3 + $0x11c] sm:$0xf] %v3307
        %3432 = vst [vmem:[#allocation3 + $0x140] sm:$0xf] %v3311
        %3433 = vst [vmem:[#allocation3 + $0x164] sm:$0xf] %v3314
        %3434 = vst [vmem:[#allocation3 + $0x188] sm:$0xf] %v3318
        %3435 = vst [vmem:[#allocation3 + $0x1ac] sm:$0xf] %v3321
        %3436 = vst [vmem:[#allocation3 + $0x1d0] sm:$0xf] %v3325
        %3437 = vst [vmem:[#allocation3 + $0x1f4] sm:$0xf] %v3328
        %3438 = vst [vmem:[#allocation3 + $0x218] sm:$0xf] %v3332
        %3439 = vst [vmem:[#allocation3 + $0x23c] sm:$0xf] %v3335
        %3440 = vst [vmem:[#allocation3 + $0x260] sm:$0xf] %v3339
        %3441 = vst [vmem:[#allocation3 + $0x284] sm:$0xf] %v3342
        %3442 = vst [vmem:[#allocation3 + $0x2a8] sm:$0xf] %v3346
        %3443 = vst [vmem:[#allocation3 + $0x2cc] sm:$0xf] %v3349
        %3444 = vst [vmem:[#allocation3 + $0x2f0] sm:$0xf] %v3353
        %3445 = vst [vmem:[#allocation3 + $0x314] sm:$0xf] %v3356
        %3446 = vst [vmem:[#allocation3 + $0x338] sm:$0xf] %v3360
        %3447 = vst [vmem:[#allocation3 + $0x35c] sm:$0xf] %v3363
        %3448 = vst [vmem:[#allocation3 + $0x380] sm:$0xf] %v3367
        %3449 = vst [vmem:[#allocation3 + $0x3a4] sm:$0xf] %v3370
        %3450 = vst [vmem:[#allocation3 + $0x3c8] sm:$0xf] %v3374
        %3451 = vst [vmem:[#allocation3 + $0x3ec] sm:$0xf] %v3377
        %3452 = vst [vmem:[#allocation3 + $0x410] sm:$0xf] %v3381
        %3453 = vst [vmem:[#allocation3 + $0x434] sm:$0xf] %v3384
        %3454 = vst [vmem:[#allocation3 + $0x458] sm:$0xf] %v3388
        %3455 = vst [vmem:[#allocation3 + $0x47c] sm:$0xf] %v3391
        %v3456 = vld [vmem:[#allocation3] sm:$0xff]
        %v3457 = vld [vmem:[#allocation3 + $0x8] sm:$0xff]
        %v3458 = vld [vmem:[#allocation3 + $0x10] sm:$0xff]
        %v3459 = vld [vmem:[#allocation3 + $0x18] sm:$0xff]
        %v3460 = vld [vmem:[#allocation3 + $0x20] sm:$0xf]
        %v3461 = vld [vmem:[#allocation3 + $0x24] sm:$0xff]
        %v3462 = vld [vmem:[#allocation3 + $0x2c] sm:$0xff]
        %v3463 = vld [vmem:[#allocation3 + $0x34] sm:$0xff]
        %v3464 = vld [vmem:[#allocation3 + $0x3c] sm:$0xff]
        %v3465 = vld [vmem:[#allocation3 + $0x44] sm:$0xf]
        %v3466 = vld [vmem:[#allocation3 + $0x48] sm:$0xff]
        %v3467 = vld [vmem:[#allocation3 + $0x50] sm:$0xff]
        %v3468 = vld [vmem:[#allocation3 + $0x58] sm:$0xff]
        %v3469 = vld [vmem:[#allocation3 + $0x60] sm:$0xff]
        %v3470 = vld [vmem:[#allocation3 + $0x68] sm:$0xf]
        %v3471 = vld [vmem:[#allocation3 + $0x6c] sm:$0xff]
        %v3472 = vld [vmem:[#allocation3 + $0x74] sm:$0xff]
        %v3473 = vld [vmem:[#allocation3 + $0x7c] sm:$0xff]
        %v3474 = vld [vmem:[#allocation3 + $0x84] sm:$0xff]
        %v3475 = vld [vmem:[#allocation3 + $0x8c] sm:$0xf]
        %v3476 = vld [vmem:[#allocation3 + $0x90] sm:$0xff]
        %v3477 = vld [vmem:[#allocation3 + $0x98] sm:$0xff]
        %v3478 = vld [vmem:[#allocation3 + $0xa0] sm:$0xff]
        %v3479 = vld [vmem:[#allocation3 + $0xa8] sm:$0xff]
        %v3480 = vld [vmem:[#allocation3 + $0xb0] sm:$0xf]
        %v3481 = vld [vmem:[#allocation3 + $0xb4] sm:$0xff]
        %v3482 = vld [vmem:[#allocation3 + $0xbc] sm:$0xff]
        %v3483 = vld [vmem:[#allocation3 + $0xc4] sm:$0xff]
        %v3484 = vld [vmem:[#allocation3 + $0xcc] sm:$0xff]
        %v3485 = vld [vmem:[#allocation3 + $0xd4] sm:$0xf]
        %v3486 = vld [vmem:[#allocation3 + $0xd8] sm:$0xff]
        %v3487 = vld [vmem:[#allocation3 + $0xe0] sm:$0xff]
        %v3488 = vld [vmem:[#allocation3 + $0xe8] sm:$0xff]
        %v3489 = vld [vmem:[#allocation3 + $0xf0] sm:$0xff]
        %v3490 = vld [vmem:[#allocation3 + $0xf8] sm:$0xf]
        %v3491 = vld [vmem:[#allocation3 + $0xfc] sm:$0xff]
        %v3492 = vld [vmem:[#allocation3 + $0x104] sm:$0xff]
        %v3493 = vld [vmem:[#allocation3 + $0x10c] sm:$0xff]
        %v3494 = vld [vmem:[#allocation3 + $0x114] sm:$0xff]
        %v3495 = vld [vmem:[#allocation3 + $0x11c] sm:$0xf]
        %v3496 = vld [vmem:[#allocation3 + $0x120] sm:$0xff]
        %v3497 = vld [vmem:[#allocation3 + $0x128] sm:$0xff]
        %v3498 = vld [vmem:[#allocation3 + $0x130] sm:$0xff]
        %v3499 = vld [vmem:[#allocation3 + $0x138] sm:$0xff]
        %v3500 = vld [vmem:[#allocation3 + $0x140] sm:$0xf]
        %v3501 = vld [vmem:[#allocation3 + $0x144] sm:$0xff]
        %v3502 = vld [vmem:[#allocation3 + $0x14c] sm:$0xff]
        %v3503 = vld [vmem:[#allocation3 + $0x154] sm:$0xff]
        %v3504 = vld [vmem:[#allocation3 + $0x15c] sm:$0xff]
        %v3505 = vld [vmem:[#allocation3 + $0x164] sm:$0xf]
        %v3506 = vld [vmem:[#allocation3 + $0x168] sm:$0xff]
        %v3507 = vld [vmem:[#allocation3 + $0x170] sm:$0xff]
        %v3508 = vld [vmem:[#allocation3 + $0x178] sm:$0xff]
        %v3509 = vld [vmem:[#allocation3 + $0x180] sm:$0xff]
        %v3510 = vld [vmem:[#allocation3 + $0x188] sm:$0xf]
        %v3511 = vld [vmem:[#allocation3 + $0x18c] sm:$0xff]
        %v3512 = vld [vmem:[#allocation3 + $0x194] sm:$0xff]
        %v3513 = vld [vmem:[#allocation3 + $0x19c] sm:$0xff]
        %v3514 = vld [vmem:[#allocation3 + $0x1a4] sm:$0xff]
        %v3515 = vld [vmem:[#allocation3 + $0x1ac] sm:$0xf]
        %v3516 = vld [vmem:[#allocation3 + $0x1b0] sm:$0xff]
        %v3517 = vld [vmem:[#allocation3 + $0x1b8] sm:$0xff]
        %v3518 = vld [vmem:[#allocation3 + $0x1c0] sm:$0xff]
        %v3519 = vld [vmem:[#allocation3 + $0x1c8] sm:$0xff]
        %v3520 = vld [vmem:[#allocation3 + $0x1d0] sm:$0xf]
        %v3521 = vld [vmem:[#allocation3 + $0x1d4] sm:$0xff]
        %v3522 = vld [vmem:[#allocation3 + $0x1dc] sm:$0xff]
        %v3523 = vld [vmem:[#allocation3 + $0x1e4] sm:$0xff]
        %v3524 = vld [vmem:[#allocation3 + $0x1ec] sm:$0xff]
        %v3525 = vld [vmem:[#allocation3 + $0x1f4] sm:$0xf]
        %v3526 = vld [vmem:[#allocation3 + $0x1f8] sm:$0xff]
        %v3527 = vld [vmem:[#allocation3 + $0x200] sm:$0xff]
        %v3528 = vld [vmem:[#allocation3 + $0x208] sm:$0xff]
        %v3529 = vld [vmem:[#allocation3 + $0x210] sm:$0xff]
        %v3530 = vld [vmem:[#allocation3 + $0x218] sm:$0xf]
        %v3531 = vld [vmem:[#allocation3 + $0x21c] sm:$0xff]
        %v3532 = vld [vmem:[#allocation3 + $0x224] sm:$0xff]
        %v3533 = vld [vmem:[#allocation3 + $0x22c] sm:$0xff]
        %v3534 = vld [vmem:[#allocation3 + $0x234] sm:$0xff]
        %v3535 = vld [vmem:[#allocation3 + $0x23c] sm:$0xf]
        %v3536 = vld [vmem:[#allocation3 + $0x240] sm:$0xff]
        %v3537 = vld [vmem:[#allocation3 + $0x248] sm:$0xff]
        %v3538 = vld [vmem:[#allocation3 + $0x250] sm:$0xff]
        %v3539 = vld [vmem:[#allocation3 + $0x258] sm:$0xff]
        %v3540 = vld [vmem:[#allocation3 + $0x260] sm:$0xf]
        %v3541 = vld [vmem:[#allocation3 + $0x264] sm:$0xff]
        %v3542 = vld [vmem:[#allocation3 + $0x26c] sm:$0xff]
        %v3543 = vld [vmem:[#allocation3 + $0x274] sm:$0xff]
        %v3544 = vld [vmem:[#allocation3 + $0x27c] sm:$0xff]
        %v3545 = vld [vmem:[#allocation3 + $0x284] sm:$0xf]
        %v3546 = vld [vmem:[#allocation3 + $0x288] sm:$0xff]
        %v3547 = vld [vmem:[#allocation3 + $0x290] sm:$0xff]
        %v3548 = vld [vmem:[#allocation3 + $0x298] sm:$0xff]
        %v3549 = vld [vmem:[#allocation3 + $0x2a0] sm:$0xff]
        %v3550 = vld [vmem:[#allocation3 + $0x2a8] sm:$0xf]
        %v3551 = vld [vmem:[#allocation3 + $0x2ac] sm:$0xff]
        %v3552 = vld [vmem:[#allocation3 + $0x2b4] sm:$0xff]
        %v3553 = vld [vmem:[#allocation3 + $0x2bc] sm:$0xff]
        %v3554 = vld [vmem:[#allocation3 + $0x2c4] sm:$0xff]
        %v3555 = vld [vmem:[#allocation3 + $0x2cc] sm:$0xf]
        %v3556 = vld [vmem:[#allocation3 + $0x2d0] sm:$0xff]
        %v3557 = vld [vmem:[#allocation3 + $0x2d8] sm:$0xff]
        %v3558 = vld [vmem:[#allocation3 + $0x2e0] sm:$0xff]
        %v3559 = vld [vmem:[#allocation3 + $0x2e8] sm:$0xff]
        %v3560 = vld [vmem:[#allocation3 + $0x2f0] sm:$0xf]
        %v3561 = vld [vmem:[#allocation3 + $0x2f4] sm:$0xff]
        %v3562 = vld [vmem:[#allocation3 + $0x2fc] sm:$0xff]
        %v3563 = vld [vmem:[#allocation3 + $0x304] sm:$0xff]
        %v3564 = vld [vmem:[#allocation3 + $0x30c] sm:$0xff]
        %v3565 = vld [vmem:[#allocation3 + $0x314] sm:$0xf]
        %v3566 = vld [vmem:[#allocation3 + $0x318] sm:$0xff]
        %v3567 = vld [vmem:[#allocation3 + $0x320] sm:$0xff]
        %v3568 = vld [vmem:[#allocation3 + $0x328] sm:$0xff]
        %v3569 = vld [vmem:[#allocation3 + $0x330] sm:$0xff]
        %v3570 = vld [vmem:[#allocation3 + $0x338] sm:$0xf]
        %v3571 = vld [vmem:[#allocation3 + $0x33c] sm:$0xff]
        %v3572 = vld [vmem:[#allocation3 + $0x344] sm:$0xff]
        %v3573 = vld [vmem:[#allocation3 + $0x34c] sm:$0xff]
        %v3574 = vld [vmem:[#allocation3 + $0x354] sm:$0xff]
        %v3575 = vld [vmem:[#allocation3 + $0x35c] sm:$0xf]
        %v3576 = vld [vmem:[#allocation3 + $0x360] sm:$0xff]
        %v3577 = vld [vmem:[#allocation3 + $0x368] sm:$0xff]
        %v3578 = vld [vmem:[#allocation3 + $0x370] sm:$0xff]
        %v3579 = vld [vmem:[#allocation3 + $0x378] sm:$0xff]
        %v3580 = vld [vmem:[#allocation3 + $0x380] sm:$0xf]
        %v3581 = vld [vmem:[#allocation3 + $0x384] sm:$0xff]
        %v3582 = vld [vmem:[#allocation3 + $0x38c] sm:$0xff]
        %v3583 = vld [vmem:[#allocation3 + $0x394] sm:$0xff]
        %v3584 = vld [vmem:[#allocation3 + $0x39c] sm:$0xff]
        %v3585 = vld [vmem:[#allocation3 + $0x3a4] sm:$0xf]
        %v3586 = vld [vmem:[#allocation3 + $0x3a8] sm:$0xff]
        %v3587 = vld [vmem:[#allocation3 + $0x3b0] sm:$0xff]
        %v3588 = vld [vmem:[#allocation3 + $0x3b8] sm:$0xff]
        %v3589 = vld [vmem:[#allocation3 + $0x3c0] sm:$0xff]
        %v3590 = vld [vmem:[#allocation3 + $0x3c8] sm:$0xf]
        %v3591 = vld [vmem:[#allocation3 + $0x3cc] sm:$0xff]
        %v3592 = vld [vmem:[#allocation3 + $0x3d4] sm:$0xff]
        %v3593 = vld [vmem:[#allocation3 + $0x3dc] sm:$0xff]
        %v3594 = vld [vmem:[#allocation3 + $0x3e4] sm:$0xff]
        %v3595 = vld [vmem:[#allocation3 + $0x3ec] sm:$0xf]
        %v3596 = vld [vmem:[#allocation3 + $0x3f0] sm:$0xff]
        %v3597 = vld [vmem:[#allocation3 + $0x3f8] sm:$0xff]
        %v3598 = vld [vmem:[#allocation3 + $0x400] sm:$0xff]
        %v3599 = vld [vmem:[#allocation3 + $0x408] sm:$0xff]
        %v3600 = vld [vmem:[#allocation3 + $0x410] sm:$0xf]
        %v3601 = vld [vmem:[#allocation3 + $0x414] sm:$0xff]
        %v3602 = vld [vmem:[#allocation3 + $0x41c] sm:$0xff]
        %v3603 = vld [vmem:[#allocation3 + $0x424] sm:$0xff]
        %v3604 = vld [vmem:[#allocation3 + $0x42c] sm:$0xff]
        %v3605 = vld [vmem:[#allocation3 + $0x434] sm:$0xf]
        %v3606 = vld [vmem:[#allocation3 + $0x438] sm:$0xff]
        %v3607 = vld [vmem:[#allocation3 + $0x440] sm:$0xff]
        %v3608 = vld [vmem:[#allocation3 + $0x448] sm:$0xff]
        %v3609 = vld [vmem:[#allocation3 + $0x450] sm:$0xff]
        %v3610 = vld [vmem:[#allocation3 + $0x458] sm:$0xf]
        %v3611 = vld [vmem:[#allocation3 + $0x45c] sm:$0xff]
        %v3612 = vld [vmem:[#allocation3 + $0x464] sm:$0xff]
        %v3613 = vld [vmem:[#allocation3 + $0x46c] sm:$0xff]
        %v3614 = vld [vmem:[#allocation3 + $0x474] sm:$0xff]
        %v3615 = vld [vmem:[#allocation3 + $0x47c] sm:$0xf]
        %v3616 = vld [vmem:[%s1] sm:$0xf]
        %v3617 = vld [vmem:[%s1 + $0x4] sm:$0xf]
        %v3618 = vld [vmem:[%s1 + $0x8] sm:$0xf]
        %v3619 = vld [vmem:[%s1 + $0xc] sm:$0xf]
        %v3620 = vld [vmem:[%s1 + $0x10] sm:$0xf]
        %v3621 = vld [vmem:[%s1 + $0x14] sm:$0xf]
        %v3622 = vld [vmem:[%s1 + $0x18] sm:$0xf]
        %v3623 = vld [vmem:[%s1 + $0x1c] sm:$0xf]
        %v3624 = vld [vmem:[%s1 + $0x20] sm:$0xf]
        %v3625 = vld [vmem:[%s1 + $0x24] sm:$0xf]
        %v3626 = vld [vmem:[%s1 + $0x28] sm:$0xf]
        %v3627 = vld [vmem:[%s1 + $0x2c] sm:$0xf]
        %v3628 = vld [vmem:[%s1 + $0x30] sm:$0xf]
        %v3629 = vld [vmem:[%s1 + $0x34] sm:$0xf]
        %v3630 = vld [vmem:[%s1 + $0x38] sm:$0xf]
        %v3631 = vld [vmem:[%s1 + $0x3c] sm:$0xf]
        %v3632 = vld [vmem:[%s1 + $0x40] sm:$0xf]
        %v3633 = vld [vmem:[%s1 + $0x44] sm:$0xf]
        %v3634 = vld [vmem:[%s1 + $0x48] sm:$0xf]
        %v3635 = vld [vmem:[%s1 + $0x4c] sm:$0xf]
        %v3636 = vld [vmem:[%s1 + $0x50] sm:$0xf]
        %v3637 = vld [vmem:[%s1 + $0x54] sm:$0xf]
        %v3638 = vld [vmem:[%s1 + $0x58] sm:$0xf]
        %v3639 = vld [vmem:[%s1 + $0x5c] sm:$0xf]
        %v3640 = vld [vmem:[%s1 + $0x60] sm:$0xf]
        %v3641 = vld [vmem:[%s1 + $0x64] sm:$0xf]
        %v3642 = vld [vmem:[%s1 + $0x68] sm:$0xf]
        %v3643 = vld [vmem:[%s1 + $0x6c] sm:$0xf]
        %v3644 = vld [vmem:[%s1 + $0x70] sm:$0xf]
        %v3645 = vld [vmem:[%s1 + $0x74] sm:$0xf]
        %v3646 = vld [vmem:[%s1 + $0x78] sm:$0xf]
        %v3647 = vld [vmem:[%s1 + $0x7c] sm:$0xf]
        %v3648 = vld [vmem:[%s1 + $0x80] sm:$0xf]
        %v3649 = vld [vmem:[%s1 + $0x84] sm:$0xf]
        %v3650 = vld [vmem:[%s1 + $0x88] sm:$0xf]
        %v3651 = vld [vmem:[%s1 + $0x8c] sm:$0xf]
        %v3652 = vld [vmem:[%s1 + $0x90] sm:$0xf]
        %v3653 = vld [vmem:[%s1 + $0x94] sm:$0xf]
        %v3654 = vld [vmem:[%s1 + $0x98] sm:$0xf]
        %v3655 = vld [vmem:[%s1 + $0x9c] sm:$0xf]
        %v3656 = vld [vmem:[%s1 + $0xa0] sm:$0xf]
        %v3657 = vld [vmem:[%s1 + $0xa4] sm:$0xf]
        %v3658 = vld [vmem:[%s1 + $0xa8] sm:$0xf]
        %v3659 = vld [vmem:[%s1 + $0xac] sm:$0xf]
        %v3660 = vld [vmem:[%s1 + $0xb0] sm:$0xf]
        %v3661 = vld [vmem:[%s1 + $0xb4] sm:$0xf]
        %v3662 = vld [vmem:[%s1 + $0xb8] sm:$0xf]
        %v3663 = vld [vmem:[%s1 + $0xbc] sm:$0xf]
        %v3664 = vld [vmem:[%s1 + $0xc0] sm:$0xf]
        %v3665 = vld [vmem:[%s1 + $0xc4] sm:$0xf]
        %v3666 = vld [vmem:[%s1 + $0xc8] sm:$0xf]
        %v3667 = vld [vmem:[%s1 + $0xcc] sm:$0xf]
        %v3668 = vld [vmem:[%s1 + $0xd0] sm:$0xf]
        %v3669 = vld [vmem:[%s1 + $0xd4] sm:$0xf]
        %v3670 = vld [vmem:[%s1 + $0xd8] sm:$0xf]
        %v3671 = vld [vmem:[%s1 + $0xdc] sm:$0xf]
        %v3672 = vld [vmem:[%s1 + $0xe0] sm:$0xf]
        %v3673 = vld [vmem:[%s1 + $0xe4] sm:$0xf]
        %v3674 = vld [vmem:[%s1 + $0xe8] sm:$0xf]
        %v3675 = vld [vmem:[%s1 + $0xec] sm:$0xf]
        %v3676 = vld [vmem:[%s1 + $0xf0] sm:$0xf]
        %v3677 = vld [vmem:[%s1 + $0xf4] sm:$0xf]
        %v3678 = vld [vmem:[%s1 + $0xf8] sm:$0xf]
        %v3679 = vld [vmem:[%s1 + $0xfc] sm:$0xf]
        %v3680 = vld [vmem:[%s1 + $0x100] sm:$0xf]
        %v3681 = vld [vmem:[%s1 + $0x104] sm:$0xf]
        %v3682 = vld [vmem:[%s1 + $0x108] sm:$0xf]
        %v3683 = vld [vmem:[%s1 + $0x10c] sm:$0xf]
        %v3684 = vld [vmem:[%s1 + $0x110] sm:$0xf]
        %v3685 = vld [vmem:[%s1 + $0x114] sm:$0xf]
        %v3686 = vld [vmem:[%s1 + $0x118] sm:$0xf]
        %v3687 = vld [vmem:[%s1 + $0x11c] sm:$0xf]
        %v3688 = vld [vmem:[%s1 + $0x120] sm:$0xf]
        %v3689 = vld [vmem:[%s1 + $0x124] sm:$0xf]
        %v3690 = vld [vmem:[%s1 + $0x128] sm:$0xf]
        %v3691 = vld [vmem:[%s1 + $0x12c] sm:$0xf]
        %v3692 = vld [vmem:[%s1 + $0x130] sm:$0xf]
        %v3693 = vld [vmem:[%s1 + $0x134] sm:$0xf]
        %v3694 = vld [vmem:[%s1 + $0x138] sm:$0xf]
        %v3695 = vld [vmem:[%s1 + $0x13c] sm:$0xf]
        %v3696 = vld [vmem:[%s1 + $0x140] sm:$0xf]
        %v3697 = vld [vmem:[%s1 + $0x144] sm:$0xf]
        %v3698 = vld [vmem:[%s1 + $0x148] sm:$0xf]
        %v3699 = vld [vmem:[%s1 + $0x14c] sm:$0xf]
        %v3700 = vld [vmem:[%s1 + $0x150] sm:$0xf]
        %v3701 = vld [vmem:[%s1 + $0x154] sm:$0xf]
        %v3702 = vld [vmem:[%s1 + $0x158] sm:$0xf]
        %v3703 = vld [vmem:[%s1 + $0x15c] sm:$0xf]
        %v3704 = vld [vmem:[%s1 + $0x160] sm:$0xf]
        %v3705 = vld [vmem:[%s1 + $0x164] sm:$0xf]
        %v3706 = vld [vmem:[%s1 + $0x168] sm:$0xf]
        %v3707 = vld [vmem:[%s1 + $0x16c] sm:$0xf]
        %v3708 = vld [vmem:[%s1 + $0x170] sm:$0xf]
        %v3709 = vld [vmem:[%s1 + $0x174] sm:$0xf]
        %v3710 = vld [vmem:[%s1 + $0x178] sm:$0xf]
        %v3711 = vld [vmem:[%s1 + $0x17c] sm:$0xf]
        %v3712 = vld [vmem:[%s1 + $0x180] sm:$0xf]
        %v3713 = vld [vmem:[%s1 + $0x184] sm:$0xf]
        %v3714 = vld [vmem:[%s1 + $0x188] sm:$0xf]
        %v3715 = vld [vmem:[%s1 + $0x18c] sm:$0xf]
        %v3716 = vld [vmem:[%s1 + $0x190] sm:$0xf]
        %v3717 = vld [vmem:[%s1 + $0x194] sm:$0xf]
        %v3718 = vld [vmem:[%s1 + $0x198] sm:$0xf]
        %v3719 = vld [vmem:[%s1 + $0x19c] sm:$0xf]
        %v3720 = vld [vmem:[%s1 + $0x1a0] sm:$0xf]
        %v3721 = vld [vmem:[%s1 + $0x1a4] sm:$0xf]
        %v3722 = vld [vmem:[%s1 + $0x1a8] sm:$0xf]
        %v3723 = vld [vmem:[%s1 + $0x1ac] sm:$0xf]
        %v3724 = vld [vmem:[%s1 + $0x1b0] sm:$0xf]
        %v3725 = vld [vmem:[%s1 + $0x1b4] sm:$0xf]
        %v3726 = vld [vmem:[%s1 + $0x1b8] sm:$0xf]
        %v3727 = vld [vmem:[%s1 + $0x1bc] sm:$0xf]
        %v3728 = vld [vmem:[%s1 + $0x1c0] sm:$0xf]
        %v3729 = vld [vmem:[%s1 + $0x1c4] sm:$0xf]
        %v3730 = vld [vmem:[%s1 + $0x1c8] sm:$0xf]
        %v3731 = vld [vmem:[%s1 + $0x1cc] sm:$0xf]
        %v3732 = vld [vmem:[%s1 + $0x1d0] sm:$0xf]
        %v3733 = vld [vmem:[%s1 + $0x1d4] sm:$0xf]
        %v3734 = vld [vmem:[%s1 + $0x1d8] sm:$0xf]
        %v3735 = vld [vmem:[%s1 + $0x1dc] sm:$0xf]
        %v3736 = vld [vmem:[%s1 + $0x1e0] sm:$0xf]
        %v3737 = vld [vmem:[%s1 + $0x1e4] sm:$0xf]
        %v3738 = vld [vmem:[%s1 + $0x1e8] sm:$0xf]
        %v3739 = vld [vmem:[%s1 + $0x1ec] sm:$0xf]
        %v3740 = vld [vmem:[%s1 + $0x1f0] sm:$0xf]
        %v3741 = vld [vmem:[%s1 + $0x1f4] sm:$0xf]
        %v3742 = vld [vmem:[%s1 + $0x1f8] sm:$0xf]
        %v3743 = vld [vmem:[%s1 + $0x1fc] sm:$0xf]
        %v3744 = vld [vmem:[%s1 + $0x200] sm:$0xf]
        %v3745 = vld [vmem:[%s1 + $0x204] sm:$0xf]
        %v3746 = vld [vmem:[%s1 + $0x208] sm:$0xf]
        %v3747 = vld [vmem:[%s1 + $0x20c] sm:$0xf]
        %v3748 = vld [vmem:[%s1 + $0x210] sm:$0xf]
        %v3749 = vld [vmem:[%s1 + $0x214] sm:$0xf]
        %v3750 = vld [vmem:[%s1 + $0x218] sm:$0xf]
        %v3751 = vld [vmem:[%s1 + $0x21c] sm:$0xf]
        %v3752 = vld [vmem:[%s1 + $0x220] sm:$0xf]
        %v3753 = vld [vmem:[%s1 + $0x224] sm:$0xf]
        %v3754 = vld [vmem:[%s1 + $0x228] sm:$0xf]
        %v3755 = vld [vmem:[%s1 + $0x22c] sm:$0xf]
        %v3756 = vld [vmem:[%s1 + $0x230] sm:$0xf]
        %v3757 = vld [vmem:[%s1 + $0x234] sm:$0xf]
        %v3758 = vld [vmem:[%s1 + $0x238] sm:$0xf]
        %v3759 = vld [vmem:[%s1 + $0x23c] sm:$0xf]
        %v3760 = vld [vmem:[%s2] sm:$0x1]
        %v3762 = vperm.slane %v3760, 0
        %v3924 = vunpack.c.l.b16 %v3456
        %v3925 = vunpack.c.h.b16 %v3456
        %v3926 = vunpack.c.l.b16 %v3457
        %v3927 = vunpack.c.h.b16 %v3457
        %v3928 = vunpack.c.l.b16 %v3458
        %v3929 = vunpack.c.h.b16 %v3458
        %v3930 = vunpack.c.l.b16 %v3459
        %v3931 = vunpack.c.h.b16 %v3459
        %v3932 = vunpack.c.l.b16 %v3460
        %v3933 = vunpack.c.l.b16 %v3461
        %v3934 = vunpack.c.h.b16 %v3461
        %v3935 = vunpack.c.l.b16 %v3462
        %v3936 = vunpack.c.h.b16 %v3462
        %v3937 = vunpack.c.l.b16 %v3463
        %v3938 = vunpack.c.h.b16 %v3463
        %v3939 = vunpack.c.l.b16 %v3464
        %v3940 = vunpack.c.h.b16 %v3464
        %v3941 = vunpack.c.l.b16 %v3465
        %v3942 = vunpack.c.l.b16 %v3466
        %v3943 = vunpack.c.h.b16 %v3466
        %v3944 = vunpack.c.l.b16 %v3467
        %v3945 = vunpack.c.h.b16 %v3467
        %v3946 = vunpack.c.l.b16 %v3468
        %v3947 = vunpack.c.h.b16 %v3468
        %v3948 = vunpack.c.l.b16 %v3469
        %v3949 = vunpack.c.h.b16 %v3469
        %v3950 = vunpack.c.l.b16 %v3470
        %v3951 = vunpack.c.l.b16 %v3471
        %v3952 = vunpack.c.h.b16 %v3471
        %v3953 = vunpack.c.l.b16 %v3472
        %v3954 = vunpack.c.h.b16 %v3472
        %v3955 = vunpack.c.l.b16 %v3473
        %v3956 = vunpack.c.h.b16 %v3473
        %v3957 = vunpack.c.l.b16 %v3474
        %v3958 = vunpack.c.h.b16 %v3474
        %v3959 = vunpack.c.l.b16 %v3475
        %v3960 = vunpack.c.l.b16 %v3476
        %v3961 = vunpack.c.h.b16 %v3476
        %v3962 = vunpack.c.l.b16 %v3477
        %v3963 = vunpack.c.h.b16 %v3477
        %v3964 = vunpack.c.l.b16 %v3478
        %v3965 = vunpack.c.h.b16 %v3478
        %v3966 = vunpack.c.l.b16 %v3479
        %v3967 = vunpack.c.h.b16 %v3479
        %v3968 = vunpack.c.l.b16 %v3480
        %v3969 = vunpack.c.l.b16 %v3481
        %v3970 = vunpack.c.h.b16 %v3481
        %v3971 = vunpack.c.l.b16 %v3482
        %v3972 = vunpack.c.h.b16 %v3482
        %v3973 = vunpack.c.l.b16 %v3483
        %v3974 = vunpack.c.h.b16 %v3483
        %v3975 = vunpack.c.l.b16 %v3484
        %v3976 = vunpack.c.h.b16 %v3484
        %v3977 = vunpack.c.l.b16 %v3485
        %v3978 = vunpack.c.l.b16 %v3486
        %v3979 = vunpack.c.h.b16 %v3486
        %v3980 = vunpack.c.l.b16 %v3487
        %v3981 = vunpack.c.h.b16 %v3487
        %v3982 = vunpack.c.l.b16 %v3488
        %v3983 = vunpack.c.h.b16 %v3488
        %v3984 = vunpack.c.l.b16 %v3489
        %v3985 = vunpack.c.h.b16 %v3489
        %v3986 = vunpack.c.l.b16 %v3490
        %v3987 = vunpack.c.l.b16 %v3491
        %v3988 = vunpack.c.h.b16 %v3491
        %v3989 = vunpack.c.l.b16 %v3492
        %v3990 = vunpack.c.h.b16 %v3492
        %v3991 = vunpack.c.l.b16 %v3493
        %v3992 = vunpack.c.h.b16 %v3493
        %v3993 = vunpack.c.l.b16 %v3494
        %v3994 = vunpack.c.h.b16 %v3494
        %v3995 = vunpack.c.l.b16 %v3495
        %v3996 = vunpack.c.l.b16 %v3496
        %v3997 = vunpack.c.h.b16 %v3496
        %v3998 = vunpack.c.l.b16 %v3497
        %v3999 = vunpack.c.h.b16 %v3497
        %v4000 = vunpack.c.l.b16 %v3498
        %v4001 = vunpack.c.h.b16 %v3498
        %v4002 = vunpack.c.l.b16 %v3499
        %v4003 = vunpack.c.h.b16 %v3499
        %v4004 = vunpack.c.l.b16 %v3500
        %v4005 = vunpack.c.l.b16 %v3501
        %v4006 = vunpack.c.h.b16 %v3501
        %v4007 = vunpack.c.l.b16 %v3502
        %v4008 = vunpack.c.h.b16 %v3502
        %v4009 = vunpack.c.l.b16 %v3503
        %v4010 = vunpack.c.h.b16 %v3503
        %v4011 = vunpack.c.l.b16 %v3504
        %v4012 = vunpack.c.h.b16 %v3504
        %v4013 = vunpack.c.l.b16 %v3505
        %v4014 = vunpack.c.l.b16 %v3506
        %v4015 = vunpack.c.h.b16 %v3506
        %v4016 = vunpack.c.l.b16 %v3507
        %v4017 = vunpack.c.h.b16 %v3507
        %v4018 = vunpack.c.l.b16 %v3508
        %v4019 = vunpack.c.h.b16 %v3508
        %v4020 = vunpack.c.l.b16 %v3509
        %v4021 = vunpack.c.h.b16 %v3509
        %v4022 = vunpack.c.l.b16 %v3510
        %v4023 = vunpack.c.l.b16 %v3511
        %v4024 = vunpack.c.h.b16 %v3511
        %v4025 = vunpack.c.l.b16 %v3512
        %v4026 = vunpack.c.h.b16 %v3512
        %v4027 = vunpack.c.l.b16 %v3513
        %v4028 = vunpack.c.h.b16 %v3513
        %v4029 = vunpack.c.l.b16 %v3514
        %v4030 = vunpack.c.h.b16 %v3514
        %v4031 = vunpack.c.l.b16 %v3515
        %v4032 = vunpack.c.l.b16 %v3516
        %v4033 = vunpack.c.h.b16 %v3516
        %v4034 = vunpack.c.l.b16 %v3517
        %v4035 = vunpack.c.h.b16 %v3517
        %v4036 = vunpack.c.l.b16 %v3518
        %v4037 = vunpack.c.h.b16 %v3518
        %v4038 = vunpack.c.l.b16 %v3519
        %v4039 = vunpack.c.h.b16 %v3519
        %v4040 = vunpack.c.l.b16 %v3520
        %v4041 = vunpack.c.l.b16 %v3521
        %v4042 = vunpack.c.h.b16 %v3521
        %v4043 = vunpack.c.l.b16 %v3522
        %v4044 = vunpack.c.h.b16 %v3522
        %v4045 = vunpack.c.l.b16 %v3523
        %v4046 = vunpack.c.h.b16 %v3523
        %v4047 = vunpack.c.l.b16 %v3524
        %v4048 = vunpack.c.h.b16 %v3524
        %v4049 = vunpack.c.l.b16 %v3525
        %v4050 = vunpack.c.l.b16 %v3526
        %v4051 = vunpack.c.h.b16 %v3526
        %v4052 = vunpack.c.l.b16 %v3527
        %v4053 = vunpack.c.h.b16 %v3527
        %v4054 = vunpack.c.l.b16 %v3528
        %v4055 = vunpack.c.h.b16 %v3528
        %v4056 = vunpack.c.l.b16 %v3529
        %v4057 = vunpack.c.h.b16 %v3529
        %v4058 = vunpack.c.l.b16 %v3530
        %v4059 = vunpack.c.l.b16 %v3531
        %v4060 = vunpack.c.h.b16 %v3531
        %v4061 = vunpack.c.l.b16 %v3532
        %v4062 = vunpack.c.h.b16 %v3532
        %v4063 = vunpack.c.l.b16 %v3533
        %v4064 = vunpack.c.h.b16 %v3533
        %v4065 = vunpack.c.l.b16 %v3534
        %v4066 = vunpack.c.h.b16 %v3534
        %v4067 = vunpack.c.l.b16 %v3535
        %v4068 = vunpack.c.l.b16 %v3536
        %v4069 = vunpack.c.h.b16 %v3536
        %v4070 = vunpack.c.l.b16 %v3537
        %v4071 = vunpack.c.h.b16 %v3537
        %v4072 = vunpack.c.l.b16 %v3538
        %v4073 = vunpack.c.h.b16 %v3538
        %v4074 = vunpack.c.l.b16 %v3539
        %v4075 = vunpack.c.h.b16 %v3539
        %v4076 = vunpack.c.l.b16 %v3540
        %v4077 = vunpack.c.l.b16 %v3541
        %v4078 = vunpack.c.h.b16 %v3541
        %v4079 = vunpack.c.l.b16 %v3542
        %v4080 = vunpack.c.h.b16 %v3542
        %v4081 = vunpack.c.l.b16 %v3543
        %v4082 = vunpack.c.h.b16 %v3543
        %v4083 = vunpack.c.l.b16 %v3544
        %v4084 = vunpack.c.h.b16 %v3544
        %v4085 = vunpack.c.l.b16 %v3545
        %v4086 = vunpack.c.l.b16 %v3546
        %v4087 = vunpack.c.h.b16 %v3546
        %v4088 = vunpack.c.l.b16 %v3547
        %v4089 = vunpack.c.h.b16 %v3547
        %v4090 = vunpack.c.l.b16 %v3548
        %v4091 = vunpack.c.h.b16 %v3548
        %v4092 = vunpack.c.l.b16 %v3549
        %v4093 = vunpack.c.h.b16 %v3549
        %v4094 = vunpack.c.l.b16 %v3550
        %v4095 = vunpack.c.l.b16 %v3551
        %v4096 = vunpack.c.h.b16 %v3551
        %v4097 = vunpack.c.l.b16 %v3552
        %v4098 = vunpack.c.h.b16 %v3552
        %v4099 = vunpack.c.l.b16 %v3553
        %v4100 = vunpack.c.h.b16 %v3553
        %v4101 = vunpack.c.l.b16 %v3554
        %v4102 = vunpack.c.h.b16 %v3554
        %v4103 = vunpack.c.l.b16 %v3555
        %v4104 = vunpack.c.l.b16 %v3556
        %v4105 = vunpack.c.h.b16 %v3556
        %v4106 = vunpack.c.l.b16 %v3557
        %v4107 = vunpack.c.h.b16 %v3557
        %v4108 = vunpack.c.l.b16 %v3558
        %v4109 = vunpack.c.h.b16 %v3558
        %v4110 = vunpack.c.l.b16 %v3559
        %v4111 = vunpack.c.h.b16 %v3559
        %v4112 = vunpack.c.l.b16 %v3560
        %v4113 = vunpack.c.l.b16 %v3561
        %v4114 = vunpack.c.h.b16 %v3561
        %v4115 = vunpack.c.l.b16 %v3562
        %v4116 = vunpack.c.h.b16 %v3562
        %v4117 = vunpack.c.l.b16 %v3563
        %v4118 = vunpack.c.h.b16 %v3563
        %v4119 = vunpack.c.l.b16 %v3564
        %v4120 = vunpack.c.h.b16 %v3564
        %v4121 = vunpack.c.l.b16 %v3565
        %v4122 = vunpack.c.l.b16 %v3566
        %v4123 = vunpack.c.h.b16 %v3566
        %v4124 = vunpack.c.l.b16 %v3567
        %v4125 = vunpack.c.h.b16 %v3567
        %v4126 = vunpack.c.l.b16 %v3568
        %v4127 = vunpack.c.h.b16 %v3568
        %v4128 = vunpack.c.l.b16 %v3569
        %v4129 = vunpack.c.h.b16 %v3569
        %v4130 = vunpack.c.l.b16 %v3570
        %v4131 = vunpack.c.l.b16 %v3571
        %v4132 = vunpack.c.h.b16 %v3571
        %v4133 = vunpack.c.l.b16 %v3572
        %v4134 = vunpack.c.h.b16 %v3572
        %v4135 = vunpack.c.l.b16 %v3573
        %v4136 = vunpack.c.h.b16 %v3573
        %v4137 = vunpack.c.l.b16 %v3574
        %v4138 = vunpack.c.h.b16 %v3574
        %v4139 = vunpack.c.l.b16 %v3575
        %v4140 = vunpack.c.l.b16 %v3576
        %v4141 = vunpack.c.h.b16 %v3576
        %v4142 = vunpack.c.l.b16 %v3577
        %v4143 = vunpack.c.h.b16 %v3577
        %v4144 = vunpack.c.l.b16 %v3578
        %v4145 = vunpack.c.h.b16 %v3578
        %v4146 = vunpack.c.l.b16 %v3579
        %v4147 = vunpack.c.h.b16 %v3579
        %v4148 = vunpack.c.l.b16 %v3580
        %v4149 = vunpack.c.l.b16 %v3581
        %v4150 = vunpack.c.h.b16 %v3581
        %v4151 = vunpack.c.l.b16 %v3582
        %v4152 = vunpack.c.h.b16 %v3582
        %v4153 = vunpack.c.l.b16 %v3583
        %v4154 = vunpack.c.h.b16 %v3583
        %v4155 = vunpack.c.l.b16 %v3584
        %v4156 = vunpack.c.h.b16 %v3584
        %v4157 = vunpack.c.l.b16 %v3585
        %v4158 = vunpack.c.l.b16 %v3586
        %v4159 = vunpack.c.h.b16 %v3586
        %v4160 = vunpack.c.l.b16 %v3587
        %v4161 = vunpack.c.h.b16 %v3587
        %v4162 = vunpack.c.l.b16 %v3588
        %v4163 = vunpack.c.h.b16 %v3588
        %v4164 = vunpack.c.l.b16 %v3589
        %v4165 = vunpack.c.h.b16 %v3589
        %v4166 = vunpack.c.l.b16 %v3590
        %v4167 = vunpack.c.l.b16 %v3591
        %v4168 = vunpack.c.h.b16 %v3591
        %v4169 = vunpack.c.l.b16 %v3592
        %v4170 = vunpack.c.h.b16 %v3592
        %v4171 = vunpack.c.l.b16 %v3593
        %v4172 = vunpack.c.h.b16 %v3593
        %v4173 = vunpack.c.l.b16 %v3594
        %v4174 = vunpack.c.h.b16 %v3594
        %v4175 = vunpack.c.l.b16 %v3595
        %v4176 = vunpack.c.l.b16 %v3596
        %v4177 = vunpack.c.h.b16 %v3596
        %v4178 = vunpack.c.l.b16 %v3597
        %v4179 = vunpack.c.h.b16 %v3597
        %v4180 = vunpack.c.l.b16 %v3598
        %v4181 = vunpack.c.h.b16 %v3598
        %v4182 = vunpack.c.l.b16 %v3599
        %v4183 = vunpack.c.h.b16 %v3599
        %v4184 = vunpack.c.l.b16 %v3600
        %v4185 = vunpack.c.l.b16 %v3601
        %v4186 = vunpack.c.h.b16 %v3601
        %v4187 = vunpack.c.l.b16 %v3602
        %v4188 = vunpack.c.h.b16 %v3602
        %v4189 = vunpack.c.l.b16 %v3603
        %v4190 = vunpack.c.h.b16 %v3603
        %v4191 = vunpack.c.l.b16 %v3604
        %v4192 = vunpack.c.h.b16 %v3604
        %v4193 = vunpack.c.l.b16 %v3605
        %v4194 = vunpack.c.l.b16 %v3606
        %v4195 = vunpack.c.h.b16 %v3606
        %v4196 = vunpack.c.l.b16 %v3607
        %v4197 = vunpack.c.h.b16 %v3607
        %v4198 = vunpack.c.l.b16 %v3608
        %v4199 = vunpack.c.h.b16 %v3608
        %v4200 = vunpack.c.l.b16 %v3609
        %v4201 = vunpack.c.h.b16 %v3609
        %v4202 = vunpack.c.l.b16 %v3610
        %v4203 = vunpack.c.l.b16 %v3611
        %v4204 = vunpack.c.h.b16 %v3611
        %v4205 = vunpack.c.l.b16 %v3612
        %v4206 = vunpack.c.h.b16 %v3612
        %v4207 = vunpack.c.l.b16 %v3613
        %v4208 = vunpack.c.h.b16 %v3613
        %v4209 = vunpack.c.l.b16 %v3614
        %v4210 = vunpack.c.h.b16 %v3614
        %v4211 = vunpack.c.l.b16 %v3615
        %v4212 = vpack.c.b16 %v3933, %v3924
        %v4213 = vpack.c.b16 %v3934, %v3925
        %v4214 = vpack.c.b16 %v3935, %v3926
        %v4215 = vpack.c.b16 %v3936, %v3927
        %v4216 = vpack.c.b16 %v3937, %v3928
        %v4217 = vpack.c.b16 %v3938, %v3929
        %v4218 = vpack.c.b16 %v3939, %v3930
        %v4219 = vpack.c.b16 %v3940, %v3931
        %v4220 = vpack.c.b16 %v3941, %v3932
        %v4221 = vpack.c.b16 %v3951, %v3942
        %v4222 = vpack.c.b16 %v3952, %v3943
        %v4223 = vpack.c.b16 %v3953, %v3944
        %v4224 = vpack.c.b16 %v3954, %v3945
        %v4225 = vpack.c.b16 %v3955, %v3946
        %v4226 = vpack.c.b16 %v3956, %v3947
        %v4227 = vpack.c.b16 %v3957, %v3948
        %v4228 = vpack.c.b16 %v3958, %v3949
        %v4229 = vpack.c.b16 %v3959, %v3950
        %v4230 = vpack.c.b16 %v3969, %v3960
        %v4231 = vpack.c.b16 %v3970, %v3961
        %v4232 = vpack.c.b16 %v3971, %v3962
        %v4233 = vpack.c.b16 %v3972, %v3963
        %v4234 = vpack.c.b16 %v3973, %v3964
        %v4235 = vpack.c.b16 %v3974, %v3965
        %v4236 = vpack.c.b16 %v3975, %v3966
        %v4237 = vpack.c.b16 %v3976, %v3967
        %v4238 = vpack.c.b16 %v3977, %v3968
        %v4239 = vpack.c.b16 %v3987, %v3978
        %v4240 = vpack.c.b16 %v3988, %v3979
        %v4241 = vpack.c.b16 %v3989, %v3980
        %v4242 = vpack.c.b16 %v3990, %v3981
        %v4243 = vpack.c.b16 %v3991, %v3982
        %v4244 = vpack.c.b16 %v3992, %v3983
        %v4245 = vpack.c.b16 %v3993, %v3984
        %v4246 = vpack.c.b16 %v3994, %v3985
        %v4247 = vpack.c.b16 %v3995, %v3986
        %v4248 = vpack.c.b16 %v4005, %v3996
        %v4249 = vpack.c.b16 %v4006, %v3997
        %v4250 = vpack.c.b16 %v4007, %v3998
        %v4251 = vpack.c.b16 %v4008, %v3999
        %v4252 = vpack.c.b16 %v4009, %v4000
        %v4253 = vpack.c.b16 %v4010, %v4001
        %v4254 = vpack.c.b16 %v4011, %v4002
        %v4255 = vpack.c.b16 %v4012, %v4003
        %v4256 = vpack.c.b16 %v4013, %v4004
        %v4257 = vpack.c.b16 %v4023, %v4014
        %v4258 = vpack.c.b16 %v4024, %v4015
        %v4259 = vpack.c.b16 %v4025, %v4016
        %v4260 = vpack.c.b16 %v4026, %v4017
        %v4261 = vpack.c.b16 %v4027, %v4018
        %v4262 = vpack.c.b16 %v4028, %v4019
        %v4263 = vpack.c.b16 %v4029, %v4020
        %v4264 = vpack.c.b16 %v4030, %v4021
        %v4265 = vpack.c.b16 %v4031, %v4022
        %v4266 = vpack.c.b16 %v4041, %v4032
        %v4267 = vpack.c.b16 %v4042, %v4033
        %v4268 = vpack.c.b16 %v4043, %v4034
        %v4269 = vpack.c.b16 %v4044, %v4035
        %v4270 = vpack.c.b16 %v4045, %v4036
        %v4271 = vpack.c.b16 %v4046, %v4037
        %v4272 = vpack.c.b16 %v4047, %v4038
        %v4273 = vpack.c.b16 %v4048, %v4039
        %v4274 = vpack.c.b16 %v4049, %v4040
        %v4275 = vpack.c.b16 %v4059, %v4050
        %v4276 = vpack.c.b16 %v4060, %v4051
        %v4277 = vpack.c.b16 %v4061, %v4052
        %v4278 = vpack.c.b16 %v4062, %v4053
        %v4279 = vpack.c.b16 %v4063, %v4054
        %v4280 = vpack.c.b16 %v4064, %v4055
        %v4281 = vpack.c.b16 %v4065, %v4056
        %v4282 = vpack.c.b16 %v4066, %v4057
        %v4283 = vpack.c.b16 %v4067, %v4058
        %v4284 = vpack.c.b16 %v4077, %v4068
        %v4285 = vpack.c.b16 %v4078, %v4069
        %v4286 = vpack.c.b16 %v4079, %v4070
        %v4287 = vpack.c.b16 %v4080, %v4071
        %v4288 = vpack.c.b16 %v4081, %v4072
        %v4289 = vpack.c.b16 %v4082, %v4073
        %v4290 = vpack.c.b16 %v4083, %v4074
        %v4291 = vpack.c.b16 %v4084, %v4075
        %v4292 = vpack.c.b16 %v4085, %v4076
        %v4293 = vpack.c.b16 %v4095, %v4086
        %v4294 = vpack.c.b16 %v4096, %v4087
        %v4295 = vpack.c.b16 %v4097, %v4088
        %v4296 = vpack.c.b16 %v4098, %v4089
        %v4297 = vpack.c.b16 %v4099, %v4090
        %v4298 = vpack.c.b16 %v4100, %v4091
        %v4299 = vpack.c.b16 %v4101, %v4092
        %v4300 = vpack.c.b16 %v4102, %v4093
        %v4301 = vpack.c.b16 %v4103, %v4094
        %v4302 = vpack.c.b16 %v4113, %v4104
        %v4303 = vpack.c.b16 %v4114, %v4105
        %v4304 = vpack.c.b16 %v4115, %v4106
        %v4305 = vpack.c.b16 %v4116, %v4107
        %v4306 = vpack.c.b16 %v4117, %v4108
        %v4307 = vpack.c.b16 %v4118, %v4109
        %v4308 = vpack.c.b16 %v4119, %v4110
        %v4309 = vpack.c.b16 %v4120, %v4111
        %v4310 = vpack.c.b16 %v4121, %v4112
        %v4311 = vpack.c.b16 %v4131, %v4122
        %v4312 = vpack.c.b16 %v4132, %v4123
        %v4313 = vpack.c.b16 %v4133, %v4124
        %v4314 = vpack.c.b16 %v4134, %v4125
        %v4315 = vpack.c.b16 %v4135, %v4126
        %v4316 = vpack.c.b16 %v4136, %v4127
        %v4317 = vpack.c.b16 %v4137, %v4128
        %v4318 = vpack.c.b16 %v4138, %v4129
        %v4319 = vpack.c.b16 %v4139, %v4130
        %v4320 = vpack.c.b16 %v4149, %v4140
        %v4321 = vpack.c.b16 %v4150, %v4141
        %v4322 = vpack.c.b16 %v4151, %v4142
        %v4323 = vpack.c.b16 %v4152, %v4143
        %v4324 = vpack.c.b16 %v4153, %v4144
        %v4325 = vpack.c.b16 %v4154, %v4145
        %v4326 = vpack.c.b16 %v4155, %v4146
        %v4327 = vpack.c.b16 %v4156, %v4147
        %v4328 = vpack.c.b16 %v4157, %v4148
        %v4329 = vpack.c.b16 %v4167, %v4158
        %v4330 = vpack.c.b16 %v4168, %v4159
        %v4331 = vpack.c.b16 %v4169, %v4160
        %v4332 = vpack.c.b16 %v4170, %v4161
        %v4333 = vpack.c.b16 %v4171, %v4162
        %v4334 = vpack.c.b16 %v4172, %v4163
        %v4335 = vpack.c.b16 %v4173, %v4164
        %v4336 = vpack.c.b16 %v4174, %v4165
        %v4337 = vpack.c.b16 %v4175, %v4166
        %v4338 = vpack.c.b16 %v4185, %v4176
        %v4339 = vpack.c.b16 %v4186, %v4177
        %v4340 = vpack.c.b16 %v4187, %v4178
        %v4341 = vpack.c.b16 %v4188, %v4179
        %v4342 = vpack.c.b16 %v4189, %v4180
        %v4343 = vpack.c.b16 %v4190, %v4181
        %v4344 = vpack.c.b16 %v4191, %v4182
        %v4345 = vpack.c.b16 %v4192, %v4183
        %v4346 = vpack.c.b16 %v4193, %v4184
        %v4347 = vpack.c.b16 %v4203, %v4194
        %v4348 = vpack.c.b16 %v4204, %v4195
        %v4349 = vpack.c.b16 %v4205, %v4196
        %v4350 = vpack.c.b16 %v4206, %v4197
        %v4351 = vpack.c.b16 %v4207, %v4198
        %v4352 = vpack.c.b16 %v4208, %v4199
        %v4353 = vpack.c.b16 %v4209, %v4200
        %v4354 = vpack.c.b16 %v4210, %v4201
        %v4355 = vpack.c.b16 %v4211, %v4202
        %v4644 = vunpack.c.l.b16 %v3616
        %v4645 = vunpack.c.l.b16 %v3617
        %v4646 = vunpack.c.l.b16 %v3618
        %v4647 = vunpack.c.l.b16 %v3619
        %v4648 = vunpack.c.l.b16 %v3620
        %v4649 = vunpack.c.l.b16 %v3621
        %v4650 = vunpack.c.l.b16 %v3622
        %v4651 = vunpack.c.l.b16 %v3623
        %v4652 = vunpack.c.l.b16 %v3624
        %v4653 = vunpack.c.l.b16 %v3625
        %v4654 = vunpack.c.l.b16 %v3626
        %v4655 = vunpack.c.l.b16 %v3627
        %v4656 = vunpack.c.l.b16 %v3628
        %v4657 = vunpack.c.l.b16 %v3629
        %v4658 = vunpack.c.l.b16 %v3630
        %v4659 = vunpack.c.l.b16 %v3631
        %v4660 = vunpack.c.l.b16 %v3632
        %v4661 = vunpack.c.l.b16 %v3633
        %v4662 = vunpack.c.l.b16 %v3634
        %v4663 = vunpack.c.l.b16 %v3635
        %v4664 = vunpack.c.l.b16 %v3636
        %v4665 = vunpack.c.l.b16 %v3637
        %v4666 = vunpack.c.l.b16 %v3638
        %v4667 = vunpack.c.l.b16 %v3639
        %v4668 = vunpack.c.l.b16 %v3640
        %v4669 = vunpack.c.l.b16 %v3641
        %v4670 = vunpack.c.l.b16 %v3642
        %v4671 = vunpack.c.l.b16 %v3643
        %v4672 = vunpack.c.l.b16 %v3644
        %v4673 = vunpack.c.l.b16 %v3645
        %v4674 = vunpack.c.l.b16 %v3646
        %v4675 = vunpack.c.l.b16 %v3647
        %v4676 = vunpack.c.l.b16 %v3648
        %v4677 = vunpack.c.l.b16 %v3649
        %v4678 = vunpack.c.l.b16 %v3650
        %v4679 = vunpack.c.l.b16 %v3651
        %v4680 = vunpack.c.l.b16 %v3652
        %v4681 = vunpack.c.l.b16 %v3653
        %v4682 = vunpack.c.l.b16 %v3654
        %v4683 = vunpack.c.l.b16 %v3655
        %v4684 = vunpack.c.l.b16 %v3656
        %v4685 = vunpack.c.l.b16 %v3657
        %v4686 = vunpack.c.l.b16 %v3658
        %v4687 = vunpack.c.l.b16 %v3659
        %v4688 = vunpack.c.l.b16 %v3660
        %v4689 = vunpack.c.l.b16 %v3661
        %v4690 = vunpack.c.l.b16 %v3662
        %v4691 = vunpack.c.l.b16 %v3663
        %v4692 = vunpack.c.l.b16 %v3664
        %v4693 = vunpack.c.l.b16 %v3665
        %v4694 = vunpack.c.l.b16 %v3666
        %v4695 = vunpack.c.l.b16 %v3667
        %v4696 = vunpack.c.l.b16 %v3668
        %v4697 = vunpack.c.l.b16 %v3669
        %v4698 = vunpack.c.l.b16 %v3670
        %v4699 = vunpack.c.l.b16 %v3671
        %v4700 = vunpack.c.l.b16 %v3672
        %v4701 = vunpack.c.l.b16 %v3673
        %v4702 = vunpack.c.l.b16 %v3674
        %v4703 = vunpack.c.l.b16 %v3675
        %v4704 = vunpack.c.l.b16 %v3676
        %v4705 = vunpack.c.l.b16 %v3677
        %v4706 = vunpack.c.l.b16 %v3678
        %v4707 = vunpack.c.l.b16 %v3679
        %v4708 = vunpack.c.l.b16 %v3680
        %v4709 = vunpack.c.l.b16 %v3681
        %v4710 = vunpack.c.l.b16 %v3682
        %v4711 = vunpack.c.l.b16 %v3683
        %v4712 = vunpack.c.l.b16 %v3684
        %v4713 = vunpack.c.l.b16 %v3685
        %v4714 = vunpack.c.l.b16 %v3686
        %v4715 = vunpack.c.l.b16 %v3687
        %v4716 = vunpack.c.l.b16 %v3688
        %v4717 = vunpack.c.l.b16 %v3689
        %v4718 = vunpack.c.l.b16 %v3690
        %v4719 = vunpack.c.l.b16 %v3691
        %v4720 = vunpack.c.l.b16 %v3692
        %v4721 = vunpack.c.l.b16 %v3693
        %v4722 = vunpack.c.l.b16 %v3694
        %v4723 = vunpack.c.l.b16 %v3695
        %v4724 = vunpack.c.l.b16 %v3696
        %v4725 = vunpack.c.l.b16 %v3697
        %v4726 = vunpack.c.l.b16 %v3698
        %v4727 = vunpack.c.l.b16 %v3699
        %v4728 = vunpack.c.l.b16 %v3700
        %v4729 = vunpack.c.l.b16 %v3701
        %v4730 = vunpack.c.l.b16 %v3702
        %v4731 = vunpack.c.l.b16 %v3703
        %v4732 = vunpack.c.l.b16 %v3704
        %v4733 = vunpack.c.l.b16 %v3705
        %v4734 = vunpack.c.l.b16 %v3706
        %v4735 = vunpack.c.l.b16 %v3707
        %v4736 = vunpack.c.l.b16 %v3708
        %v4737 = vunpack.c.l.b16 %v3709
        %v4738 = vunpack.c.l.b16 %v3710
        %v4739 = vunpack.c.l.b16 %v3711
        %v4740 = vunpack.c.l.b16 %v3712
        %v4741 = vunpack.c.l.b16 %v3713
        %v4742 = vunpack.c.l.b16 %v3714
        %v4743 = vunpack.c.l.b16 %v3715
        %v4744 = vunpack.c.l.b16 %v3716
        %v4745 = vunpack.c.l.b16 %v3717
        %v4746 = vunpack.c.l.b16 %v3718
        %v4747 = vunpack.c.l.b16 %v3719
        %v4748 = vunpack.c.l.b16 %v3720
        %v4749 = vunpack.c.l.b16 %v3721
        %v4750 = vunpack.c.l.b16 %v3722
        %v4751 = vunpack.c.l.b16 %v3723
        %v4752 = vunpack.c.l.b16 %v3724
        %v4753 = vunpack.c.l.b16 %v3725
        %v4754 = vunpack.c.l.b16 %v3726
        %v4755 = vunpack.c.l.b16 %v3727
        %v4756 = vunpack.c.l.b16 %v3728
        %v4757 = vunpack.c.l.b16 %v3729
        %v4758 = vunpack.c.l.b16 %v3730
        %v4759 = vunpack.c.l.b16 %v3731
        %v4760 = vunpack.c.l.b16 %v3732
        %v4761 = vunpack.c.l.b16 %v3733
        %v4762 = vunpack.c.l.b16 %v3734
        %v4763 = vunpack.c.l.b16 %v3735
        %v4764 = vunpack.c.l.b16 %v3736
        %v4765 = vunpack.c.l.b16 %v3737
        %v4766 = vunpack.c.l.b16 %v3738
        %v4767 = vunpack.c.l.b16 %v3739
        %v4768 = vunpack.c.l.b16 %v3740
        %v4769 = vunpack.c.l.b16 %v3741
        %v4770 = vunpack.c.l.b16 %v3742
        %v4771 = vunpack.c.l.b16 %v3743
        %v4772 = vunpack.c.l.b16 %v3744
        %v4773 = vunpack.c.l.b16 %v3745
        %v4774 = vunpack.c.l.b16 %v3746
        %v4775 = vunpack.c.l.b16 %v3747
        %v4776 = vunpack.c.l.b16 %v3748
        %v4777 = vunpack.c.l.b16 %v3749
        %v4778 = vunpack.c.l.b16 %v3750
        %v4779 = vunpack.c.l.b16 %v3751
        %v4780 = vunpack.c.l.b16 %v3752
        %v4781 = vunpack.c.l.b16 %v3753
        %v4782 = vunpack.c.l.b16 %v3754
        %v4783 = vunpack.c.l.b16 %v3755
        %v4784 = vunpack.c.l.b16 %v3756
        %v4785 = vunpack.c.l.b16 %v3757
        %v4786 = vunpack.c.l.b16 %v3758
        %v4787 = vunpack.c.l.b16 %v3759
        %v4788 = vpack.c.b16 %v4645, %v4644
        %v4789 = vpack.c.b16 %v4647, %v4646
        %v4790 = vpack.c.b16 %v4649, %v4648
        %v4791 = vpack.c.b16 %v4651, %v4650
        %v4792 = vpack.c.b16 %v4653, %v4652
        %v4793 = vpack.c.b16 %v4655, %v4654
        %v4794 = vpack.c.b16 %v4657, %v4656
        %v4795 = vpack.c.b16 %v4659, %v4658
        %v4796 = vpack.c.b16 %v4661, %v4660
        %v4797 = vpack.c.b16 %v4663, %v4662
        %v4798 = vpack.c.b16 %v4665, %v4664
        %v4799 = vpack.c.b16 %v4667, %v4666
        %v4800 = vpack.c.b16 %v4669, %v4668
        %v4801 = vpack.c.b16 %v4671, %v4670
        %v4802 = vpack.c.b16 %v4673, %v4672
        %v4803 = vpack.c.b16 %v4675, %v4674
        %v4804 = vpack.c.b16 %v4677, %v4676
        %v4805 = vpack.c.b16 %v4679, %v4678
        %v4806 = vpack.c.b16 %v4681, %v4680
        %v4807 = vpack.c.b16 %v4683, %v4682
        %v4808 = vpack.c.b16 %v4685, %v4684
        %v4809 = vpack.c.b16 %v4687, %v4686
        %v4810 = vpack.c.b16 %v4689, %v4688
        %v4811 = vpack.c.b16 %v4691, %v4690
        %v4812 = vpack.c.b16 %v4693, %v4692
        %v4813 = vpack.c.b16 %v4695, %v4694
        %v4814 = vpack.c.b16 %v4697, %v4696
        %v4815 = vpack.c.b16 %v4699, %v4698
        %v4816 = vpack.c.b16 %v4701, %v4700
        %v4817 = vpack.c.b16 %v4703, %v4702
        %v4818 = vpack.c.b16 %v4705, %v4704
        %v4819 = vpack.c.b16 %v4707, %v4706
        %v4820 = vpack.c.b16 %v4709, %v4708
        %v4821 = vpack.c.b16 %v4711, %v4710
        %v4822 = vpack.c.b16 %v4713, %v4712
        %v4823 = vpack.c.b16 %v4715, %v4714
        %v4824 = vpack.c.b16 %v4717, %v4716
        %v4825 = vpack.c.b16 %v4719, %v4718
        %v4826 = vpack.c.b16 %v4721, %v4720
        %v4827 = vpack.c.b16 %v4723, %v4722
        %v4828 = vpack.c.b16 %v4725, %v4724
        %v4829 = vpack.c.b16 %v4727, %v4726
        %v4830 = vpack.c.b16 %v4729, %v4728
        %v4831 = vpack.c.b16 %v4731, %v4730
        %v4832 = vpack.c.b16 %v4733, %v4732
        %v4833 = vpack.c.b16 %v4735, %v4734
        %v4834 = vpack.c.b16 %v4737, %v4736
        %v4835 = vpack.c.b16 %v4739, %v4738
        %v4836 = vpack.c.b16 %v4741, %v4740
        %v4837 = vpack.c.b16 %v4743, %v4742
        %v4838 = vpack.c.b16 %v4745, %v4744
        %v4839 = vpack.c.b16 %v4747, %v4746
        %v4840 = vpack.c.b16 %v4749, %v4748
        %v4841 = vpack.c.b16 %v4751, %v4750
        %v4842 = vpack.c.b16 %v4753, %v4752
        %v4843 = vpack.c.b16 %v4755, %v4754
        %v4844 = vpack.c.b16 %v4757, %v4756
        %v4845 = vpack.c.b16 %v4759, %v4758
        %v4846 = vpack.c.b16 %v4761, %v4760
        %v4847 = vpack.c.b16 %v4763, %v4762
        %v4848 = vpack.c.b16 %v4765, %v4764
        %v4849 = vpack.c.b16 %v4767, %v4766
        %v4850 = vpack.c.b16 %v4769, %v4768
        %v4851 = vpack.c.b16 %v4771, %v4770
        %v4852 = vpack.c.b16 %v4773, %v4772
        %v4853 = vpack.c.b16 %v4775, %v4774
        %v4854 = vpack.c.b16 %v4777, %v4776
        %v4855 = vpack.c.b16 %v4779, %v4778
        %v4856 = vpack.c.b16 %v4781, %v4780
        %v4857 = vpack.c.b16 %v4783, %v4782
        %v4858 = vpack.c.b16 %v4785, %v4784
        %v4859 = vpack.c.b16 %v4787, %v4786
        %4932 = vmatpush.bf16.msra.mxu0 %v4795
        %4933 = vmatpush.bf16.msra.mxu0 %v4794
        %4934 = vmatpush.bf16.msra.mxu0 %v4793
        %4935 = vmatpush.bf16.msra.mxu0 %v4792
        %4936 = vmatpush.bf16.msra.mxu0 %v4791
        %4937 = vmatpush.bf16.msra.mxu0 %v4790
        %4938 = vmatpush.bf16.msra.mxu0 %v4789
        %4939 = vmatpush.bf16.msra.mxu0 %v4788
        %4940 = vmatmul.bf16.gmra.mxu0 %v4212
        %v4941 = vpop.f32.mrf.mxu0
        %v4942 = vadd.f32 %v3762, %v4941
        %v4943 = vpop.f32.mrf.mxu0
        %v4944 = vadd.f32 %v3762, %v4943
        %4945 = vmatmul.bf16.gmra.mxu0 %v4221
        %v4946 = vpop.f32.mrf.mxu0
        %v4947 = vadd.f32 %v3762, %v4946
        %v4948 = vpop.f32.mrf.mxu0
        %v4949 = vadd.f32 %v3762, %v4948
        %4950 = vmatmul.bf16.gmra.mxu0 %v4230
        %v4951 = vpop.f32.mrf.mxu0
        %v4952 = vadd.f32 %v3762, %v4951
        %v4953 = vpop.f32.mrf.mxu0
        %v4954 = vadd.f32 %v3762, %v4953
        %4955 = vmatmul.bf16.gmra.mxu0 %v4239
        %v4956 = vpop.f32.mrf.mxu0
        %v4957 = vadd.f32 %v3762, %v4956
        %v4958 = vpop.f32.mrf.mxu0
        %v4959 = vadd.f32 %v3762, %v4958
        %4960 = vmatmul.bf16.gmra.mxu0 %v4248
        %v4961 = vpop.f32.mrf.mxu0
        %v4962 = vadd.f32 %v3762, %v4961
        %v4963 = vpop.f32.mrf.mxu0
        %v4964 = vadd.f32 %v3762, %v4963
        %4965 = vmatmul.bf16.gmra.mxu0 %v4257
        %v4966 = vpop.f32.mrf.mxu0
        %v4967 = vadd.f32 %v3762, %v4966
        %v4968 = vpop.f32.mrf.mxu0
        %v4969 = vadd.f32 %v3762, %v4968
        %4970 = vmatmul.bf16.gmra.mxu0 %v4266
        %v4971 = vpop.f32.mrf.mxu0
        %v4972 = vadd.f32 %v3762, %v4971
        %v4973 = vpop.f32.mrf.mxu0
        %v4974 = vadd.f32 %v3762, %v4973
        %4975 = vmatmul.bf16.gmra.mxu0 %v4275
        %v4976 = vpop.f32.mrf.mxu0
        %v4977 = vadd.f32 %v3762, %v4976
        %v4978 = vpop.f32.mrf.mxu0
        %v4979 = vadd.f32 %v3762, %v4978
        %4980 = vmatmul.bf16.gmra.mxu0 %v4284
        %v4981 = vpop.f32.mrf.mxu0
        %v4982 = vadd.f32 %v3762, %v4981
        %v4983 = vpop.f32.mrf.mxu0
        %v4984 = vadd.f32 %v3762, %v4983
        %4985 = vmatmul.bf16.gmra.mxu0 %v4293
        %v4986 = vpop.f32.mrf.mxu0
        %v4987 = vadd.f32 %v3762, %v4986
        %v4988 = vpop.f32.mrf.mxu0
        %v4989 = vadd.f32 %v3762, %v4988
        %4990 = vmatmul.bf16.gmra.mxu0 %v4302
        %v4991 = vpop.f32.mrf.mxu0
        %v4992 = vadd.f32 %v3762, %v4991
        %v4993 = vpop.f32.mrf.mxu0
        %v4994 = vadd.f32 %v3762, %v4993
        %4995 = vmatmul.bf16.gmra.mxu0 %v4311
        %v4996 = vpop.f32.mrf.mxu0
        %v4997 = vadd.f32 %v3762, %v4996
        %v4998 = vpop.f32.mrf.mxu0
        %v4999 = vadd.f32 %v3762, %v4998
        %5000 = vmatmul.bf16.gmra.mxu0 %v4320
        %v5001 = vpop.f32.mrf.mxu0
        %v5002 = vadd.f32 %v3762, %v5001
        %v5003 = vpop.f32.mrf.mxu0
        %v5004 = vadd.f32 %v3762, %v5003
        %5005 = vmatmul.bf16.gmra.mxu0 %v4329
        %v5006 = vpop.f32.mrf.mxu0
        %v5007 = vadd.f32 %v3762, %v5006
        %v5008 = vpop.f32.mrf.mxu0
        %v5009 = vadd.f32 %v3762, %v5008
        %5010 = vmatmul.bf16.gmra.mxu0 %v4338
        %v5011 = vpop.f32.mrf.mxu0
        %v5012 = vadd.f32 %v3762, %v5011
        %v5013 = vpop.f32.mrf.mxu0
        %v5014 = vadd.f32 %v3762, %v5013
        %5015 = vmatmul.bf16.gmra.mxu0 %v4347
        %v5016 = vpop.f32.mrf.mxu0
        %v5017 = vadd.f32 %v3762, %v5016
        %v5018 = vpop.f32.mrf.mxu0
        %v5019 = vadd.f32 %v3762, %v5018
        %5020 = vdwg.mxu0
        %5021 = vmatpush.bf16.msra.mxu0 %v4803
        %5022 = vmatpush.bf16.msra.mxu0 %v4802
        %5023 = vmatpush.bf16.msra.mxu0 %v4801
        %5024 = vmatpush.bf16.msra.mxu0 %v4800
        %5025 = vmatpush.bf16.msra.mxu0 %v4799
        %5026 = vmatpush.bf16.msra.mxu0 %v4798
        %5027 = vmatpush.bf16.msra.mxu0 %v4797
        %5028 = vmatpush.bf16.msra.mxu0 %v4796
        %5029 = vmatmul.bf16.gmra.mxu0 %v4213
        %v5030 = vpop.f32.mrf.mxu0
        %v5031 = vadd.f32 %v4942, %v5030
        %v5032 = vpop.f32.mrf.mxu0
        %v5033 = vadd.f32 %v4944, %v5032
        %5034 = vmatmul.bf16.gmra.mxu0 %v4222
        %v5035 = vpop.f32.mrf.mxu0
        %v5036 = vadd.f32 %v4947, %v5035
        %v5037 = vpop.f32.mrf.mxu0
        %v5038 = vadd.f32 %v4949, %v5037
        %5039 = vmatmul.bf16.gmra.mxu0 %v4231
        %v5040 = vpop.f32.mrf.mxu0
        %v5041 = vadd.f32 %v4952, %v5040
        %v5042 = vpop.f32.mrf.mxu0
        %v5043 = vadd.f32 %v4954, %v5042
        %5044 = vmatmul.bf16.gmra.mxu0 %v4240
        %v5045 = vpop.f32.mrf.mxu0
        %v5046 = vadd.f32 %v4957, %v5045
        %v5047 = vpop.f32.mrf.mxu0
        %v5048 = vadd.f32 %v4959, %v5047
        %5049 = vmatmul.bf16.gmra.mxu0 %v4249
        %v5050 = vpop.f32.mrf.mxu0
        %v5051 = vadd.f32 %v4962, %v5050
        %v5052 = vpop.f32.mrf.mxu0
        %v5053 = vadd.f32 %v4964, %v5052
        %5054 = vmatmul.bf16.gmra.mxu0 %v4258
        %v5055 = vpop.f32.mrf.mxu0
        %v5056 = vadd.f32 %v4967, %v5055
        %v5057 = vpop.f32.mrf.mxu0
        %v5058 = vadd.f32 %v4969, %v5057
        %5059 = vmatmul.bf16.gmra.mxu0 %v4267
        %v5060 = vpop.f32.mrf.mxu0
        %v5061 = vadd.f32 %v4972, %v5060
        %v5062 = vpop.f32.mrf.mxu0
        %v5063 = vadd.f32 %v4974, %v5062
        %5064 = vmatmul.bf16.gmra.mxu0 %v4276
        %v5065 = vpop.f32.mrf.mxu0
        %v5066 = vadd.f32 %v4977, %v5065
        %v5067 = vpop.f32.mrf.mxu0
        %v5068 = vadd.f32 %v4979, %v5067
        %5069 = vmatmul.bf16.gmra.mxu0 %v4285
        %v5070 = vpop.f32.mrf.mxu0
        %v5071 = vadd.f32 %v4982, %v5070
        %v5072 = vpop.f32.mrf.mxu0
        %v5073 = vadd.f32 %v4984, %v5072
        %5074 = vmatmul.bf16.gmra.mxu0 %v4294
        %v5075 = vpop.f32.mrf.mxu0
        %v5076 = vadd.f32 %v4987, %v5075
        %v5077 = vpop.f32.mrf.mxu0
        %v5078 = vadd.f32 %v4989, %v5077
        %5079 = vmatmul.bf16.gmra.mxu0 %v4303
        %v5080 = vpop.f32.mrf.mxu0
        %v5081 = vadd.f32 %v4992, %v5080
        %v5082 = vpop.f32.mrf.mxu0
        %v5083 = vadd.f32 %v4994, %v5082
        %5084 = vmatmul.bf16.gmra.mxu0 %v4312
        %v5085 = vpop.f32.mrf.mxu0
        %v5086 = vadd.f32 %v4997, %v5085
        %v5087 = vpop.f32.mrf.mxu0
        %v5088 = vadd.f32 %v4999, %v5087
        %5089 = vmatmul.bf16.gmra.mxu0 %v4321
        %v5090 = vpop.f32.mrf.mxu0
        %v5091 = vadd.f32 %v5002, %v5090
        %v5092 = vpop.f32.mrf.mxu0
        %v5093 = vadd.f32 %v5004, %v5092
        %5094 = vmatmul.bf16.gmra.mxu0 %v4330
        %v5095 = vpop.f32.mrf.mxu0
        %v5096 = vadd.f32 %v5007, %v5095
        %v5097 = vpop.f32.mrf.mxu0
        %v5098 = vadd.f32 %v5009, %v5097
        %5099 = vmatmul.bf16.gmra.mxu0 %v4339
        %v5100 = vpop.f32.mrf.mxu0
        %v5101 = vadd.f32 %v5012, %v5100
        %v5102 = vpop.f32.mrf.mxu0
        %v5103 = vadd.f32 %v5014, %v5102
        %5104 = vmatmul.bf16.gmra.mxu0 %v4348
        %v5105 = vpop.f32.mrf.mxu0
        %v5106 = vadd.f32 %v5017, %v5105
        %v5107 = vpop.f32.mrf.mxu0
        %v5108 = vadd.f32 %v5019, %v5107
        %5109 = vdwg.mxu0
        %5110 = vmatpush.bf16.msra.mxu0 %v4811
        %5111 = vmatpush.bf16.msra.mxu0 %v4810
        %5112 = vmatpush.bf16.msra.mxu0 %v4809
        %5113 = vmatpush.bf16.msra.mxu0 %v4808
        %5114 = vmatpush.bf16.msra.mxu0 %v4807
        %5115 = vmatpush.bf16.msra.mxu0 %v4806
        %5116 = vmatpush.bf16.msra.mxu0 %v4805
        %5117 = vmatpush.bf16.msra.mxu0 %v4804
        %5118 = vmatmul.bf16.gmra.mxu0 %v4214
        %v5119 = vpop.f32.mrf.mxu0
        %v5120 = vadd.f32 %v5031, %v5119
        %v5121 = vpop.f32.mrf.mxu0
        %v5122 = vadd.f32 %v5033, %v5121
        %5123 = vmatmul.bf16.gmra.mxu0 %v4223
        %v5124 = vpop.f32.mrf.mxu0
        %v5125 = vadd.f32 %v5036, %v5124
        %v5126 = vpop.f32.mrf.mxu0
        %v5127 = vadd.f32 %v5038, %v5126
        %5128 = vmatmul.bf16.gmra.mxu0 %v4232
        %v5129 = vpop.f32.mrf.mxu0
        %v5130 = vadd.f32 %v5041, %v5129
        %v5131 = vpop.f32.mrf.mxu0
        %v5132 = vadd.f32 %v5043, %v5131
        %5133 = vmatmul.bf16.gmra.mxu0 %v4241
        %v5134 = vpop.f32.mrf.mxu0
        %v5135 = vadd.f32 %v5046, %v5134
        %v5136 = vpop.f32.mrf.mxu0
        %v5137 = vadd.f32 %v5048, %v5136
        %5138 = vmatmul.bf16.gmra.mxu0 %v4250
        %v5139 = vpop.f32.mrf.mxu0
        %v5140 = vadd.f32 %v5051, %v5139
        %v5141 = vpop.f32.mrf.mxu0
        %v5142 = vadd.f32 %v5053, %v5141
        %5143 = vmatmul.bf16.gmra.mxu0 %v4259
        %v5144 = vpop.f32.mrf.mxu0
        %v5145 = vadd.f32 %v5056, %v5144
        %v5146 = vpop.f32.mrf.mxu0
        %v5147 = vadd.f32 %v5058, %v5146
        %5148 = vmatmul.bf16.gmra.mxu0 %v4268
        %v5149 = vpop.f32.mrf.mxu0
        %v5150 = vadd.f32 %v5061, %v5149
        %v5151 = vpop.f32.mrf.mxu0
        %v5152 = vadd.f32 %v5063, %v5151
        %5153 = vmatmul.bf16.gmra.mxu0 %v4277
        %v5154 = vpop.f32.mrf.mxu0
        %v5155 = vadd.f32 %v5066, %v5154
        %v5156 = vpop.f32.mrf.mxu0
        %v5157 = vadd.f32 %v5068, %v5156
        %5158 = vmatmul.bf16.gmra.mxu0 %v4286
        %v5159 = vpop.f32.mrf.mxu0
        %v5160 = vadd.f32 %v5071, %v5159
        %v5161 = vpop.f32.mrf.mxu0
        %v5162 = vadd.f32 %v5073, %v5161
        %5163 = vmatmul.bf16.gmra.mxu0 %v4295
        %v5164 = vpop.f32.mrf.mxu0
        %v5165 = vadd.f32 %v5076, %v5164
        %v5166 = vpop.f32.mrf.mxu0
        %v5167 = vadd.f32 %v5078, %v5166
        %5168 = vmatmul.bf16.gmra.mxu0 %v4304
        %v5169 = vpop.f32.mrf.mxu0
        %v5170 = vadd.f32 %v5081, %v5169
        %v5171 = vpop.f32.mrf.mxu0
        %v5172 = vadd.f32 %v5083, %v5171
        %5173 = vmatmul.bf16.gmra.mxu0 %v4313
        %v5174 = vpop.f32.mrf.mxu0
        %v5175 = vadd.f32 %v5086, %v5174
        %v5176 = vpop.f32.mrf.mxu0
        %v5177 = vadd.f32 %v5088, %v5176
        %5178 = vmatmul.bf16.gmra.mxu0 %v4322
        %v5179 = vpop.f32.mrf.mxu0
        %v5180 = vadd.f32 %v5091, %v5179
        %v5181 = vpop.f32.mrf.mxu0
        %v5182 = vadd.f32 %v5093, %v5181
        %5183 = vmatmul.bf16.gmra.mxu0 %v4331
        %v5184 = vpop.f32.mrf.mxu0
        %v5185 = vadd.f32 %v5096, %v5184
        %v5186 = vpop.f32.mrf.mxu0
        %v5187 = vadd.f32 %v5098, %v5186
        %5188 = vmatmul.bf16.gmra.mxu0 %v4340
        %v5189 = vpop.f32.mrf.mxu0
        %v5190 = vadd.f32 %v5101, %v5189
        %v5191 = vpop.f32.mrf.mxu0
        %v5192 = vadd.f32 %v5103, %v5191
        %5193 = vmatmul.bf16.gmra.mxu0 %v4349
        %v5194 = vpop.f32.mrf.mxu0
        %v5195 = vadd.f32 %v5106, %v5194
        %v5196 = vpop.f32.mrf.mxu0
        %v5197 = vadd.f32 %v5108, %v5196
        %5198 = vdwg.mxu0
        %5199 = vmatpush.bf16.msra.mxu0 %v4819
        %5200 = vmatpush.bf16.msra.mxu0 %v4818
        %5201 = vmatpush.bf16.msra.mxu0 %v4817
        %5202 = vmatpush.bf16.msra.mxu0 %v4816
        %5203 = vmatpush.bf16.msra.mxu0 %v4815
        %5204 = vmatpush.bf16.msra.mxu0 %v4814
        %5205 = vmatpush.bf16.msra.mxu0 %v4813
        %5206 = vmatpush.bf16.msra.mxu0 %v4812
        %5207 = vmatmul.bf16.gmra.mxu0 %v4215
        %v5208 = vpop.f32.mrf.mxu0
        %v5209 = vadd.f32 %v5120, %v5208
        %v5210 = vpop.f32.mrf.mxu0
        %v5211 = vadd.f32 %v5122, %v5210
        %5212 = vmatmul.bf16.gmra.mxu0 %v4224
        %v5213 = vpop.f32.mrf.mxu0
        %v5214 = vadd.f32 %v5125, %v5213
        %v5215 = vpop.f32.mrf.mxu0
        %v5216 = vadd.f32 %v5127, %v5215
        %5217 = vmatmul.bf16.gmra.mxu0 %v4233
        %v5218 = vpop.f32.mrf.mxu0
        %v5219 = vadd.f32 %v5130, %v5218
        %v5220 = vpop.f32.mrf.mxu0
        %v5221 = vadd.f32 %v5132, %v5220
        %5222 = vmatmul.bf16.gmra.mxu0 %v4242
        %v5223 = vpop.f32.mrf.mxu0
        %v5224 = vadd.f32 %v5135, %v5223
        %v5225 = vpop.f32.mrf.mxu0
        %v5226 = vadd.f32 %v5137, %v5225
        %5227 = vmatmul.bf16.gmra.mxu0 %v4251
        %v5228 = vpop.f32.mrf.mxu0
        %v5229 = vadd.f32 %v5140, %v5228
        %v5230 = vpop.f32.mrf.mxu0
        %v5231 = vadd.f32 %v5142, %v5230
        %5232 = vmatmul.bf16.gmra.mxu0 %v4260
        %v5233 = vpop.f32.mrf.mxu0
        %v5234 = vadd.f32 %v5145, %v5233
        %v5235 = vpop.f32.mrf.mxu0
        %v5236 = vadd.f32 %v5147, %v5235
        %5237 = vmatmul.bf16.gmra.mxu0 %v4269
        %v5238 = vpop.f32.mrf.mxu0
        %v5239 = vadd.f32 %v5150, %v5238
        %v5240 = vpop.f32.mrf.mxu0
        %v5241 = vadd.f32 %v5152, %v5240
        %5242 = vmatmul.bf16.gmra.mxu0 %v4278
        %v5243 = vpop.f32.mrf.mxu0
        %v5244 = vadd.f32 %v5155, %v5243
        %v5245 = vpop.f32.mrf.mxu0
        %v5246 = vadd.f32 %v5157, %v5245
        %5247 = vmatmul.bf16.gmra.mxu0 %v4287
        %v5248 = vpop.f32.mrf.mxu0
        %v5249 = vadd.f32 %v5160, %v5248
        %v5250 = vpop.f32.mrf.mxu0
        %v5251 = vadd.f32 %v5162, %v5250
        %5252 = vmatmul.bf16.gmra.mxu0 %v4296
        %v5253 = vpop.f32.mrf.mxu0
        %v5254 = vadd.f32 %v5165, %v5253
        %v5255 = vpop.f32.mrf.mxu0
        %v5256 = vadd.f32 %v5167, %v5255
        %5257 = vmatmul.bf16.gmra.mxu0 %v4305
        %v5258 = vpop.f32.mrf.mxu0
        %v5259 = vadd.f32 %v5170, %v5258
        %v5260 = vpop.f32.mrf.mxu0
        %v5261 = vadd.f32 %v5172, %v5260
        %5262 = vmatmul.bf16.gmra.mxu0 %v4314
        %v5263 = vpop.f32.mrf.mxu0
        %v5264 = vadd.f32 %v5175, %v5263
        %v5265 = vpop.f32.mrf.mxu0
        %v5266 = vadd.f32 %v5177, %v5265
        %5267 = vmatmul.bf16.gmra.mxu0 %v4323
        %v5268 = vpop.f32.mrf.mxu0
        %v5269 = vadd.f32 %v5180, %v5268
        %v5270 = vpop.f32.mrf.mxu0
        %v5271 = vadd.f32 %v5182, %v5270
        %5272 = vmatmul.bf16.gmra.mxu0 %v4332
        %v5273 = vpop.f32.mrf.mxu0
        %v5274 = vadd.f32 %v5185, %v5273
        %v5275 = vpop.f32.mrf.mxu0
        %v5276 = vadd.f32 %v5187, %v5275
        %5277 = vmatmul.bf16.gmra.mxu0 %v4341
        %v5278 = vpop.f32.mrf.mxu0
        %v5279 = vadd.f32 %v5190, %v5278
        %v5280 = vpop.f32.mrf.mxu0
        %v5281 = vadd.f32 %v5192, %v5280
        %5282 = vmatmul.bf16.gmra.mxu0 %v4350
        %v5283 = vpop.f32.mrf.mxu0
        %v5284 = vadd.f32 %v5195, %v5283
        %v5285 = vpop.f32.mrf.mxu0
        %v5286 = vadd.f32 %v5197, %v5285
        %5287 = vdwg.mxu0
        %5288 = vmatpush.bf16.msra.mxu0 %v4827
        %5289 = vmatpush.bf16.msra.mxu0 %v4826
        %5290 = vmatpush.bf16.msra.mxu0 %v4825
        %5291 = vmatpush.bf16.msra.mxu0 %v4824
        %5292 = vmatpush.bf16.msra.mxu0 %v4823
        %5293 = vmatpush.bf16.msra.mxu0 %v4822
        %5294 = vmatpush.bf16.msra.mxu0 %v4821
        %5295 = vmatpush.bf16.msra.mxu0 %v4820
        %5296 = vmatmul.bf16.gmra.mxu0 %v4216
        %v5297 = vpop.f32.mrf.mxu0
        %v5298 = vadd.f32 %v5209, %v5297
        %v5299 = vpop.f32.mrf.mxu0
        %v5300 = vadd.f32 %v5211, %v5299
        %5301 = vmatmul.bf16.gmra.mxu0 %v4225
        %v5302 = vpop.f32.mrf.mxu0
        %v5303 = vadd.f32 %v5214, %v5302
        %v5304 = vpop.f32.mrf.mxu0
        %v5305 = vadd.f32 %v5216, %v5304
        %5306 = vmatmul.bf16.gmra.mxu0 %v4234
        %v5307 = vpop.f32.mrf.mxu0
        %v5308 = vadd.f32 %v5219, %v5307
        %v5309 = vpop.f32.mrf.mxu0
        %v5310 = vadd.f32 %v5221, %v5309
        %5311 = vmatmul.bf16.gmra.mxu0 %v4243
        %v5312 = vpop.f32.mrf.mxu0
        %v5313 = vadd.f32 %v5224, %v5312
        %v5314 = vpop.f32.mrf.mxu0
        %v5315 = vadd.f32 %v5226, %v5314
        %5316 = vmatmul.bf16.gmra.mxu0 %v4252
        %v5317 = vpop.f32.mrf.mxu0
        %v5318 = vadd.f32 %v5229, %v5317
        %v5319 = vpop.f32.mrf.mxu0
        %v5320 = vadd.f32 %v5231, %v5319
        %5321 = vmatmul.bf16.gmra.mxu0 %v4261
        %v5322 = vpop.f32.mrf.mxu0
        %v5323 = vadd.f32 %v5234, %v5322
        %v5324 = vpop.f32.mrf.mxu0
        %v5325 = vadd.f32 %v5236, %v5324
        %5326 = vmatmul.bf16.gmra.mxu0 %v4270
        %v5327 = vpop.f32.mrf.mxu0
        %v5328 = vadd.f32 %v5239, %v5327
        %v5329 = vpop.f32.mrf.mxu0
        %v5330 = vadd.f32 %v5241, %v5329
        %5331 = vmatmul.bf16.gmra.mxu0 %v4279
        %v5332 = vpop.f32.mrf.mxu0
        %v5333 = vadd.f32 %v5244, %v5332
        %v5334 = vpop.f32.mrf.mxu0
        %v5335 = vadd.f32 %v5246, %v5334
        %5336 = vmatmul.bf16.gmra.mxu0 %v4288
        %v5337 = vpop.f32.mrf.mxu0
        %v5338 = vadd.f32 %v5249, %v5337
        %v5339 = vpop.f32.mrf.mxu0
        %v5340 = vadd.f32 %v5251, %v5339
        %5341 = vmatmul.bf16.gmra.mxu0 %v4297
        %v5342 = vpop.f32.mrf.mxu0
        %v5343 = vadd.f32 %v5254, %v5342
        %v5344 = vpop.f32.mrf.mxu0
        %v5345 = vadd.f32 %v5256, %v5344
        %5346 = vmatmul.bf16.gmra.mxu0 %v4306
        %v5347 = vpop.f32.mrf.mxu0
        %v5348 = vadd.f32 %v5259, %v5347
        %v5349 = vpop.f32.mrf.mxu0
        %v5350 = vadd.f32 %v5261, %v5349
        %5351 = vmatmul.bf16.gmra.mxu0 %v4315
        %v5352 = vpop.f32.mrf.mxu0
        %v5353 = vadd.f32 %v5264, %v5352
        %v5354 = vpop.f32.mrf.mxu0
        %v5355 = vadd.f32 %v5266, %v5354
        %5356 = vmatmul.bf16.gmra.mxu0 %v4324
        %v5357 = vpop.f32.mrf.mxu0
        %v5358 = vadd.f32 %v5269, %v5357
        %v5359 = vpop.f32.mrf.mxu0
        %v5360 = vadd.f32 %v5271, %v5359
        %5361 = vmatmul.bf16.gmra.mxu0 %v4333
        %v5362 = vpop.f32.mrf.mxu0
        %v5363 = vadd.f32 %v5274, %v5362
        %v5364 = vpop.f32.mrf.mxu0
        %v5365 = vadd.f32 %v5276, %v5364
        %5366 = vmatmul.bf16.gmra.mxu0 %v4342
        %v5367 = vpop.f32.mrf.mxu0
        %v5368 = vadd.f32 %v5279, %v5367
        %v5369 = vpop.f32.mrf.mxu0
        %v5370 = vadd.f32 %v5281, %v5369
        %5371 = vmatmul.bf16.gmra.mxu0 %v4351
        %v5372 = vpop.f32.mrf.mxu0
        %v5373 = vadd.f32 %v5284, %v5372
        %v5374 = vpop.f32.mrf.mxu0
        %v5375 = vadd.f32 %v5286, %v5374
        %5376 = vdwg.mxu0
        %5377 = vmatpush.bf16.msra.mxu0 %v4835
        %5378 = vmatpush.bf16.msra.mxu0 %v4834
        %5379 = vmatpush.bf16.msra.mxu0 %v4833
        %5380 = vmatpush.bf16.msra.mxu0 %v4832
        %5381 = vmatpush.bf16.msra.mxu0 %v4831
        %5382 = vmatpush.bf16.msra.mxu0 %v4830
        %5383 = vmatpush.bf16.msra.mxu0 %v4829
        %5384 = vmatpush.bf16.msra.mxu0 %v4828
        %5385 = vmatmul.bf16.gmra.mxu0 %v4217
        %v5386 = vpop.f32.mrf.mxu0
        %v5387 = vadd.f32 %v5298, %v5386
        %v5388 = vpop.f32.mrf.mxu0
        %v5389 = vadd.f32 %v5300, %v5388
        %5390 = vmatmul.bf16.gmra.mxu0 %v4226
        %v5391 = vpop.f32.mrf.mxu0
        %v5392 = vadd.f32 %v5303, %v5391
        %v5393 = vpop.f32.mrf.mxu0
        %v5394 = vadd.f32 %v5305, %v5393
        %5395 = vmatmul.bf16.gmra.mxu0 %v4235
        %v5396 = vpop.f32.mrf.mxu0
        %v5397 = vadd.f32 %v5308, %v5396
        %v5398 = vpop.f32.mrf.mxu0
        %v5399 = vadd.f32 %v5310, %v5398
        %5400 = vmatmul.bf16.gmra.mxu0 %v4244
        %v5401 = vpop.f32.mrf.mxu0
        %v5402 = vadd.f32 %v5313, %v5401
        %v5403 = vpop.f32.mrf.mxu0
        %v5404 = vadd.f32 %v5315, %v5403
        %5405 = vmatmul.bf16.gmra.mxu0 %v4253
        %v5406 = vpop.f32.mrf.mxu0
        %v5407 = vadd.f32 %v5318, %v5406
        %v5408 = vpop.f32.mrf.mxu0
        %v5409 = vadd.f32 %v5320, %v5408
        %5410 = vmatmul.bf16.gmra.mxu0 %v4262
        %v5411 = vpop.f32.mrf.mxu0
        %v5412 = vadd.f32 %v5323, %v5411
        %v5413 = vpop.f32.mrf.mxu0
        %v5414 = vadd.f32 %v5325, %v5413
        %5415 = vmatmul.bf16.gmra.mxu0 %v4271
        %v5416 = vpop.f32.mrf.mxu0
        %v5417 = vadd.f32 %v5328, %v5416
        %v5418 = vpop.f32.mrf.mxu0
        %v5419 = vadd.f32 %v5330, %v5418
        %5420 = vmatmul.bf16.gmra.mxu0 %v4280
        %v5421 = vpop.f32.mrf.mxu0
        %v5422 = vadd.f32 %v5333, %v5421
        %v5423 = vpop.f32.mrf.mxu0
        %v5424 = vadd.f32 %v5335, %v5423
        %5425 = vmatmul.bf16.gmra.mxu0 %v4289
        %v5426 = vpop.f32.mrf.mxu0
        %v5427 = vadd.f32 %v5338, %v5426
        %v5428 = vpop.f32.mrf.mxu0
        %v5429 = vadd.f32 %v5340, %v5428
        %5430 = vmatmul.bf16.gmra.mxu0 %v4298
        %v5431 = vpop.f32.mrf.mxu0
        %v5432 = vadd.f32 %v5343, %v5431
        %v5433 = vpop.f32.mrf.mxu0
        %v5434 = vadd.f32 %v5345, %v5433
        %5435 = vmatmul.bf16.gmra.mxu0 %v4307
        %v5436 = vpop.f32.mrf.mxu0
        %v5437 = vadd.f32 %v5348, %v5436
        %v5438 = vpop.f32.mrf.mxu0
        %v5439 = vadd.f32 %v5350, %v5438
        %5440 = vmatmul.bf16.gmra.mxu0 %v4316
        %v5441 = vpop.f32.mrf.mxu0
        %v5442 = vadd.f32 %v5353, %v5441
        %v5443 = vpop.f32.mrf.mxu0
        %v5444 = vadd.f32 %v5355, %v5443
        %5445 = vmatmul.bf16.gmra.mxu0 %v4325
        %v5446 = vpop.f32.mrf.mxu0
        %v5447 = vadd.f32 %v5358, %v5446
        %v5448 = vpop.f32.mrf.mxu0
        %v5449 = vadd.f32 %v5360, %v5448
        %5450 = vmatmul.bf16.gmra.mxu0 %v4334
        %v5451 = vpop.f32.mrf.mxu0
        %v5452 = vadd.f32 %v5363, %v5451
        %v5453 = vpop.f32.mrf.mxu0
        %v5454 = vadd.f32 %v5365, %v5453
        %5455 = vmatmul.bf16.gmra.mxu0 %v4343
        %v5456 = vpop.f32.mrf.mxu0
        %v5457 = vadd.f32 %v5368, %v5456
        %v5458 = vpop.f32.mrf.mxu0
        %v5459 = vadd.f32 %v5370, %v5458
        %5460 = vmatmul.bf16.gmra.mxu0 %v4352
        %v5461 = vpop.f32.mrf.mxu0
        %v5462 = vadd.f32 %v5373, %v5461
        %v5463 = vpop.f32.mrf.mxu0
        %v5464 = vadd.f32 %v5375, %v5463
        %5465 = vdwg.mxu0
        %5466 = vmatpush.bf16.msra.mxu0 %v4843
        %5467 = vmatpush.bf16.msra.mxu0 %v4842
        %5468 = vmatpush.bf16.msra.mxu0 %v4841
        %5469 = vmatpush.bf16.msra.mxu0 %v4840
        %5470 = vmatpush.bf16.msra.mxu0 %v4839
        %5471 = vmatpush.bf16.msra.mxu0 %v4838
        %5472 = vmatpush.bf16.msra.mxu0 %v4837
        %5473 = vmatpush.bf16.msra.mxu0 %v4836
        %5474 = vmatmul.bf16.gmra.mxu0 %v4218
        %v5475 = vpop.f32.mrf.mxu0
        %v5476 = vadd.f32 %v5387, %v5475
        %v5477 = vpop.f32.mrf.mxu0
        %v5478 = vadd.f32 %v5389, %v5477
        %5479 = vmatmul.bf16.gmra.mxu0 %v4227
        %v5480 = vpop.f32.mrf.mxu0
        %v5481 = vadd.f32 %v5392, %v5480
        %v5482 = vpop.f32.mrf.mxu0
        %v5483 = vadd.f32 %v5394, %v5482
        %5484 = vmatmul.bf16.gmra.mxu0 %v4236
        %v5485 = vpop.f32.mrf.mxu0
        %v5486 = vadd.f32 %v5397, %v5485
        %v5487 = vpop.f32.mrf.mxu0
        %v5488 = vadd.f32 %v5399, %v5487
        %5489 = vmatmul.bf16.gmra.mxu0 %v4245
        %v5490 = vpop.f32.mrf.mxu0
        %v5491 = vadd.f32 %v5402, %v5490
        %v5492 = vpop.f32.mrf.mxu0
        %v5493 = vadd.f32 %v5404, %v5492
        %5494 = vmatmul.bf16.gmra.mxu0 %v4254
        %v5495 = vpop.f32.mrf.mxu0
        %v5496 = vadd.f32 %v5407, %v5495
        %v5497 = vpop.f32.mrf.mxu0
        %v5498 = vadd.f32 %v5409, %v5497
        %5499 = vmatmul.bf16.gmra.mxu0 %v4263
        %v5500 = vpop.f32.mrf.mxu0
        %v5501 = vadd.f32 %v5412, %v5500
        %v5502 = vpop.f32.mrf.mxu0
        %v5503 = vadd.f32 %v5414, %v5502
        %5504 = vmatmul.bf16.gmra.mxu0 %v4272
        %v5505 = vpop.f32.mrf.mxu0
        %v5506 = vadd.f32 %v5417, %v5505
        %v5507 = vpop.f32.mrf.mxu0
        %v5508 = vadd.f32 %v5419, %v5507
        %5509 = vmatmul.bf16.gmra.mxu0 %v4281
        %v5510 = vpop.f32.mrf.mxu0
        %v5511 = vadd.f32 %v5422, %v5510
        %v5512 = vpop.f32.mrf.mxu0
        %v5513 = vadd.f32 %v5424, %v5512
        %5514 = vmatmul.bf16.gmra.mxu0 %v4290
        %v5515 = vpop.f32.mrf.mxu0
        %v5516 = vadd.f32 %v5427, %v5515
        %v5517 = vpop.f32.mrf.mxu0
        %v5518 = vadd.f32 %v5429, %v5517
        %5519 = vmatmul.bf16.gmra.mxu0 %v4299
        %v5520 = vpop.f32.mrf.mxu0
        %v5521 = vadd.f32 %v5432, %v5520
        %v5522 = vpop.f32.mrf.mxu0
        %v5523 = vadd.f32 %v5434, %v5522
        %5524 = vmatmul.bf16.gmra.mxu0 %v4308
        %v5525 = vpop.f32.mrf.mxu0
        %v5526 = vadd.f32 %v5437, %v5525
        %v5527 = vpop.f32.mrf.mxu0
        %v5528 = vadd.f32 %v5439, %v5527
        %5529 = vmatmul.bf16.gmra.mxu0 %v4317
        %v5530 = vpop.f32.mrf.mxu0
        %v5531 = vadd.f32 %v5442, %v5530
        %v5532 = vpop.f32.mrf.mxu0
        %v5533 = vadd.f32 %v5444, %v5532
        %5534 = vmatmul.bf16.gmra.mxu0 %v4326
        %v5535 = vpop.f32.mrf.mxu0
        %v5536 = vadd.f32 %v5447, %v5535
        %v5537 = vpop.f32.mrf.mxu0
        %v5538 = vadd.f32 %v5449, %v5537
        %5539 = vmatmul.bf16.gmra.mxu0 %v4335
        %v5540 = vpop.f32.mrf.mxu0
        %v5541 = vadd.f32 %v5452, %v5540
        %v5542 = vpop.f32.mrf.mxu0
        %v5543 = vadd.f32 %v5454, %v5542
        %5544 = vmatmul.bf16.gmra.mxu0 %v4344
        %v5545 = vpop.f32.mrf.mxu0
        %v5546 = vadd.f32 %v5457, %v5545
        %v5547 = vpop.f32.mrf.mxu0
        %v5548 = vadd.f32 %v5459, %v5547
        %5549 = vmatmul.bf16.gmra.mxu0 %v4353
        %v5550 = vpop.f32.mrf.mxu0
        %v5551 = vadd.f32 %v5462, %v5550
        %v5552 = vpop.f32.mrf.mxu0
        %v5553 = vadd.f32 %v5464, %v5552
        %5554 = vdwg.mxu0
        %5555 = vmatpush.bf16.msra.mxu0 %v4851
        %5556 = vmatpush.bf16.msra.mxu0 %v4850
        %5557 = vmatpush.bf16.msra.mxu0 %v4849
        %5558 = vmatpush.bf16.msra.mxu0 %v4848
        %5559 = vmatpush.bf16.msra.mxu0 %v4847
        %5560 = vmatpush.bf16.msra.mxu0 %v4846
        %5561 = vmatpush.bf16.msra.mxu0 %v4845
        %5562 = vmatpush.bf16.msra.mxu0 %v4844
        %5563 = vmatmul.bf16.gmra.mxu0 %v4219
        %v5564 = vpop.f32.mrf.mxu0
        %v5565 = vadd.f32 %v5476, %v5564
        %v5566 = vpop.f32.mrf.mxu0
        %v5567 = vadd.f32 %v5478, %v5566
        %5568 = vmatmul.bf16.gmra.mxu0 %v4228
        %v5569 = vpop.f32.mrf.mxu0
        %v5570 = vadd.f32 %v5481, %v5569
        %v5571 = vpop.f32.mrf.mxu0
        %v5572 = vadd.f32 %v5483, %v5571
        %5573 = vmatmul.bf16.gmra.mxu0 %v4237
        %v5574 = vpop.f32.mrf.mxu0
        %v5575 = vadd.f32 %v5486, %v5574
        %v5576 = vpop.f32.mrf.mxu0
        %v5577 = vadd.f32 %v5488, %v5576
        %5578 = vmatmul.bf16.gmra.mxu0 %v4246
        %v5579 = vpop.f32.mrf.mxu0
        %v5580 = vadd.f32 %v5491, %v5579
        %v5581 = vpop.f32.mrf.mxu0
        %v5582 = vadd.f32 %v5493, %v5581
        %5583 = vmatmul.bf16.gmra.mxu0 %v4255
        %v5584 = vpop.f32.mrf.mxu0
        %v5585 = vadd.f32 %v5496, %v5584
        %v5586 = vpop.f32.mrf.mxu0
        %v5587 = vadd.f32 %v5498, %v5586
        %5588 = vmatmul.bf16.gmra.mxu0 %v4264
        %v5589 = vpop.f32.mrf.mxu0
        %v5590 = vadd.f32 %v5501, %v5589
        %v5591 = vpop.f32.mrf.mxu0
        %v5592 = vadd.f32 %v5503, %v5591
        %5593 = vmatmul.bf16.gmra.mxu0 %v4273
        %v5594 = vpop.f32.mrf.mxu0
        %v5595 = vadd.f32 %v5506, %v5594
        %v5596 = vpop.f32.mrf.mxu0
        %v5597 = vadd.f32 %v5508, %v5596
        %5598 = vmatmul.bf16.gmra.mxu0 %v4282
        %v5599 = vpop.f32.mrf.mxu0
        %v5600 = vadd.f32 %v5511, %v5599
        %v5601 = vpop.f32.mrf.mxu0
        %v5602 = vadd.f32 %v5513, %v5601
        %5603 = vmatmul.bf16.gmra.mxu0 %v4291
        %v5604 = vpop.f32.mrf.mxu0
        %v5605 = vadd.f32 %v5516, %v5604
        %v5606 = vpop.f32.mrf.mxu0
        %v5607 = vadd.f32 %v5518, %v5606
        %5608 = vmatmul.bf16.gmra.mxu0 %v4300
        %v5609 = vpop.f32.mrf.mxu0
        %v5610 = vadd.f32 %v5521, %v5609
        %v5611 = vpop.f32.mrf.mxu0
        %v5612 = vadd.f32 %v5523, %v5611
        %5613 = vmatmul.bf16.gmra.mxu0 %v4309
        %v5614 = vpop.f32.mrf.mxu0
        %v5615 = vadd.f32 %v5526, %v5614
        %v5616 = vpop.f32.mrf.mxu0
        %v5617 = vadd.f32 %v5528, %v5616
        %5618 = vmatmul.bf16.gmra.mxu0 %v4318
        %v5619 = vpop.f32.mrf.mxu0
        %v5620 = vadd.f32 %v5531, %v5619
        %v5621 = vpop.f32.mrf.mxu0
        %v5622 = vadd.f32 %v5533, %v5621
        %5623 = vmatmul.bf16.gmra.mxu0 %v4327
        %v5624 = vpop.f32.mrf.mxu0
        %v5625 = vadd.f32 %v5536, %v5624
        %v5626 = vpop.f32.mrf.mxu0
        %v5627 = vadd.f32 %v5538, %v5626
        %5628 = vmatmul.bf16.gmra.mxu0 %v4336
        %v5629 = vpop.f32.mrf.mxu0
        %v5630 = vadd.f32 %v5541, %v5629
        %v5631 = vpop.f32.mrf.mxu0
        %v5632 = vadd.f32 %v5543, %v5631
        %5633 = vmatmul.bf16.gmra.mxu0 %v4345
        %v5634 = vpop.f32.mrf.mxu0
        %v5635 = vadd.f32 %v5546, %v5634
        %v5636 = vpop.f32.mrf.mxu0
        %v5637 = vadd.f32 %v5548, %v5636
        %5638 = vmatmul.bf16.gmra.mxu0 %v4354
        %v5639 = vpop.f32.mrf.mxu0
        %v5640 = vadd.f32 %v5551, %v5639
        %v5641 = vpop.f32.mrf.mxu0
        %v5642 = vadd.f32 %v5553, %v5641
        %5643 = vdwg.mxu0
        %5644 = vmatpush.bf16.msra.mxu0 %v4859
        %5645 = vmatpush.bf16.msra.mxu0 %v4858
        %5646 = vmatpush.bf16.msra.mxu0 %v4857
        %5647 = vmatpush.bf16.msra.mxu0 %v4856
        %5648 = vmatpush.bf16.msra.mxu0 %v4855
        %5649 = vmatpush.bf16.msra.mxu0 %v4854
        %5650 = vmatpush.bf16.msra.mxu0 %v4853
        %5651 = vmatpush.bf16.msra.mxu0 %v4852
        %5652 = vmatmul.bf16.gmra.mxu0 %v4220
        %v5653 = vpop.f32.mrf.mxu0
        %v5654 = vadd.f32 %v5565, %v5653
        %v5655 = vpop.f32.mrf.mxu0
        %v5656 = vadd.f32 %v5567, %v5655
        %5657 = vmatmul.bf16.gmra.mxu0 %v4229
        %v5658 = vpop.f32.mrf.mxu0
        %v5659 = vadd.f32 %v5570, %v5658
        %v5660 = vpop.f32.mrf.mxu0
        %v5661 = vadd.f32 %v5572, %v5660
        %5662 = vmatmul.bf16.gmra.mxu0 %v4238
        %v5663 = vpop.f32.mrf.mxu0
        %v5664 = vadd.f32 %v5575, %v5663
        %v5665 = vpop.f32.mrf.mxu0
        %v5666 = vadd.f32 %v5577, %v5665
        %5667 = vmatmul.bf16.gmra.mxu0 %v4247
        %v5668 = vpop.f32.mrf.mxu0
        %v5669 = vadd.f32 %v5580, %v5668
        %v5670 = vpop.f32.mrf.mxu0
        %v5671 = vadd.f32 %v5582, %v5670
        %5672 = vmatmul.bf16.gmra.mxu0 %v4256
        %v5673 = vpop.f32.mrf.mxu0
        %v5674 = vadd.f32 %v5585, %v5673
        %v5675 = vpop.f32.mrf.mxu0
        %v5676 = vadd.f32 %v5587, %v5675
        %5677 = vmatmul.bf16.gmra.mxu0 %v4265
        %v5678 = vpop.f32.mrf.mxu0
        %v5679 = vadd.f32 %v5590, %v5678
        %v5680 = vpop.f32.mrf.mxu0
        %v5681 = vadd.f32 %v5592, %v5680
        %5682 = vmatmul.bf16.gmra.mxu0 %v4274
        %v5683 = vpop.f32.mrf.mxu0
        %v5684 = vadd.f32 %v5595, %v5683
        %v5685 = vpop.f32.mrf.mxu0
        %v5686 = vadd.f32 %v5597, %v5685
        %5687 = vmatmul.bf16.gmra.mxu0 %v4283
        %v5688 = vpop.f32.mrf.mxu0
        %v5689 = vadd.f32 %v5600, %v5688
        %v5690 = vpop.f32.mrf.mxu0
        %v5691 = vadd.f32 %v5602, %v5690
        %5692 = vmatmul.bf16.gmra.mxu0 %v4292
        %v5693 = vpop.f32.mrf.mxu0
        %v5694 = vadd.f32 %v5605, %v5693
        %v5695 = vpop.f32.mrf.mxu0
        %v5696 = vadd.f32 %v5607, %v5695
        %5697 = vmatmul.bf16.gmra.mxu0 %v4301
        %v5698 = vpop.f32.mrf.mxu0
        %v5699 = vadd.f32 %v5610, %v5698
        %v5700 = vpop.f32.mrf.mxu0
        %v5701 = vadd.f32 %v5612, %v5700
        %5702 = vmatmul.bf16.gmra.mxu0 %v4310
        %v5703 = vpop.f32.mrf.mxu0
        %v5704 = vadd.f32 %v5615, %v5703
        %v5705 = vpop.f32.mrf.mxu0
        %v5706 = vadd.f32 %v5617, %v5705
        %5707 = vmatmul.bf16.gmra.mxu0 %v4319
        %v5708 = vpop.f32.mrf.mxu0
        %v5709 = vadd.f32 %v5620, %v5708
        %v5710 = vpop.f32.mrf.mxu0
        %v5711 = vadd.f32 %v5622, %v5710
        %5712 = vmatmul.bf16.gmra.mxu0 %v4328
        %v5713 = vpop.f32.mrf.mxu0
        %v5714 = vadd.f32 %v5625, %v5713
        %v5715 = vpop.f32.mrf.mxu0
        %v5716 = vadd.f32 %v5627, %v5715
        %5717 = vmatmul.bf16.gmra.mxu0 %v4337
        %v5718 = vpop.f32.mrf.mxu0
        %v5719 = vadd.f32 %v5630, %v5718
        %v5720 = vpop.f32.mrf.mxu0
        %v5721 = vadd.f32 %v5632, %v5720
        %5722 = vmatmul.bf16.gmra.mxu0 %v4346
        %v5723 = vpop.f32.mrf.mxu0
        %v5724 = vadd.f32 %v5635, %v5723
        %v5725 = vpop.f32.mrf.mxu0
        %v5726 = vadd.f32 %v5637, %v5725
        %5727 = vmatmul.bf16.gmra.mxu0 %v4355
        %v5728 = vpop.f32.mrf.mxu0
        %v5729 = vadd.f32 %v5640, %v5728
        %v5730 = vpop.f32.mrf.mxu0
        %v5731 = vadd.f32 %v5642, %v5730
        %5732 = vdwg.mxu0
        %v5733 = vmul.f32 %v5654, %v5654
        %v5734 = vmul.f32 %v5656, %v5656
        %v5735 = vmul.f32 %v5659, %v5659
        %v5736 = vmul.f32 %v5661, %v5661
        %v5737 = vmul.f32 %v5664, %v5664
        %v5738 = vmul.f32 %v5666, %v5666
        %v5739 = vmul.f32 %v5669, %v5669
        %v5740 = vmul.f32 %v5671, %v5671
        %v5741 = vmul.f32 %v5674, %v5674
        %v5742 = vmul.f32 %v5676, %v5676
        %v5743 = vmul.f32 %v5679, %v5679
        %v5744 = vmul.f32 %v5681, %v5681
        %v5745 = vmul.f32 %v5684, %v5684
        %v5746 = vmul.f32 %v5686, %v5686
        %v5747 = vmul.f32 %v5689, %v5689
        %v5748 = vmul.f32 %v5691, %v5691
        %v5749 = vmul.f32 %v5694, %v5694
        %v5750 = vmul.f32 %v5696, %v5696
        %v5751 = vmul.f32 %v5699, %v5699
        %v5752 = vmul.f32 %v5701, %v5701
        %v5753 = vmul.f32 %v5704, %v5704
        %v5754 = vmul.f32 %v5706, %v5706
        %v5755 = vmul.f32 %v5709, %v5709
        %v5756 = vmul.f32 %v5711, %v5711
        %v5757 = vmul.f32 %v5714, %v5714
        %v5758 = vmul.f32 %v5716, %v5716
        %v5759 = vmul.f32 %v5719, %v5719
        %v5760 = vmul.f32 %v5721, %v5721
        %v5761 = vmul.f32 %v5724, %v5724
        %v5762 = vmul.f32 %v5726, %v5726
        %v5763 = vmul.f32 %v5729, %v5729
        %v5764 = vmul.f32 %v5731, %v5731
        %v5765 = vpack.c.bf16 %v5734, %v5733
        %v5766 = vpack.c.bf16 %v5736, %v5735
        %v5767 = vpack.c.bf16 %v5738, %v5737
        %v5768 = vpack.c.bf16 %v5740, %v5739
        %v5769 = vpack.c.bf16 %v5742, %v5741
        %v5770 = vpack.c.bf16 %v5744, %v5743
        %v5771 = vpack.c.bf16 %v5746, %v5745
        %v5772 = vpack.c.bf16 %v5748, %v5747
        %v5773 = vpack.c.bf16 %v5750, %v5749
        %v5774 = vpack.c.bf16 %v5752, %v5751
        %v5775 = vpack.c.bf16 %v5754, %v5753
        %v5776 = vpack.c.bf16 %v5756, %v5755
        %v5777 = vpack.c.bf16 %v5758, %v5757
        %v5778 = vpack.c.bf16 %v5760, %v5759
        %v5779 = vpack.c.bf16 %v5762, %v5761
        %v5780 = vpack.c.bf16 %v5764, %v5763
        %v5781 = vld [vmem:[%s3] sm:$0xf]
        %v5782 = vld [vmem:[%s3 + $0x4] sm:$0xf]
        %v5783 = vld [vmem:[%s3 + $0x8] sm:$0xf]
        %v5784 = vld [vmem:[%s3 + $0xc] sm:$0xf]
        %v5785 = vld [vmem:[%s3 + $0x10] sm:$0xf]
        %v5786 = vld [vmem:[%s3 + $0x14] sm:$0xf]
        %v5787 = vld [vmem:[%s3 + $0x18] sm:$0xf]
        %v5788 = vld [vmem:[%s3 + $0x1c] sm:$0xf]
        %v5789 = vld [vmem:[%s3 + $0x20] sm:$0xf]
        %v5790 = vld [vmem:[%s3 + $0x24] sm:$0xf]
        %v5791 = vld [vmem:[%s3 + $0x28] sm:$0xf]
        %v5792 = vld [vmem:[%s3 + $0x2c] sm:$0xf]
        %v5793 = vld [vmem:[%s3 + $0x30] sm:$0xf]
        %v5794 = vld [vmem:[%s3 + $0x34] sm:$0xf]
        %v5795 = vld [vmem:[%s3 + $0x38] sm:$0xf]
        %v5796 = vld [vmem:[%s3 + $0x3c] sm:$0xf]
        %v5797 = vld [vmem:[%s4] sm:$0x1]
        %v5799 = vperm.slane %v5797, 0
        %v5817 = vunpack.c.l.b16 %v5781
        %v5818 = vunpack.c.l.b16 %v5782
        %v5819 = vunpack.c.l.b16 %v5783
        %v5820 = vunpack.c.l.b16 %v5784
        %v5821 = vunpack.c.l.b16 %v5785
        %v5822 = vunpack.c.l.b16 %v5786
        %v5823 = vunpack.c.l.b16 %v5787
        %v5824 = vunpack.c.l.b16 %v5788
        %v5825 = vunpack.c.l.b16 %v5789
        %v5826 = vunpack.c.l.b16 %v5790
        %v5827 = vunpack.c.l.b16 %v5791
        %v5828 = vunpack.c.l.b16 %v5792
        %v5829 = vunpack.c.l.b16 %v5793
        %v5830 = vunpack.c.l.b16 %v5794
        %v5831 = vunpack.c.l.b16 %v5795
        %v5832 = vunpack.c.l.b16 %v5796
        %v5833 = vpack.c.b16 %v5818, %v5817
        %v5834 = vpack.c.b16 %v5820, %v5819
        %v5835 = vpack.c.b16 %v5822, %v5821
        %v5836 = vpack.c.b16 %v5824, %v5823
        %v5837 = vpack.c.b16 %v5826, %v5825
        %v5838 = vpack.c.b16 %v5828, %v5827
        %v5839 = vpack.c.b16 %v5830, %v5829
        %v5840 = vpack.c.b16 %v5832, %v5831
        %5849 = vmatpush.bf16.msra.mxu0 %v5840
        %5850 = vmatpush.bf16.msra.mxu0 %v5839
        %5851 = vmatpush.bf16.msra.mxu0 %v5838
        %5852 = vmatpush.bf16.msra.mxu0 %v5837
        %5853 = vmatpush.bf16.msra.mxu0 %v5836
        %5854 = vmatpush.bf16.msra.mxu0 %v5835
        %5855 = vmatpush.bf16.msra.mxu0 %v5834
        %5856 = vmatpush.bf16.msra.mxu0 %v5833
        %5857 = vmatmul.bf16.gmra.mxu0 %v5765
        %v5858 = vpop.f32.mrf.mxu0
        %v5859 = vadd.f32 %v5799, %v5858
        %v5860 = vpop.f32.mrf.mxu0
        %v5861 = vadd.f32 %v5799, %v5860
        %5862 = vmatmul.bf16.gmra.mxu0 %v5766
        %v5863 = vpop.f32.mrf.mxu0
        %v5864 = vadd.f32 %v5799, %v5863
        %v5865 = vpop.f32.mrf.mxu0
        %v5866 = vadd.f32 %v5799, %v5865
        %5867 = vmatmul.bf16.gmra.mxu0 %v5767
        %v5868 = vpop.f32.mrf.mxu0
        %v5869 = vadd.f32 %v5799, %v5868
        %v5870 = vpop.f32.mrf.mxu0
        %v5871 = vadd.f32 %v5799, %v5870
        %5872 = vmatmul.bf16.gmra.mxu0 %v5768
        %v5873 = vpop.f32.mrf.mxu0
        %v5874 = vadd.f32 %v5799, %v5873
        %v5875 = vpop.f32.mrf.mxu0
        %v5876 = vadd.f32 %v5799, %v5875
        %5877 = vmatmul.bf16.gmra.mxu0 %v5769
        %v5878 = vpop.f32.mrf.mxu0
        %v5879 = vadd.f32 %v5799, %v5878
        %v5880 = vpop.f32.mrf.mxu0
        %v5881 = vadd.f32 %v5799, %v5880
        %5882 = vmatmul.bf16.gmra.mxu0 %v5770
        %v5883 = vpop.f32.mrf.mxu0
        %v5884 = vadd.f32 %v5799, %v5883
        %v5885 = vpop.f32.mrf.mxu0
        %v5886 = vadd.f32 %v5799, %v5885
        %5887 = vmatmul.bf16.gmra.mxu0 %v5771
        %v5888 = vpop.f32.mrf.mxu0
        %v5889 = vadd.f32 %v5799, %v5888
        %v5890 = vpop.f32.mrf.mxu0
        %v5891 = vadd.f32 %v5799, %v5890
        %5892 = vmatmul.bf16.gmra.mxu0 %v5772
        %v5893 = vpop.f32.mrf.mxu0
        %v5894 = vadd.f32 %v5799, %v5893
        %v5895 = vpop.f32.mrf.mxu0
        %v5896 = vadd.f32 %v5799, %v5895
        %5897 = vmatmul.bf16.gmra.mxu0 %v5773
        %v5898 = vpop.f32.mrf.mxu0
        %v5899 = vadd.f32 %v5799, %v5898
        %v5900 = vpop.f32.mrf.mxu0
        %v5901 = vadd.f32 %v5799, %v5900
        %5902 = vmatmul.bf16.gmra.mxu0 %v5774
        %v5903 = vpop.f32.mrf.mxu0
        %v5904 = vadd.f32 %v5799, %v5903
        %v5905 = vpop.f32.mrf.mxu0
        %v5906 = vadd.f32 %v5799, %v5905
        %5907 = vmatmul.bf16.gmra.mxu0 %v5775
        %v5908 = vpop.f32.mrf.mxu0
        %v5909 = vadd.f32 %v5799, %v5908
        %v5910 = vpop.f32.mrf.mxu0
        %v5911 = vadd.f32 %v5799, %v5910
        %5912 = vmatmul.bf16.gmra.mxu0 %v5776
        %v5913 = vpop.f32.mrf.mxu0
        %v5914 = vadd.f32 %v5799, %v5913
        %v5915 = vpop.f32.mrf.mxu0
        %v5916 = vadd.f32 %v5799, %v5915
        %5917 = vmatmul.bf16.gmra.mxu0 %v5777
        %v5918 = vpop.f32.mrf.mxu0
        %v5919 = vadd.f32 %v5799, %v5918
        %v5920 = vpop.f32.mrf.mxu0
        %v5921 = vadd.f32 %v5799, %v5920
        %5922 = vmatmul.bf16.gmra.mxu0 %v5778
        %v5923 = vpop.f32.mrf.mxu0
        %v5924 = vadd.f32 %v5799, %v5923
        %v5925 = vpop.f32.mrf.mxu0
        %v5926 = vadd.f32 %v5799, %v5925
        %5927 = vmatmul.bf16.gmra.mxu0 %v5779
        %v5928 = vpop.f32.mrf.mxu0
        %v5929 = vadd.f32 %v5799, %v5928
        %v5930 = vpop.f32.mrf.mxu0
        %v5931 = vadd.f32 %v5799, %v5930
        %5932 = vmatmul.bf16.gmra.mxu0 %v5780
        %v5933 = vpop.f32.mrf.mxu0
        %v5934 = vadd.f32 %v5799, %v5933
        %v5935 = vpop.f32.mrf.mxu0
        %v5936 = vadd.f32 %v5799, %v5935
        %5937 = vdwg.mxu0
        %v5938 = vrsqrt.pop %v5859
        %v5939 = vmul.f32 %v5938, %v5859
        %v5940 = vmul.f32 %v5939, %v5938
        %v5941 = vmul.f32 0.5, %v5940
        %v5942 = vsub.f32 1.5, %v5941
        %v5943 = vmul.f32 %v5938, %v5942
        %vm5944 = vweird.f32 %v5859
        %vm5945 = vweird.f32 %v5938
        %vm5946 = vmor %vm5944, %vm5945
        %v5947 = vsel %vm5946, %v5938, %v5943
        %v5948 = vrsqrt.pop %v5861
        %v5949 = vmul.f32 %v5948, %v5861
        %v5950 = vmul.f32 %v5949, %v5948
        %v5951 = vmul.f32 0.5, %v5950
        %v5952 = vsub.f32 1.5, %v5951
        %v5953 = vmul.f32 %v5948, %v5952
        %vm5954 = vweird.f32 %v5861
        %vm5955 = vweird.f32 %v5948
        %vm5956 = vmor %vm5954, %vm5955
        %v5957 = vsel %vm5956, %v5948, %v5953
        %v5958 = vrsqrt.pop %v5864
        %v5959 = vmul.f32 %v5958, %v5864
        %v5960 = vmul.f32 %v5959, %v5958
        %v5961 = vmul.f32 0.5, %v5960
        %v5962 = vsub.f32 1.5, %v5961
        %v5963 = vmul.f32 %v5958, %v5962
        %vm5964 = vweird.f32 %v5864
        %vm5965 = vweird.f32 %v5958
        %vm5966 = vmor %vm5964, %vm5965
        %v5967 = vsel %vm5966, %v5958, %v5963
        %v5968 = vrsqrt.pop %v5866
        %v5969 = vmul.f32 %v5968, %v5866
        %v5970 = vmul.f32 %v5969, %v5968
        %v5971 = vmul.f32 0.5, %v5970
        %v5972 = vsub.f32 1.5, %v5971
        %v5973 = vmul.f32 %v5968, %v5972
        %vm5974 = vweird.f32 %v5866
        %vm5975 = vweird.f32 %v5968
        %vm5976 = vmor %vm5974, %vm5975
        %v5977 = vsel %vm5976, %v5968, %v5973
        %v5978 = vrsqrt.pop %v5869
        %v5979 = vmul.f32 %v5978, %v5869
        %v5980 = vmul.f32 %v5979, %v5978
        %v5981 = vmul.f32 0.5, %v5980
        %v5982 = vsub.f32 1.5, %v5981
        %v5983 = vmul.f32 %v5978, %v5982
        %vm5984 = vweird.f32 %v5869
        %vm5985 = vweird.f32 %v5978
        %vm5986 = vmor %vm5984, %vm5985
        %v5987 = vsel %vm5986, %v5978, %v5983
        %v5988 = vrsqrt.pop %v5871
        %v5989 = vmul.f32 %v5988, %v5871
        %v5990 = vmul.f32 %v5989, %v5988
        %v5991 = vmul.f32 0.5, %v5990
        %v5992 = vsub.f32 1.5, %v5991
        %v5993 = vmul.f32 %v5988, %v5992
        %vm5994 = vweird.f32 %v5871
        %vm5995 = vweird.f32 %v5988
        %vm5996 = vmor %vm5994, %vm5995
        %v5997 = vsel %vm5996, %v5988, %v5993
        %v5998 = vrsqrt.pop %v5874
        %v5999 = vmul.f32 %v5998, %v5874
        %v6000 = vmul.f32 %v5999, %v5998
        %v6001 = vmul.f32 0.5, %v6000
        %v6002 = vsub.f32 1.5, %v6001
        %v6003 = vmul.f32 %v5998, %v6002
        %vm6004 = vweird.f32 %v5874
        %vm6005 = vweird.f32 %v5998
        %vm6006 = vmor %vm6004, %vm6005
        %v6007 = vsel %vm6006, %v5998, %v6003
        %v6008 = vrsqrt.pop %v5876
        %v6009 = vmul.f32 %v6008, %v5876
        %v6010 = vmul.f32 %v6009, %v6008
        %v6011 = vmul.f32 0.5, %v6010
        %v6012 = vsub.f32 1.5, %v6011
        %v6013 = vmul.f32 %v6008, %v6012
        %vm6014 = vweird.f32 %v5876
        %vm6015 = vweird.f32 %v6008
        %vm6016 = vmor %vm6014, %vm6015
        %v6017 = vsel %vm6016, %v6008, %v6013
        %v6018 = vrsqrt.pop %v5879
        %v6019 = vmul.f32 %v6018, %v5879
        %v6020 = vmul.f32 %v6019, %v6018
        %v6021 = vmul.f32 0.5, %v6020
        %v6022 = vsub.f32 1.5, %v6021
        %v6023 = vmul.f32 %v6018, %v6022
        %vm6024 = vweird.f32 %v5879
        %vm6025 = vweird.f32 %v6018
        %vm6026 = vmor %vm6024, %vm6025
        %v6027 = vsel %vm6026, %v6018, %v6023
        %v6028 = vrsqrt.pop %v5881
        %v6029 = vmul.f32 %v6028, %v5881
        %v6030 = vmul.f32 %v6029, %v6028
        %v6031 = vmul.f32 0.5, %v6030
        %v6032 = vsub.f32 1.5, %v6031
        %v6033 = vmul.f32 %v6028, %v6032
        %vm6034 = vweird.f32 %v5881
        %vm6035 = vweird.f32 %v6028
        %vm6036 = vmor %vm6034, %vm6035
        %v6037 = vsel %vm6036, %v6028, %v6033
        %v6038 = vrsqrt.pop %v5884
        %v6039 = vmul.f32 %v6038, %v5884
        %v6040 = vmul.f32 %v6039, %v6038
        %v6041 = vmul.f32 0.5, %v6040
        %v6042 = vsub.f32 1.5, %v6041
        %v6043 = vmul.f32 %v6038, %v6042
        %vm6044 = vweird.f32 %v5884
        %vm6045 = vweird.f32 %v6038
        %vm6046 = vmor %vm6044, %vm6045
        %v6047 = vsel %vm6046, %v6038, %v6043
        %v6048 = vrsqrt.pop %v5886
        %v6049 = vmul.f32 %v6048, %v5886
        %v6050 = vmul.f32 %v6049, %v6048
        %v6051 = vmul.f32 0.5, %v6050
        %v6052 = vsub.f32 1.5, %v6051
        %v6053 = vmul.f32 %v6048, %v6052
        %vm6054 = vweird.f32 %v5886
        %vm6055 = vweird.f32 %v6048
        %vm6056 = vmor %vm6054, %vm6055
        %v6057 = vsel %vm6056, %v6048, %v6053
        %v6058 = vrsqrt.pop %v5889
        %v6059 = vmul.f32 %v6058, %v5889
        %v6060 = vmul.f32 %v6059, %v6058
        %v6061 = vmul.f32 0.5, %v6060
        %v6062 = vsub.f32 1.5, %v6061
        %v6063 = vmul.f32 %v6058, %v6062
        %vm6064 = vweird.f32 %v5889
        %vm6065 = vweird.f32 %v6058
        %vm6066 = vmor %vm6064, %vm6065
        %v6067 = vsel %vm6066, %v6058, %v6063
        %v6068 = vrsqrt.pop %v5891
        %v6069 = vmul.f32 %v6068, %v5891
        %v6070 = vmul.f32 %v6069, %v6068
        %v6071 = vmul.f32 0.5, %v6070
        %v6072 = vsub.f32 1.5, %v6071
        %v6073 = vmul.f32 %v6068, %v6072
        %vm6074 = vweird.f32 %v5891
        %vm6075 = vweird.f32 %v6068
        %vm6076 = vmor %vm6074, %vm6075
        %v6077 = vsel %vm6076, %v6068, %v6073
        %v6078 = vrsqrt.pop %v5894
        %v6079 = vmul.f32 %v6078, %v5894
        %v6080 = vmul.f32 %v6079, %v6078
        %v6081 = vmul.f32 0.5, %v6080
        %v6082 = vsub.f32 1.5, %v6081
        %v6083 = vmul.f32 %v6078, %v6082
        %vm6084 = vweird.f32 %v5894
        %vm6085 = vweird.f32 %v6078
        %vm6086 = vmor %vm6084, %vm6085
        %v6087 = vsel %vm6086, %v6078, %v6083
        %v6088 = vrsqrt.pop %v5896
        %v6089 = vmul.f32 %v6088, %v5896
        %v6090 = vmul.f32 %v6089, %v6088
        %v6091 = vmul.f32 0.5, %v6090
        %v6092 = vsub.f32 1.5, %v6091
        %v6093 = vmul.f32 %v6088, %v6092
        %vm6094 = vweird.f32 %v5896
        %vm6095 = vweird.f32 %v6088
        %vm6096 = vmor %vm6094, %vm6095
        %v6097 = vsel %vm6096, %v6088, %v6093
        %v6098 = vrsqrt.pop %v5899
        %v6099 = vmul.f32 %v6098, %v5899
        %v6100 = vmul.f32 %v6099, %v6098
        %v6101 = vmul.f32 0.5, %v6100
        %v6102 = vsub.f32 1.5, %v6101
        %v6103 = vmul.f32 %v6098, %v6102
        %vm6104 = vweird.f32 %v5899
        %vm6105 = vweird.f32 %v6098
        %vm6106 = vmor %vm6104, %vm6105
        %v6107 = vsel %vm6106, %v6098, %v6103
        %v6108 = vrsqrt.pop %v5901
        %v6109 = vmul.f32 %v6108, %v5901
        %v6110 = vmul.f32 %v6109, %v6108
        %v6111 = vmul.f32 0.5, %v6110
        %v6112 = vsub.f32 1.5, %v6111
        %v6113 = vmul.f32 %v6108, %v6112
        %vm6114 = vweird.f32 %v5901
        %vm6115 = vweird.f32 %v6108
        %vm6116 = vmor %vm6114, %vm6115
        %v6117 = vsel %vm6116, %v6108, %v6113
        %v6118 = vrsqrt.pop %v5904
        %v6119 = vmul.f32 %v6118, %v5904
        %v6120 = vmul.f32 %v6119, %v6118
        %v6121 = vmul.f32 0.5, %v6120
        %v6122 = vsub.f32 1.5, %v6121
        %v6123 = vmul.f32 %v6118, %v6122
        %vm6124 = vweird.f32 %v5904
        %vm6125 = vweird.f32 %v6118
        %vm6126 = vmor %vm6124, %vm6125
        %v6127 = vsel %vm6126, %v6118, %v6123
        %v6128 = vrsqrt.pop %v5906
        %v6129 = vmul.f32 %v6128, %v5906
        %v6130 = vmul.f32 %v6129, %v6128
        %v6131 = vmul.f32 0.5, %v6130
        %v6132 = vsub.f32 1.5, %v6131
        %v6133 = vmul.f32 %v6128, %v6132
        %vm6134 = vweird.f32 %v5906
        %vm6135 = vweird.f32 %v6128
        %vm6136 = vmor %vm6134, %vm6135
        %v6137 = vsel %vm6136, %v6128, %v6133
        %v6138 = vrsqrt.pop %v5909
        %v6139 = vmul.f32 %v6138, %v5909
        %v6140 = vmul.f32 %v6139, %v6138
        %v6141 = vmul.f32 0.5, %v6140
        %v6142 = vsub.f32 1.5, %v6141
        %v6143 = vmul.f32 %v6138, %v6142
        %vm6144 = vweird.f32 %v5909
        %vm6145 = vweird.f32 %v6138
        %vm6146 = vmor %vm6144, %vm6145
        %v6147 = vsel %vm6146, %v6138, %v6143
        %v6148 = vrsqrt.pop %v5911
        %v6149 = vmul.f32 %v6148, %v5911
        %v6150 = vmul.f32 %v6149, %v6148
        %v6151 = vmul.f32 0.5, %v6150
        %v6152 = vsub.f32 1.5, %v6151
        %v6153 = vmul.f32 %v6148, %v6152
        %vm6154 = vweird.f32 %v5911
        %vm6155 = vweird.f32 %v6148
        %vm6156 = vmor %vm6154, %vm6155
        %v6157 = vsel %vm6156, %v6148, %v6153
        %v6158 = vrsqrt.pop %v5914
        %v6159 = vmul.f32 %v6158, %v5914
        %v6160 = vmul.f32 %v6159, %v6158
        %v6161 = vmul.f32 0.5, %v6160
        %v6162 = vsub.f32 1.5, %v6161
        %v6163 = vmul.f32 %v6158, %v6162
        %vm6164 = vweird.f32 %v5914
        %vm6165 = vweird.f32 %v6158
        %vm6166 = vmor %vm6164, %vm6165
        %v6167 = vsel %vm6166, %v6158, %v6163
        %v6168 = vrsqrt.pop %v5916
        %v6169 = vmul.f32 %v6168, %v5916
        %v6170 = vmul.f32 %v6169, %v6168
        %v6171 = vmul.f32 0.5, %v6170
        %v6172 = vsub.f32 1.5, %v6171
        %v6173 = vmul.f32 %v6168, %v6172
        %vm6174 = vweird.f32 %v5916
        %vm6175 = vweird.f32 %v6168
        %vm6176 = vmor %vm6174, %vm6175
        %v6177 = vsel %vm6176, %v6168, %v6173
        %v6178 = vrsqrt.pop %v5919
        %v6179 = vmul.f32 %v6178, %v5919
        %v6180 = vmul.f32 %v6179, %v6178
        %v6181 = vmul.f32 0.5, %v6180
        %v6182 = vsub.f32 1.5, %v6181
        %v6183 = vmul.f32 %v6178, %v6182
        %vm6184 = vweird.f32 %v5919
        %vm6185 = vweird.f32 %v6178
        %vm6186 = vmor %vm6184, %vm6185
        %v6187 = vsel %vm6186, %v6178, %v6183
        %v6188 = vrsqrt.pop %v5921
        %v6189 = vmul.f32 %v6188, %v5921
        %v6190 = vmul.f32 %v6189, %v6188
        %v6191 = vmul.f32 0.5, %v6190
        %v6192 = vsub.f32 1.5, %v6191
        %v6193 = vmul.f32 %v6188, %v6192
        %vm6194 = vweird.f32 %v5921
        %vm6195 = vweird.f32 %v6188
        %vm6196 = vmor %vm6194, %vm6195
        %v6197 = vsel %vm6196, %v6188, %v6193
        %v6198 = vrsqrt.pop %v5924
        %v6199 = vmul.f32 %v6198, %v5924
        %v6200 = vmul.f32 %v6199, %v6198
        %v6201 = vmul.f32 0.5, %v6200
        %v6202 = vsub.f32 1.5, %v6201
        %v6203 = vmul.f32 %v6198, %v6202
        %vm6204 = vweird.f32 %v5924
        %vm6205 = vweird.f32 %v6198
        %vm6206 = vmor %vm6204, %vm6205
        %v6207 = vsel %vm6206, %v6198, %v6203
        %v6208 = vrsqrt.pop %v5926
        %v6209 = vmul.f32 %v6208, %v5926
        %v6210 = vmul.f32 %v6209, %v6208
        %v6211 = vmul.f32 0.5, %v6210
        %v6212 = vsub.f32 1.5, %v6211
        %v6213 = vmul.f32 %v6208, %v6212
        %vm6214 = vweird.f32 %v5926
        %vm6215 = vweird.f32 %v6208
        %vm6216 = vmor %vm6214, %vm6215
        %v6217 = vsel %vm6216, %v6208, %v6213
        %v6218 = vrsqrt.pop %v5929
        %v6219 = vmul.f32 %v6218, %v5929
        %v6220 = vmul.f32 %v6219, %v6218
        %v6221 = vmul.f32 0.5, %v6220
        %v6222 = vsub.f32 1.5, %v6221
        %v6223 = vmul.f32 %v6218, %v6222
        %vm6224 = vweird.f32 %v5929
        %vm6225 = vweird.f32 %v6218
        %vm6226 = vmor %vm6224, %vm6225
        %v6227 = vsel %vm6226, %v6218, %v6223
        %v6228 = vrsqrt.pop %v5931
        %v6229 = vmul.f32 %v6228, %v5931
        %v6230 = vmul.f32 %v6229, %v6228
        %v6231 = vmul.f32 0.5, %v6230
        %v6232 = vsub.f32 1.5, %v6231
        %v6233 = vmul.f32 %v6228, %v6232
        %vm6234 = vweird.f32 %v5931
        %vm6235 = vweird.f32 %v6228
        %vm6236 = vmor %vm6234, %vm6235
        %v6237 = vsel %vm6236, %v6228, %v6233
        %v6238 = vrsqrt.pop %v5934
        %v6239 = vmul.f32 %v6238, %v5934
        %v6240 = vmul.f32 %v6239, %v6238
        %v6241 = vmul.f32 0.5, %v6240
        %v6242 = vsub.f32 1.5, %v6241
        %v6243 = vmul.f32 %v6238, %v6242
        %vm6244 = vweird.f32 %v5934
        %vm6245 = vweird.f32 %v6238
        %vm6246 = vmor %vm6244, %vm6245
        %v6247 = vsel %vm6246, %v6238, %v6243
        %v6248 = vrsqrt.pop %v5936
        %v6249 = vmul.f32 %v6248, %v5936
        %v6250 = vmul.f32 %v6249, %v6248
        %v6251 = vmul.f32 0.5, %v6250
        %v6252 = vsub.f32 1.5, %v6251
        %v6253 = vmul.f32 %v6248, %v6252
        %vm6254 = vweird.f32 %v5936
        %vm6255 = vweird.f32 %v6248
        %vm6256 = vmor %vm6254, %vm6255
        %v6257 = vsel %vm6256, %v6248, %v6253
        %v6258 = vmul.f32 %v5654, %v5947
        %v6259 = vmul.f32 %v5656, %v5957
        %v6260 = vmul.f32 %v5659, %v5967
        %v6261 = vmul.f32 %v5661, %v5977
        %v6262 = vmul.f32 %v5664, %v5987
        %v6263 = vmul.f32 %v5666, %v5997
        %v6264 = vmul.f32 %v5669, %v6007
        %v6265 = vmul.f32 %v5671, %v6017
        %v6266 = vmul.f32 %v5674, %v6027
        %v6267 = vmul.f32 %v5676, %v6037
        %v6268 = vmul.f32 %v5679, %v6047
        %v6269 = vmul.f32 %v5681, %v6057
        %v6270 = vmul.f32 %v5684, %v6067
        %v6271 = vmul.f32 %v5686, %v6077
        %v6272 = vmul.f32 %v5689, %v6087
        %v6273 = vmul.f32 %v5691, %v6097
        %v6274 = vmul.f32 %v5694, %v6107
        %v6275 = vmul.f32 %v5696, %v6117
        %v6276 = vmul.f32 %v5699, %v6127
        %v6277 = vmul.f32 %v5701, %v6137
        %v6278 = vmul.f32 %v5704, %v6147
        %v6279 = vmul.f32 %v5706, %v6157
        %v6280 = vmul.f32 %v5709, %v6167
        %v6281 = vmul.f32 %v5711, %v6177
        %v6282 = vmul.f32 %v5714, %v6187
        %v6283 = vmul.f32 %v5716, %v6197
        %v6284 = vmul.f32 %v5719, %v6207
        %v6285 = vmul.f32 %v5721, %v6217
        %v6286 = vmul.f32 %v5724, %v6227
        %v6287 = vmul.f32 %v5726, %v6237
        %v6288 = vmul.f32 %v5729, %v6247
        %v6289 = vmul.f32 %v5731, %v6257
        %v6290 = vpack.c.bf16 %v6258, %v6258
        %v6291 = vpack.c.bf16 %v6259, %v6259
        %v6292 = vpack.c.bf16 %v6260, %v6260
        %v6293 = vpack.c.bf16 %v6261, %v6261
        %v6294 = vpack.c.bf16 %v6262, %v6262
        %v6295 = vpack.c.bf16 %v6263, %v6263
        %v6296 = vpack.c.bf16 %v6264, %v6264
        %v6297 = vpack.c.bf16 %v6265, %v6265
        %v6298 = vpack.c.bf16 %v6266, %v6266
        %v6299 = vpack.c.bf16 %v6267, %v6267
        %v6300 = vpack.c.bf16 %v6268, %v6268
        %v6301 = vpack.c.bf16 %v6269, %v6269
        %v6302 = vpack.c.bf16 %v6270, %v6270
        %v6303 = vpack.c.bf16 %v6271, %v6271
        %v6304 = vpack.c.bf16 %v6272, %v6272
        %v6305 = vpack.c.bf16 %v6273, %v6273
        %v6306 = vpack.c.bf16 %v6274, %v6274
        %v6307 = vpack.c.bf16 %v6275, %v6275
        %v6308 = vpack.c.bf16 %v6276, %v6276
        %v6309 = vpack.c.bf16 %v6277, %v6277
        %v6310 = vpack.c.bf16 %v6278, %v6278
        %v6311 = vpack.c.bf16 %v6279, %v6279
        %v6312 = vpack.c.bf16 %v6280, %v6280
        %v6313 = vpack.c.bf16 %v6281, %v6281
        %v6314 = vpack.c.bf16 %v6282, %v6282
        %v6315 = vpack.c.bf16 %v6283, %v6283
        %v6316 = vpack.c.bf16 %v6284, %v6284
        %v6317 = vpack.c.bf16 %v6285, %v6285
        %v6318 = vpack.c.bf16 %v6286, %v6286
        %v6319 = vpack.c.bf16 %v6287, %v6287
        %v6320 = vpack.c.bf16 %v6288, %v6288
        %v6321 = vpack.c.bf16 %v6289, %v6289
        %v6323 = vshrl.u32 %v6290, 16
        %v6325 = vrot.slane %v6323, 7
        %v6326 = vshll.u32 %v6290, 16
        %v6328 = vor.u32 %v6325, %v6326
        %v6329 = vrot.slane %v6325, 4
        %v6331 = vshrl.u32 %v6291, 16
        %v6333 = vrot.slane %v6331, 7
        %v6334 = vshll.u32 %v6291, 16
        %v6336 = vor.u32 %v6333, %v6334
        %v6337 = vsel %vm517, %v6329, %v6336
        %v6338 = vrot.slane %v6333, 4
        %v6340 = vshrl.u32 %v6292, 16
        %v6342 = vrot.slane %v6340, 7
        %v6343 = vshll.u32 %v6292, 16
        %v6345 = vor.u32 %v6342, %v6343
        %v6346 = vrot.slane %v6342, 4
        %v6348 = vshrl.u32 %v6293, 16
        %v6350 = vrot.slane %v6348, 7
        %v6351 = vshll.u32 %v6293, 16
        %v6353 = vor.u32 %v6350, %v6351
        %v6354 = vsel %vm517, %v6346, %v6353
        %v6355 = vrot.slane %v6350, 4
        %v6357 = vshrl.u32 %v6294, 16
        %v6359 = vrot.slane %v6357, 7
        %v6360 = vshll.u32 %v6294, 16
        %v6362 = vor.u32 %v6359, %v6360
        %v6363 = vrot.slane %v6359, 4
        %v6365 = vshrl.u32 %v6295, 16
        %v6367 = vrot.slane %v6365, 7
        %v6368 = vshll.u32 %v6295, 16
        %v6370 = vor.u32 %v6367, %v6368
        %v6371 = vsel %vm517, %v6363, %v6370
        %v6372 = vrot.slane %v6367, 4
        %v6374 = vshrl.u32 %v6296, 16
        %v6376 = vrot.slane %v6374, 7
        %v6377 = vshll.u32 %v6296, 16
        %v6379 = vor.u32 %v6376, %v6377
        %v6380 = vrot.slane %v6376, 4
        %v6382 = vshrl.u32 %v6297, 16
        %v6384 = vrot.slane %v6382, 7
        %v6385 = vshll.u32 %v6297, 16
        %v6387 = vor.u32 %v6384, %v6385
        %v6388 = vsel %vm517, %v6380, %v6387
        %v6389 = vrot.slane %v6384, 4
        %v6391 = vshrl.u32 %v6298, 16
        %v6393 = vrot.slane %v6391, 7
        %v6394 = vshll.u32 %v6298, 16
        %v6396 = vor.u32 %v6393, %v6394
        %v6397 = vrot.slane %v6393, 4
        %v6399 = vshrl.u32 %v6299, 16
        %v6401 = vrot.slane %v6399, 7
        %v6402 = vshll.u32 %v6299, 16
        %v6404 = vor.u32 %v6401, %v6402
        %v6405 = vsel %vm517, %v6397, %v6404
        %v6406 = vrot.slane %v6401, 4
        %v6408 = vshrl.u32 %v6300, 16
        %v6410 = vrot.slane %v6408, 7
        %v6411 = vshll.u32 %v6300, 16
        %v6413 = vor.u32 %v6410, %v6411
        %v6414 = vrot.slane %v6410, 4
        %v6416 = vshrl.u32 %v6301, 16
        %v6418 = vrot.slane %v6416, 7
        %v6419 = vshll.u32 %v6301, 16
        %v6421 = vor.u32 %v6418, %v6419
        %v6422 = vsel %vm517, %v6414, %v6421
        %v6423 = vrot.slane %v6418, 4
        %v6425 = vshrl.u32 %v6302, 16
        %v6427 = vrot.slane %v6425, 7
        %v6428 = vshll.u32 %v6302, 16
        %v6430 = vor.u32 %v6427, %v6428
        %v6431 = vrot.slane %v6427, 4
        %v6433 = vshrl.u32 %v6303, 16
        %v6435 = vrot.slane %v6433, 7
        %v6436 = vshll.u32 %v6303, 16
        %v6438 = vor.u32 %v6435, %v6436
        %v6439 = vsel %vm517, %v6431, %v6438
        %v6440 = vrot.slane %v6435, 4
        %v6442 = vshrl.u32 %v6304, 16
        %v6444 = vrot.slane %v6442, 7
        %v6445 = vshll.u32 %v6304, 16
        %v6447 = vor.u32 %v6444, %v6445
        %v6448 = vrot.slane %v6444, 4
        %v6450 = vshrl.u32 %v6305, 16
        %v6452 = vrot.slane %v6450, 7
        %v6453 = vshll.u32 %v6305, 16
        %v6455 = vor.u32 %v6452, %v6453
        %v6456 = vsel %vm517, %v6448, %v6455
        %v6457 = vrot.slane %v6452, 4
        %v6459 = vshrl.u32 %v6306, 16
        %v6461 = vrot.slane %v6459, 7
        %v6462 = vshll.u32 %v6306, 16
        %v6464 = vor.u32 %v6461, %v6462
        %v6465 = vrot.slane %v6461, 4
        %v6467 = vshrl.u32 %v6307, 16
        %v6469 = vrot.slane %v6467, 7
        %v6470 = vshll.u32 %v6307, 16
        %v6472 = vor.u32 %v6469, %v6470
        %v6473 = vsel %vm517, %v6465, %v6472
        %v6474 = vrot.slane %v6469, 4
        %v6476 = vshrl.u32 %v6308, 16
        %v6478 = vrot.slane %v6476, 7
        %v6479 = vshll.u32 %v6308, 16
        %v6481 = vor.u32 %v6478, %v6479
        %v6482 = vrot.slane %v6478, 4
        %v6484 = vshrl.u32 %v6309, 16
        %v6486 = vrot.slane %v6484, 7
        %v6487 = vshll.u32 %v6309, 16
        %v6489 = vor.u32 %v6486, %v6487
        %v6490 = vsel %vm517, %v6482, %v6489
        %v6491 = vrot.slane %v6486, 4
        %v6493 = vshrl.u32 %v6310, 16
        %v6495 = vrot.slane %v6493, 7
        %v6496 = vshll.u32 %v6310, 16
        %v6498 = vor.u32 %v6495, %v6496
        %v6499 = vrot.slane %v6495, 4
        %v6501 = vshrl.u32 %v6311, 16
        %v6503 = vrot.slane %v6501, 7
        %v6504 = vshll.u32 %v6311, 16
        %v6506 = vor.u32 %v6503, %v6504
        %v6507 = vsel %vm517, %v6499, %v6506
        %v6508 = vrot.slane %v6503, 4
        %v6510 = vshrl.u32 %v6312, 16
        %v6512 = vrot.slane %v6510, 7
        %v6513 = vshll.u32 %v6312, 16
        %v6515 = vor.u32 %v6512, %v6513
        %v6516 = vrot.slane %v6512, 4
        %v6518 = vshrl.u32 %v6313, 16
        %v6520 = vrot.slane %v6518, 7
        %v6521 = vshll.u32 %v6313, 16
        %v6523 = vor.u32 %v6520, %v6521
        %v6524 = vsel %vm517, %v6516, %v6523
        %v6525 = vrot.slane %v6520, 4
        %v6527 = vshrl.u32 %v6314, 16
        %v6529 = vrot.slane %v6527, 7
        %v6530 = vshll.u32 %v6314, 16
        %v6532 = vor.u32 %v6529, %v6530
        %v6533 = vrot.slane %v6529, 4
        %v6535 = vshrl.u32 %v6315, 16
        %v6537 = vrot.slane %v6535, 7
        %v6538 = vshll.u32 %v6315, 16
        %v6540 = vor.u32 %v6537, %v6538
        %v6541 = vsel %vm517, %v6533, %v6540
        %v6542 = vrot.slane %v6537, 4
        %v6544 = vshrl.u32 %v6316, 16
        %v6546 = vrot.slane %v6544, 7
        %v6547 = vshll.u32 %v6316, 16
        %v6549 = vor.u32 %v6546, %v6547
        %v6550 = vrot.slane %v6546, 4
        %v6552 = vshrl.u32 %v6317, 16
        %v6554 = vrot.slane %v6552, 7
        %v6555 = vshll.u32 %v6317, 16
        %v6557 = vor.u32 %v6554, %v6555
        %v6558 = vsel %vm517, %v6550, %v6557
        %v6559 = vrot.slane %v6554, 4
        %v6561 = vshrl.u32 %v6318, 16
        %v6563 = vrot.slane %v6561, 7
        %v6564 = vshll.u32 %v6318, 16
        %v6566 = vor.u32 %v6563, %v6564
        %v6567 = vrot.slane %v6563, 4
        %v6569 = vshrl.u32 %v6319, 16
        %v6571 = vrot.slane %v6569, 7
        %v6572 = vshll.u32 %v6319, 16
        %v6574 = vor.u32 %v6571, %v6572
        %v6575 = vsel %vm517, %v6567, %v6574
        %v6576 = vrot.slane %v6571, 4
        %v6578 = vshrl.u32 %v6320, 16
        %v6580 = vrot.slane %v6578, 7
        %v6581 = vshll.u32 %v6320, 16
        %v6583 = vor.u32 %v6580, %v6581
        %v6584 = vrot.slane %v6580, 4
        %v6586 = vshrl.u32 %v6321, 16
        %v6588 = vrot.slane %v6586, 7
        %v6589 = vshll.u32 %v6321, 16
        %v6591 = vor.u32 %v6588, %v6589
        %v6592 = vsel %vm517, %v6584, %v6591
        %v6593 = vrot.slane %v6588, 4
        %v6642 = vld [vmem:[%s838] sm:$0xf]
        %v6643 = vsel %vm840, %v6328, %v6642
        %6644 = vst [vmem:[%s838] sm:$0xf] %v6643
        %6645 = vst [vmem:[%s838 + $0x4] sm:$0xf] %v6337
        %v6646 = vld [vmem:[%s838 + $0x8] sm:$0x1]
        %v6647 = vsel %vm341, %v6338, %v6646
        %6648 = vst [vmem:[%s838 + $0x8] sm:$0x1] %v6647
        %v6649 = vld [vmem:[%s838 + $0xc] sm:$0xf]
        %v6650 = vsel %vm840, %v6345, %v6649
        %6651 = vst [vmem:[%s838 + $0xc] sm:$0xf] %v6650
        %6652 = vst [vmem:[%s838 + $0x10] sm:$0xf] %v6354
        %v6653 = vld [vmem:[%s838 + $0x14] sm:$0x1]
        %v6654 = vsel %vm341, %v6355, %v6653
        %6655 = vst [vmem:[%s838 + $0x14] sm:$0x1] %v6654
        %v6656 = vld [vmem:[%s838 + $0x18] sm:$0xf]
        %v6657 = vsel %vm840, %v6362, %v6656
        %6658 = vst [vmem:[%s838 + $0x18] sm:$0xf] %v6657
        %6659 = vst [vmem:[%s838 + $0x1c] sm:$0xf] %v6371
        %v6660 = vld [vmem:[%s838 + $0x20] sm:$0x1]
        %v6661 = vsel %vm341, %v6372, %v6660
        %6662 = vst [vmem:[%s838 + $0x20] sm:$0x1] %v6661
        %v6663 = vld [vmem:[%s838 + $0x24] sm:$0xf]
        %v6664 = vsel %vm840, %v6379, %v6663
        %6665 = vst [vmem:[%s838 + $0x24] sm:$0xf] %v6664
        %6666 = vst [vmem:[%s838 + $0x28] sm:$0xf] %v6388
        %v6667 = vld [vmem:[%s838 + $0x2c] sm:$0x1]
        %v6668 = vsel %vm341, %v6389, %v6667
        %6669 = vst [vmem:[%s838 + $0x2c] sm:$0x1] %v6668
        %v6670 = vld [vmem:[%s838 + $0x30] sm:$0xf]
        %v6671 = vsel %vm840, %v6396, %v6670
        %6672 = vst [vmem:[%s838 + $0x30] sm:$0xf] %v6671
        %6673 = vst [vmem:[%s838 + $0x34] sm:$0xf] %v6405
        %v6674 = vld [vmem:[%s838 + $0x38] sm:$0x1]
        %v6675 = vsel %vm341, %v6406, %v6674
        %6676 = vst [vmem:[%s838 + $0x38] sm:$0x1] %v6675
        %v6677 = vld [vmem:[%s838 + $0x3c] sm:$0xf]
        %v6678 = vsel %vm840, %v6413, %v6677
        %6679 = vst [vmem:[%s838 + $0x3c] sm:$0xf] %v6678
        %6680 = vst [vmem:[%s838 + $0x40] sm:$0xf] %v6422
        %v6681 = vld [vmem:[%s838 + $0x44] sm:$0x1]
        %v6682 = vsel %vm341, %v6423, %v6681
        %6683 = vst [vmem:[%s838 + $0x44] sm:$0x1] %v6682
        %v6684 = vld [vmem:[%s838 + $0x48] sm:$0xf]
        %v6685 = vsel %vm840, %v6430, %v6684
        %6686 = vst [vmem:[%s838 + $0x48] sm:$0xf] %v6685
        %6687 = vst [vmem:[%s838 + $0x4c] sm:$0xf] %v6439
        %v6688 = vld [vmem:[%s838 + $0x50] sm:$0x1]
        %v6689 = vsel %vm341, %v6440, %v6688
        %6690 = vst [vmem:[%s838 + $0x50] sm:$0x1] %v6689
        %v6691 = vld [vmem:[%s838 + $0x54] sm:$0xf]
        %v6692 = vsel %vm840, %v6447, %v6691
        %6693 = vst [vmem:[%s838 + $0x54] sm:$0xf] %v6692
        %6694 = vst [vmem:[%s838 + $0x58] sm:$0xf] %v6456
        %v6695 = vld [vmem:[%s838 + $0x5c] sm:$0x1]
        %v6696 = vsel %vm341, %v6457, %v6695
        %6697 = vst [vmem:[%s838 + $0x5c] sm:$0x1] %v6696
        %v6698 = vld [vmem:[%s838 + $0x60] sm:$0xf]
        %v6699 = vsel %vm840, %v6464, %v6698
        %6700 = vst [vmem:[%s838 + $0x60] sm:$0xf] %v6699
        %6701 = vst [vmem:[%s838 + $0x64] sm:$0xf] %v6473
        %v6702 = vld [vmem:[%s838 + $0x68] sm:$0x1]
        %v6703 = vsel %vm341, %v6474, %v6702
        %6704 = vst [vmem:[%s838 + $0x68] sm:$0x1] %v6703
        %v6705 = vld [vmem:[%s838 + $0x6c] sm:$0xf]
        %v6706 = vsel %vm840, %v6481, %v6705
        %6707 = vst [vmem:[%s838 + $0x6c] sm:$0xf] %v6706
        %6708 = vst [vmem:[%s838 + $0x70] sm:$0xf] %v6490
        %v6709 = vld [vmem:[%s838 + $0x74] sm:$0x1]
        %v6710 = vsel %vm341, %v6491, %v6709
        %6711 = vst [vmem:[%s838 + $0x74] sm:$0x1] %v6710
        %v6712 = vld [vmem:[%s838 + $0x78] sm:$0xf]
        %v6713 = vsel %vm840, %v6498, %v6712
        %6714 = vst [vmem:[%s838 + $0x78] sm:$0xf] %v6713
        %6715 = vst [vmem:[%s838 + $0x7c] sm:$0xf] %v6507
        %v6716 = vld [vmem:[%s838 + $0x80] sm:$0x1]
        %v6717 = vsel %vm341, %v6508, %v6716
        %6718 = vst [vmem:[%s838 + $0x80] sm:$0x1] %v6717
        %v6719 = vld [vmem:[%s838 + $0x84] sm:$0xf]
        %v6720 = vsel %vm840, %v6515, %v6719
        %6721 = vst [vmem:[%s838 + $0x84] sm:$0xf] %v6720
        %6722 = vst [vmem:[%s838 + $0x88] sm:$0xf] %v6524
        %v6723 = vld [vmem:[%s838 + $0x8c] sm:$0x1]
        %v6724 = vsel %vm341, %v6525, %v6723
        %6725 = vst [vmem:[%s838 + $0x8c] sm:$0x1] %v6724
        %v6726 = vld [vmem:[%s838 + $0x90] sm:$0xf]
        %v6727 = vsel %vm840, %v6532, %v6726
        %6728 = vst [vmem:[%s838 + $0x90] sm:$0xf] %v6727
        %6729 = vst [vmem:[%s838 + $0x94] sm:$0xf] %v6541
        %v6730 = vld [vmem:[%s838 + $0x98] sm:$0x1]
        %v6731 = vsel %vm341, %v6542, %v6730
        %6732 = vst [vmem:[%s838 + $0x98] sm:$0x1] %v6731
        %v6733 = vld [vmem:[%s838 + $0x9c] sm:$0xf]
        %v6734 = vsel %vm840, %v6549, %v6733
        %6735 = vst [vmem:[%s838 + $0x9c] sm:$0xf] %v6734
        %6736 = vst [vmem:[%s838 + $0xa0] sm:$0xf] %v6558
        %v6737 = vld [vmem:[%s838 + $0xa4] sm:$0x1]
        %v6738 = vsel %vm341, %v6559, %v6737
        %6739 = vst [vmem:[%s838 + $0xa4] sm:$0x1] %v6738
        %v6740 = vld [vmem:[%s838 + $0xa8] sm:$0xf]
        %v6741 = vsel %vm840, %v6566, %v6740
        %6742 = vst [vmem:[%s838 + $0xa8] sm:$0xf] %v6741
        %6743 = vst [vmem:[%s838 + $0xac] sm:$0xf] %v6575
        %v6744 = vld [vmem:[%s838 + $0xb0] sm:$0x1]
        %v6745 = vsel %vm341, %v6576, %v6744
        %6746 = vst [vmem:[%s838 + $0xb0] sm:$0x1] %v6745
        %v6747 = vld [vmem:[%s838 + $0xb4] sm:$0xf]
        %v6748 = vsel %vm840, %v6583, %v6747
        %6749 = vst [vmem:[%s838 + $0xb4] sm:$0xf] %v6748
        %6750 = vst [vmem:[%s838 + $0xb8] sm:$0xf] %v6592
        %v6751 = vld [vmem:[%s838 + $0xbc] sm:$0x1]
        %v6752 = vsel %vm341, %v6593, %v6751
        %6753 = vst [vmem:[%s838 + $0xbc] sm:$0x1] %v6752
        %v6754 = vld [vmem:[#allocation2] sm:$0xf]
        %v6755 = vld [vmem:[#allocation2 + $0x4] sm:$0xf]
        %v6756 = vld [vmem:[#allocation2 + $0xc] sm:$0xf]
        %v6757 = vld [vmem:[#allocation2 + $0x10] sm:$0xf]
        %v6758 = vld [vmem:[#allocation2 + $0x18] sm:$0xf]
        %v6759 = vld [vmem:[#allocation2 + $0x1c] sm:$0xf]
        %v6760 = vld [vmem:[#allocation2 + $0x24] sm:$0xf]
        %v6761 = vld [vmem:[#allocation2 + $0x28] sm:$0xf]
        %v6762 = vld [vmem:[#allocation2 + $0x30] sm:$0xf]
        %v6763 = vld [vmem:[#allocation2 + $0x34] sm:$0xf]
        %v6764 = vld [vmem:[#allocation2 + $0x3c] sm:$0xf]
        %v6765 = vld [vmem:[#allocation2 + $0x40] sm:$0xf]
        %v6766 = vld [vmem:[#allocation2 + $0x48] sm:$0xf]
        %v6767 = vld [vmem:[#allocation2 + $0x4c] sm:$0xf]
        %v6768 = vld [vmem:[#allocation2 + $0x54] sm:$0xf]
        %v6769 = vld [vmem:[#allocation2 + $0x58] sm:$0xf]
        %v6770 = vld [vmem:[#allocation2 + $0x60] sm:$0xf]
        %v6771 = vld [vmem:[#allocation2 + $0x64] sm:$0xf]
        %v6772 = vld [vmem:[#allocation2 + $0x6c] sm:$0xf]
        %v6773 = vld [vmem:[#allocation2 + $0x70] sm:$0xf]
        %v6774 = vld [vmem:[#allocation2 + $0x78] sm:$0xf]
        %v6775 = vld [vmem:[#allocation2 + $0x7c] sm:$0xf]
        %v6776 = vld [vmem:[#allocation2 + $0x84] sm:$0xf]
        %v6777 = vld [vmem:[#allocation2 + $0x88] sm:$0xf]
        %v6778 = vld [vmem:[#allocation2 + $0x90] sm:$0xf]
        %v6779 = vld [vmem:[#allocation2 + $0x94] sm:$0xf]
        %v6780 = vld [vmem:[#allocation2 + $0x9c] sm:$0xf]
        %v6781 = vld [vmem:[#allocation2 + $0xa0] sm:$0xf]
        %v6782 = vld [vmem:[#allocation2 + $0xa8] sm:$0xf]
        %v6783 = vld [vmem:[#allocation2 + $0xac] sm:$0xf]
        %v6784 = vld [vmem:[#allocation2 + $0xb4] sm:$0xf]
        %v6785 = vld [vmem:[#allocation2 + $0xb8] sm:$0xf]
        %6786 = vst [vmem:[#allocation3] sm:$0xf] %v6754
        %6787 = vst [vmem:[#allocation3 + $0x24] sm:$0xf] %v6755
        %6788 = vst [vmem:[#allocation3 + $0x48] sm:$0xf] %v6756
        %6789 = vst [vmem:[#allocation3 + $0x6c] sm:$0xf] %v6757
        %6790 = vst [vmem:[#allocation3 + $0x90] sm:$0xf] %v6758
        %6791 = vst [vmem:[#allocation3 + $0xb4] sm:$0xf] %v6759
        %6792 = vst [vmem:[#allocation3 + $0xd8] sm:$0xf] %v6760
        %6793 = vst [vmem:[#allocation3 + $0xfc] sm:$0xf] %v6761
        %6794 = vst [vmem:[#allocation3 + $0x120] sm:$0xf] %v6762
        %6795 = vst [vmem:[#allocation3 + $0x144] sm:$0xf] %v6763
        %6796 = vst [vmem:[#allocation3 + $0x168] sm:$0xf] %v6764
        %6797 = vst [vmem:[#allocation3 + $0x18c] sm:$0xf] %v6765
        %6798 = vst [vmem:[#allocation3 + $0x1b0] sm:$0xf] %v6766
        %6799 = vst [vmem:[#allocation3 + $0x1d4] sm:$0xf] %v6767
        %6800 = vst [vmem:[#allocation3 + $0x1f8] sm:$0xf] %v6768
        %6801 = vst [vmem:[#allocation3 + $0x21c] sm:$0xf] %v6769
        %6802 = vst [vmem:[#allocation3 + $0x240] sm:$0xf] %v6770
        %6803 = vst [vmem:[#allocation3 + $0x264] sm:$0xf] %v6771
        %6804 = vst [vmem:[#allocation3 + $0x288] sm:$0xf] %v6772
        %6805 = vst [vmem:[#allocation3 + $0x2ac] sm:$0xf] %v6773
        %6806 = vst [vmem:[#allocation3 + $0x2d0] sm:$0xf] %v6774
        %6807 = vst [vmem:[#allocation3 + $0x2f4] sm:$0xf] %v6775
        %6808 = vst [vmem:[#allocation3 + $0x318] sm:$0xf] %v6776
        %6809 = vst [vmem:[#allocation3 + $0x33c] sm:$0xf] %v6777
        %6810 = vst [vmem:[#allocation3 + $0x360] sm:$0xf] %v6778
        %6811 = vst [vmem:[#allocation3 + $0x384] sm:$0xf] %v6779
        %6812 = vst [vmem:[#allocation3 + $0x3a8] sm:$0xf] %v6780
        %6813 = vst [vmem:[#allocation3 + $0x3cc] sm:$0xf] %v6781
        %6814 = vst [vmem:[#allocation3 + $0x3f0] sm:$0xf] %v6782
        %6815 = vst [vmem:[#allocation3 + $0x414] sm:$0xf] %v6783
        %6816 = vst [vmem:[#allocation3 + $0x438] sm:$0xf] %v6784
        %6817 = vst [vmem:[#allocation3 + $0x45c] sm:$0xf] %v6785
        %v6818 = vld [vmem:[#allocation2] sm:$0xf]
        %v6819 = vld [vmem:[#allocation2 + $0x4] sm:$0xf]
        %v6820 = vld [vmem:[#allocation2 + $0x8] sm:$0x1]
        %v6821 = vld [vmem:[#allocation2 + $0xc] sm:$0xf]
        %v6822 = vld [vmem:[#allocation2 + $0x10] sm:$0xf]
        %v6823 = vld [vmem:[#allocation2 + $0x14] sm:$0x1]
        %v6824 = vld [vmem:[#allocation2 + $0x18] sm:$0xf]
        %v6825 = vld [vmem:[#allocation2 + $0x1c] sm:$0xf]
        %v6826 = vld [vmem:[#allocation2 + $0x20] sm:$0x1]
        %v6827 = vld [vmem:[#allocation2 + $0x24] sm:$0xf]
        %v6828 = vld [vmem:[#allocation2 + $0x28] sm:$0xf]
        %v6829 = vld [vmem:[#allocation2 + $0x2c] sm:$0x1]
        %v6830 = vld [vmem:[#allocation2 + $0x30] sm:$0xf]
        %v6831 = vld [vmem:[#allocation2 + $0x34] sm:$0xf]
        %v6832 = vld [vmem:[#allocation2 + $0x38] sm:$0x1]
        %v6833 = vld [vmem:[#allocation2 + $0x3c] sm:$0xf]
        %v6834 = vld [vmem:[#allocation2 + $0x40] sm:$0xf]
        %v6835 = vld [vmem:[#allocation2 + $0x44] sm:$0x1]
        %v6836 = vld [vmem:[#allocation2 + $0x48] sm:$0xf]
        %v6837 = vld [vmem:[#allocation2 + $0x4c] sm:$0xf]
        %v6838 = vld [vmem:[#allocation2 + $0x50] sm:$0x1]
        %v6839 = vld [vmem:[#allocation2 + $0x54] sm:$0xf]
        %v6840 = vld [vmem:[#allocation2 + $0x58] sm:$0xf]
        %v6841 = vld [vmem:[#allocation2 + $0x5c] sm:$0x1]
        %v6842 = vld [vmem:[#allocation2 + $0x60] sm:$0xf]
        %v6843 = vld [vmem:[#allocation2 + $0x64] sm:$0xf]
        %v6844 = vld [vmem:[#allocation2 + $0x68] sm:$0x1]
        %v6845 = vld [vmem:[#allocation2 + $0x6c] sm:$0xf]
        %v6846 = vld [vmem:[#allocation2 + $0x70] sm:$0xf]
        %v6847 = vld [vmem:[#allocation2 + $0x74] sm:$0x1]
        %v6848 = vld [vmem:[#allocation2 + $0x78] sm:$0xf]
        %v6849 = vld [vmem:[#allocation2 + $0x7c] sm:$0xf]
        %v6850 = vld [vmem:[#allocation2 + $0x80] sm:$0x1]
        %v6851 = vld [vmem:[#allocation2 + $0x84] sm:$0xf]
        %v6852 = vld [vmem:[#allocation2 + $0x88] sm:$0xf]
        %v6853 = vld [vmem:[#allocation2 + $0x8c] sm:$0x1]
        %v6854 = vld [vmem:[#allocation2 + $0x90] sm:$0xf]
        %v6855 = vld [vmem:[#allocation2 + $0x94] sm:$0xf]
        %v6856 = vld [vmem:[#allocation2 + $0x98] sm:$0x1]
        %v6857 = vld [vmem:[#allocation2 + $0x9c] sm:$0xf]
        %v6858 = vld [vmem:[#allocation2 + $0xa0] sm:$0xf]
        %v6859 = vld [vmem:[#allocation2 + $0xa4] sm:$0x1]
        %v6860 = vld [vmem:[#allocation2 + $0xa8] sm:$0xf]
        %v6861 = vld [vmem:[#allocation2 + $0xac] sm:$0xf]
        %v6862 = vld [vmem:[#allocation2 + $0xb0] sm:$0x1]
        %v6863 = vld [vmem:[#allocation2 + $0xb4] sm:$0xf]
        %v6864 = vld [vmem:[#allocation2 + $0xb8] sm:$0xf]
        %v6865 = vld [vmem:[#allocation2 + $0xbc] sm:$0x1]
        %v6867 = vshrl.u32 %v6818, 16
        %v6869 = vrot.slane %v6867, 4
        %v6870 = vshll.u32 %v6818, 16
        %v6872 = vrot.slane %v6870, 5
        %v6873 = vor.u32 %v6869, %v6872
        %v6874 = vrot.slane %v6873, 4
        %v6876 = vshll.u32 %v6819, 16
        %v6878 = vrot.slane %v6876, 5
        %v6879 = vsel %vm1067, %v6874, %v6878
        %v6880 = vshrl.u32 %v6819, 16
        %v6882 = vrot.slane %v6880, 4
        %v6883 = vor.u32 %v6882, %v6878
        %v6884 = vrot.slane %v6883, 4
        %v6886 = vshll.u32 %v6820, 16
        %v6888 = vrot.slane %v6886, 5
        %v6889 = vsel %vm1067, %v6884, %v6888
        %v6891 = vshrl.u32 %v6821, 16
        %v6893 = vrot.slane %v6891, 4
        %v6894 = vshll.u32 %v6821, 16
        %v6896 = vrot.slane %v6894, 5
        %v6897 = vor.u32 %v6893, %v6896
        %v6898 = vrot.slane %v6897, 4
        %v6900 = vshll.u32 %v6822, 16
        %v6902 = vrot.slane %v6900, 5
        %v6903 = vsel %vm1067, %v6898, %v6902
        %v6904 = vshrl.u32 %v6822, 16
        %v6906 = vrot.slane %v6904, 4
        %v6907 = vor.u32 %v6906, %v6902
        %v6908 = vrot.slane %v6907, 4
        %v6910 = vshll.u32 %v6823, 16
        %v6912 = vrot.slane %v6910, 5
        %v6913 = vsel %vm1067, %v6908, %v6912
        %v6915 = vshrl.u32 %v6824, 16
        %v6917 = vrot.slane %v6915, 4
        %v6918 = vshll.u32 %v6824, 16
        %v6920 = vrot.slane %v6918, 5
        %v6921 = vor.u32 %v6917, %v6920
        %v6922 = vrot.slane %v6921, 4
        %v6924 = vshll.u32 %v6825, 16
        %v6926 = vrot.slane %v6924, 5
        %v6927 = vsel %vm1067, %v6922, %v6926
        %v6928 = vshrl.u32 %v6825, 16
        %v6930 = vrot.slane %v6928, 4
        %v6931 = vor.u32 %v6930, %v6926
        %v6932 = vrot.slane %v6931, 4
        %v6934 = vshll.u32 %v6826, 16
        %v6936 = vrot.slane %v6934, 5
        %v6937 = vsel %vm1067, %v6932, %v6936
        %v6939 = vshrl.u32 %v6827, 16
        %v6941 = vrot.slane %v6939, 4
        %v6942 = vshll.u32 %v6827, 16
        %v6944 = vrot.slane %v6942, 5
        %v6945 = vor.u32 %v6941, %v6944
        %v6946 = vrot.slane %v6945, 4
        %v6948 = vshll.u32 %v6828, 16
        %v6950 = vrot.slane %v6948, 5
        %v6951 = vsel %vm1067, %v6946, %v6950
        %v6952 = vshrl.u32 %v6828, 16
        %v6954 = vrot.slane %v6952, 4
        %v6955 = vor.u32 %v6954, %v6950
        %v6956 = vrot.slane %v6955, 4
        %v6958 = vshll.u32 %v6829, 16
        %v6960 = vrot.slane %v6958, 5
        %v6961 = vsel %vm1067, %v6956, %v6960
        %v6963 = vshrl.u32 %v6830, 16
        %v6965 = vrot.slane %v6963, 4
        %v6966 = vshll.u32 %v6830, 16
        %v6968 = vrot.slane %v6966, 5
        %v6969 = vor.u32 %v6965, %v6968
        %v6970 = vrot.slane %v6969, 4
        %v6972 = vshll.u32 %v6831, 16
        %v6974 = vrot.slane %v6972, 5
        %v6975 = vsel %vm1067, %v6970, %v6974
        %v6976 = vshrl.u32 %v6831, 16
        %v6978 = vrot.slane %v6976, 4
        %v6979 = vor.u32 %v6978, %v6974
        %v6980 = vrot.slane %v6979, 4
        %v6982 = vshll.u32 %v6832, 16
        %v6984 = vrot.slane %v6982, 5
        %v6985 = vsel %vm1067, %v6980, %v6984
        %v6987 = vshrl.u32 %v6833, 16
        %v6989 = vrot.slane %v6987, 4
        %v6990 = vshll.u32 %v6833, 16
        %v6992 = vrot.slane %v6990, 5
        %v6993 = vor.u32 %v6989, %v6992
        %v6994 = vrot.slane %v6993, 4
        %v6996 = vshll.u32 %v6834, 16
        %v6998 = vrot.slane %v6996, 5
        %v6999 = vsel %vm1067, %v6994, %v6998
        %v7000 = vshrl.u32 %v6834, 16
        %v7002 = vrot.slane %v7000, 4
        %v7003 = vor.u32 %v7002, %v6998
        %v7004 = vrot.slane %v7003, 4
        %v7006 = vshll.u32 %v6835, 16
        %v7008 = vrot.slane %v7006, 5
        %v7009 = vsel %vm1067, %v7004, %v7008
        %v7011 = vshrl.u32 %v6836, 16
        %v7013 = vrot.slane %v7011, 4
        %v7014 = vshll.u32 %v6836, 16
        %v7016 = vrot.slane %v7014, 5
        %v7017 = vor.u32 %v7013, %v7016
        %v7018 = vrot.slane %v7017, 4
        %v7020 = vshll.u32 %v6837, 16
        %v7022 = vrot.slane %v7020, 5
        %v7023 = vsel %vm1067, %v7018, %v7022
        %v7024 = vshrl.u32 %v6837, 16
        %v7026 = vrot.slane %v7024, 4
        %v7027 = vor.u32 %v7026, %v7022
        %v7028 = vrot.slane %v7027, 4
        %v7030 = vshll.u32 %v6838, 16
        %v7032 = vrot.slane %v7030, 5
        %v7033 = vsel %vm1067, %v7028, %v7032
        %v7035 = vshrl.u32 %v6839, 16
        %v7037 = vrot.slane %v7035, 4
        %v7038 = vshll.u32 %v6839, 16
        %v7040 = vrot.slane %v7038, 5
        %v7041 = vor.u32 %v7037, %v7040
        %v7042 = vrot.slane %v7041, 4
        %v7044 = vshll.u32 %v6840, 16
        %v7046 = vrot.slane %v7044, 5
        %v7047 = vsel %vm1067, %v7042, %v7046
        %v7048 = vshrl.u32 %v6840, 16
        %v7050 = vrot.slane %v7048, 4
        %v7051 = vor.u32 %v7050, %v7046
        %v7052 = vrot.slane %v7051, 4
        %v7054 = vshll.u32 %v6841, 16
        %v7056 = vrot.slane %v7054, 5
        %v7057 = vsel %vm1067, %v7052, %v7056
        %v7059 = vshrl.u32 %v6842, 16
        %v7061 = vrot.slane %v7059, 4
        %v7062 = vshll.u32 %v6842, 16
        %v7064 = vrot.slane %v7062, 5
        %v7065 = vor.u32 %v7061, %v7064
        %v7066 = vrot.slane %v7065, 4
        %v7068 = vshll.u32 %v6843, 16
        %v7070 = vrot.slane %v7068, 5
        %v7071 = vsel %vm1067, %v7066, %v7070
        %v7072 = vshrl.u32 %v6843, 16
        %v7074 = vrot.slane %v7072, 4
        %v7075 = vor.u32 %v7074, %v7070
        %v7076 = vrot.slane %v7075, 4
        %v7078 = vshll.u32 %v6844, 16
        %v7080 = vrot.slane %v7078, 5
        %v7081 = vsel %vm1067, %v7076, %v7080
        %v7083 = vshrl.u32 %v6845, 16
        %v7085 = vrot.slane %v7083, 4
        %v7086 = vshll.u32 %v6845, 16
        %v7088 = vrot.slane %v7086, 5
        %v7089 = vor.u32 %v7085, %v7088
        %v7090 = vrot.slane %v7089, 4
        %v7092 = vshll.u32 %v6846, 16
        %v7094 = vrot.slane %v7092, 5
        %v7095 = vsel %vm1067, %v7090, %v7094
        %v7096 = vshrl.u32 %v6846, 16
        %v7098 = vrot.slane %v7096, 4
        %v7099 = vor.u32 %v7098, %v7094
        %v7100 = vrot.slane %v7099, 4
        %v7102 = vshll.u32 %v6847, 16
        %v7104 = vrot.slane %v7102, 5
        %v7105 = vsel %vm1067, %v7100, %v7104
        %v7107 = vshrl.u32 %v6848, 16
        %v7109 = vrot.slane %v7107, 4
        %v7110 = vshll.u32 %v6848, 16
        %v7112 = vrot.slane %v7110, 5
        %v7113 = vor.u32 %v7109, %v7112
        %v7114 = vrot.slane %v7113, 4
        %v7116 = vshll.u32 %v6849, 16
        %v7118 = vrot.slane %v7116, 5
        %v7119 = vsel %vm1067, %v7114, %v7118
        %v7120 = vshrl.u32 %v6849, 16
        %v7122 = vrot.slane %v7120, 4
        %v7123 = vor.u32 %v7122, %v7118
        %v7124 = vrot.slane %v7123, 4
        %v7126 = vshll.u32 %v6850, 16
        %v7128 = vrot.slane %v7126, 5
        %v7129 = vsel %vm1067, %v7124, %v7128
        %v7131 = vshrl.u32 %v6851, 16
        %v7133 = vrot.slane %v7131, 4
        %v7134 = vshll.u32 %v6851, 16
        %v7136 = vrot.slane %v7134, 5
        %v7137 = vor.u32 %v7133, %v7136
        %v7138 = vrot.slane %v7137, 4
        %v7140 = vshll.u32 %v6852, 16
        %v7142 = vrot.slane %v7140, 5
        %v7143 = vsel %vm1067, %v7138, %v7142
        %v7144 = vshrl.u32 %v6852, 16
        %v7146 = vrot.slane %v7144, 4
        %v7147 = vor.u32 %v7146, %v7142
        %v7148 = vrot.slane %v7147, 4
        %v7150 = vshll.u32 %v6853, 16
        %v7152 = vrot.slane %v7150, 5
        %v7153 = vsel %vm1067, %v7148, %v7152
        %v7155 = vshrl.u32 %v6854, 16
        %v7157 = vrot.slane %v7155, 4
        %v7158 = vshll.u32 %v6854, 16
        %v7160 = vrot.slane %v7158, 5
        %v7161 = vor.u32 %v7157, %v7160
        %v7162 = vrot.slane %v7161, 4
        %v7164 = vshll.u32 %v6855, 16
        %v7166 = vrot.slane %v7164, 5
        %v7167 = vsel %vm1067, %v7162, %v7166
        %v7168 = vshrl.u32 %v6855, 16
        %v7170 = vrot.slane %v7168, 4
        %v7171 = vor.u32 %v7170, %v7166
        %v7172 = vrot.slane %v7171, 4
        %v7174 = vshll.u32 %v6856, 16
        %v7176 = vrot.slane %v7174, 5
        %v7177 = vsel %vm1067, %v7172, %v7176
        %v7179 = vshrl.u32 %v6857, 16
        %v7181 = vrot.slane %v7179, 4
        %v7182 = vshll.u32 %v6857, 16
        %v7184 = vrot.slane %v7182, 5
        %v7185 = vor.u32 %v7181, %v7184
        %v7186 = vrot.slane %v7185, 4
        %v7188 = vshll.u32 %v6858, 16
        %v7190 = vrot.slane %v7188, 5
        %v7191 = vsel %vm1067, %v7186, %v7190
        %v7192 = vshrl.u32 %v6858, 16
        %v7194 = vrot.slane %v7192, 4
        %v7195 = vor.u32 %v7194, %v7190
        %v7196 = vrot.slane %v7195, 4
        %v7198 = vshll.u32 %v6859, 16
        %v7200 = vrot.slane %v7198, 5
        %v7201 = vsel %vm1067, %v7196, %v7200
        %v7203 = vshrl.u32 %v6860, 16
        %v7205 = vrot.slane %v7203, 4
        %v7206 = vshll.u32 %v6860, 16
        %v7208 = vrot.slane %v7206, 5
        %v7209 = vor.u32 %v7205, %v7208
        %v7210 = vrot.slane %v7209, 4
        %v7212 = vshll.u32 %v6861, 16
        %v7214 = vrot.slane %v7212, 5
        %v7215 = vsel %vm1067, %v7210, %v7214
        %v7216 = vshrl.u32 %v6861, 16
        %v7218 = vrot.slane %v7216, 4
        %v7219 = vor.u32 %v7218, %v7214
        %v7220 = vrot.slane %v7219, 4
        %v7222 = vshll.u32 %v6862, 16
        %v7224 = vrot.slane %v7222, 5
        %v7225 = vsel %vm1067, %v7220, %v7224
        %v7227 = vshrl.u32 %v6863, 16
        %v7229 = vrot.slane %v7227, 4
        %v7230 = vshll.u32 %v6863, 16
        %v7232 = vrot.slane %v7230, 5
        %v7233 = vor.u32 %v7229, %v7232
        %v7234 = vrot.slane %v7233, 4
        %v7236 = vshll.u32 %v6864, 16
        %v7238 = vrot.slane %v7236, 5
        %v7239 = vsel %vm1067, %v7234, %v7238
        %v7240 = vshrl.u32 %v6864, 16
        %v7242 = vrot.slane %v7240, 4
        %v7243 = vor.u32 %v7242, %v7238
        %v7244 = vrot.slane %v7243, 4
        %v7246 = vshll.u32 %v6865, 16
        %v7248 = vrot.slane %v7246, 5
        %v7249 = vsel %vm1067, %v7244, %v7248
        %7282 = vst [vmem:[#allocation3 + $0x4] sm:$0xf] %v6879
        %7283 = vst [vmem:[#allocation3 + $0x28] sm:$0xf] %v6889
        %7284 = vst [vmem:[#allocation3 + $0x4c] sm:$0xf] %v6903
        %7285 = vst [vmem:[#allocation3 + $0x70] sm:$0xf] %v6913
        %7286 = vst [vmem:[#allocation3 + $0x94] sm:$0xf] %v6927
        %7287 = vst [vmem:[#allocation3 + $0xb8] sm:$0xf] %v6937
        %7288 = vst [vmem:[#allocation3 + $0xdc] sm:$0xf] %v6951
        %7289 = vst [vmem:[#allocation3 + $0x100] sm:$0xf] %v6961
        %7290 = vst [vmem:[#allocation3 + $0x124] sm:$0xf] %v6975
        %7291 = vst [vmem:[#allocation3 + $0x148] sm:$0xf] %v6985
        %7292 = vst [vmem:[#allocation3 + $0x16c] sm:$0xf] %v6999
        %7293 = vst [vmem:[#allocation3 + $0x190] sm:$0xf] %v7009
        %7294 = vst [vmem:[#allocation3 + $0x1b4] sm:$0xf] %v7023
        %7295 = vst [vmem:[#allocation3 + $0x1d8] sm:$0xf] %v7033
        %7296 = vst [vmem:[#allocation3 + $0x1fc] sm:$0xf] %v7047
        %7297 = vst [vmem:[#allocation3 + $0x220] sm:$0xf] %v7057
        %7298 = vst [vmem:[#allocation3 + $0x244] sm:$0xf] %v7071
        %7299 = vst [vmem:[#allocation3 + $0x268] sm:$0xf] %v7081
        %7300 = vst [vmem:[#allocation3 + $0x28c] sm:$0xf] %v7095
        %7301 = vst [vmem:[#allocation3 + $0x2b0] sm:$0xf] %v7105
        %7302 = vst [vmem:[#allocation3 + $0x2d4] sm:$0xf] %v7119
        %7303 = vst [vmem:[#allocation3 + $0x2f8] sm:$0xf] %v7129
        %7304 = vst [vmem:[#allocation3 + $0x31c] sm:$0xf] %v7143
        %7305 = vst [vmem:[#allocation3 + $0x340] sm:$0xf] %v7153
        %7306 = vst [vmem:[#allocation3 + $0x364] sm:$0xf] %v7167
        %7307 = vst [vmem:[#allocation3 + $0x388] sm:$0xf] %v7177
        %7308 = vst [vmem:[#allocation3 + $0x3ac] sm:$0xf] %v7191
        %7309 = vst [vmem:[#allocation3 + $0x3d0] sm:$0xf] %v7201
        %7310 = vst [vmem:[#allocation3 + $0x3f4] sm:$0xf] %v7215
        %7311 = vst [vmem:[#allocation3 + $0x418] sm:$0xf] %v7225
        %7312 = vst [vmem:[#allocation3 + $0x43c] sm:$0xf] %v7239
        %7313 = vst [vmem:[#allocation3 + $0x460] sm:$0xf] %v7249
        %v7314 = vld [vmem:[#allocation2] sm:$0xe]
        %v7315 = vld [vmem:[#allocation2 + $0x4] sm:$0xf]
        %v7316 = vld [vmem:[#allocation2 + $0x8] sm:$0x1]
        %v7317 = vld [vmem:[#allocation2 + $0xc] sm:$0xe]
        %v7318 = vld [vmem:[#allocation2 + $0x10] sm:$0xf]
        %v7319 = vld [vmem:[#allocation2 + $0x14] sm:$0x1]
        %v7320 = vld [vmem:[#allocation2 + $0x18] sm:$0xe]
        %v7321 = vld [vmem:[#allocation2 + $0x1c] sm:$0xf]
        %v7322 = vld [vmem:[#allocation2 + $0x20] sm:$0x1]
        %v7323 = vld [vmem:[#allocation2 + $0x24] sm:$0xe]
        %v7324 = vld [vmem:[#allocation2 + $0x28] sm:$0xf]
        %v7325 = vld [vmem:[#allocation2 + $0x2c] sm:$0x1]
        %v7326 = vld [vmem:[#allocation2 + $0x30] sm:$0xe]
        %v7327 = vld [vmem:[#allocation2 + $0x34] sm:$0xf]
        %v7328 = vld [vmem:[#allocation2 + $0x38] sm:$0x1]
        %v7329 = vld [vmem:[#allocation2 + $0x3c] sm:$0xe]
        %v7330 = vld [vmem:[#allocation2 + $0x40] sm:$0xf]
        %v7331 = vld [vmem:[#allocation2 + $0x44] sm:$0x1]
        %v7332 = vld [vmem:[#allocation2 + $0x48] sm:$0xe]
        %v7333 = vld [vmem:[#allocation2 + $0x4c] sm:$0xf]
        %v7334 = vld [vmem:[#allocation2 + $0x50] sm:$0x1]
        %v7335 = vld [vmem:[#allocation2 + $0x54] sm:$0xe]
        %v7336 = vld [vmem:[#allocation2 + $0x58] sm:$0xf]
        %v7337 = vld [vmem:[#allocation2 + $0x5c] sm:$0x1]
        %v7338 = vld [vmem:[#allocation2 + $0x60] sm:$0xe]
        %v7339 = vld [vmem:[#allocation2 + $0x64] sm:$0xf]
        %v7340 = vld [vmem:[#allocation2 + $0x68] sm:$0x1]
        %v7341 = vld [vmem:[#allocation2 + $0x6c] sm:$0xe]
        %v7342 = vld [vmem:[#allocation2 + $0x70] sm:$0xf]
        %v7343 = vld [vmem:[#allocation2 + $0x74] sm:$0x1]
        %v7344 = vld [vmem:[#allocation2 + $0x78] sm:$0xe]
        %v7345 = vld [vmem:[#allocation2 + $0x7c] sm:$0xf]
        %v7346 = vld [vmem:[#allocation2 + $0x80] sm:$0x1]
        %v7347 = vld [vmem:[#allocation2 + $0x84] sm:$0xe]
        %v7348 = vld [vmem:[#allocation2 + $0x88] sm:$0xf]
        %v7349 = vld [vmem:[#allocation2 + $0x8c] sm:$0x1]
        %v7350 = vld [vmem:[#allocation2 + $0x90] sm:$0xe]
        %v7351 = vld [vmem:[#allocation2 + $0x94] sm:$0xf]
        %v7352 = vld [vmem:[#allocation2 + $0x98] sm:$0x1]
        %v7353 = vld [vmem:[#allocation2 + $0x9c] sm:$0xe]
        %v7354 = vld [vmem:[#allocation2 + $0xa0] sm:$0xf]
        %v7355 = vld [vmem:[#allocation2 + $0xa4] sm:$0x1]
        %v7356 = vld [vmem:[#allocation2 + $0xa8] sm:$0xe]
        %v7357 = vld [vmem:[#allocation2 + $0xac] sm:$0xf]
        %v7358 = vld [vmem:[#allocation2 + $0xb0] sm:$0x1]
        %v7359 = vld [vmem:[#allocation2 + $0xb4] sm:$0xe]
        %v7360 = vld [vmem:[#allocation2 + $0xb8] sm:$0xf]
        %v7361 = vld [vmem:[#allocation2 + $0xbc] sm:$0x1]
        %v7410 = vrot.slane %v7314, 5
        %v7411 = vrot.slane %v7410, 4
        %v7412 = vrot.slane %v7315, 5
        %v7413 = vsel %vm1614, %v7411, %v7412
        %v7414 = vrot.slane %v7412, 4
        %v7415 = vrot.slane %v7316, 5
        %v7416 = vsel %vm1614, %v7414, %v7415
        %v7417 = vrot.slane %v7317, 5
        %v7418 = vrot.slane %v7417, 4
        %v7419 = vrot.slane %v7318, 5
        %v7420 = vsel %vm1614, %v7418, %v7419
        %v7421 = vrot.slane %v7419, 4
        %v7422 = vrot.slane %v7319, 5
        %v7423 = vsel %vm1614, %v7421, %v7422
        %v7424 = vrot.slane %v7320, 5
        %v7425 = vrot.slane %v7424, 4
        %v7426 = vrot.slane %v7321, 5
        %v7427 = vsel %vm1614, %v7425, %v7426
        %v7428 = vrot.slane %v7426, 4
        %v7429 = vrot.slane %v7322, 5
        %v7430 = vsel %vm1614, %v7428, %v7429
        %v7431 = vrot.slane %v7323, 5
        %v7432 = vrot.slane %v7431, 4
        %v7433 = vrot.slane %v7324, 5
        %v7434 = vsel %vm1614, %v7432, %v7433
        %v7435 = vrot.slane %v7433, 4
        %v7436 = vrot.slane %v7325, 5
        %v7437 = vsel %vm1614, %v7435, %v7436
        %v7438 = vrot.slane %v7326, 5
        %v7439 = vrot.slane %v7438, 4
        %v7440 = vrot.slane %v7327, 5
        %v7441 = vsel %vm1614, %v7439, %v7440
        %v7442 = vrot.slane %v7440, 4
        %v7443 = vrot.slane %v7328, 5
        %v7444 = vsel %vm1614, %v7442, %v7443
        %v7445 = vrot.slane %v7329, 5
        %v7446 = vrot.slane %v7445, 4
        %v7447 = vrot.slane %v7330, 5
        %v7448 = vsel %vm1614, %v7446, %v7447
        %v7449 = vrot.slane %v7447, 4
        %v7450 = vrot.slane %v7331, 5
        %v7451 = vsel %vm1614, %v7449, %v7450
        %v7452 = vrot.slane %v7332, 5
        %v7453 = vrot.slane %v7452, 4
        %v7454 = vrot.slane %v7333, 5
        %v7455 = vsel %vm1614, %v7453, %v7454
        %v7456 = vrot.slane %v7454, 4
        %v7457 = vrot.slane %v7334, 5
        %v7458 = vsel %vm1614, %v7456, %v7457
        %v7459 = vrot.slane %v7335, 5
        %v7460 = vrot.slane %v7459, 4
        %v7461 = vrot.slane %v7336, 5
        %v7462 = vsel %vm1614, %v7460, %v7461
        %v7463 = vrot.slane %v7461, 4
        %v7464 = vrot.slane %v7337, 5
        %v7465 = vsel %vm1614, %v7463, %v7464
        %v7466 = vrot.slane %v7338, 5
        %v7467 = vrot.slane %v7466, 4
        %v7468 = vrot.slane %v7339, 5
        %v7469 = vsel %vm1614, %v7467, %v7468
        %v7470 = vrot.slane %v7468, 4
        %v7471 = vrot.slane %v7340, 5
        %v7472 = vsel %vm1614, %v7470, %v7471
        %v7473 = vrot.slane %v7341, 5
        %v7474 = vrot.slane %v7473, 4
        %v7475 = vrot.slane %v7342, 5
        %v7476 = vsel %vm1614, %v7474, %v7475
        %v7477 = vrot.slane %v7475, 4
        %v7478 = vrot.slane %v7343, 5
        %v7479 = vsel %vm1614, %v7477, %v7478
        %v7480 = vrot.slane %v7344, 5
        %v7481 = vrot.slane %v7480, 4
        %v7482 = vrot.slane %v7345, 5
        %v7483 = vsel %vm1614, %v7481, %v7482
        %v7484 = vrot.slane %v7482, 4
        %v7485 = vrot.slane %v7346, 5
        %v7486 = vsel %vm1614, %v7484, %v7485
        %v7487 = vrot.slane %v7347, 5
        %v7488 = vrot.slane %v7487, 4
        %v7489 = vrot.slane %v7348, 5
        %v7490 = vsel %vm1614, %v7488, %v7489
        %v7491 = vrot.slane %v7489, 4
        %v7492 = vrot.slane %v7349, 5
        %v7493 = vsel %vm1614, %v7491, %v7492
        %v7494 = vrot.slane %v7350, 5
        %v7495 = vrot.slane %v7494, 4
        %v7496 = vrot.slane %v7351, 5
        %v7497 = vsel %vm1614, %v7495, %v7496
        %v7498 = vrot.slane %v7496, 4
        %v7499 = vrot.slane %v7352, 5
        %v7500 = vsel %vm1614, %v7498, %v7499
        %v7501 = vrot.slane %v7353, 5
        %v7502 = vrot.slane %v7501, 4
        %v7503 = vrot.slane %v7354, 5
        %v7504 = vsel %vm1614, %v7502, %v7503
        %v7505 = vrot.slane %v7503, 4
        %v7506 = vrot.slane %v7355, 5
        %v7507 = vsel %vm1614, %v7505, %v7506
        %v7508 = vrot.slane %v7356, 5
        %v7509 = vrot.slane %v7508, 4
        %v7510 = vrot.slane %v7357, 5
        %v7511 = vsel %vm1614, %v7509, %v7510
        %v7512 = vrot.slane %v7510, 4
        %v7513 = vrot.slane %v7358, 5
        %v7514 = vsel %vm1614, %v7512, %v7513
        %v7515 = vrot.slane %v7359, 5
        %v7516 = vrot.slane %v7515, 4
        %v7517 = vrot.slane %v7360, 5
        %v7518 = vsel %vm1614, %v7516, %v7517
        %v7519 = vrot.slane %v7517, 4
        %v7520 = vrot.slane %v7361, 5
        %v7521 = vsel %vm1614, %v7519, %v7520
        %7554 = vst [vmem:[#allocation3 + $0x8] sm:$0xf] %v7413
        %7555 = vst [vmem:[#allocation3 + $0x2c] sm:$0xf] %v7416
        %7556 = vst [vmem:[#allocation3 + $0x50] sm:$0xf] %v7420
        %7557 = vst [vmem:[#allocation3 + $0x74] sm:$0xf] %v7423
        %7558 = vst [vmem:[#allocation3 + $0x98] sm:$0xf] %v7427
        %7559 = vst [vmem:[#allocation3 + $0xbc] sm:$0xf] %v7430
        %7560 = vst [vmem:[#allocation3 + $0xe0] sm:$0xf] %v7434
        %7561 = vst [vmem:[#allocation3 + $0x104] sm:$0xf] %v7437
        %7562 = vst [vmem:[#allocation3 + $0x128] sm:$0xf] %v7441
        %7563 = vst [vmem:[#allocation3 + $0x14c] sm:$0xf] %v7444
        %7564 = vst [vmem:[#allocation3 + $0x170] sm:$0xf] %v7448
        %7565 = vst [vmem:[#allocation3 + $0x194] sm:$0xf] %v7451
        %7566 = vst [vmem:[#allocation3 + $0x1b8] sm:$0xf] %v7455
        %7567 = vst [vmem:[#allocation3 + $0x1dc] sm:$0xf] %v7458
        %7568 = vst [vmem:[#allocation3 + $0x200] sm:$0xf] %v7462
        %7569 = vst [vmem:[#allocation3 + $0x224] sm:$0xf] %v7465
        %7570 = vst [vmem:[#allocation3 + $0x248] sm:$0xf] %v7469
        %7571 = vst [vmem:[#allocation3 + $0x26c] sm:$0xf] %v7472
        %7572 = vst [vmem:[#allocation3 + $0x290] sm:$0xf] %v7476
        %7573 = vst [vmem:[#allocation3 + $0x2b4] sm:$0xf] %v7479
        %7574 = vst [vmem:[#allocation3 + $0x2d8] sm:$0xf] %v7483
        %7575 = vst [vmem:[#allocation3 + $0x2fc] sm:$0xf] %v7486
        %7576 = vst [vmem:[#allocation3 + $0x320] sm:$0xf] %v7490
        %7577 = vst [vmem:[#allocation3 + $0x344] sm:$0xf] %v7493
        %7578 = vst [vmem:[#allocation3 + $0x368] sm:$0xf] %v7497
        %7579 = vst [vmem:[#allocation3 + $0x38c] sm:$0xf] %v7500
        %7580 = vst [vmem:[#allocation3 + $0x3b0] sm:$0xf] %v7504
        %7581 = vst [vmem:[#allocation3 + $0x3d4] sm:$0xf] %v7507
        %7582 = vst [vmem:[#allocation3 + $0x3f8] sm:$0xf] %v7511
        %7583 = vst [vmem:[#allocation3 + $0x41c] sm:$0xf] %v7514
        %7584 = vst [vmem:[#allocation3 + $0x440] sm:$0xf] %v7518
        %7585 = vst [vmem:[#allocation3 + $0x464] sm:$0xf] %v7521
        %v7586 = vld [vmem:[%s838] sm:$0xf]
        %v7587 = vld [vmem:[%s838 + $0x4] sm:$0xf]
        %v7588 = vld [vmem:[%s838 + $0xc] sm:$0xf]
        %v7589 = vld [vmem:[%s838 + $0x10] sm:$0xf]
        %v7590 = vld [vmem:[%s838 + $0x18] sm:$0xf]
        %v7591 = vld [vmem:[%s838 + $0x1c] sm:$0xf]
        %v7592 = vld [vmem:[%s838 + $0x24] sm:$0xf]
        %v7593 = vld [vmem:[%s838 + $0x28] sm:$0xf]
        %v7594 = vld [vmem:[%s838 + $0x30] sm:$0xf]
        %v7595 = vld [vmem:[%s838 + $0x34] sm:$0xf]
        %v7596 = vld [vmem:[%s838 + $0x3c] sm:$0xf]
        %v7597 = vld [vmem:[%s838 + $0x40] sm:$0xf]
        %v7598 = vld [vmem:[%s838 + $0x48] sm:$0xf]
        %v7599 = vld [vmem:[%s838 + $0x4c] sm:$0xf]
        %v7600 = vld [vmem:[%s838 + $0x54] sm:$0xf]
        %v7601 = vld [vmem:[%s838 + $0x58] sm:$0xf]
        %v7602 = vld [vmem:[%s838 + $0x60] sm:$0xf]
        %v7603 = vld [vmem:[%s838 + $0x64] sm:$0xf]
        %v7604 = vld [vmem:[%s838 + $0x6c] sm:$0xf]
        %v7605 = vld [vmem:[%s838 + $0x70] sm:$0xf]
        %v7606 = vld [vmem:[%s838 + $0x78] sm:$0xf]
        %v7607 = vld [vmem:[%s838 + $0x7c] sm:$0xf]
        %v7608 = vld [vmem:[%s838 + $0x84] sm:$0xf]
        %v7609 = vld [vmem:[%s838 + $0x88] sm:$0xf]
        %v7610 = vld [vmem:[%s838 + $0x90] sm:$0xf]
        %v7611 = vld [vmem:[%s838 + $0x94] sm:$0xf]
        %v7612 = vld [vmem:[%s838 + $0x9c] sm:$0xf]
        %v7613 = vld [vmem:[%s838 + $0xa0] sm:$0xf]
        %v7614 = vld [vmem:[%s838 + $0xa8] sm:$0xf]
        %v7615 = vld [vmem:[%s838 + $0xac] sm:$0xf]
        %v7616 = vld [vmem:[%s838 + $0xb4] sm:$0xf]
        %v7617 = vld [vmem:[%s838 + $0xb8] sm:$0xf]
        %7618 = vst [vmem:[#allocation3 + $0xc] sm:$0xf] %v7586
        %7619 = vst [vmem:[#allocation3 + $0x30] sm:$0xf] %v7587
        %7620 = vst [vmem:[#allocation3 + $0x54] sm:$0xf] %v7588
        %7621 = vst [vmem:[#allocation3 + $0x78] sm:$0xf] %v7589
        %7622 = vst [vmem:[#allocation3 + $0x9c] sm:$0xf] %v7590
        %7623 = vst [vmem:[#allocation3 + $0xc0] sm:$0xf] %v7591
        %7624 = vst [vmem:[#allocation3 + $0xe4] sm:$0xf] %v7592
        %7625 = vst [vmem:[#allocation3 + $0x108] sm:$0xf] %v7593
        %7626 = vst [vmem:[#allocation3 + $0x12c] sm:$0xf] %v7594
        %7627 = vst [vmem:[#allocation3 + $0x150] sm:$0xf] %v7595
        %7628 = vst [vmem:[#allocation3 + $0x174] sm:$0xf] %v7596
        %7629 = vst [vmem:[#allocation3 + $0x198] sm:$0xf] %v7597
        %7630 = vst [vmem:[#allocation3 + $0x1bc] sm:$0xf] %v7598
        %7631 = vst [vmem:[#allocation3 + $0x1e0] sm:$0xf] %v7599
        %7632 = vst [vmem:[#allocation3 + $0x204] sm:$0xf] %v7600
        %7633 = vst [vmem:[#allocation3 + $0x228] sm:$0xf] %v7601
        %7634 = vst [vmem:[#allocation3 + $0x24c] sm:$0xf] %v7602
        %7635 = vst [vmem:[#allocation3 + $0x270] sm:$0xf] %v7603
        %7636 = vst [vmem:[#allocation3 + $0x294] sm:$0xf] %v7604
        %7637 = vst [vmem:[#allocation3 + $0x2b8] sm:$0xf] %v7605
        %7638 = vst [vmem:[#allocation3 + $0x2dc] sm:$0xf] %v7606
        %7639 = vst [vmem:[#allocation3 + $0x300] sm:$0xf] %v7607
        %7640 = vst [vmem:[#allocation3 + $0x324] sm:$0xf] %v7608
        %7641 = vst [vmem:[#allocation3 + $0x348] sm:$0xf] %v7609
        %7642 = vst [vmem:[#allocation3 + $0x36c] sm:$0xf] %v7610
        %7643 = vst [vmem:[#allocation3 + $0x390] sm:$0xf] %v7611
        %7644 = vst [vmem:[#allocation3 + $0x3b4] sm:$0xf] %v7612
        %7645 = vst [vmem:[#allocation3 + $0x3d8] sm:$0xf] %v7613
        %7646 = vst [vmem:[#allocation3 + $0x3fc] sm:$0xf] %v7614
        %7647 = vst [vmem:[#allocation3 + $0x420] sm:$0xf] %v7615
        %7648 = vst [vmem:[#allocation3 + $0x444] sm:$0xf] %v7616
        %7649 = vst [vmem:[#allocation3 + $0x468] sm:$0xf] %v7617
        %v7650 = vld [vmem:[%s838] sm:$0xf]
        %v7651 = vld [vmem:[%s838 + $0x4] sm:$0xf]
        %v7652 = vld [vmem:[%s838 + $0x8] sm:$0x1]
        %v7653 = vld [vmem:[%s838 + $0xc] sm:$0xf]
        %v7654 = vld [vmem:[%s838 + $0x10] sm:$0xf]
        %v7655 = vld [vmem:[%s838 + $0x14] sm:$0x1]
        %v7656 = vld [vmem:[%s838 + $0x18] sm:$0xf]
        %v7657 = vld [vmem:[%s838 + $0x1c] sm:$0xf]
        %v7658 = vld [vmem:[%s838 + $0x20] sm:$0x1]
        %v7659 = vld [vmem:[%s838 + $0x24] sm:$0xf]
        %v7660 = vld [vmem:[%s838 + $0x28] sm:$0xf]
        %v7661 = vld [vmem:[%s838 + $0x2c] sm:$0x1]
        %v7662 = vld [vmem:[%s838 + $0x30] sm:$0xf]
        %v7663 = vld [vmem:[%s838 + $0x34] sm:$0xf]
        %v7664 = vld [vmem:[%s838 + $0x38] sm:$0x1]
        %v7665 = vld [vmem:[%s838 + $0x3c] sm:$0xf]
        %v7666 = vld [vmem:[%s838 + $0x40] sm:$0xf]
        %v7667 = vld [vmem:[%s838 + $0x44] sm:$0x1]
        %v7668 = vld [vmem:[%s838 + $0x48] sm:$0xf]
        %v7669 = vld [vmem:[%s838 + $0x4c] sm:$0xf]
        %v7670 = vld [vmem:[%s838 + $0x50] sm:$0x1]
        %v7671 = vld [vmem:[%s838 + $0x54] sm:$0xf]
        %v7672 = vld [vmem:[%s838 + $0x58] sm:$0xf]
        %v7673 = vld [vmem:[%s838 + $0x5c] sm:$0x1]
        %v7674 = vld [vmem:[%s838 + $0x60] sm:$0xf]
        %v7675 = vld [vmem:[%s838 + $0x64] sm:$0xf]
        %v7676 = vld [vmem:[%s838 + $0x68] sm:$0x1]
        %v7677 = vld [vmem:[%s838 + $0x6c] sm:$0xf]
        %v7678 = vld [vmem:[%s838 + $0x70] sm:$0xf]
        %v7679 = vld [vmem:[%s838 + $0x74] sm:$0x1]
        %v7680 = vld [vmem:[%s838 + $0x78] sm:$0xf]
        %v7681 = vld [vmem:[%s838 + $0x7c] sm:$0xf]
        %v7682 = vld [vmem:[%s838 + $0x80] sm:$0x1]
        %v7683 = vld [vmem:[%s838 + $0x84] sm:$0xf]
        %v7684 = vld [vmem:[%s838 + $0x88] sm:$0xf]
        %v7685 = vld [vmem:[%s838 + $0x8c] sm:$0x1]
        %v7686 = vld [vmem:[%s838 + $0x90] sm:$0xf]
        %v7687 = vld [vmem:[%s838 + $0x94] sm:$0xf]
        %v7688 = vld [vmem:[%s838 + $0x98] sm:$0x1]
        %v7689 = vld [vmem:[%s838 + $0x9c] sm:$0xf]
        %v7690 = vld [vmem:[%s838 + $0xa0] sm:$0xf]
        %v7691 = vld [vmem:[%s838 + $0xa4] sm:$0x1]
        %v7692 = vld [vmem:[%s838 + $0xa8] sm:$0xf]
        %v7693 = vld [vmem:[%s838 + $0xac] sm:$0xf]
        %v7694 = vld [vmem:[%s838 + $0xb0] sm:$0x1]
        %v7695 = vld [vmem:[%s838 + $0xb4] sm:$0xf]
        %v7696 = vld [vmem:[%s838 + $0xb8] sm:$0xf]
        %v7697 = vld [vmem:[%s838 + $0xbc] sm:$0x1]
        %v7699 = vshrl.u32 %v7650, 16
        %v7701 = vrot.slane %v7699, 4
        %v7702 = vshll.u32 %v7650, 16
        %v7704 = vrot.slane %v7702, 5
        %v7705 = vor.u32 %v7701, %v7704
        %v7706 = vrot.slane %v7705, 4
        %v7708 = vshll.u32 %v7651, 16
        %v7710 = vrot.slane %v7708, 5
        %v7711 = vsel %vm1067, %v7706, %v7710
        %v7712 = vshrl.u32 %v7651, 16
        %v7714 = vrot.slane %v7712, 4
        %v7715 = vor.u32 %v7714, %v7710
        %v7716 = vrot.slane %v7715, 4
        %v7718 = vshll.u32 %v7652, 16
        %v7720 = vrot.slane %v7718, 5
        %v7721 = vsel %vm1067, %v7716, %v7720
        %v7723 = vshrl.u32 %v7653, 16
        %v7725 = vrot.slane %v7723, 4
        %v7726 = vshll.u32 %v7653, 16
        %v7728 = vrot.slane %v7726, 5
        %v7729 = vor.u32 %v7725, %v7728
        %v7730 = vrot.slane %v7729, 4
        %v7732 = vshll.u32 %v7654, 16
        %v7734 = vrot.slane %v7732, 5
        %v7735 = vsel %vm1067, %v7730, %v7734
        %v7736 = vshrl.u32 %v7654, 16
        %v7738 = vrot.slane %v7736, 4
        %v7739 = vor.u32 %v7738, %v7734
        %v7740 = vrot.slane %v7739, 4
        %v7742 = vshll.u32 %v7655, 16
        %v7744 = vrot.slane %v7742, 5
        %v7745 = vsel %vm1067, %v7740, %v7744
        %v7747 = vshrl.u32 %v7656, 16
        %v7749 = vrot.slane %v7747, 4
        %v7750 = vshll.u32 %v7656, 16
        %v7752 = vrot.slane %v7750, 5
        %v7753 = vor.u32 %v7749, %v7752
        %v7754 = vrot.slane %v7753, 4
        %v7756 = vshll.u32 %v7657, 16
        %v7758 = vrot.slane %v7756, 5
        %v7759 = vsel %vm1067, %v7754, %v7758
        %v7760 = vshrl.u32 %v7657, 16
        %v7762 = vrot.slane %v7760, 4
        %v7763 = vor.u32 %v7762, %v7758
        %v7764 = vrot.slane %v7763, 4
        %v7766 = vshll.u32 %v7658, 16
        %v7768 = vrot.slane %v7766, 5
        %v7769 = vsel %vm1067, %v7764, %v7768
        %v7771 = vshrl.u32 %v7659, 16
        %v7773 = vrot.slane %v7771, 4
        %v7774 = vshll.u32 %v7659, 16
        %v7776 = vrot.slane %v7774, 5
        %v7777 = vor.u32 %v7773, %v7776
        %v7778 = vrot.slane %v7777, 4
        %v7780 = vshll.u32 %v7660, 16
        %v7782 = vrot.slane %v7780, 5
        %v7783 = vsel %vm1067, %v7778, %v7782
        %v7784 = vshrl.u32 %v7660, 16
        %v7786 = vrot.slane %v7784, 4
        %v7787 = vor.u32 %v7786, %v7782
        %v7788 = vrot.slane %v7787, 4
        %v7790 = vshll.u32 %v7661, 16
        %v7792 = vrot.slane %v7790, 5
        %v7793 = vsel %vm1067, %v7788, %v7792
        %v7795 = vshrl.u32 %v7662, 16
        %v7797 = vrot.slane %v7795, 4
        %v7798 = vshll.u32 %v7662, 16
        %v7800 = vrot.slane %v7798, 5
        %v7801 = vor.u32 %v7797, %v7800
        %v7802 = vrot.slane %v7801, 4
        %v7804 = vshll.u32 %v7663, 16
        %v7806 = vrot.slane %v7804, 5
        %v7807 = vsel %vm1067, %v7802, %v7806
        %v7808 = vshrl.u32 %v7663, 16
        %v7810 = vrot.slane %v7808, 4
        %v7811 = vor.u32 %v7810, %v7806
        %v7812 = vrot.slane %v7811, 4
        %v7814 = vshll.u32 %v7664, 16
        %v7816 = vrot.slane %v7814, 5
        %v7817 = vsel %vm1067, %v7812, %v7816
        %v7819 = vshrl.u32 %v7665, 16
        %v7821 = vrot.slane %v7819, 4
        %v7822 = vshll.u32 %v7665, 16
        %v7824 = vrot.slane %v7822, 5
        %v7825 = vor.u32 %v7821, %v7824
        %v7826 = vrot.slane %v7825, 4
        %v7828 = vshll.u32 %v7666, 16
        %v7830 = vrot.slane %v7828, 5
        %v7831 = vsel %vm1067, %v7826, %v7830
        %v7832 = vshrl.u32 %v7666, 16
        %v7834 = vrot.slane %v7832, 4
        %v7835 = vor.u32 %v7834, %v7830
        %v7836 = vrot.slane %v7835, 4
        %v7838 = vshll.u32 %v7667, 16
        %v7840 = vrot.slane %v7838, 5
        %v7841 = vsel %vm1067, %v7836, %v7840
        %v7843 = vshrl.u32 %v7668, 16
        %v7845 = vrot.slane %v7843, 4
        %v7846 = vshll.u32 %v7668, 16
        %v7848 = vrot.slane %v7846, 5
        %v7849 = vor.u32 %v7845, %v7848
        %v7850 = vrot.slane %v7849, 4
        %v7852 = vshll.u32 %v7669, 16
        %v7854 = vrot.slane %v7852, 5
        %v7855 = vsel %vm1067, %v7850, %v7854
        %v7856 = vshrl.u32 %v7669, 16
        %v7858 = vrot.slane %v7856, 4
        %v7859 = vor.u32 %v7858, %v7854
        %v7860 = vrot.slane %v7859, 4
        %v7862 = vshll.u32 %v7670, 16
        %v7864 = vrot.slane %v7862, 5
        %v7865 = vsel %vm1067, %v7860, %v7864
        %v7867 = vshrl.u32 %v7671, 16
        %v7869 = vrot.slane %v7867, 4
        %v7870 = vshll.u32 %v7671, 16
        %v7872 = vrot.slane %v7870, 5
        %v7873 = vor.u32 %v7869, %v7872
        %v7874 = vrot.slane %v7873, 4
        %v7876 = vshll.u32 %v7672, 16
        %v7878 = vrot.slane %v7876, 5
        %v7879 = vsel %vm1067, %v7874, %v7878
        %v7880 = vshrl.u32 %v7672, 16
        %v7882 = vrot.slane %v7880, 4
        %v7883 = vor.u32 %v7882, %v7878
        %v7884 = vrot.slane %v7883, 4
        %v7886 = vshll.u32 %v7673, 16
        %v7888 = vrot.slane %v7886, 5
        %v7889 = vsel %vm1067, %v7884, %v7888
        %v7891 = vshrl.u32 %v7674, 16
        %v7893 = vrot.slane %v7891, 4
        %v7894 = vshll.u32 %v7674, 16
        %v7896 = vrot.slane %v7894, 5
        %v7897 = vor.u32 %v7893, %v7896
        %v7898 = vrot.slane %v7897, 4
        %v7900 = vshll.u32 %v7675, 16
        %v7902 = vrot.slane %v7900, 5
        %v7903 = vsel %vm1067, %v7898, %v7902
        %v7904 = vshrl.u32 %v7675, 16
        %v7906 = vrot.slane %v7904, 4
        %v7907 = vor.u32 %v7906, %v7902
        %v7908 = vrot.slane %v7907, 4
        %v7910 = vshll.u32 %v7676, 16
        %v7912 = vrot.slane %v7910, 5
        %v7913 = vsel %vm1067, %v7908, %v7912
        %v7915 = vshrl.u32 %v7677, 16
        %v7917 = vrot.slane %v7915, 4
        %v7918 = vshll.u32 %v7677, 16
        %v7920 = vrot.slane %v7918, 5
        %v7921 = vor.u32 %v7917, %v7920
        %v7922 = vrot.slane %v7921, 4
        %v7924 = vshll.u32 %v7678, 16
        %v7926 = vrot.slane %v7924, 5
        %v7927 = vsel %vm1067, %v7922, %v7926
        %v7928 = vshrl.u32 %v7678, 16
        %v7930 = vrot.slane %v7928, 4
        %v7931 = vor.u32 %v7930, %v7926
        %v7932 = vrot.slane %v7931, 4
        %v7934 = vshll.u32 %v7679, 16
        %v7936 = vrot.slane %v7934, 5
        %v7937 = vsel %vm1067, %v7932, %v7936
        %v7939 = vshrl.u32 %v7680, 16
        %v7941 = vrot.slane %v7939, 4
        %v7942 = vshll.u32 %v7680, 16
        %v7944 = vrot.slane %v7942, 5
        %v7945 = vor.u32 %v7941, %v7944
        %v7946 = vrot.slane %v7945, 4
        %v7948 = vshll.u32 %v7681, 16
        %v7950 = vrot.slane %v7948, 5
        %v7951 = vsel %vm1067, %v7946, %v7950
        %v7952 = vshrl.u32 %v7681, 16
        %v7954 = vrot.slane %v7952, 4
        %v7955 = vor.u32 %v7954, %v7950
        %v7956 = vrot.slane %v7955, 4
        %v7958 = vshll.u32 %v7682, 16
        %v7960 = vrot.slane %v7958, 5
        %v7961 = vsel %vm1067, %v7956, %v7960
        %v7963 = vshrl.u32 %v7683, 16
        %v7965 = vrot.slane %v7963, 4
        %v7966 = vshll.u32 %v7683, 16
        %v7968 = vrot.slane %v7966, 5
        %v7969 = vor.u32 %v7965, %v7968
        %v7970 = vrot.slane %v7969, 4
        %v7972 = vshll.u32 %v7684, 16
        %v7974 = vrot.slane %v7972, 5
        %v7975 = vsel %vm1067, %v7970, %v7974
        %v7976 = vshrl.u32 %v7684, 16
        %v7978 = vrot.slane %v7976, 4
        %v7979 = vor.u32 %v7978, %v7974
        %v7980 = vrot.slane %v7979, 4
        %v7982 = vshll.u32 %v7685, 16
        %v7984 = vrot.slane %v7982, 5
        %v7985 = vsel %vm1067, %v7980, %v7984
        %v7987 = vshrl.u32 %v7686, 16
        %v7989 = vrot.slane %v7987, 4
        %v7990 = vshll.u32 %v7686, 16
        %v7992 = vrot.slane %v7990, 5
        %v7993 = vor.u32 %v7989, %v7992
        %v7994 = vrot.slane %v7993, 4
        %v7996 = vshll.u32 %v7687, 16
        %v7998 = vrot.slane %v7996, 5
        %v7999 = vsel %vm1067, %v7994, %v7998
        %v8000 = vshrl.u32 %v7687, 16
        %v8002 = vrot.slane %v8000, 4
        %v8003 = vor.u32 %v8002, %v7998
        %v8004 = vrot.slane %v8003, 4
        %v8006 = vshll.u32 %v7688, 16
        %v8008 = vrot.slane %v8006, 5
        %v8009 = vsel %vm1067, %v8004, %v8008
        %v8011 = vshrl.u32 %v7689, 16
        %v8013 = vrot.slane %v8011, 4
        %v8014 = vshll.u32 %v7689, 16
        %v8016 = vrot.slane %v8014, 5
        %v8017 = vor.u32 %v8013, %v8016
        %v8018 = vrot.slane %v8017, 4
        %v8020 = vshll.u32 %v7690, 16
        %v8022 = vrot.slane %v8020, 5
        %v8023 = vsel %vm1067, %v8018, %v8022
        %v8024 = vshrl.u32 %v7690, 16
        %v8026 = vrot.slane %v8024, 4
        %v8027 = vor.u32 %v8026, %v8022
        %v8028 = vrot.slane %v8027, 4
        %v8030 = vshll.u32 %v7691, 16
        %v8032 = vrot.slane %v8030, 5
        %v8033 = vsel %vm1067, %v8028, %v8032
        %v8035 = vshrl.u32 %v7692, 16
        %v8037 = vrot.slane %v8035, 4
        %v8038 = vshll.u32 %v7692, 16
        %v8040 = vrot.slane %v8038, 5
        %v8041 = vor.u32 %v8037, %v8040
        %v8042 = vrot.slane %v8041, 4
        %v8044 = vshll.u32 %v7693, 16
        %v8046 = vrot.slane %v8044, 5
        %v8047 = vsel %vm1067, %v8042, %v8046
        %v8048 = vshrl.u32 %v7693, 16
        %v8050 = vrot.slane %v8048, 4
        %v8051 = vor.u32 %v8050, %v8046
        %v8052 = vrot.slane %v8051, 4
        %v8054 = vshll.u32 %v7694, 16
        %v8056 = vrot.slane %v8054, 5
        %v8057 = vsel %vm1067, %v8052, %v8056
        %v8059 = vshrl.u32 %v7695, 16
        %v8061 = vrot.slane %v8059, 4
        %v8062 = vshll.u32 %v7695, 16
        %v8064 = vrot.slane %v8062, 5
        %v8065 = vor.u32 %v8061, %v8064
        %v8066 = vrot.slane %v8065, 4
        %v8068 = vshll.u32 %v7696, 16
        %v8070 = vrot.slane %v8068, 5
        %v8071 = vsel %vm1067, %v8066, %v8070
        %v8072 = vshrl.u32 %v7696, 16
        %v8074 = vrot.slane %v8072, 4
        %v8075 = vor.u32 %v8074, %v8070
        %v8076 = vrot.slane %v8075, 4
        %v8078 = vshll.u32 %v7697, 16
        %v8080 = vrot.slane %v8078, 5
        %v8081 = vsel %vm1067, %v8076, %v8080
        %8114 = vst [vmem:[#allocation3 + $0x10] sm:$0xf] %v7711
        %8115 = vst [vmem:[#allocation3 + $0x34] sm:$0xf] %v7721
        %8116 = vst [vmem:[#allocation3 + $0x58] sm:$0xf] %v7735
        %8117 = vst [vmem:[#allocation3 + $0x7c] sm:$0xf] %v7745
        %8118 = vst [vmem:[#allocation3 + $0xa0] sm:$0xf] %v7759
        %8119 = vst [vmem:[#allocation3 + $0xc4] sm:$0xf] %v7769
        %8120 = vst [vmem:[#allocation3 + $0xe8] sm:$0xf] %v7783
        %8121 = vst [vmem:[#allocation3 + $0x10c] sm:$0xf] %v7793
        %8122 = vst [vmem:[#allocation3 + $0x130] sm:$0xf] %v7807
        %8123 = vst [vmem:[#allocation3 + $0x154] sm:$0xf] %v7817
        %8124 = vst [vmem:[#allocation3 + $0x178] sm:$0xf] %v7831
        %8125 = vst [vmem:[#allocation3 + $0x19c] sm:$0xf] %v7841
        %8126 = vst [vmem:[#allocation3 + $0x1c0] sm:$0xf] %v7855
        %8127 = vst [vmem:[#allocation3 + $0x1e4] sm:$0xf] %v7865
        %8128 = vst [vmem:[#allocation3 + $0x208] sm:$0xf] %v7879
        %8129 = vst [vmem:[#allocation3 + $0x22c] sm:$0xf] %v7889
        %8130 = vst [vmem:[#allocation3 + $0x250] sm:$0xf] %v7903
        %8131 = vst [vmem:[#allocation3 + $0x274] sm:$0xf] %v7913
        %8132 = vst [vmem:[#allocation3 + $0x298] sm:$0xf] %v7927
        %8133 = vst [vmem:[#allocation3 + $0x2bc] sm:$0xf] %v7937
        %8134 = vst [vmem:[#allocation3 + $0x2e0] sm:$0xf] %v7951
        %8135 = vst [vmem:[#allocation3 + $0x304] sm:$0xf] %v7961
        %8136 = vst [vmem:[#allocation3 + $0x328] sm:$0xf] %v7975
        %8137 = vst [vmem:[#allocation3 + $0x34c] sm:$0xf] %v7985
        %8138 = vst [vmem:[#allocation3 + $0x370] sm:$0xf] %v7999
        %8139 = vst [vmem:[#allocation3 + $0x394] sm:$0xf] %v8009
        %8140 = vst [vmem:[#allocation3 + $0x3b8] sm:$0xf] %v8023
        %8141 = vst [vmem:[#allocation3 + $0x3dc] sm:$0xf] %v8033
        %8142 = vst [vmem:[#allocation3 + $0x400] sm:$0xf] %v8047
        %8143 = vst [vmem:[#allocation3 + $0x424] sm:$0xf] %v8057
        %8144 = vst [vmem:[#allocation3 + $0x448] sm:$0xf] %v8071
        %8145 = vst [vmem:[#allocation3 + $0x46c] sm:$0xf] %v8081
        %v8146 = vld [vmem:[%s838] sm:$0xe]
        %v8147 = vld [vmem:[%s838 + $0x4] sm:$0xf]
        %v8148 = vld [vmem:[%s838 + $0x8] sm:$0x1]
        %v8149 = vld [vmem:[%s838 + $0xc] sm:$0xe]
        %v8150 = vld [vmem:[%s838 + $0x10] sm:$0xf]
        %v8151 = vld [vmem:[%s838 + $0x14] sm:$0x1]
        %v8152 = vld [vmem:[%s838 + $0x18] sm:$0xe]
        %v8153 = vld [vmem:[%s838 + $0x1c] sm:$0xf]
        %v8154 = vld [vmem:[%s838 + $0x20] sm:$0x1]
        %v8155 = vld [vmem:[%s838 + $0x24] sm:$0xe]
        %v8156 = vld [vmem:[%s838 + $0x28] sm:$0xf]
        %v8157 = vld [vmem:[%s838 + $0x2c] sm:$0x1]
        %v8158 = vld [vmem:[%s838 + $0x30] sm:$0xe]
        %v8159 = vld [vmem:[%s838 + $0x34] sm:$0xf]
        %v8160 = vld [vmem:[%s838 + $0x38] sm:$0x1]
        %v8161 = vld [vmem:[%s838 + $0x3c] sm:$0xe]
        %v8162 = vld [vmem:[%s838 + $0x40] sm:$0xf]
        %v8163 = vld [vmem:[%s838 + $0x44] sm:$0x1]
        %v8164 = vld [vmem:[%s838 + $0x48] sm:$0xe]
        %v8165 = vld [vmem:[%s838 + $0x4c] sm:$0xf]
        %v8166 = vld [vmem:[%s838 + $0x50] sm:$0x1]
        %v8167 = vld [vmem:[%s838 + $0x54] sm:$0xe]
        %v8168 = vld [vmem:[%s838 + $0x58] sm:$0xf]
        %v8169 = vld [vmem:[%s838 + $0x5c] sm:$0x1]
        %v8170 = vld [vmem:[%s838 + $0x60] sm:$0xe]
        %v8171 = vld [vmem:[%s838 + $0x64] sm:$0xf]
        %v8172 = vld [vmem:[%s838 + $0x68] sm:$0x1]
        %v8173 = vld [vmem:[%s838 + $0x6c] sm:$0xe]
        %v8174 = vld [vmem:[%s838 + $0x70] sm:$0xf]
        %v8175 = vld [vmem:[%s838 + $0x74] sm:$0x1]
        %v8176 = vld [vmem:[%s838 + $0x78] sm:$0xe]
        %v8177 = vld [vmem:[%s838 + $0x7c] sm:$0xf]
        %v8178 = vld [vmem:[%s838 + $0x80] sm:$0x1]
        %v8179 = vld [vmem:[%s838 + $0x84] sm:$0xe]
        %v8180 = vld [vmem:[%s838 + $0x88] sm:$0xf]
        %v8181 = vld [vmem:[%s838 + $0x8c] sm:$0x1]
        %v8182 = vld [vmem:[%s838 + $0x90] sm:$0xe]
        %v8183 = vld [vmem:[%s838 + $0x94] sm:$0xf]
        %v8184 = vld [vmem:[%s838 + $0x98] sm:$0x1]
        %v8185 = vld [vmem:[%s838 + $0x9c] sm:$0xe]
        %v8186 = vld [vmem:[%s838 + $0xa0] sm:$0xf]
        %v8187 = vld [vmem:[%s838 + $0xa4] sm:$0x1]
        %v8188 = vld [vmem:[%s838 + $0xa8] sm:$0xe]
        %v8189 = vld [vmem:[%s838 + $0xac] sm:$0xf]
        %v8190 = vld [vmem:[%s838 + $0xb0] sm:$0x1]
        %v8191 = vld [vmem:[%s838 + $0xb4] sm:$0xe]
        %v8192 = vld [vmem:[%s838 + $0xb8] sm:$0xf]
        %v8193 = vld [vmem:[%s838 + $0xbc] sm:$0x1]
        %v8242 = vrot.slane %v8146, 5
        %v8243 = vrot.slane %v8242, 4
        %v8244 = vrot.slane %v8147, 5
        %v8245 = vsel %vm1614, %v8243, %v8244
        %v8246 = vrot.slane %v8244, 4
        %v8247 = vrot.slane %v8148, 5
        %v8248 = vsel %vm1614, %v8246, %v8247
        %v8249 = vrot.slane %v8149, 5
        %v8250 = vrot.slane %v8249, 4
        %v8251 = vrot.slane %v8150, 5
        %v8252 = vsel %vm1614, %v8250, %v8251
        %v8253 = vrot.slane %v8251, 4
        %v8254 = vrot.slane %v8151, 5
        %v8255 = vsel %vm1614, %v8253, %v8254
        %v8256 = vrot.slane %v8152, 5
        %v8257 = vrot.slane %v8256, 4
        %v8258 = vrot.slane %v8153, 5
        %v8259 = vsel %vm1614, %v8257, %v8258
        %v8260 = vrot.slane %v8258, 4
        %v8261 = vrot.slane %v8154, 5
        %v8262 = vsel %vm1614, %v8260, %v8261
        %v8263 = vrot.slane %v8155, 5
        %v8264 = vrot.slane %v8263, 4
        %v8265 = vrot.slane %v8156, 5
        %v8266 = vsel %vm1614, %v8264, %v8265
        %v8267 = vrot.slane %v8265, 4
        %v8268 = vrot.slane %v8157, 5
        %v8269 = vsel %vm1614, %v8267, %v8268
        %v8270 = vrot.slane %v8158, 5
        %v8271 = vrot.slane %v8270, 4
        %v8272 = vrot.slane %v8159, 5
        %v8273 = vsel %vm1614, %v8271, %v8272
        %v8274 = vrot.slane %v8272, 4
        %v8275 = vrot.slane %v8160, 5
        %v8276 = vsel %vm1614, %v8274, %v8275
        %v8277 = vrot.slane %v8161, 5
        %v8278 = vrot.slane %v8277, 4
        %v8279 = vrot.slane %v8162, 5
        %v8280 = vsel %vm1614, %v8278, %v8279
        %v8281 = vrot.slane %v8279, 4
        %v8282 = vrot.slane %v8163, 5
        %v8283 = vsel %vm1614, %v8281, %v8282
        %v8284 = vrot.slane %v8164, 5
        %v8285 = vrot.slane %v8284, 4
        %v8286 = vrot.slane %v8165, 5
        %v8287 = vsel %vm1614, %v8285, %v8286
        %v8288 = vrot.slane %v8286, 4
        %v8289 = vrot.slane %v8166, 5
        %v8290 = vsel %vm1614, %v8288, %v8289
        %v8291 = vrot.slane %v8167, 5
        %v8292 = vrot.slane %v8291, 4
        %v8293 = vrot.slane %v8168, 5
        %v8294 = vsel %vm1614, %v8292, %v8293
        %v8295 = vrot.slane %v8293, 4
        %v8296 = vrot.slane %v8169, 5
        %v8297 = vsel %vm1614, %v8295, %v8296
        %v8298 = vrot.slane %v8170, 5
        %v8299 = vrot.slane %v8298, 4
        %v8300 = vrot.slane %v8171, 5
        %v8301 = vsel %vm1614, %v8299, %v8300
        %v8302 = vrot.slane %v8300, 4
        %v8303 = vrot.slane %v8172, 5
        %v8304 = vsel %vm1614, %v8302, %v8303
        %v8305 = vrot.slane %v8173, 5
        %v8306 = vrot.slane %v8305, 4
        %v8307 = vrot.slane %v8174, 5
        %v8308 = vsel %vm1614, %v8306, %v8307
        %v8309 = vrot.slane %v8307, 4
        %v8310 = vrot.slane %v8175, 5
        %v8311 = vsel %vm1614, %v8309, %v8310
        %v8312 = vrot.slane %v8176, 5
        %v8313 = vrot.slane %v8312, 4
        %v8314 = vrot.slane %v8177, 5
        %v8315 = vsel %vm1614, %v8313, %v8314
        %v8316 = vrot.slane %v8314, 4
        %v8317 = vrot.slane %v8178, 5
        %v8318 = vsel %vm1614, %v8316, %v8317
        %v8319 = vrot.slane %v8179, 5
        %v8320 = vrot.slane %v8319, 4
        %v8321 = vrot.slane %v8180, 5
        %v8322 = vsel %vm1614, %v8320, %v8321
        %v8323 = vrot.slane %v8321, 4
        %v8324 = vrot.slane %v8181, 5
        %v8325 = vsel %vm1614, %v8323, %v8324
        %v8326 = vrot.slane %v8182, 5
        %v8327 = vrot.slane %v8326, 4
        %v8328 = vrot.slane %v8183, 5
        %v8329 = vsel %vm1614, %v8327, %v8328
        %v8330 = vrot.slane %v8328, 4
        %v8331 = vrot.slane %v8184, 5
        %v8332 = vsel %vm1614, %v8330, %v8331
        %v8333 = vrot.slane %v8185, 5
        %v8334 = vrot.slane %v8333, 4
        %v8335 = vrot.slane %v8186, 5
        %v8336 = vsel %vm1614, %v8334, %v8335
        %v8337 = vrot.slane %v8335, 4
        %v8338 = vrot.slane %v8187, 5
        %v8339 = vsel %vm1614, %v8337, %v8338
        %v8340 = vrot.slane %v8188, 5
        %v8341 = vrot.slane %v8340, 4
        %v8342 = vrot.slane %v8189, 5
        %v8343 = vsel %vm1614, %v8341, %v8342
        %v8344 = vrot.slane %v8342, 4
        %v8345 = vrot.slane %v8190, 5
        %v8346 = vsel %vm1614, %v8344, %v8345
        %v8347 = vrot.slane %v8191, 5
        %v8348 = vrot.slane %v8347, 4
        %v8349 = vrot.slane %v8192, 5
        %v8350 = vsel %vm1614, %v8348, %v8349
        %v8351 = vrot.slane %v8349, 4
        %v8352 = vrot.slane %v8193, 5
        %v8353 = vsel %vm1614, %v8351, %v8352
        %8386 = vst [vmem:[#allocation3 + $0x14] sm:$0xf] %v8245
        %8387 = vst [vmem:[#allocation3 + $0x38] sm:$0xf] %v8248
        %8388 = vst [vmem:[#allocation3 + $0x5c] sm:$0xf] %v8252
        %8389 = vst [vmem:[#allocation3 + $0x80] sm:$0xf] %v8255
        %8390 = vst [vmem:[#allocation3 + $0xa4] sm:$0xf] %v8259
        %8391 = vst [vmem:[#allocation3 + $0xc8] sm:$0xf] %v8262
        %8392 = vst [vmem:[#allocation3 + $0xec] sm:$0xf] %v8266
        %8393 = vst [vmem:[#allocation3 + $0x110] sm:$0xf] %v8269
        %8394 = vst [vmem:[#allocation3 + $0x134] sm:$0xf] %v8273
        %8395 = vst [vmem:[#allocation3 + $0x158] sm:$0xf] %v8276
        %8396 = vst [vmem:[#allocation3 + $0x17c] sm:$0xf] %v8280
        %8397 = vst [vmem:[#allocation3 + $0x1a0] sm:$0xf] %v8283
        %8398 = vst [vmem:[#allocation3 + $0x1c4] sm:$0xf] %v8287
        %8399 = vst [vmem:[#allocation3 + $0x1e8] sm:$0xf] %v8290
        %8400 = vst [vmem:[#allocation3 + $0x20c] sm:$0xf] %v8294
        %8401 = vst [vmem:[#allocation3 + $0x230] sm:$0xf] %v8297
        %8402 = vst [vmem:[#allocation3 + $0x254] sm:$0xf] %v8301
        %8403 = vst [vmem:[#allocation3 + $0x278] sm:$0xf] %v8304
        %8404 = vst [vmem:[#allocation3 + $0x29c] sm:$0xf] %v8308
        %8405 = vst [vmem:[#allocation3 + $0x2c0] sm:$0xf] %v8311
        %8406 = vst [vmem:[#allocation3 + $0x2e4] sm:$0xf] %v8315
        %8407 = vst [vmem:[#allocation3 + $0x308] sm:$0xf] %v8318
        %8408 = vst [vmem:[#allocation3 + $0x32c] sm:$0xf] %v8322
        %8409 = vst [vmem:[#allocation3 + $0x350] sm:$0xf] %v8325
        %8410 = vst [vmem:[#allocation3 + $0x374] sm:$0xf] %v8329
        %8411 = vst [vmem:[#allocation3 + $0x398] sm:$0xf] %v8332
        %8412 = vst [vmem:[#allocation3 + $0x3bc] sm:$0xf] %v8336
        %8413 = vst [vmem:[#allocation3 + $0x3e0] sm:$0xf] %v8339
        %8414 = vst [vmem:[#allocation3 + $0x404] sm:$0xf] %v8343
        %8415 = vst [vmem:[#allocation3 + $0x428] sm:$0xf] %v8346
        %8416 = vst [vmem:[#allocation3 + $0x44c] sm:$0xf] %v8350
        %8417 = vst [vmem:[#allocation3 + $0x470] sm:$0xf] %v8353
        %v8418 = vld [vmem:[%s2623] sm:$0xf]
        %v8419 = vld [vmem:[%s2623 + $0x4] sm:$0xf]
        %v8420 = vld [vmem:[%s2623 + $0xc] sm:$0xf]
        %v8421 = vld [vmem:[%s2623 + $0x10] sm:$0xf]
        %v8422 = vld [vmem:[%s2623 + $0x18] sm:$0xf]
        %v8423 = vld [vmem:[%s2623 + $0x1c] sm:$0xf]
        %v8424 = vld [vmem:[%s2623 + $0x24] sm:$0xf]
        %v8425 = vld [vmem:[%s2623 + $0x28] sm:$0xf]
        %v8426 = vld [vmem:[%s2623 + $0x30] sm:$0xf]
        %v8427 = vld [vmem:[%s2623 + $0x34] sm:$0xf]
        %v8428 = vld [vmem:[%s2623 + $0x3c] sm:$0xf]
        %v8429 = vld [vmem:[%s2623 + $0x40] sm:$0xf]
        %v8430 = vld [vmem:[%s2623 + $0x48] sm:$0xf]
        %v8431 = vld [vmem:[%s2623 + $0x4c] sm:$0xf]
        %v8432 = vld [vmem:[%s2623 + $0x54] sm:$0xf]
        %v8433 = vld [vmem:[%s2623 + $0x58] sm:$0xf]
        %v8434 = vld [vmem:[%s2623 + $0x60] sm:$0xf]
        %v8435 = vld [vmem:[%s2623 + $0x64] sm:$0xf]
        %v8436 = vld [vmem:[%s2623 + $0x6c] sm:$0xf]
        %v8437 = vld [vmem:[%s2623 + $0x70] sm:$0xf]
        %v8438 = vld [vmem:[%s2623 + $0x78] sm:$0xf]
        %v8439 = vld [vmem:[%s2623 + $0x7c] sm:$0xf]
        %v8440 = vld [vmem:[%s2623 + $0x84] sm:$0xf]
        %v8441 = vld [vmem:[%s2623 + $0x88] sm:$0xf]
        %v8442 = vld [vmem:[%s2623 + $0x90] sm:$0xf]
        %v8443 = vld [vmem:[%s2623 + $0x94] sm:$0xf]
        %v8444 = vld [vmem:[%s2623 + $0x9c] sm:$0xf]
        %v8445 = vld [vmem:[%s2623 + $0xa0] sm:$0xf]
        %v8446 = vld [vmem:[%s2623 + $0xa8] sm:$0xf]
        %v8447 = vld [vmem:[%s2623 + $0xac] sm:$0xf]
        %v8448 = vld [vmem:[%s2623 + $0xb4] sm:$0xf]
        %v8449 = vld [vmem:[%s2623 + $0xb8] sm:$0xf]
        %8450 = vst [vmem:[#allocation3 + $0x18] sm:$0xf] %v8418
        %8451 = vst [vmem:[#allocation3 + $0x3c] sm:$0xf] %v8419
        %8452 = vst [vmem:[#allocation3 + $0x60] sm:$0xf] %v8420
        %8453 = vst [vmem:[#allocation3 + $0x84] sm:$0xf] %v8421
        %8454 = vst [vmem:[#allocation3 + $0xa8] sm:$0xf] %v8422
        %8455 = vst [vmem:[#allocation3 + $0xcc] sm:$0xf] %v8423
        %8456 = vst [vmem:[#allocation3 + $0xf0] sm:$0xf] %v8424
        %8457 = vst [vmem:[#allocation3 + $0x114] sm:$0xf] %v8425
        %8458 = vst [vmem:[#allocation3 + $0x138] sm:$0xf] %v8426
        %8459 = vst [vmem:[#allocation3 + $0x15c] sm:$0xf] %v8427
        %8460 = vst [vmem:[#allocation3 + $0x180] sm:$0xf] %v8428
        %8461 = vst [vmem:[#allocation3 + $0x1a4] sm:$0xf] %v8429
        %8462 = vst [vmem:[#allocation3 + $0x1c8] sm:$0xf] %v8430
        %8463 = vst [vmem:[#allocation3 + $0x1ec] sm:$0xf] %v8431
        %8464 = vst [vmem:[#allocation3 + $0x210] sm:$0xf] %v8432
        %8465 = vst [vmem:[#allocation3 + $0x234] sm:$0xf] %v8433
        %8466 = vst [vmem:[#allocation3 + $0x258] sm:$0xf] %v8434
        %8467 = vst [vmem:[#allocation3 + $0x27c] sm:$0xf] %v8435
        %8468 = vst [vmem:[#allocation3 + $0x2a0] sm:$0xf] %v8436
        %8469 = vst [vmem:[#allocation3 + $0x2c4] sm:$0xf] %v8437
        %8470 = vst [vmem:[#allocation3 + $0x2e8] sm:$0xf] %v8438
        %8471 = vst [vmem:[#allocation3 + $0x30c] sm:$0xf] %v8439
        %8472 = vst [vmem:[#allocation3 + $0x330] sm:$0xf] %v8440
        %8473 = vst [vmem:[#allocation3 + $0x354] sm:$0xf] %v8441
        %8474 = vst [vmem:[#allocation3 + $0x378] sm:$0xf] %v8442
        %8475 = vst [vmem:[#allocation3 + $0x39c] sm:$0xf] %v8443
        %8476 = vst [vmem:[#allocation3 + $0x3c0] sm:$0xf] %v8444
        %8477 = vst [vmem:[#allocation3 + $0x3e4] sm:$0xf] %v8445
        %8478 = vst [vmem:[#allocation3 + $0x408] sm:$0xf] %v8446
        %8479 = vst [vmem:[#allocation3 + $0x42c] sm:$0xf] %v8447
        %8480 = vst [vmem:[#allocation3 + $0x450] sm:$0xf] %v8448
        %8481 = vst [vmem:[#allocation3 + $0x474] sm:$0xf] %v8449
        %v8482 = vld [vmem:[%s2623] sm:$0xf]
        %v8483 = vld [vmem:[%s2623 + $0x4] sm:$0xf]
        %v8484 = vld [vmem:[%s2623 + $0x8] sm:$0x1]
        %v8485 = vld [vmem:[%s2623 + $0xc] sm:$0xf]
        %v8486 = vld [vmem:[%s2623 + $0x10] sm:$0xf]
        %v8487 = vld [vmem:[%s2623 + $0x14] sm:$0x1]
        %v8488 = vld [vmem:[%s2623 + $0x18] sm:$0xf]
        %v8489 = vld [vmem:[%s2623 + $0x1c] sm:$0xf]
        %v8490 = vld [vmem:[%s2623 + $0x20] sm:$0x1]
        %v8491 = vld [vmem:[%s2623 + $0x24] sm:$0xf]
        %v8492 = vld [vmem:[%s2623 + $0x28] sm:$0xf]
        %v8493 = vld [vmem:[%s2623 + $0x2c] sm:$0x1]
        %v8494 = vld [vmem:[%s2623 + $0x30] sm:$0xf]
        %v8495 = vld [vmem:[%s2623 + $0x34] sm:$0xf]
        %v8496 = vld [vmem:[%s2623 + $0x38] sm:$0x1]
        %v8497 = vld [vmem:[%s2623 + $0x3c] sm:$0xf]
        %v8498 = vld [vmem:[%s2623 + $0x40] sm:$0xf]
        %v8499 = vld [vmem:[%s2623 + $0x44] sm:$0x1]
        %v8500 = vld [vmem:[%s2623 + $0x48] sm:$0xf]
        %v8501 = vld [vmem:[%s2623 + $0x4c] sm:$0xf]
        %v8502 = vld [vmem:[%s2623 + $0x50] sm:$0x1]
        %v8503 = vld [vmem:[%s2623 + $0x54] sm:$0xf]
        %v8504 = vld [vmem:[%s2623 + $0x58] sm:$0xf]
        %v8505 = vld [vmem:[%s2623 + $0x5c] sm:$0x1]
        %v8506 = vld [vmem:[%s2623 + $0x60] sm:$0xf]
        %v8507 = vld [vmem:[%s2623 + $0x64] sm:$0xf]
        %v8508 = vld [vmem:[%s2623 + $0x68] sm:$0x1]
        %v8509 = vld [vmem:[%s2623 + $0x6c] sm:$0xf]
        %v8510 = vld [vmem:[%s2623 + $0x70] sm:$0xf]
        %v8511 = vld [vmem:[%s2623 + $0x74] sm:$0x1]
        %v8512 = vld [vmem:[%s2623 + $0x78] sm:$0xf]
        %v8513 = vld [vmem:[%s2623 + $0x7c] sm:$0xf]
        %v8514 = vld [vmem:[%s2623 + $0x80] sm:$0x1]
        %v8515 = vld [vmem:[%s2623 + $0x84] sm:$0xf]
        %v8516 = vld [vmem:[%s2623 + $0x88] sm:$0xf]
        %v8517 = vld [vmem:[%s2623 + $0x8c] sm:$0x1]
        %v8518 = vld [vmem:[%s2623 + $0x90] sm:$0xf]
        %v8519 = vld [vmem:[%s2623 + $0x94] sm:$0xf]
        %v8520 = vld [vmem:[%s2623 + $0x98] sm:$0x1]
        %v8521 = vld [vmem:[%s2623 + $0x9c] sm:$0xf]
        %v8522 = vld [vmem:[%s2623 + $0xa0] sm:$0xf]
        %v8523 = vld [vmem:[%s2623 + $0xa4] sm:$0x1]
        %v8524 = vld [vmem:[%s2623 + $0xa8] sm:$0xf]
        %v8525 = vld [vmem:[%s2623 + $0xac] sm:$0xf]
        %v8526 = vld [vmem:[%s2623 + $0xb0] sm:$0x1]
        %v8527 = vld [vmem:[%s2623 + $0xb4] sm:$0xf]
        %v8528 = vld [vmem:[%s2623 + $0xb8] sm:$0xf]
        %v8529 = vld [vmem:[%s2623 + $0xbc] sm:$0x1]
        %v8531 = vshrl.u32 %v8482, 16
        %v8533 = vrot.slane %v8531, 4
        %v8534 = vshll.u32 %v8482, 16
        %v8536 = vrot.slane %v8534, 5
        %v8537 = vor.u32 %v8533, %v8536
        %v8538 = vrot.slane %v8537, 4
        %v8540 = vshll.u32 %v8483, 16
        %v8542 = vrot.slane %v8540, 5
        %v8543 = vsel %vm1067, %v8538, %v8542
        %v8544 = vshrl.u32 %v8483, 16
        %v8546 = vrot.slane %v8544, 4
        %v8547 = vor.u32 %v8546, %v8542
        %v8548 = vrot.slane %v8547, 4
        %v8550 = vshll.u32 %v8484, 16
        %v8552 = vrot.slane %v8550, 5
        %v8553 = vsel %vm1067, %v8548, %v8552
        %v8555 = vshrl.u32 %v8485, 16
        %v8557 = vrot.slane %v8555, 4
        %v8558 = vshll.u32 %v8485, 16
        %v8560 = vrot.slane %v8558, 5
        %v8561 = vor.u32 %v8557, %v8560
        %v8562 = vrot.slane %v8561, 4
        %v8564 = vshll.u32 %v8486, 16
        %v8566 = vrot.slane %v8564, 5
        %v8567 = vsel %vm1067, %v8562, %v8566
        %v8568 = vshrl.u32 %v8486, 16
        %v8570 = vrot.slane %v8568, 4
        %v8571 = vor.u32 %v8570, %v8566
        %v8572 = vrot.slane %v8571, 4
        %v8574 = vshll.u32 %v8487, 16
        %v8576 = vrot.slane %v8574, 5
        %v8577 = vsel %vm1067, %v8572, %v8576
        %v8579 = vshrl.u32 %v8488, 16
        %v8581 = vrot.slane %v8579, 4
        %v8582 = vshll.u32 %v8488, 16
        %v8584 = vrot.slane %v8582, 5
        %v8585 = vor.u32 %v8581, %v8584
        %v8586 = vrot.slane %v8585, 4
        %v8588 = vshll.u32 %v8489, 16
        %v8590 = vrot.slane %v8588, 5
        %v8591 = vsel %vm1067, %v8586, %v8590
        %v8592 = vshrl.u32 %v8489, 16
        %v8594 = vrot.slane %v8592, 4
        %v8595 = vor.u32 %v8594, %v8590
        %v8596 = vrot.slane %v8595, 4
        %v8598 = vshll.u32 %v8490, 16
        %v8600 = vrot.slane %v8598, 5
        %v8601 = vsel %vm1067, %v8596, %v8600
        %v8603 = vshrl.u32 %v8491, 16
        %v8605 = vrot.slane %v8603, 4
        %v8606 = vshll.u32 %v8491, 16
        %v8608 = vrot.slane %v8606, 5
        %v8609 = vor.u32 %v8605, %v8608
        %v8610 = vrot.slane %v8609, 4
        %v8612 = vshll.u32 %v8492, 16
        %v8614 = vrot.slane %v8612, 5
        %v8615 = vsel %vm1067, %v8610, %v8614
        %v8616 = vshrl.u32 %v8492, 16
        %v8618 = vrot.slane %v8616, 4
        %v8619 = vor.u32 %v8618, %v8614
        %v8620 = vrot.slane %v8619, 4
        %v8622 = vshll.u32 %v8493, 16
        %v8624 = vrot.slane %v8622, 5
        %v8625 = vsel %vm1067, %v8620, %v8624
        %v8627 = vshrl.u32 %v8494, 16
        %v8629 = vrot.slane %v8627, 4
        %v8630 = vshll.u32 %v8494, 16
        %v8632 = vrot.slane %v8630, 5
        %v8633 = vor.u32 %v8629, %v8632
        %v8634 = vrot.slane %v8633, 4
        %v8636 = vshll.u32 %v8495, 16
        %v8638 = vrot.slane %v8636, 5
        %v8639 = vsel %vm1067, %v8634, %v8638
        %v8640 = vshrl.u32 %v8495, 16
        %v8642 = vrot.slane %v8640, 4
        %v8643 = vor.u32 %v8642, %v8638
        %v8644 = vrot.slane %v8643, 4
        %v8646 = vshll.u32 %v8496, 16
        %v8648 = vrot.slane %v8646, 5
        %v8649 = vsel %vm1067, %v8644, %v8648
        %v8651 = vshrl.u32 %v8497, 16
        %v8653 = vrot.slane %v8651, 4
        %v8654 = vshll.u32 %v8497, 16
        %v8656 = vrot.slane %v8654, 5
        %v8657 = vor.u32 %v8653, %v8656
        %v8658 = vrot.slane %v8657, 4
        %v8660 = vshll.u32 %v8498, 16
        %v8662 = vrot.slane %v8660, 5
        %v8663 = vsel %vm1067, %v8658, %v8662
        %v8664 = vshrl.u32 %v8498, 16
        %v8666 = vrot.slane %v8664, 4
        %v8667 = vor.u32 %v8666, %v8662
        %v8668 = vrot.slane %v8667, 4
        %v8670 = vshll.u32 %v8499, 16
        %v8672 = vrot.slane %v8670, 5
        %v8673 = vsel %vm1067, %v8668, %v8672
        %v8675 = vshrl.u32 %v8500, 16
        %v8677 = vrot.slane %v8675, 4
        %v8678 = vshll.u32 %v8500, 16
        %v8680 = vrot.slane %v8678, 5
        %v8681 = vor.u32 %v8677, %v8680
        %v8682 = vrot.slane %v8681, 4
        %v8684 = vshll.u32 %v8501, 16
        %v8686 = vrot.slane %v8684, 5
        %v8687 = vsel %vm1067, %v8682, %v8686
        %v8688 = vshrl.u32 %v8501, 16
        %v8690 = vrot.slane %v8688, 4
        %v8691 = vor.u32 %v8690, %v8686
        %v8692 = vrot.slane %v8691, 4
        %v8694 = vshll.u32 %v8502, 16
        %v8696 = vrot.slane %v8694, 5
        %v8697 = vsel %vm1067, %v8692, %v8696
        %v8699 = vshrl.u32 %v8503, 16
        %v8701 = vrot.slane %v8699, 4
        %v8702 = vshll.u32 %v8503, 16
        %v8704 = vrot.slane %v8702, 5
        %v8705 = vor.u32 %v8701, %v8704
        %v8706 = vrot.slane %v8705, 4
        %v8708 = vshll.u32 %v8504, 16
        %v8710 = vrot.slane %v8708, 5
        %v8711 = vsel %vm1067, %v8706, %v8710
        %v8712 = vshrl.u32 %v8504, 16
        %v8714 = vrot.slane %v8712, 4
        %v8715 = vor.u32 %v8714, %v8710
        %v8716 = vrot.slane %v8715, 4
        %v8718 = vshll.u32 %v8505, 16
        %v8720 = vrot.slane %v8718, 5
        %v8721 = vsel %vm1067, %v8716, %v8720
        %v8723 = vshrl.u32 %v8506, 16
        %v8725 = vrot.slane %v8723, 4
        %v8726 = vshll.u32 %v8506, 16
        %v8728 = vrot.slane %v8726, 5
        %v8729 = vor.u32 %v8725, %v8728
        %v8730 = vrot.slane %v8729, 4
        %v8732 = vshll.u32 %v8507, 16
        %v8734 = vrot.slane %v8732, 5
        %v8735 = vsel %vm1067, %v8730, %v8734
        %v8736 = vshrl.u32 %v8507, 16
        %v8738 = vrot.slane %v8736, 4
        %v8739 = vor.u32 %v8738, %v8734
        %v8740 = vrot.slane %v8739, 4
        %v8742 = vshll.u32 %v8508, 16
        %v8744 = vrot.slane %v8742, 5
        %v8745 = vsel %vm1067, %v8740, %v8744
        %v8747 = vshrl.u32 %v8509, 16
        %v8749 = vrot.slane %v8747, 4
        %v8750 = vshll.u32 %v8509, 16
        %v8752 = vrot.slane %v8750, 5
        %v8753 = vor.u32 %v8749, %v8752
        %v8754 = vrot.slane %v8753, 4
        %v8756 = vshll.u32 %v8510, 16
        %v8758 = vrot.slane %v8756, 5
        %v8759 = vsel %vm1067, %v8754, %v8758
        %v8760 = vshrl.u32 %v8510, 16
        %v8762 = vrot.slane %v8760, 4
        %v8763 = vor.u32 %v8762, %v8758
        %v8764 = vrot.slane %v8763, 4
        %v8766 = vshll.u32 %v8511, 16
        %v8768 = vrot.slane %v8766, 5
        %v8769 = vsel %vm1067, %v8764, %v8768
        %v8771 = vshrl.u32 %v8512, 16
        %v8773 = vrot.slane %v8771, 4
        %v8774 = vshll.u32 %v8512, 16
        %v8776 = vrot.slane %v8774, 5
        %v8777 = vor.u32 %v8773, %v8776
        %v8778 = vrot.slane %v8777, 4
        %v8780 = vshll.u32 %v8513, 16
        %v8782 = vrot.slane %v8780, 5
        %v8783 = vsel %vm1067, %v8778, %v8782
        %v8784 = vshrl.u32 %v8513, 16
        %v8786 = vrot.slane %v8784, 4
        %v8787 = vor.u32 %v8786, %v8782
        %v8788 = vrot.slane %v8787, 4
        %v8790 = vshll.u32 %v8514, 16
        %v8792 = vrot.slane %v8790, 5
        %v8793 = vsel %vm1067, %v8788, %v8792
        %v8795 = vshrl.u32 %v8515, 16
        %v8797 = vrot.slane %v8795, 4
        %v8798 = vshll.u32 %v8515, 16
        %v8800 = vrot.slane %v8798, 5
        %v8801 = vor.u32 %v8797, %v8800
        %v8802 = vrot.slane %v8801, 4
        %v8804 = vshll.u32 %v8516, 16
        %v8806 = vrot.slane %v8804, 5
        %v8807 = vsel %vm1067, %v8802, %v8806
        %v8808 = vshrl.u32 %v8516, 16
        %v8810 = vrot.slane %v8808, 4
        %v8811 = vor.u32 %v8810, %v8806
        %v8812 = vrot.slane %v8811, 4
        %v8814 = vshll.u32 %v8517, 16
        %v8816 = vrot.slane %v8814, 5
        %v8817 = vsel %vm1067, %v8812, %v8816
        %v8819 = vshrl.u32 %v8518, 16
        %v8821 = vrot.slane %v8819, 4
        %v8822 = vshll.u32 %v8518, 16
        %v8824 = vrot.slane %v8822, 5
        %v8825 = vor.u32 %v8821, %v8824
        %v8826 = vrot.slane %v8825, 4
        %v8828 = vshll.u32 %v8519, 16
        %v8830 = vrot.slane %v8828, 5
        %v8831 = vsel %vm1067, %v8826, %v8830
        %v8832 = vshrl.u32 %v8519, 16
        %v8834 = vrot.slane %v8832, 4
        %v8835 = vor.u32 %v8834, %v8830
        %v8836 = vrot.slane %v8835, 4
        %v8838 = vshll.u32 %v8520, 16
        %v8840 = vrot.slane %v8838, 5
        %v8841 = vsel %vm1067, %v8836, %v8840
        %v8843 = vshrl.u32 %v8521, 16
        %v8845 = vrot.slane %v8843, 4
        %v8846 = vshll.u32 %v8521, 16
        %v8848 = vrot.slane %v8846, 5
        %v8849 = vor.u32 %v8845, %v8848
        %v8850 = vrot.slane %v8849, 4
        %v8852 = vshll.u32 %v8522, 16
        %v8854 = vrot.slane %v8852, 5
        %v8855 = vsel %vm1067, %v8850, %v8854
        %v8856 = vshrl.u32 %v8522, 16
        %v8858 = vrot.slane %v8856, 4
        %v8859 = vor.u32 %v8858, %v8854
        %v8860 = vrot.slane %v8859, 4
        %v8862 = vshll.u32 %v8523, 16
        %v8864 = vrot.slane %v8862, 5
        %v8865 = vsel %vm1067, %v8860, %v8864
        %v8867 = vshrl.u32 %v8524, 16
        %v8869 = vrot.slane %v8867, 4
        %v8870 = vshll.u32 %v8524, 16
        %v8872 = vrot.slane %v8870, 5
        %v8873 = vor.u32 %v8869, %v8872
        %v8874 = vrot.slane %v8873, 4
        %v8876 = vshll.u32 %v8525, 16
        %v8878 = vrot.slane %v8876, 5
        %v8879 = vsel %vm1067, %v8874, %v8878
        %v8880 = vshrl.u32 %v8525, 16
        %v8882 = vrot.slane %v8880, 4
        %v8883 = vor.u32 %v8882, %v8878
        %v8884 = vrot.slane %v8883, 4
        %v8886 = vshll.u32 %v8526, 16
        %v8888 = vrot.slane %v8886, 5
        %v8889 = vsel %vm1067, %v8884, %v8888
        %v8891 = vshrl.u32 %v8527, 16
        %v8893 = vrot.slane %v8891, 4
        %v8894 = vshll.u32 %v8527, 16
        %v8896 = vrot.slane %v8894, 5
        %v8897 = vor.u32 %v8893, %v8896
        %v8898 = vrot.slane %v8897, 4
        %v8900 = vshll.u32 %v8528, 16
        %v8902 = vrot.slane %v8900, 5
        %v8903 = vsel %vm1067, %v8898, %v8902
        %v8904 = vshrl.u32 %v8528, 16
        %v8906 = vrot.slane %v8904, 4
        %v8907 = vor.u32 %v8906, %v8902
        %v8908 = vrot.slane %v8907, 4
        %v8910 = vshll.u32 %v8529, 16
        %v8912 = vrot.slane %v8910, 5
        %v8913 = vsel %vm1067, %v8908, %v8912
        %8946 = vst [vmem:[#allocation3 + $0x1c] sm:$0xf] %v8543
        %8947 = vst [vmem:[#allocation3 + $0x40] sm:$0xf] %v8553
        %8948 = vst [vmem:[#allocation3 + $0x64] sm:$0xf] %v8567
        %8949 = vst [vmem:[#allocation3 + $0x88] sm:$0xf] %v8577
        %8950 = vst [vmem:[#allocation3 + $0xac] sm:$0xf] %v8591
        %8951 = vst [vmem:[#allocation3 + $0xd0] sm:$0xf] %v8601
        %8952 = vst [vmem:[#allocation3 + $0xf4] sm:$0xf] %v8615
        %8953 = vst [vmem:[#allocation3 + $0x118] sm:$0xf] %v8625
        %8954 = vst [vmem:[#allocation3 + $0x13c] sm:$0xf] %v8639
        %8955 = vst [vmem:[#allocation3 + $0x160] sm:$0xf] %v8649
        %8956 = vst [vmem:[#allocation3 + $0x184] sm:$0xf] %v8663
        %8957 = vst [vmem:[#allocation3 + $0x1a8] sm:$0xf] %v8673
        %8958 = vst [vmem:[#allocation3 + $0x1cc] sm:$0xf] %v8687
        %8959 = vst [vmem:[#allocation3 + $0x1f0] sm:$0xf] %v8697
        %8960 = vst [vmem:[#allocation3 + $0x214] sm:$0xf] %v8711
        %8961 = vst [vmem:[#allocation3 + $0x238] sm:$0xf] %v8721
        %8962 = vst [vmem:[#allocation3 + $0x25c] sm:$0xf] %v8735
        %8963 = vst [vmem:[#allocation3 + $0x280] sm:$0xf] %v8745
        %8964 = vst [vmem:[#allocation3 + $0x2a4] sm:$0xf] %v8759
        %8965 = vst [vmem:[#allocation3 + $0x2c8] sm:$0xf] %v8769
        %8966 = vst [vmem:[#allocation3 + $0x2ec] sm:$0xf] %v8783
        %8967 = vst [vmem:[#allocation3 + $0x310] sm:$0xf] %v8793
        %8968 = vst [vmem:[#allocation3 + $0x334] sm:$0xf] %v8807
        %8969 = vst [vmem:[#allocation3 + $0x358] sm:$0xf] %v8817
        %8970 = vst [vmem:[#allocation3 + $0x37c] sm:$0xf] %v8831
        %8971 = vst [vmem:[#allocation3 + $0x3a0] sm:$0xf] %v8841
        %8972 = vst [vmem:[#allocation3 + $0x3c4] sm:$0xf] %v8855
        %8973 = vst [vmem:[#allocation3 + $0x3e8] sm:$0xf] %v8865
        %8974 = vst [vmem:[#allocation3 + $0x40c] sm:$0xf] %v8879
        %8975 = vst [vmem:[#allocation3 + $0x430] sm:$0xf] %v8889
        %8976 = vst [vmem:[#allocation3 + $0x454] sm:$0xf] %v8903
        %8977 = vst [vmem:[#allocation3 + $0x478] sm:$0xf] %v8913
        %v8978 = vld [vmem:[%s2623] sm:$0xe]
        %v8979 = vld [vmem:[%s2623 + $0x4] sm:$0xf]
        %v8980 = vld [vmem:[%s2623 + $0x8] sm:$0x1]
        %v8981 = vld [vmem:[%s2623 + $0xc] sm:$0xe]
        %v8982 = vld [vmem:[%s2623 + $0x10] sm:$0xf]
        %v8983 = vld [vmem:[%s2623 + $0x14] sm:$0x1]
        %v8984 = vld [vmem:[%s2623 + $0x18] sm:$0xe]
        %v8985 = vld [vmem:[%s2623 + $0x1c] sm:$0xf]
        %v8986 = vld [vmem:[%s2623 + $0x20] sm:$0x1]
        %v8987 = vld [vmem:[%s2623 + $0x24] sm:$0xe]
        %v8988 = vld [vmem:[%s2623 + $0x28] sm:$0xf]
        %v8989 = vld [vmem:[%s2623 + $0x2c] sm:$0x1]
        %v8990 = vld [vmem:[%s2623 + $0x30] sm:$0xe]
        %v8991 = vld [vmem:[%s2623 + $0x34] sm:$0xf]
        %v8992 = vld [vmem:[%s2623 + $0x38] sm:$0x1]
        %v8993 = vld [vmem:[%s2623 + $0x3c] sm:$0xe]
        %v8994 = vld [vmem:[%s2623 + $0x40] sm:$0xf]
        %v8995 = vld [vmem:[%s2623 + $0x44] sm:$0x1]
        %v8996 = vld [vmem:[%s2623 + $0x48] sm:$0xe]
        %v8997 = vld [vmem:[%s2623 + $0x4c] sm:$0xf]
        %v8998 = vld [vmem:[%s2623 + $0x50] sm:$0x1]
        %v8999 = vld [vmem:[%s2623 + $0x54] sm:$0xe]
        %v9000 = vld [vmem:[%s2623 + $0x58] sm:$0xf]
        %v9001 = vld [vmem:[%s2623 + $0x5c] sm:$0x1]
        %v9002 = vld [vmem:[%s2623 + $0x60] sm:$0xe]
        %v9003 = vld [vmem:[%s2623 + $0x64] sm:$0xf]
        %v9004 = vld [vmem:[%s2623 + $0x68] sm:$0x1]
        %v9005 = vld [vmem:[%s2623 + $0x6c] sm:$0xe]
        %v9006 = vld [vmem:[%s2623 + $0x70] sm:$0xf]
        %v9007 = vld [vmem:[%s2623 + $0x74] sm:$0x1]
        %v9008 = vld [vmem:[%s2623 + $0x78] sm:$0xe]
        %v9009 = vld [vmem:[%s2623 + $0x7c] sm:$0xf]
        %v9010 = vld [vmem:[%s2623 + $0x80] sm:$0x1]
        %v9011 = vld [vmem:[%s2623 + $0x84] sm:$0xe]
        %v9012 = vld [vmem:[%s2623 + $0x88] sm:$0xf]
        %v9013 = vld [vmem:[%s2623 + $0x8c] sm:$0x1]
        %v9014 = vld [vmem:[%s2623 + $0x90] sm:$0xe]
        %v9015 = vld [vmem:[%s2623 + $0x94] sm:$0xf]
        %v9016 = vld [vmem:[%s2623 + $0x98] sm:$0x1]
        %v9017 = vld [vmem:[%s2623 + $0x9c] sm:$0xe]
        %v9018 = vld [vmem:[%s2623 + $0xa0] sm:$0xf]
        %v9019 = vld [vmem:[%s2623 + $0xa4] sm:$0x1]
        %v9020 = vld [vmem:[%s2623 + $0xa8] sm:$0xe]
        %v9021 = vld [vmem:[%s2623 + $0xac] sm:$0xf]
        %v9022 = vld [vmem:[%s2623 + $0xb0] sm:$0x1]
        %v9023 = vld [vmem:[%s2623 + $0xb4] sm:$0xe]
        %v9024 = vld [vmem:[%s2623 + $0xb8] sm:$0xf]
        %v9025 = vld [vmem:[%s2623 + $0xbc] sm:$0x1]
        %v9074 = vrot.slane %v8978, 5
        %v9075 = vrot.slane %v9074, 4
        %v9076 = vrot.slane %v8979, 5
        %v9077 = vsel %vm1614, %v9075, %v9076
        %v9078 = vrot.slane %v9076, 4
        %v9079 = vrot.slane %v8980, 5
        %v9080 = vsel %vm1614, %v9078, %v9079
        %v9081 = vrot.slane %v8981, 5
        %v9082 = vrot.slane %v9081, 4
        %v9083 = vrot.slane %v8982, 5
        %v9084 = vsel %vm1614, %v9082, %v9083
        %v9085 = vrot.slane %v9083, 4
        %v9086 = vrot.slane %v8983, 5
        %v9087 = vsel %vm1614, %v9085, %v9086
        %v9088 = vrot.slane %v8984, 5
        %v9089 = vrot.slane %v9088, 4
        %v9090 = vrot.slane %v8985, 5
        %v9091 = vsel %vm1614, %v9089, %v9090
        %v9092 = vrot.slane %v9090, 4
        %v9093 = vrot.slane %v8986, 5
        %v9094 = vsel %vm1614, %v9092, %v9093
        %v9095 = vrot.slane %v8987, 5
        %v9096 = vrot.slane %v9095, 4
        %v9097 = vrot.slane %v8988, 5
        %v9098 = vsel %vm1614, %v9096, %v9097
        %v9099 = vrot.slane %v9097, 4
        %v9100 = vrot.slane %v8989, 5
        %v9101 = vsel %vm1614, %v9099, %v9100
        %v9102 = vrot.slane %v8990, 5
        %v9103 = vrot.slane %v9102, 4
        %v9104 = vrot.slane %v8991, 5
        %v9105 = vsel %vm1614, %v9103, %v9104
        %v9106 = vrot.slane %v9104, 4
        %v9107 = vrot.slane %v8992, 5
        %v9108 = vsel %vm1614, %v9106, %v9107
        %v9109 = vrot.slane %v8993, 5
        %v9110 = vrot.slane %v9109, 4
        %v9111 = vrot.slane %v8994, 5
        %v9112 = vsel %vm1614, %v9110, %v9111
        %v9113 = vrot.slane %v9111, 4
        %v9114 = vrot.slane %v8995, 5
        %v9115 = vsel %vm1614, %v9113, %v9114
        %v9116 = vrot.slane %v8996, 5
        %v9117 = vrot.slane %v9116, 4
        %v9118 = vrot.slane %v8997, 5
        %v9119 = vsel %vm1614, %v9117, %v9118
        %v9120 = vrot.slane %v9118, 4
        %v9121 = vrot.slane %v8998, 5
        %v9122 = vsel %vm1614, %v9120, %v9121
        %v9123 = vrot.slane %v8999, 5
        %v9124 = vrot.slane %v9123, 4
        %v9125 = vrot.slane %v9000, 5
        %v9126 = vsel %vm1614, %v9124, %v9125
        %v9127 = vrot.slane %v9125, 4
        %v9128 = vrot.slane %v9001, 5
        %v9129 = vsel %vm1614, %v9127, %v9128
        %v9130 = vrot.slane %v9002, 5
        %v9131 = vrot.slane %v9130, 4
        %v9132 = vrot.slane %v9003, 5
        %v9133 = vsel %vm1614, %v9131, %v9132
        %v9134 = vrot.slane %v9132, 4
        %v9135 = vrot.slane %v9004, 5
        %v9136 = vsel %vm1614, %v9134, %v9135
        %v9137 = vrot.slane %v9005, 5
        %v9138 = vrot.slane %v9137, 4
        %v9139 = vrot.slane %v9006, 5
        %v9140 = vsel %vm1614, %v9138, %v9139
        %v9141 = vrot.slane %v9139, 4
        %v9142 = vrot.slane %v9007, 5
        %v9143 = vsel %vm1614, %v9141, %v9142
        %v9144 = vrot.slane %v9008, 5
        %v9145 = vrot.slane %v9144, 4
        %v9146 = vrot.slane %v9009, 5
        %v9147 = vsel %vm1614, %v9145, %v9146
        %v9148 = vrot.slane %v9146, 4
        %v9149 = vrot.slane %v9010, 5
        %v9150 = vsel %vm1614, %v9148, %v9149
        %v9151 = vrot.slane %v9011, 5
        %v9152 = vrot.slane %v9151, 4
        %v9153 = vrot.slane %v9012, 5
        %v9154 = vsel %vm1614, %v9152, %v9153
        %v9155 = vrot.slane %v9153, 4
        %v9156 = vrot.slane %v9013, 5
        %v9157 = vsel %vm1614, %v9155, %v9156
        %v9158 = vrot.slane %v9014, 5
        %v9159 = vrot.slane %v9158, 4
        %v9160 = vrot.slane %v9015, 5
        %v9161 = vsel %vm1614, %v9159, %v9160
        %v9162 = vrot.slane %v9160, 4
        %v9163 = vrot.slane %v9016, 5
        %v9164 = vsel %vm1614, %v9162, %v9163
        %v9165 = vrot.slane %v9017, 5
        %v9166 = vrot.slane %v9165, 4
        %v9167 = vrot.slane %v9018, 5
        %v9168 = vsel %vm1614, %v9166, %v9167
        %v9169 = vrot.slane %v9167, 4
        %v9170 = vrot.slane %v9019, 5
        %v9171 = vsel %vm1614, %v9169, %v9170
        %v9172 = vrot.slane %v9020, 5
        %v9173 = vrot.slane %v9172, 4
        %v9174 = vrot.slane %v9021, 5
        %v9175 = vsel %vm1614, %v9173, %v9174
        %v9176 = vrot.slane %v9174, 4
        %v9177 = vrot.slane %v9022, 5
        %v9178 = vsel %vm1614, %v9176, %v9177
        %v9179 = vrot.slane %v9023, 5
        %v9180 = vrot.slane %v9179, 4
        %v9181 = vrot.slane %v9024, 5
        %v9182 = vsel %vm1614, %v9180, %v9181
        %v9183 = vrot.slane %v9181, 4
        %v9184 = vrot.slane %v9025, 5
        %v9185 = vsel %vm1614, %v9183, %v9184
        %9218 = vst [vmem:[#allocation3 + $0x20] sm:$0xf] %v9077
        %9219 = vst [vmem:[#allocation3 + $0x44] sm:$0xf] %v9080
        %9220 = vst [vmem:[#allocation3 + $0x68] sm:$0xf] %v9084
        %9221 = vst [vmem:[#allocation3 + $0x8c] sm:$0xf] %v9087
        %9222 = vst [vmem:[#allocation3 + $0xb0] sm:$0xf] %v9091
        %9223 = vst [vmem:[#allocation3 + $0xd4] sm:$0xf] %v9094
        %9224 = vst [vmem:[#allocation3 + $0xf8] sm:$0xf] %v9098
        %9225 = vst [vmem:[#allocation3 + $0x11c] sm:$0xf] %v9101
        %9226 = vst [vmem:[#allocation3 + $0x140] sm:$0xf] %v9105
        %9227 = vst [vmem:[#allocation3 + $0x164] sm:$0xf] %v9108
        %9228 = vst [vmem:[#allocation3 + $0x188] sm:$0xf] %v9112
        %9229 = vst [vmem:[#allocation3 + $0x1ac] sm:$0xf] %v9115
        %9230 = vst [vmem:[#allocation3 + $0x1d0] sm:$0xf] %v9119
        %9231 = vst [vmem:[#allocation3 + $0x1f4] sm:$0xf] %v9122
        %9232 = vst [vmem:[#allocation3 + $0x218] sm:$0xf] %v9126
        %9233 = vst [vmem:[#allocation3 + $0x23c] sm:$0xf] %v9129
        %9234 = vst [vmem:[#allocation3 + $0x260] sm:$0xf] %v9133
        %9235 = vst [vmem:[#allocation3 + $0x284] sm:$0xf] %v9136
        %9236 = vst [vmem:[#allocation3 + $0x2a8] sm:$0xf] %v9140
        %9237 = vst [vmem:[#allocation3 + $0x2cc] sm:$0xf] %v9143
        %9238 = vst [vmem:[#allocation3 + $0x2f0] sm:$0xf] %v9147
        %9239 = vst [vmem:[#allocation3 + $0x314] sm:$0xf] %v9150
        %9240 = vst [vmem:[#allocation3 + $0x338] sm:$0xf] %v9154
        %9241 = vst [vmem:[#allocation3 + $0x35c] sm:$0xf] %v9157
        %9242 = vst [vmem:[#allocation3 + $0x380] sm:$0xf] %v9161
        %9243 = vst [vmem:[#allocation3 + $0x3a4] sm:$0xf] %v9164
        %9244 = vst [vmem:[#allocation3 + $0x3c8] sm:$0xf] %v9168
        %9245 = vst [vmem:[#allocation3 + $0x3ec] sm:$0xf] %v9171
        %9246 = vst [vmem:[#allocation3 + $0x410] sm:$0xf] %v9175
        %9247 = vst [vmem:[#allocation3 + $0x434] sm:$0xf] %v9178
        %9248 = vst [vmem:[#allocation3 + $0x458] sm:$0xf] %v9182
        %9249 = vst [vmem:[#allocation3 + $0x47c] sm:$0xf] %v9185
        %v9250 = vld [vmem:[#allocation3] sm:$0xff]
        %v9251 = vld [vmem:[#allocation3 + $0x8] sm:$0xff]
        %v9252 = vld [vmem:[#allocation3 + $0x10] sm:$0xff]
        %v9253 = vld [vmem:[#allocation3 + $0x18] sm:$0xff]
        %v9254 = vld [vmem:[#allocation3 + $0x20] sm:$0xf]
        %v9255 = vld [vmem:[#allocation3 + $0x24] sm:$0xff]
        %v9256 = vld [vmem:[#allocation3 + $0x2c] sm:$0xff]
        %v9257 = vld [vmem:[#allocation3 + $0x34] sm:$0xff]
        %v9258 = vld [vmem:[#allocation3 + $0x3c] sm:$0xff]
        %v9259 = vld [vmem:[#allocation3 + $0x44] sm:$0xf]
        %v9260 = vld [vmem:[#allocation3 + $0x48] sm:$0xff]
        %v9261 = vld [vmem:[#allocation3 + $0x50] sm:$0xff]
        %v9262 = vld [vmem:[#allocation3 + $0x58] sm:$0xff]
        %v9263 = vld [vmem:[#allocation3 + $0x60] sm:$0xff]
        %v9264 = vld [vmem:[#allocation3 + $0x68] sm:$0xf]
        %v9265 = vld [vmem:[#allocation3 + $0x6c] sm:$0xff]
        %v9266 = vld [vmem:[#allocation3 + $0x74] sm:$0xff]
        %v9267 = vld [vmem:[#allocation3 + $0x7c] sm:$0xff]
        %v9268 = vld [vmem:[#allocation3 + $0x84] sm:$0xff]
        %v9269 = vld [vmem:[#allocation3 + $0x8c] sm:$0xf]
        %v9270 = vld [vmem:[#allocation3 + $0x90] sm:$0xff]
        %v9271 = vld [vmem:[#allocation3 + $0x98] sm:$0xff]
        %v9272 = vld [vmem:[#allocation3 + $0xa0] sm:$0xff]
        %v9273 = vld [vmem:[#allocation3 + $0xa8] sm:$0xff]
        %v9274 = vld [vmem:[#allocation3 + $0xb0] sm:$0xf]
        %v9275 = vld [vmem:[#allocation3 + $0xb4] sm:$0xff]
        %v9276 = vld [vmem:[#allocation3 + $0xbc] sm:$0xff]
        %v9277 = vld [vmem:[#allocation3 + $0xc4] sm:$0xff]
        %v9278 = vld [vmem:[#allocation3 + $0xcc] sm:$0xff]
        %v9279 = vld [vmem:[#allocation3 + $0xd4] sm:$0xf]
        %v9280 = vld [vmem:[#allocation3 + $0xd8] sm:$0xff]
        %v9281 = vld [vmem:[#allocation3 + $0xe0] sm:$0xff]
        %v9282 = vld [vmem:[#allocation3 + $0xe8] sm:$0xff]
        %v9283 = vld [vmem:[#allocation3 + $0xf0] sm:$0xff]
        %v9284 = vld [vmem:[#allocation3 + $0xf8] sm:$0xf]
        %v9285 = vld [vmem:[#allocation3 + $0xfc] sm:$0xff]
        %v9286 = vld [vmem:[#allocation3 + $0x104] sm:$0xff]
        %v9287 = vld [vmem:[#allocation3 + $0x10c] sm:$0xff]
        %v9288 = vld [vmem:[#allocation3 + $0x114] sm:$0xff]
        %v9289 = vld [vmem:[#allocation3 + $0x11c] sm:$0xf]
        %v9290 = vld [vmem:[#allocation3 + $0x120] sm:$0xff]
        %v9291 = vld [vmem:[#allocation3 + $0x128] sm:$0xff]
        %v9292 = vld [vmem:[#allocation3 + $0x130] sm:$0xff]
        %v9293 = vld [vmem:[#allocation3 + $0x138] sm:$0xff]
        %v9294 = vld [vmem:[#allocation3 + $0x140] sm:$0xf]
        %v9295 = vld [vmem:[#allocation3 + $0x144] sm:$0xff]
        %v9296 = vld [vmem:[#allocation3 + $0x14c] sm:$0xff]
        %v9297 = vld [vmem:[#allocation3 + $0x154] sm:$0xff]
        %v9298 = vld [vmem:[#allocation3 + $0x15c] sm:$0xff]
        %v9299 = vld [vmem:[#allocation3 + $0x164] sm:$0xf]
        %v9300 = vld [vmem:[#allocation3 + $0x168] sm:$0xff]
        %v9301 = vld [vmem:[#allocation3 + $0x170] sm:$0xff]
        %v9302 = vld [vmem:[#allocation3 + $0x178] sm:$0xff]
        %v9303 = vld [vmem:[#allocation3 + $0x180] sm:$0xff]
        %v9304 = vld [vmem:[#allocation3 + $0x188] sm:$0xf]
        %v9305 = vld [vmem:[#allocation3 + $0x18c] sm:$0xff]
        %v9306 = vld [vmem:[#allocation3 + $0x194] sm:$0xff]
        %v9307 = vld [vmem:[#allocation3 + $0x19c] sm:$0xff]
        %v9308 = vld [vmem:[#allocation3 + $0x1a4] sm:$0xff]
        %v9309 = vld [vmem:[#allocation3 + $0x1ac] sm:$0xf]
        %v9310 = vld [vmem:[#allocation3 + $0x1b0] sm:$0xff]
        %v9311 = vld [vmem:[#allocation3 + $0x1b8] sm:$0xff]
        %v9312 = vld [vmem:[#allocation3 + $0x1c0] sm:$0xff]
        %v9313 = vld [vmem:[#allocation3 + $0x1c8] sm:$0xff]
        %v9314 = vld [vmem:[#allocation3 + $0x1d0] sm:$0xf]
        %v9315 = vld [vmem:[#allocation3 + $0x1d4] sm:$0xff]
        %v9316 = vld [vmem:[#allocation3 + $0x1dc] sm:$0xff]
        %v9317 = vld [vmem:[#allocation3 + $0x1e4] sm:$0xff]
        %v9318 = vld [vmem:[#allocation3 + $0x1ec] sm:$0xff]
        %v9319 = vld [vmem:[#allocation3 + $0x1f4] sm:$0xf]
        %v9320 = vld [vmem:[#allocation3 + $0x1f8] sm:$0xff]
        %v9321 = vld [vmem:[#allocation3 + $0x200] sm:$0xff]
        %v9322 = vld [vmem:[#allocation3 + $0x208] sm:$0xff]
        %v9323 = vld [vmem:[#allocation3 + $0x210] sm:$0xff]
        %v9324 = vld [vmem:[#allocation3 + $0x218] sm:$0xf]
        %v9325 = vld [vmem:[#allocation3 + $0x21c] sm:$0xff]
        %v9326 = vld [vmem:[#allocation3 + $0x224] sm:$0xff]
        %v9327 = vld [vmem:[#allocation3 + $0x22c] sm:$0xff]
        %v9328 = vld [vmem:[#allocation3 + $0x234] sm:$0xff]
        %v9329 = vld [vmem:[#allocation3 + $0x23c] sm:$0xf]
        %v9330 = vld [vmem:[#allocation3 + $0x240] sm:$0xff]
        %v9331 = vld [vmem:[#allocation3 + $0x248] sm:$0xff]
        %v9332 = vld [vmem:[#allocation3 + $0x250] sm:$0xff]
        %v9333 = vld [vmem:[#allocation3 + $0x258] sm:$0xff]
        %v9334 = vld [vmem:[#allocation3 + $0x260] sm:$0xf]
        %v9335 = vld [vmem:[#allocation3 + $0x264] sm:$0xff]
        %v9336 = vld [vmem:[#allocation3 + $0x26c] sm:$0xff]
        %v9337 = vld [vmem:[#allocation3 + $0x274] sm:$0xff]
        %v9338 = vld [vmem:[#allocation3 + $0x27c] sm:$0xff]
        %v9339 = vld [vmem:[#allocation3 + $0x284] sm:$0xf]
        %v9340 = vld [vmem:[#allocation3 + $0x288] sm:$0xff]
        %v9341 = vld [vmem:[#allocation3 + $0x290] sm:$0xff]
        %v9342 = vld [vmem:[#allocation3 + $0x298] sm:$0xff]
        %v9343 = vld [vmem:[#allocation3 + $0x2a0] sm:$0xff]
        %v9344 = vld [vmem:[#allocation3 + $0x2a8] sm:$0xf]
        %v9345 = vld [vmem:[#allocation3 + $0x2ac] sm:$0xff]
        %v9346 = vld [vmem:[#allocation3 + $0x2b4] sm:$0xff]
        %v9347 = vld [vmem:[#allocation3 + $0x2bc] sm:$0xff]
        %v9348 = vld [vmem:[#allocation3 + $0x2c4] sm:$0xff]
        %v9349 = vld [vmem:[#allocation3 + $0x2cc] sm:$0xf]
        %v9350 = vld [vmem:[#allocation3 + $0x2d0] sm:$0xff]
        %v9351 = vld [vmem:[#allocation3 + $0x2d8] sm:$0xff]
        %v9352 = vld [vmem:[#allocation3 + $0x2e0] sm:$0xff]
        %v9353 = vld [vmem:[#allocation3 + $0x2e8] sm:$0xff]
        %v9354 = vld [vmem:[#allocation3 + $0x2f0] sm:$0xf]
        %v9355 = vld [vmem:[#allocation3 + $0x2f4] sm:$0xff]
        %v9356 = vld [vmem:[#allocation3 + $0x2fc] sm:$0xff]
        %v9357 = vld [vmem:[#allocation3 + $0x304] sm:$0xff]
        %v9358 = vld [vmem:[#allocation3 + $0x30c] sm:$0xff]
        %v9359 = vld [vmem:[#allocation3 + $0x314] sm:$0xf]
        %v9360 = vld [vmem:[#allocation3 + $0x318] sm:$0xff]
        %v9361 = vld [vmem:[#allocation3 + $0x320] sm:$0xff]
        %v9362 = vld [vmem:[#allocation3 + $0x328] sm:$0xff]
        %v9363 = vld [vmem:[#allocation3 + $0x330] sm:$0xff]
        %v9364 = vld [vmem:[#allocation3 + $0x338] sm:$0xf]
        %v9365 = vld [vmem:[#allocation3 + $0x33c] sm:$0xff]
        %v9366 = vld [vmem:[#allocation3 + $0x344] sm:$0xff]
        %v9367 = vld [vmem:[#allocation3 + $0x34c] sm:$0xff]
        %v9368 = vld [vmem:[#allocation3 + $0x354] sm:$0xff]
        %v9369 = vld [vmem:[#allocation3 + $0x35c] sm:$0xf]
        %v9370 = vld [vmem:[#allocation3 + $0x360] sm:$0xff]
        %v9371 = vld [vmem:[#allocation3 + $0x368] sm:$0xff]
        %v9372 = vld [vmem:[#allocation3 + $0x370] sm:$0xff]
        %v9373 = vld [vmem:[#allocation3 + $0x378] sm:$0xff]
        %v9374 = vld [vmem:[#allocation3 + $0x380] sm:$0xf]
        %v9375 = vld [vmem:[#allocation3 + $0x384] sm:$0xff]
        %v9376 = vld [vmem:[#allocation3 + $0x38c] sm:$0xff]
        %v9377 = vld [vmem:[#allocation3 + $0x394] sm:$0xff]
        %v9378 = vld [vmem:[#allocation3 + $0x39c] sm:$0xff]
        %v9379 = vld [vmem:[#allocation3 + $0x3a4] sm:$0xf]
        %v9380 = vld [vmem:[#allocation3 + $0x3a8] sm:$0xff]
        %v9381 = vld [vmem:[#allocation3 + $0x3b0] sm:$0xff]
        %v9382 = vld [vmem:[#allocation3 + $0x3b8] sm:$0xff]
        %v9383 = vld [vmem:[#allocation3 + $0x3c0] sm:$0xff]
        %v9384 = vld [vmem:[#allocation3 + $0x3c8] sm:$0xf]
        %v9385 = vld [vmem:[#allocation3 + $0x3cc] sm:$0xff]
        %v9386 = vld [vmem:[#allocation3 + $0x3d4] sm:$0xff]
        %v9387 = vld [vmem:[#allocation3 + $0x3dc] sm:$0xff]
        %v9388 = vld [vmem:[#allocation3 + $0x3e4] sm:$0xff]
        %v9389 = vld [vmem:[#allocation3 + $0x3ec] sm:$0xf]
        %v9390 = vld [vmem:[#allocation3 + $0x3f0] sm:$0xff]
        %v9391 = vld [vmem:[#allocation3 + $0x3f8] sm:$0xff]
        %v9392 = vld [vmem:[#allocation3 + $0x400] sm:$0xff]
        %v9393 = vld [vmem:[#allocation3 + $0x408] sm:$0xff]
        %v9394 = vld [vmem:[#allocation3 + $0x410] sm:$0xf]
        %v9395 = vld [vmem:[#allocation3 + $0x414] sm:$0xff]
        %v9396 = vld [vmem:[#allocation3 + $0x41c] sm:$0xff]
        %v9397 = vld [vmem:[#allocation3 + $0x424] sm:$0xff]
        %v9398 = vld [vmem:[#allocation3 + $0x42c] sm:$0xff]
        %v9399 = vld [vmem:[#allocation3 + $0x434] sm:$0xf]
        %v9400 = vld [vmem:[#allocation3 + $0x438] sm:$0xff]
        %v9401 = vld [vmem:[#allocation3 + $0x440] sm:$0xff]
        %v9402 = vld [vmem:[#allocation3 + $0x448] sm:$0xff]
        %v9403 = vld [vmem:[#allocation3 + $0x450] sm:$0xff]
        %v9404 = vld [vmem:[#allocation3 + $0x458] sm:$0xf]
        %v9405 = vld [vmem:[#allocation3 + $0x45c] sm:$0xff]
        %v9406 = vld [vmem:[#allocation3 + $0x464] sm:$0xff]
        %v9407 = vld [vmem:[#allocation3 + $0x46c] sm:$0xff]
        %v9408 = vld [vmem:[#allocation3 + $0x474] sm:$0xff]
        %v9409 = vld [vmem:[#allocation3 + $0x47c] sm:$0xf]
        %v9410 = vld [vmem:[%s5] sm:$0xf]
        %v9411 = vld [vmem:[%s5 + $0x4] sm:$0xf]
        %v9412 = vld [vmem:[%s5 + $0x8] sm:$0xf]
        %v9413 = vld [vmem:[%s5 + $0xc] sm:$0xf]
        %v9414 = vld [vmem:[%s5 + $0x10] sm:$0xf]
        %v9415 = vld [vmem:[%s5 + $0x14] sm:$0xf]
        %v9416 = vld [vmem:[%s5 + $0x18] sm:$0xf]
        %v9417 = vld [vmem:[%s5 + $0x1c] sm:$0xf]
        %v9418 = vld [vmem:[%s5 + $0x20] sm:$0xf]
        %v9419 = vld [vmem:[%s5 + $0x24] sm:$0xf]
        %v9420 = vld [vmem:[%s5 + $0x28] sm:$0xf]
        %v9421 = vld [vmem:[%s5 + $0x2c] sm:$0xf]
        %v9422 = vld [vmem:[%s5 + $0x30] sm:$0xf]
        %v9423 = vld [vmem:[%s5 + $0x34] sm:$0xf]
        %v9424 = vld [vmem:[%s5 + $0x38] sm:$0xf]
        %v9425 = vld [vmem:[%s5 + $0x3c] sm:$0xf]
        %v9426 = vld [vmem:[%s5 + $0x40] sm:$0xf]
        %v9427 = vld [vmem:[%s5 + $0x44] sm:$0xf]
        %v9428 = vld [vmem:[%s5 + $0x48] sm:$0xf]
        %v9429 = vld [vmem:[%s5 + $0x4c] sm:$0xf]
        %v9430 = vld [vmem:[%s5 + $0x50] sm:$0xf]
        %v9431 = vld [vmem:[%s5 + $0x54] sm:$0xf]
        %v9432 = vld [vmem:[%s5 + $0x58] sm:$0xf]
        %v9433 = vld [vmem:[%s5 + $0x5c] sm:$0xf]
        %v9434 = vld [vmem:[%s5 + $0x60] sm:$0xf]
        %v9435 = vld [vmem:[%s5 + $0x64] sm:$0xf]
        %v9436 = vld [vmem:[%s5 + $0x68] sm:$0xf]
        %v9437 = vld [vmem:[%s5 + $0x6c] sm:$0xf]
        %v9438 = vld [vmem:[%s5 + $0x70] sm:$0xf]
        %v9439 = vld [vmem:[%s5 + $0x74] sm:$0xf]
        %v9440 = vld [vmem:[%s5 + $0x78] sm:$0xf]
        %v9441 = vld [vmem:[%s5 + $0x7c] sm:$0xf]
        %v9442 = vld [vmem:[%s5 + $0x80] sm:$0xf]
        %v9443 = vld [vmem:[%s5 + $0x84] sm:$0xf]
        %v9444 = vld [vmem:[%s5 + $0x88] sm:$0xf]
        %v9445 = vld [vmem:[%s5 + $0x8c] sm:$0xf]
        %v9446 = vld [vmem:[%s5 + $0x90] sm:$0xf]
        %v9447 = vld [vmem:[%s5 + $0x94] sm:$0xf]
        %v9448 = vld [vmem:[%s5 + $0x98] sm:$0xf]
        %v9449 = vld [vmem:[%s5 + $0x9c] sm:$0xf]
        %v9450 = vld [vmem:[%s5 + $0xa0] sm:$0xf]
        %v9451 = vld [vmem:[%s5 + $0xa4] sm:$0xf]
        %v9452 = vld [vmem:[%s5 + $0xa8] sm:$0xf]
        %v9453 = vld [vmem:[%s5 + $0xac] sm:$0xf]
        %v9454 = vld [vmem:[%s5 + $0xb0] sm:$0xf]
        %v9455 = vld [vmem:[%s5 + $0xb4] sm:$0xf]
        %v9456 = vld [vmem:[%s5 + $0xb8] sm:$0xf]
        %v9457 = vld [vmem:[%s5 + $0xbc] sm:$0xf]
        %v9458 = vld [vmem:[%s5 + $0xc0] sm:$0xf]
        %v9459 = vld [vmem:[%s5 + $0xc4] sm:$0xf]
        %v9460 = vld [vmem:[%s5 + $0xc8] sm:$0xf]
        %v9461 = vld [vmem:[%s5 + $0xcc] sm:$0xf]
        %v9462 = vld [vmem:[%s5 + $0xd0] sm:$0xf]
        %v9463 = vld [vmem:[%s5 + $0xd4] sm:$0xf]
        %v9464 = vld [vmem:[%s5 + $0xd8] sm:$0xf]
        %v9465 = vld [vmem:[%s5 + $0xdc] sm:$0xf]
        %v9466 = vld [vmem:[%s5 + $0xe0] sm:$0xf]
        %v9467 = vld [vmem:[%s5 + $0xe4] sm:$0xf]
        %v9468 = vld [vmem:[%s5 + $0xe8] sm:$0xf]
        %v9469 = vld [vmem:[%s5 + $0xec] sm:$0xf]
        %v9470 = vld [vmem:[%s5 + $0xf0] sm:$0xf]
        %v9471 = vld [vmem:[%s5 + $0xf4] sm:$0xf]
        %v9472 = vld [vmem:[%s5 + $0xf8] sm:$0xf]
        %v9473 = vld [vmem:[%s5 + $0xfc] sm:$0xf]
        %v9474 = vld [vmem:[%s5 + $0x100] sm:$0xf]
        %v9475 = vld [vmem:[%s5 + $0x104] sm:$0xf]
        %v9476 = vld [vmem:[%s5 + $0x108] sm:$0xf]
        %v9477 = vld [vmem:[%s5 + $0x10c] sm:$0xf]
        %v9478 = vld [vmem:[%s5 + $0x110] sm:$0xf]
        %v9479 = vld [vmem:[%s5 + $0x114] sm:$0xf]
        %v9480 = vld [vmem:[%s5 + $0x118] sm:$0xf]
        %v9481 = vld [vmem:[%s5 + $0x11c] sm:$0xf]
        %v9482 = vld [vmem:[%s5 + $0x120] sm:$0xf]
        %v9483 = vld [vmem:[%s5 + $0x124] sm:$0xf]
        %v9484 = vld [vmem:[%s5 + $0x128] sm:$0xf]
        %v9485 = vld [vmem:[%s5 + $0x12c] sm:$0xf]
        %v9486 = vld [vmem:[%s5 + $0x130] sm:$0xf]
        %v9487 = vld [vmem:[%s5 + $0x134] sm:$0xf]
        %v9488 = vld [vmem:[%s5 + $0x138] sm:$0xf]
        %v9489 = vld [vmem:[%s5 + $0x13c] sm:$0xf]
        %v9490 = vld [vmem:[%s5 + $0x140] sm:$0xf]
        %v9491 = vld [vmem:[%s5 + $0x144] sm:$0xf]
        %v9492 = vld [vmem:[%s5 + $0x148] sm:$0xf]
        %v9493 = vld [vmem:[%s5 + $0x14c] sm:$0xf]
        %v9494 = vld [vmem:[%s5 + $0x150] sm:$0xf]
        %v9495 = vld [vmem:[%s5 + $0x154] sm:$0xf]
        %v9496 = vld [vmem:[%s5 + $0x158] sm:$0xf]
        %v9497 = vld [vmem:[%s5 + $0x15c] sm:$0xf]
        %v9498 = vld [vmem:[%s5 + $0x160] sm:$0xf]
        %v9499 = vld [vmem:[%s5 + $0x164] sm:$0xf]
        %v9500 = vld [vmem:[%s5 + $0x168] sm:$0xf]
        %v9501 = vld [vmem:[%s5 + $0x16c] sm:$0xf]
        %v9502 = vld [vmem:[%s5 + $0x170] sm:$0xf]
        %v9503 = vld [vmem:[%s5 + $0x174] sm:$0xf]
        %v9504 = vld [vmem:[%s5 + $0x178] sm:$0xf]
        %v9505 = vld [vmem:[%s5 + $0x17c] sm:$0xf]
        %v9506 = vld [vmem:[%s5 + $0x180] sm:$0xf]
        %v9507 = vld [vmem:[%s5 + $0x184] sm:$0xf]
        %v9508 = vld [vmem:[%s5 + $0x188] sm:$0xf]
        %v9509 = vld [vmem:[%s5 + $0x18c] sm:$0xf]
        %v9510 = vld [vmem:[%s5 + $0x190] sm:$0xf]
        %v9511 = vld [vmem:[%s5 + $0x194] sm:$0xf]
        %v9512 = vld [vmem:[%s5 + $0x198] sm:$0xf]
        %v9513 = vld [vmem:[%s5 + $0x19c] sm:$0xf]
        %v9514 = vld [vmem:[%s5 + $0x1a0] sm:$0xf]
        %v9515 = vld [vmem:[%s5 + $0x1a4] sm:$0xf]
        %v9516 = vld [vmem:[%s5 + $0x1a8] sm:$0xf]
        %v9517 = vld [vmem:[%s5 + $0x1ac] sm:$0xf]
        %v9518 = vld [vmem:[%s5 + $0x1b0] sm:$0xf]
        %v9519 = vld [vmem:[%s5 + $0x1b4] sm:$0xf]
        %v9520 = vld [vmem:[%s5 + $0x1b8] sm:$0xf]
        %v9521 = vld [vmem:[%s5 + $0x1bc] sm:$0xf]
        %v9522 = vld [vmem:[%s5 + $0x1c0] sm:$0xf]
        %v9523 = vld [vmem:[%s5 + $0x1c4] sm:$0xf]
        %v9524 = vld [vmem:[%s5 + $0x1c8] sm:$0xf]
        %v9525 = vld [vmem:[%s5 + $0x1cc] sm:$0xf]
        %v9526 = vld [vmem:[%s5 + $0x1d0] sm:$0xf]
        %v9527 = vld [vmem:[%s5 + $0x1d4] sm:$0xf]
        %v9528 = vld [vmem:[%s5 + $0x1d8] sm:$0xf]
        %v9529 = vld [vmem:[%s5 + $0x1dc] sm:$0xf]
        %v9530 = vld [vmem:[%s5 + $0x1e0] sm:$0xf]
        %v9531 = vld [vmem:[%s5 + $0x1e4] sm:$0xf]
        %v9532 = vld [vmem:[%s5 + $0x1e8] sm:$0xf]
        %v9533 = vld [vmem:[%s5 + $0x1ec] sm:$0xf]
        %v9534 = vld [vmem:[%s5 + $0x1f0] sm:$0xf]
        %v9535 = vld [vmem:[%s5 + $0x1f4] sm:$0xf]
        %v9536 = vld [vmem:[%s5 + $0x1f8] sm:$0xf]
        %v9537 = vld [vmem:[%s5 + $0x1fc] sm:$0xf]
        %v9538 = vld [vmem:[%s5 + $0x200] sm:$0xf]
        %v9539 = vld [vmem:[%s5 + $0x204] sm:$0xf]
        %v9540 = vld [vmem:[%s5 + $0x208] sm:$0xf]
        %v9541 = vld [vmem:[%s5 + $0x20c] sm:$0xf]
        %v9542 = vld [vmem:[%s5 + $0x210] sm:$0xf]
        %v9543 = vld [vmem:[%s5 + $0x214] sm:$0xf]
        %v9544 = vld [vmem:[%s5 + $0x218] sm:$0xf]
        %v9545 = vld [vmem:[%s5 + $0x21c] sm:$0xf]
        %v9546 = vld [vmem:[%s5 + $0x220] sm:$0xf]
        %v9547 = vld [vmem:[%s5 + $0x224] sm:$0xf]
        %v9548 = vld [vmem:[%s5 + $0x228] sm:$0xf]
        %v9549 = vld [vmem:[%s5 + $0x22c] sm:$0xf]
        %v9550 = vld [vmem:[%s5 + $0x230] sm:$0xf]
        %v9551 = vld [vmem:[%s5 + $0x234] sm:$0xf]
        %v9552 = vld [vmem:[%s5 + $0x238] sm:$0xf]
        %v9553 = vld [vmem:[%s5 + $0x23c] sm:$0xf]
        %v9554 = vld [vmem:[%s6] sm:$0x1]
        %v9556 = vperm.slane %v9554, 0
        %v9718 = vunpack.c.l.b16 %v9250
        %v9719 = vunpack.c.h.b16 %v9250
        %v9720 = vunpack.c.l.b16 %v9251
        %v9721 = vunpack.c.h.b16 %v9251
        %v9722 = vunpack.c.l.b16 %v9252
        %v9723 = vunpack.c.h.b16 %v9252
        %v9724 = vunpack.c.l.b16 %v9253
        %v9725 = vunpack.c.h.b16 %v9253
        %v9726 = vunpack.c.l.b16 %v9254
        %v9727 = vunpack.c.l.b16 %v9255
        %v9728 = vunpack.c.h.b16 %v9255
        %v9729 = vunpack.c.l.b16 %v9256
        %v9730 = vunpack.c.h.b16 %v9256
        %v9731 = vunpack.c.l.b16 %v9257
        %v9732 = vunpack.c.h.b16 %v9257
        %v9733 = vunpack.c.l.b16 %v9258
        %v9734 = vunpack.c.h.b16 %v9258
        %v9735 = vunpack.c.l.b16 %v9259
        %v9736 = vunpack.c.l.b16 %v9260
        %v9737 = vunpack.c.h.b16 %v9260
        %v9738 = vunpack.c.l.b16 %v9261
        %v9739 = vunpack.c.h.b16 %v9261
        %v9740 = vunpack.c.l.b16 %v9262
        %v9741 = vunpack.c.h.b16 %v9262
        %v9742 = vunpack.c.l.b16 %v9263
        %v9743 = vunpack.c.h.b16 %v9263
        %v9744 = vunpack.c.l.b16 %v9264
        %v9745 = vunpack.c.l.b16 %v9265
        %v9746 = vunpack.c.h.b16 %v9265
        %v9747 = vunpack.c.l.b16 %v9266
        %v9748 = vunpack.c.h.b16 %v9266
        %v9749 = vunpack.c.l.b16 %v9267
        %v9750 = vunpack.c.h.b16 %v9267
        %v9751 = vunpack.c.l.b16 %v9268
        %v9752 = vunpack.c.h.b16 %v9268
        %v9753 = vunpack.c.l.b16 %v9269
        %v9754 = vunpack.c.l.b16 %v9270
        %v9755 = vunpack.c.h.b16 %v9270
        %v9756 = vunpack.c.l.b16 %v9271
        %v9757 = vunpack.c.h.b16 %v9271
        %v9758 = vunpack.c.l.b16 %v9272
        %v9759 = vunpack.c.h.b16 %v9272
        %v9760 = vunpack.c.l.b16 %v9273
        %v9761 = vunpack.c.h.b16 %v9273
        %v9762 = vunpack.c.l.b16 %v9274
        %v9763 = vunpack.c.l.b16 %v9275
        %v9764 = vunpack.c.h.b16 %v9275
        %v9765 = vunpack.c.l.b16 %v9276
        %v9766 = vunpack.c.h.b16 %v9276
        %v9767 = vunpack.c.l.b16 %v9277
        %v9768 = vunpack.c.h.b16 %v9277
        %v9769 = vunpack.c.l.b16 %v9278
        %v9770 = vunpack.c.h.b16 %v9278
        %v9771 = vunpack.c.l.b16 %v9279
        %v9772 = vunpack.c.l.b16 %v9280
        %v9773 = vunpack.c.h.b16 %v9280
        %v9774 = vunpack.c.l.b16 %v9281
        %v9775 = vunpack.c.h.b16 %v9281
        %v9776 = vunpack.c.l.b16 %v9282
        %v9777 = vunpack.c.h.b16 %v9282
        %v9778 = vunpack.c.l.b16 %v9283
        %v9779 = vunpack.c.h.b16 %v9283
        %v9780 = vunpack.c.l.b16 %v9284
        %v9781 = vunpack.c.l.b16 %v9285
        %v9782 = vunpack.c.h.b16 %v9285
        %v9783 = vunpack.c.l.b16 %v9286
        %v9784 = vunpack.c.h.b16 %v9286
        %v9785 = vunpack.c.l.b16 %v9287
        %v9786 = vunpack.c.h.b16 %v9287
        %v9787 = vunpack.c.l.b16 %v9288
        %v9788 = vunpack.c.h.b16 %v9288
        %v9789 = vunpack.c.l.b16 %v9289
        %v9790 = vunpack.c.l.b16 %v9290
        %v9791 = vunpack.c.h.b16 %v9290
        %v9792 = vunpack.c.l.b16 %v9291
        %v9793 = vunpack.c.h.b16 %v9291
        %v9794 = vunpack.c.l.b16 %v9292
        %v9795 = vunpack.c.h.b16 %v9292
        %v9796 = vunpack.c.l.b16 %v9293
        %v9797 = vunpack.c.h.b16 %v9293
        %v9798 = vunpack.c.l.b16 %v9294
        %v9799 = vunpack.c.l.b16 %v9295
        %v9800 = vunpack.c.h.b16 %v9295
        %v9801 = vunpack.c.l.b16 %v9296
        %v9802 = vunpack.c.h.b16 %v9296
        %v9803 = vunpack.c.l.b16 %v9297
        %v9804 = vunpack.c.h.b16 %v9297
        %v9805 = vunpack.c.l.b16 %v9298
        %v9806 = vunpack.c.h.b16 %v9298
        %v9807 = vunpack.c.l.b16 %v9299
        %v9808 = vunpack.c.l.b16 %v9300
        %v9809 = vunpack.c.h.b16 %v9300
        %v9810 = vunpack.c.l.b16 %v9301
        %v9811 = vunpack.c.h.b16 %v9301
        %v9812 = vunpack.c.l.b16 %v9302
        %v9813 = vunpack.c.h.b16 %v9302
        %v9814 = vunpack.c.l.b16 %v9303
        %v9815 = vunpack.c.h.b16 %v9303
        %v9816 = vunpack.c.l.b16 %v9304
        %v9817 = vunpack.c.l.b16 %v9305
        %v9818 = vunpack.c.h.b16 %v9305
        %v9819 = vunpack.c.l.b16 %v9306
        %v9820 = vunpack.c.h.b16 %v9306
        %v9821 = vunpack.c.l.b16 %v9307
        %v9822 = vunpack.c.h.b16 %v9307
        %v9823 = vunpack.c.l.b16 %v9308
        %v9824 = vunpack.c.h.b16 %v9308
        %v9825 = vunpack.c.l.b16 %v9309
        %v9826 = vunpack.c.l.b16 %v9310
        %v9827 = vunpack.c.h.b16 %v9310
        %v9828 = vunpack.c.l.b16 %v9311
        %v9829 = vunpack.c.h.b16 %v9311
        %v9830 = vunpack.c.l.b16 %v9312
        %v9831 = vunpack.c.h.b16 %v9312
        %v9832 = vunpack.c.l.b16 %v9313
        %v9833 = vunpack.c.h.b16 %v9313
        %v9834 = vunpack.c.l.b16 %v9314
        %v9835 = vunpack.c.l.b16 %v9315
        %v9836 = vunpack.c.h.b16 %v9315
        %v9837 = vunpack.c.l.b16 %v9316
        %v9838 = vunpack.c.h.b16 %v9316
        %v9839 = vunpack.c.l.b16 %v9317
        %v9840 = vunpack.c.h.b16 %v9317
        %v9841 = vunpack.c.l.b16 %v9318
        %v9842 = vunpack.c.h.b16 %v9318
        %v9843 = vunpack.c.l.b16 %v9319
        %v9844 = vunpack.c.l.b16 %v9320
        %v9845 = vunpack.c.h.b16 %v9320
        %v9846 = vunpack.c.l.b16 %v9321
        %v9847 = vunpack.c.h.b16 %v9321
        %v9848 = vunpack.c.l.b16 %v9322
        %v9849 = vunpack.c.h.b16 %v9322
        %v9850 = vunpack.c.l.b16 %v9323
        %v9851 = vunpack.c.h.b16 %v9323
        %v9852 = vunpack.c.l.b16 %v9324
        %v9853 = vunpack.c.l.b16 %v9325
        %v9854 = vunpack.c.h.b16 %v9325
        %v9855 = vunpack.c.l.b16 %v9326
        %v9856 = vunpack.c.h.b16 %v9326
        %v9857 = vunpack.c.l.b16 %v9327
        %v9858 = vunpack.c.h.b16 %v9327
        %v9859 = vunpack.c.l.b16 %v9328
        %v9860 = vunpack.c.h.b16 %v9328
        %v9861 = vunpack.c.l.b16 %v9329
        %v9862 = vunpack.c.l.b16 %v9330
        %v9863 = vunpack.c.h.b16 %v9330
        %v9864 = vunpack.c.l.b16 %v9331
        %v9865 = vunpack.c.h.b16 %v9331
        %v9866 = vunpack.c.l.b16 %v9332
        %v9867 = vunpack.c.h.b16 %v9332
        %v9868 = vunpack.c.l.b16 %v9333
        %v9869 = vunpack.c.h.b16 %v9333
        %v9870 = vunpack.c.l.b16 %v9334
        %v9871 = vunpack.c.l.b16 %v9335
        %v9872 = vunpack.c.h.b16 %v9335
        %v9873 = vunpack.c.l.b16 %v9336
        %v9874 = vunpack.c.h.b16 %v9336
        %v9875 = vunpack.c.l.b16 %v9337
        %v9876 = vunpack.c.h.b16 %v9337
        %v9877 = vunpack.c.l.b16 %v9338
        %v9878 = vunpack.c.h.b16 %v9338
        %v9879 = vunpack.c.l.b16 %v9339
        %v9880 = vunpack.c.l.b16 %v9340
        %v9881 = vunpack.c.h.b16 %v9340
        %v9882 = vunpack.c.l.b16 %v9341
        %v9883 = vunpack.c.h.b16 %v9341
        %v9884 = vunpack.c.l.b16 %v9342
        %v9885 = vunpack.c.h.b16 %v9342
        %v9886 = vunpack.c.l.b16 %v9343
        %v9887 = vunpack.c.h.b16 %v9343
        %v9888 = vunpack.c.l.b16 %v9344
        %v9889 = vunpack.c.l.b16 %v9345
        %v9890 = vunpack.c.h.b16 %v9345
        %v9891 = vunpack.c.l.b16 %v9346
        %v9892 = vunpack.c.h.b16 %v9346
        %v9893 = vunpack.c.l.b16 %v9347
        %v9894 = vunpack.c.h.b16 %v9347
        %v9895 = vunpack.c.l.b16 %v9348
        %v9896 = vunpack.c.h.b16 %v9348
        %v9897 = vunpack.c.l.b16 %v9349
        %v9898 = vunpack.c.l.b16 %v9350
        %v9899 = vunpack.c.h.b16 %v9350
        %v9900 = vunpack.c.l.b16 %v9351
        %v9901 = vunpack.c.h.b16 %v9351
        %v9902 = vunpack.c.l.b16 %v9352
        %v9903 = vunpack.c.h.b16 %v9352
        %v9904 = vunpack.c.l.b16 %v9353
        %v9905 = vunpack.c.h.b16 %v9353
        %v9906 = vunpack.c.l.b16 %v9354
        %v9907 = vunpack.c.l.b16 %v9355
        %v9908 = vunpack.c.h.b16 %v9355
        %v9909 = vunpack.c.l.b16 %v9356
        %v9910 = vunpack.c.h.b16 %v9356
        %v9911 = vunpack.c.l.b16 %v9357
        %v9912 = vunpack.c.h.b16 %v9357
        %v9913 = vunpack.c.l.b16 %v9358
        %v9914 = vunpack.c.h.b16 %v9358
        %v9915 = vunpack.c.l.b16 %v9359
        %v9916 = vunpack.c.l.b16 %v9360
        %v9917 = vunpack.c.h.b16 %v9360
        %v9918 = vunpack.c.l.b16 %v9361
        %v9919 = vunpack.c.h.b16 %v9361
        %v9920 = vunpack.c.l.b16 %v9362
        %v9921 = vunpack.c.h.b16 %v9362
        %v9922 = vunpack.c.l.b16 %v9363
        %v9923 = vunpack.c.h.b16 %v9363
        %v9924 = vunpack.c.l.b16 %v9364
        %v9925 = vunpack.c.l.b16 %v9365
        %v9926 = vunpack.c.h.b16 %v9365
        %v9927 = vunpack.c.l.b16 %v9366
        %v9928 = vunpack.c.h.b16 %v9366
        %v9929 = vunpack.c.l.b16 %v9367
        %v9930 = vunpack.c.h.b16 %v9367
        %v9931 = vunpack.c.l.b16 %v9368
        %v9932 = vunpack.c.h.b16 %v9368
        %v9933 = vunpack.c.l.b16 %v9369
        %v9934 = vunpack.c.l.b16 %v9370
        %v9935 = vunpack.c.h.b16 %v9370
        %v9936 = vunpack.c.l.b16 %v9371
        %v9937 = vunpack.c.h.b16 %v9371
        %v9938 = vunpack.c.l.b16 %v9372
        %v9939 = vunpack.c.h.b16 %v9372
        %v9940 = vunpack.c.l.b16 %v9373
        %v9941 = vunpack.c.h.b16 %v9373
        %v9942 = vunpack.c.l.b16 %v9374
        %v9943 = vunpack.c.l.b16 %v9375
        %v9944 = vunpack.c.h.b16 %v9375
        %v9945 = vunpack.c.l.b16 %v9376
        %v9946 = vunpack.c.h.b16 %v9376
        %v9947 = vunpack.c.l.b16 %v9377
        %v9948 = vunpack.c.h.b16 %v9377
        %v9949 = vunpack.c.l.b16 %v9378
        %v9950 = vunpack.c.h.b16 %v9378
        %v9951 = vunpack.c.l.b16 %v9379
        %v9952 = vunpack.c.l.b16 %v9380
        %v9953 = vunpack.c.h.b16 %v9380
        %v9954 = vunpack.c.l.b16 %v9381
        %v9955 = vunpack.c.h.b16 %v9381
        %v9956 = vunpack.c.l.b16 %v9382
        %v9957 = vunpack.c.h.b16 %v9382
        %v9958 = vunpack.c.l.b16 %v9383
        %v9959 = vunpack.c.h.b16 %v9383
        %v9960 = vunpack.c.l.b16 %v9384
        %v9961 = vunpack.c.l.b16 %v9385
        %v9962 = vunpack.c.h.b16 %v9385
        %v9963 = vunpack.c.l.b16 %v9386
        %v9964 = vunpack.c.h.b16 %v9386
        %v9965 = vunpack.c.l.b16 %v9387
        %v9966 = vunpack.c.h.b16 %v9387
        %v9967 = vunpack.c.l.b16 %v9388
        %v9968 = vunpack.c.h.b16 %v9388
        %v9969 = vunpack.c.l.b16 %v9389
        %v9970 = vunpack.c.l.b16 %v9390
        %v9971 = vunpack.c.h.b16 %v9390
        %v9972 = vunpack.c.l.b16 %v9391
        %v9973 = vunpack.c.h.b16 %v9391
        %v9974 = vunpack.c.l.b16 %v9392
        %v9975 = vunpack.c.h.b16 %v9392
        %v9976 = vunpack.c.l.b16 %v9393
        %v9977 = vunpack.c.h.b16 %v9393
        %v9978 = vunpack.c.l.b16 %v9394
        %v9979 = vunpack.c.l.b16 %v9395
        %v9980 = vunpack.c.h.b16 %v9395
        %v9981 = vunpack.c.l.b16 %v9396
        %v9982 = vunpack.c.h.b16 %v9396
        %v9983 = vunpack.c.l.b16 %v9397
        %v9984 = vunpack.c.h.b16 %v9397
        %v9985 = vunpack.c.l.b16 %v9398
        %v9986 = vunpack.c.h.b16 %v9398
        %v9987 = vunpack.c.l.b16 %v9399
        %v9988 = vunpack.c.l.b16 %v9400
        %v9989 = vunpack.c.h.b16 %v9400
        %v9990 = vunpack.c.l.b16 %v9401
        %v9991 = vunpack.c.h.b16 %v9401
        %v9992 = vunpack.c.l.b16 %v9402
        %v9993 = vunpack.c.h.b16 %v9402
        %v9994 = vunpack.c.l.b16 %v9403
        %v9995 = vunpack.c.h.b16 %v9403
        %v9996 = vunpack.c.l.b16 %v9404
        %v9997 = vunpack.c.l.b16 %v9405
        %v9998 = vunpack.c.h.b16 %v9405
        %v9999 = vunpack.c.l.b16 %v9406
        %v10000 = vunpack.c.h.b16 %v9406
        %v10001 = vunpack.c.l.b16 %v9407
        %v10002 = vunpack.c.h.b16 %v9407
        %v10003 = vunpack.c.l.b16 %v9408
        %v10004 = vunpack.c.h.b16 %v9408
        %v10005 = vunpack.c.l.b16 %v9409
        %v10006 = vpack.c.b16 %v9727, %v9718
        %v10007 = vpack.c.b16 %v9728, %v9719
        %v10008 = vpack.c.b16 %v9729, %v9720
        %v10009 = vpack.c.b16 %v9730, %v9721
        %v10010 = vpack.c.b16 %v9731, %v9722
        %v10011 = vpack.c.b16 %v9732, %v9723
        %v10012 = vpack.c.b16 %v9733, %v9724
        %v10013 = vpack.c.b16 %v9734, %v9725
        %v10014 = vpack.c.b16 %v9735, %v9726
        %v10015 = vpack.c.b16 %v9745, %v9736
        %v10016 = vpack.c.b16 %v9746, %v9737
        %v10017 = vpack.c.b16 %v9747, %v9738
        %v10018 = vpack.c.b16 %v9748, %v9739
        %v10019 = vpack.c.b16 %v9749, %v9740
        %v10020 = vpack.c.b16 %v9750, %v9741
        %v10021 = vpack.c.b16 %v9751, %v9742
        %v10022 = vpack.c.b16 %v9752, %v9743
        %v10023 = vpack.c.b16 %v9753, %v9744
        %v10024 = vpack.c.b16 %v9763, %v9754
        %v10025 = vpack.c.b16 %v9764, %v9755
        %v10026 = vpack.c.b16 %v9765, %v9756
        %v10027 = vpack.c.b16 %v9766, %v9757
        %v10028 = vpack.c.b16 %v9767, %v9758
        %v10029 = vpack.c.b16 %v9768, %v9759
        %v10030 = vpack.c.b16 %v9769, %v9760
        %v10031 = vpack.c.b16 %v9770, %v9761
        %v10032 = vpack.c.b16 %v9771, %v9762
        %v10033 = vpack.c.b16 %v9781, %v9772
        %v10034 = vpack.c.b16 %v9782, %v9773
        %v10035 = vpack.c.b16 %v9783, %v9774
        %v10036 = vpack.c.b16 %v9784, %v9775
        %v10037 = vpack.c.b16 %v9785, %v9776
        %v10038 = vpack.c.b16 %v9786, %v9777
        %v10039 = vpack.c.b16 %v9787, %v9778
        %v10040 = vpack.c.b16 %v9788, %v9779
        %v10041 = vpack.c.b16 %v9789, %v9780
        %v10042 = vpack.c.b16 %v9799, %v9790
        %v10043 = vpack.c.b16 %v9800, %v9791
        %v10044 = vpack.c.b16 %v9801, %v9792
        %v10045 = vpack.c.b16 %v9802, %v9793
        %v10046 = vpack.c.b16 %v9803, %v9794
        %v10047 = vpack.c.b16 %v9804, %v9795
        %v10048 = vpack.c.b16 %v9805, %v9796
        %v10049 = vpack.c.b16 %v9806, %v9797
        %v10050 = vpack.c.b16 %v9807, %v9798
        %v10051 = vpack.c.b16 %v9817, %v9808
        %v10052 = vpack.c.b16 %v9818, %v9809
        %v10053 = vpack.c.b16 %v9819, %v9810
        %v10054 = vpack.c.b16 %v9820, %v9811
        %v10055 = vpack.c.b16 %v9821, %v9812
        %v10056 = vpack.c.b16 %v9822, %v9813
        %v10057 = vpack.c.b16 %v9823, %v9814
        %v10058 = vpack.c.b16 %v9824, %v9815
        %v10059 = vpack.c.b16 %v9825, %v9816
        %v10060 = vpack.c.b16 %v9835, %v9826
        %v10061 = vpack.c.b16 %v9836, %v9827
        %v10062 = vpack.c.b16 %v9837, %v9828
        %v10063 = vpack.c.b16 %v9838, %v9829
        %v10064 = vpack.c.b16 %v9839, %v9830
        %v10065 = vpack.c.b16 %v9840, %v9831
        %v10066 = vpack.c.b16 %v9841, %v9832
        %v10067 = vpack.c.b16 %v9842, %v9833
        %v10068 = vpack.c.b16 %v9843, %v9834
        %v10069 = vpack.c.b16 %v9853, %v9844
        %v10070 = vpack.c.b16 %v9854, %v9845
        %v10071 = vpack.c.b16 %v9855, %v9846
        %v10072 = vpack.c.b16 %v9856, %v9847
        %v10073 = vpack.c.b16 %v9857, %v9848
        %v10074 = vpack.c.b16 %v9858, %v9849
        %v10075 = vpack.c.b16 %v9859, %v9850
        %v10076 = vpack.c.b16 %v9860, %v9851
        %v10077 = vpack.c.b16 %v9861, %v9852
        %v10078 = vpack.c.b16 %v9871, %v9862
        %v10079 = vpack.c.b16 %v9872, %v9863
        %v10080 = vpack.c.b16 %v9873, %v9864
        %v10081 = vpack.c.b16 %v9874, %v9865
        %v10082 = vpack.c.b16 %v9875, %v9866
        %v10083 = vpack.c.b16 %v9876, %v9867
        %v10084 = vpack.c.b16 %v9877, %v9868
        %v10085 = vpack.c.b16 %v9878, %v9869
        %v10086 = vpack.c.b16 %v9879, %v9870
        %v10087 = vpack.c.b16 %v9889, %v9880
        %v10088 = vpack.c.b16 %v9890, %v9881
        %v10089 = vpack.c.b16 %v9891, %v9882
        %v10090 = vpack.c.b16 %v9892, %v9883
        %v10091 = vpack.c.b16 %v9893, %v9884
        %v10092 = vpack.c.b16 %v9894, %v9885
        %v10093 = vpack.c.b16 %v9895, %v9886
        %v10094 = vpack.c.b16 %v9896, %v9887
        %v10095 = vpack.c.b16 %v9897, %v9888
        %v10096 = vpack.c.b16 %v9907, %v9898
        %v10097 = vpack.c.b16 %v9908, %v9899
        %v10098 = vpack.c.b16 %v9909, %v9900
        %v10099 = vpack.c.b16 %v9910, %v9901
        %v10100 = vpack.c.b16 %v9911, %v9902
        %v10101 = vpack.c.b16 %v9912, %v9903
        %v10102 = vpack.c.b16 %v9913, %v9904
        %v10103 = vpack.c.b16 %v9914, %v9905
        %v10104 = vpack.c.b16 %v9915, %v9906
        %v10105 = vpack.c.b16 %v9925, %v9916
        %v10106 = vpack.c.b16 %v9926, %v9917
        %v10107 = vpack.c.b16 %v9927, %v9918
        %v10108 = vpack.c.b16 %v9928, %v9919
        %v10109 = vpack.c.b16 %v9929, %v9920
        %v10110 = vpack.c.b16 %v9930, %v9921
        %v10111 = vpack.c.b16 %v9931, %v9922
        %v10112 = vpack.c.b16 %v9932, %v9923
        %v10113 = vpack.c.b16 %v9933, %v9924
        %v10114 = vpack.c.b16 %v9943, %v9934
        %v10115 = vpack.c.b16 %v9944, %v9935
        %v10116 = vpack.c.b16 %v9945, %v9936
        %v10117 = vpack.c.b16 %v9946, %v9937
        %v10118 = vpack.c.b16 %v9947, %v9938
        %v10119 = vpack.c.b16 %v9948, %v9939
        %v10120 = vpack.c.b16 %v9949, %v9940
        %v10121 = vpack.c.b16 %v9950, %v9941
        %v10122 = vpack.c.b16 %v9951, %v9942
        %v10123 = vpack.c.b16 %v9961, %v9952
        %v10124 = vpack.c.b16 %v9962, %v9953
        %v10125 = vpack.c.b16 %v9963, %v9954
        %v10126 = vpack.c.b16 %v9964, %v9955
        %v10127 = vpack.c.b16 %v9965, %v9956
        %v10128 = vpack.c.b16 %v9966, %v9957
        %v10129 = vpack.c.b16 %v9967, %v9958
        %v10130 = vpack.c.b16 %v9968, %v9959
        %v10131 = vpack.c.b16 %v9969, %v9960
        %v10132 = vpack.c.b16 %v9979, %v9970
        %v10133 = vpack.c.b16 %v9980, %v9971
        %v10134 = vpack.c.b16 %v9981, %v9972
        %v10135 = vpack.c.b16 %v9982, %v9973
        %v10136 = vpack.c.b16 %v9983, %v9974
        %v10137 = vpack.c.b16 %v9984, %v9975
        %v10138 = vpack.c.b16 %v9985, %v9976
        %v10139 = vpack.c.b16 %v9986, %v9977
        %v10140 = vpack.c.b16 %v9987, %v9978
        %v10141 = vpack.c.b16 %v9997, %v9988
        %v10142 = vpack.c.b16 %v9998, %v9989
        %v10143 = vpack.c.b16 %v9999, %v9990
        %v10144 = vpack.c.b16 %v10000, %v9991
        %v10145 = vpack.c.b16 %v10001, %v9992
        %v10146 = vpack.c.b16 %v10002, %v9993
        %v10147 = vpack.c.b16 %v10003, %v9994
        %v10148 = vpack.c.b16 %v10004, %v9995
        %v10149 = vpack.c.b16 %v10005, %v9996
        %v10438 = vunpack.c.l.b16 %v9410
        %v10439 = vunpack.c.l.b16 %v9411
        %v10440 = vunpack.c.l.b16 %v9412
        %v10441 = vunpack.c.l.b16 %v9413
        %v10442 = vunpack.c.l.b16 %v9414
        %v10443 = vunpack.c.l.b16 %v9415
        %v10444 = vunpack.c.l.b16 %v9416
        %v10445 = vunpack.c.l.b16 %v9417
        %v10446 = vunpack.c.l.b16 %v9418
        %v10447 = vunpack.c.l.b16 %v9419
        %v10448 = vunpack.c.l.b16 %v9420
        %v10449 = vunpack.c.l.b16 %v9421
        %v10450 = vunpack.c.l.b16 %v9422
        %v10451 = vunpack.c.l.b16 %v9423
        %v10452 = vunpack.c.l.b16 %v9424
        %v10453 = vunpack.c.l.b16 %v9425
        %v10454 = vunpack.c.l.b16 %v9426
        %v10455 = vunpack.c.l.b16 %v9427
        %v10456 = vunpack.c.l.b16 %v9428
        %v10457 = vunpack.c.l.b16 %v9429
        %v10458 = vunpack.c.l.b16 %v9430
        %v10459 = vunpack.c.l.b16 %v9431
        %v10460 = vunpack.c.l.b16 %v9432
        %v10461 = vunpack.c.l.b16 %v9433
        %v10462 = vunpack.c.l.b16 %v9434
        %v10463 = vunpack.c.l.b16 %v9435
        %v10464 = vunpack.c.l.b16 %v9436
        %v10465 = vunpack.c.l.b16 %v9437
        %v10466 = vunpack.c.l.b16 %v9438
        %v10467 = vunpack.c.l.b16 %v9439
        %v10468 = vunpack.c.l.b16 %v9440
        %v10469 = vunpack.c.l.b16 %v9441
        %v10470 = vunpack.c.l.b16 %v9442
        %v10471 = vunpack.c.l.b16 %v9443
        %v10472 = vunpack.c.l.b16 %v9444
        %v10473 = vunpack.c.l.b16 %v9445
        %v10474 = vunpack.c.l.b16 %v9446
        %v10475 = vunpack.c.l.b16 %v9447
        %v10476 = vunpack.c.l.b16 %v9448
        %v10477 = vunpack.c.l.b16 %v9449
        %v10478 = vunpack.c.l.b16 %v9450
        %v10479 = vunpack.c.l.b16 %v9451
        %v10480 = vunpack.c.l.b16 %v9452
        %v10481 = vunpack.c.l.b16 %v9453
        %v10482 = vunpack.c.l.b16 %v9454
        %v10483 = vunpack.c.l.b16 %v9455
        %v10484 = vunpack.c.l.b16 %v9456
        %v10485 = vunpack.c.l.b16 %v9457
        %v10486 = vunpack.c.l.b16 %v9458
        %v10487 = vunpack.c.l.b16 %v9459
        %v10488 = vunpack.c.l.b16 %v9460
        %v10489 = vunpack.c.l.b16 %v9461
        %v10490 = vunpack.c.l.b16 %v9462
        %v10491 = vunpack.c.l.b16 %v9463
        %v10492 = vunpack.c.l.b16 %v9464
        %v10493 = vunpack.c.l.b16 %v9465
        %v10494 = vunpack.c.l.b16 %v9466
        %v10495 = vunpack.c.l.b16 %v9467
        %v10496 = vunpack.c.l.b16 %v9468
        %v10497 = vunpack.c.l.b16 %v9469
        %v10498 = vunpack.c.l.b16 %v9470
        %v10499 = vunpack.c.l.b16 %v9471
        %v10500 = vunpack.c.l.b16 %v9472
        %v10501 = vunpack.c.l.b16 %v9473
        %v10502 = vunpack.c.l.b16 %v9474
        %v10503 = vunpack.c.l.b16 %v9475
        %v10504 = vunpack.c.l.b16 %v9476
        %v10505 = vunpack.c.l.b16 %v9477
        %v10506 = vunpack.c.l.b16 %v9478
        %v10507 = vunpack.c.l.b16 %v9479
        %v10508 = vunpack.c.l.b16 %v9480
        %v10509 = vunpack.c.l.b16 %v9481
        %v10510 = vunpack.c.l.b16 %v9482
        %v10511 = vunpack.c.l.b16 %v9483
        %v10512 = vunpack.c.l.b16 %v9484
        %v10513 = vunpack.c.l.b16 %v9485
        %v10514 = vunpack.c.l.b16 %v9486
        %v10515 = vunpack.c.l.b16 %v9487
        %v10516 = vunpack.c.l.b16 %v9488
        %v10517 = vunpack.c.l.b16 %v9489
        %v10518 = vunpack.c.l.b16 %v9490
        %v10519 = vunpack.c.l.b16 %v9491
        %v10520 = vunpack.c.l.b16 %v9492
        %v10521 = vunpack.c.l.b16 %v9493
        %v10522 = vunpack.c.l.b16 %v9494
        %v10523 = vunpack.c.l.b16 %v9495
        %v10524 = vunpack.c.l.b16 %v9496
        %v10525 = vunpack.c.l.b16 %v9497
        %v10526 = vunpack.c.l.b16 %v9498
        %v10527 = vunpack.c.l.b16 %v9499
        %v10528 = vunpack.c.l.b16 %v9500
        %v10529 = vunpack.c.l.b16 %v9501
        %v10530 = vunpack.c.l.b16 %v9502
        %v10531 = vunpack.c.l.b16 %v9503
        %v10532 = vunpack.c.l.b16 %v9504
        %v10533 = vunpack.c.l.b16 %v9505
        %v10534 = vunpack.c.l.b16 %v9506
        %v10535 = vunpack.c.l.b16 %v9507
        %v10536 = vunpack.c.l.b16 %v9508
        %v10537 = vunpack.c.l.b16 %v9509
        %v10538 = vunpack.c.l.b16 %v9510
        %v10539 = vunpack.c.l.b16 %v9511
        %v10540 = vunpack.c.l.b16 %v9512
        %v10541 = vunpack.c.l.b16 %v9513
        %v10542 = vunpack.c.l.b16 %v9514
        %v10543 = vunpack.c.l.b16 %v9515
        %v10544 = vunpack.c.l.b16 %v9516
        %v10545 = vunpack.c.l.b16 %v9517
        %v10546 = vunpack.c.l.b16 %v9518
        %v10547 = vunpack.c.l.b16 %v9519
        %v10548 = vunpack.c.l.b16 %v9520
        %v10549 = vunpack.c.l.b16 %v9521
        %v10550 = vunpack.c.l.b16 %v9522
        %v10551 = vunpack.c.l.b16 %v9523
        %v10552 = vunpack.c.l.b16 %v9524
        %v10553 = vunpack.c.l.b16 %v9525
        %v10554 = vunpack.c.l.b16 %v9526
        %v10555 = vunpack.c.l.b16 %v9527
        %v10556 = vunpack.c.l.b16 %v9528
        %v10557 = vunpack.c.l.b16 %v9529
        %v10558 = vunpack.c.l.b16 %v9530
        %v10559 = vunpack.c.l.b16 %v9531
        %v10560 = vunpack.c.l.b16 %v9532
        %v10561 = vunpack.c.l.b16 %v9533
        %v10562 = vunpack.c.l.b16 %v9534
        %v10563 = vunpack.c.l.b16 %v9535
        %v10564 = vunpack.c.l.b16 %v9536
        %v10565 = vunpack.c.l.b16 %v9537
        %v10566 = vunpack.c.l.b16 %v9538
        %v10567 = vunpack.c.l.b16 %v9539
        %v10568 = vunpack.c.l.b16 %v9540
        %v10569 = vunpack.c.l.b16 %v9541
        %v10570 = vunpack.c.l.b16 %v9542
        %v10571 = vunpack.c.l.b16 %v9543
        %v10572 = vunpack.c.l.b16 %v9544
        %v10573 = vunpack.c.l.b16 %v9545
        %v10574 = vunpack.c.l.b16 %v9546
        %v10575 = vunpack.c.l.b16 %v9547
        %v10576 = vunpack.c.l.b16 %v9548
        %v10577 = vunpack.c.l.b16 %v9549
        %v10578 = vunpack.c.l.b16 %v9550
        %v10579 = vunpack.c.l.b16 %v9551
        %v10580 = vunpack.c.l.b16 %v9552
        %v10581 = vunpack.c.l.b16 %v9553
        %v10582 = vpack.c.b16 %v10439, %v10438
        %v10583 = vpack.c.b16 %v10441, %v10440
        %v10584 = vpack.c.b16 %v10443, %v10442
        %v10585 = vpack.c.b16 %v10445, %v10444
        %v10586 = vpack.c.b16 %v10447, %v10446
        %v10587 = vpack.c.b16 %v10449, %v10448
        %v10588 = vpack.c.b16 %v10451, %v10450
        %v10589 = vpack.c.b16 %v10453, %v10452
        %v10590 = vpack.c.b16 %v10455, %v10454
        %v10591 = vpack.c.b16 %v10457, %v10456
        %v10592 = vpack.c.b16 %v10459, %v10458
        %v10593 = vpack.c.b16 %v10461, %v10460
        %v10594 = vpack.c.b16 %v10463, %v10462
        %v10595 = vpack.c.b16 %v10465, %v10464
        %v10596 = vpack.c.b16 %v10467, %v10466
        %v10597 = vpack.c.b16 %v10469, %v10468
        %v10598 = vpack.c.b16 %v10471, %v10470
        %v10599 = vpack.c.b16 %v10473, %v10472
        %v10600 = vpack.c.b16 %v10475, %v10474
        %v10601 = vpack.c.b16 %v10477, %v10476
        %v10602 = vpack.c.b16 %v10479, %v10478
        %v10603 = vpack.c.b16 %v10481, %v10480
        %v10604 = vpack.c.b16 %v10483, %v10482
        %v10605 = vpack.c.b16 %v10485, %v10484
        %v10606 = vpack.c.b16 %v10487, %v10486
        %v10607 = vpack.c.b16 %v10489, %v10488
        %v10608 = vpack.c.b16 %v10491, %v10490
        %v10609 = vpack.c.b16 %v10493, %v10492
        %v10610 = vpack.c.b16 %v10495, %v10494
        %v10611 = vpack.c.b16 %v10497, %v10496
        %v10612 = vpack.c.b16 %v10499, %v10498
        %v10613 = vpack.c.b16 %v10501, %v10500
        %v10614 = vpack.c.b16 %v10503, %v10502
        %v10615 = vpack.c.b16 %v10505, %v10504
        %v10616 = vpack.c.b16 %v10507, %v10506
        %v10617 = vpack.c.b16 %v10509, %v10508
        %v10618 = vpack.c.b16 %v10511, %v10510
        %v10619 = vpack.c.b16 %v10513, %v10512
        %v10620 = vpack.c.b16 %v10515, %v10514
        %v10621 = vpack.c.b16 %v10517, %v10516
        %v10622 = vpack.c.b16 %v10519, %v10518
        %v10623 = vpack.c.b16 %v10521, %v10520
        %v10624 = vpack.c.b16 %v10523, %v10522
        %v10625 = vpack.c.b16 %v10525, %v10524
        %v10626 = vpack.c.b16 %v10527, %v10526
        %v10627 = vpack.c.b16 %v10529, %v10528
        %v10628 = vpack.c.b16 %v10531, %v10530
        %v10629 = vpack.c.b16 %v10533, %v10532
        %v10630 = vpack.c.b16 %v10535, %v10534
        %v10631 = vpack.c.b16 %v10537, %v10536
        %v10632 = vpack.c.b16 %v10539, %v10538
        %v10633 = vpack.c.b16 %v10541, %v10540
        %v10634 = vpack.c.b16 %v10543, %v10542
        %v10635 = vpack.c.b16 %v10545, %v10544
        %v10636 = vpack.c.b16 %v10547, %v10546
        %v10637 = vpack.c.b16 %v10549, %v10548
        %v10638 = vpack.c.b16 %v10551, %v10550
        %v10639 = vpack.c.b16 %v10553, %v10552
        %v10640 = vpack.c.b16 %v10555, %v10554
        %v10641 = vpack.c.b16 %v10557, %v10556
        %v10642 = vpack.c.b16 %v10559, %v10558
        %v10643 = vpack.c.b16 %v10561, %v10560
        %v10644 = vpack.c.b16 %v10563, %v10562
        %v10645 = vpack.c.b16 %v10565, %v10564
        %v10646 = vpack.c.b16 %v10567, %v10566
        %v10647 = vpack.c.b16 %v10569, %v10568
        %v10648 = vpack.c.b16 %v10571, %v10570
        %v10649 = vpack.c.b16 %v10573, %v10572
        %v10650 = vpack.c.b16 %v10575, %v10574
        %v10651 = vpack.c.b16 %v10577, %v10576
        %v10652 = vpack.c.b16 %v10579, %v10578
        %v10653 = vpack.c.b16 %v10581, %v10580
        %10726 = vmatpush.bf16.msra.mxu0 %v10589
        %10727 = vmatpush.bf16.msra.mxu0 %v10588
        %10728 = vmatpush.bf16.msra.mxu0 %v10587
        %10729 = vmatpush.bf16.msra.mxu0 %v10586
        %10730 = vmatpush.bf16.msra.mxu0 %v10585
        %10731 = vmatpush.bf16.msra.mxu0 %v10584
        %10732 = vmatpush.bf16.msra.mxu0 %v10583
        %10733 = vmatpush.bf16.msra.mxu0 %v10582
        %10734 = vmatmul.bf16.gmra.mxu0 %v10006
        %v10735 = vpop.f32.mrf.mxu0
        %v10736 = vadd.f32 %v9556, %v10735
        %v10737 = vpop.f32.mrf.mxu0
        %v10738 = vadd.f32 %v9556, %v10737
        %10739 = vmatmul.bf16.gmra.mxu0 %v10015
        %v10740 = vpop.f32.mrf.mxu0
        %v10741 = vadd.f32 %v9556, %v10740
        %v10742 = vpop.f32.mrf.mxu0
        %v10743 = vadd.f32 %v9556, %v10742
        %10744 = vmatmul.bf16.gmra.mxu0 %v10024
        %v10745 = vpop.f32.mrf.mxu0
        %v10746 = vadd.f32 %v9556, %v10745
        %v10747 = vpop.f32.mrf.mxu0
        %v10748 = vadd.f32 %v9556, %v10747
        %10749 = vmatmul.bf16.gmra.mxu0 %v10033
        %v10750 = vpop.f32.mrf.mxu0
        %v10751 = vadd.f32 %v9556, %v10750
        %v10752 = vpop.f32.mrf.mxu0
        %v10753 = vadd.f32 %v9556, %v10752
        %10754 = vmatmul.bf16.gmra.mxu0 %v10042
        %v10755 = vpop.f32.mrf.mxu0
        %v10756 = vadd.f32 %v9556, %v10755
        %v10757 = vpop.f32.mrf.mxu0
        %v10758 = vadd.f32 %v9556, %v10757
        %10759 = vmatmul.bf16.gmra.mxu0 %v10051
        %v10760 = vpop.f32.mrf.mxu0
        %v10761 = vadd.f32 %v9556, %v10760
        %v10762 = vpop.f32.mrf.mxu0
        %v10763 = vadd.f32 %v9556, %v10762
        %10764 = vmatmul.bf16.gmra.mxu0 %v10060
        %v10765 = vpop.f32.mrf.mxu0
        %v10766 = vadd.f32 %v9556, %v10765
        %v10767 = vpop.f32.mrf.mxu0
        %v10768 = vadd.f32 %v9556, %v10767
        %10769 = vmatmul.bf16.gmra.mxu0 %v10069
        %v10770 = vpop.f32.mrf.mxu0
        %v10771 = vadd.f32 %v9556, %v10770
        %v10772 = vpop.f32.mrf.mxu0
        %v10773 = vadd.f32 %v9556, %v10772
        %10774 = vmatmul.bf16.gmra.mxu0 %v10078
        %v10775 = vpop.f32.mrf.mxu0
        %v10776 = vadd.f32 %v9556, %v10775
        %v10777 = vpop.f32.mrf.mxu0
        %v10778 = vadd.f32 %v9556, %v10777
        %10779 = vmatmul.bf16.gmra.mxu0 %v10087
        %v10780 = vpop.f32.mrf.mxu0
        %v10781 = vadd.f32 %v9556, %v10780
        %v10782 = vpop.f32.mrf.mxu0
        %v10783 = vadd.f32 %v9556, %v10782
        %10784 = vmatmul.bf16.gmra.mxu0 %v10096
        %v10785 = vpop.f32.mrf.mxu0
        %v10786 = vadd.f32 %v9556, %v10785
        %v10787 = vpop.f32.mrf.mxu0
        %v10788 = vadd.f32 %v9556, %v10787
        %10789 = vmatmul.bf16.gmra.mxu0 %v10105
        %v10790 = vpop.f32.mrf.mxu0
        %v10791 = vadd.f32 %v9556, %v10790
        %v10792 = vpop.f32.mrf.mxu0
        %v10793 = vadd.f32 %v9556, %v10792
        %10794 = vmatmul.bf16.gmra.mxu0 %v10114
        %v10795 = vpop.f32.mrf.mxu0
        %v10796 = vadd.f32 %v9556, %v10795
        %v10797 = vpop.f32.mrf.mxu0
        %v10798 = vadd.f32 %v9556, %v10797
        %10799 = vmatmul.bf16.gmra.mxu0 %v10123
        %v10800 = vpop.f32.mrf.mxu0
        %v10801 = vadd.f32 %v9556, %v10800
        %v10802 = vpop.f32.mrf.mxu0
        %v10803 = vadd.f32 %v9556, %v10802
        %10804 = vmatmul.bf16.gmra.mxu0 %v10132
        %v10805 = vpop.f32.mrf.mxu0
        %v10806 = vadd.f32 %v9556, %v10805
        %v10807 = vpop.f32.mrf.mxu0
        %v10808 = vadd.f32 %v9556, %v10807
        %10809 = vmatmul.bf16.gmra.mxu0 %v10141
        %v10810 = vpop.f32.mrf.mxu0
        %v10811 = vadd.f32 %v9556, %v10810
        %v10812 = vpop.f32.mrf.mxu0
        %v10813 = vadd.f32 %v9556, %v10812
        %10814 = vdwg.mxu0
        %10815 = vmatpush.bf16.msra.mxu0 %v10597
        %10816 = vmatpush.bf16.msra.mxu0 %v10596
        %10817 = vmatpush.bf16.msra.mxu0 %v10595
        %10818 = vmatpush.bf16.msra.mxu0 %v10594
        %10819 = vmatpush.bf16.msra.mxu0 %v10593
        %10820 = vmatpush.bf16.msra.mxu0 %v10592
        %10821 = vmatpush.bf16.msra.mxu0 %v10591
        %10822 = vmatpush.bf16.msra.mxu0 %v10590
        %10823 = vmatmul.bf16.gmra.mxu0 %v10007
        %v10824 = vpop.f32.mrf.mxu0
        %v10825 = vadd.f32 %v10736, %v10824
        %v10826 = vpop.f32.mrf.mxu0
        %v10827 = vadd.f32 %v10738, %v10826
        %10828 = vmatmul.bf16.gmra.mxu0 %v10016
        %v10829 = vpop.f32.mrf.mxu0
        %v10830 = vadd.f32 %v10741, %v10829
        %v10831 = vpop.f32.mrf.mxu0
        %v10832 = vadd.f32 %v10743, %v10831
        %10833 = vmatmul.bf16.gmra.mxu0 %v10025
        %v10834 = vpop.f32.mrf.mxu0
        %v10835 = vadd.f32 %v10746, %v10834
        %v10836 = vpop.f32.mrf.mxu0
        %v10837 = vadd.f32 %v10748, %v10836
        %10838 = vmatmul.bf16.gmra.mxu0 %v10034
        %v10839 = vpop.f32.mrf.mxu0
        %v10840 = vadd.f32 %v10751, %v10839
        %v10841 = vpop.f32.mrf.mxu0
        %v10842 = vadd.f32 %v10753, %v10841
        %10843 = vmatmul.bf16.gmra.mxu0 %v10043
        %v10844 = vpop.f32.mrf.mxu0
        %v10845 = vadd.f32 %v10756, %v10844
        %v10846 = vpop.f32.mrf.mxu0
        %v10847 = vadd.f32 %v10758, %v10846
        %10848 = vmatmul.bf16.gmra.mxu0 %v10052
        %v10849 = vpop.f32.mrf.mxu0
        %v10850 = vadd.f32 %v10761, %v10849
        %v10851 = vpop.f32.mrf.mxu0
        %v10852 = vadd.f32 %v10763, %v10851
        %10853 = vmatmul.bf16.gmra.mxu0 %v10061
        %v10854 = vpop.f32.mrf.mxu0
        %v10855 = vadd.f32 %v10766, %v10854
        %v10856 = vpop.f32.mrf.mxu0
        %v10857 = vadd.f32 %v10768, %v10856
        %10858 = vmatmul.bf16.gmra.mxu0 %v10070
        %v10859 = vpop.f32.mrf.mxu0
        %v10860 = vadd.f32 %v10771, %v10859
        %v10861 = vpop.f32.mrf.mxu0
        %v10862 = vadd.f32 %v10773, %v10861
        %10863 = vmatmul.bf16.gmra.mxu0 %v10079
        %v10864 = vpop.f32.mrf.mxu0
        %v10865 = vadd.f32 %v10776, %v10864
        %v10866 = vpop.f32.mrf.mxu0
        %v10867 = vadd.f32 %v10778, %v10866
        %10868 = vmatmul.bf16.gmra.mxu0 %v10088
        %v10869 = vpop.f32.mrf.mxu0
        %v10870 = vadd.f32 %v10781, %v10869
        %v10871 = vpop.f32.mrf.mxu0
        %v10872 = vadd.f32 %v10783, %v10871
        %10873 = vmatmul.bf16.gmra.mxu0 %v10097
        %v10874 = vpop.f32.mrf.mxu0
        %v10875 = vadd.f32 %v10786, %v10874
        %v10876 = vpop.f32.mrf.mxu0
        %v10877 = vadd.f32 %v10788, %v10876
        %10878 = vmatmul.bf16.gmra.mxu0 %v10106
        %v10879 = vpop.f32.mrf.mxu0
        %v10880 = vadd.f32 %v10791, %v10879
        %v10881 = vpop.f32.mrf.mxu0
        %v10882 = vadd.f32 %v10793, %v10881
        %10883 = vmatmul.bf16.gmra.mxu0 %v10115
        %v10884 = vpop.f32.mrf.mxu0
        %v10885 = vadd.f32 %v10796, %v10884
        %v10886 = vpop.f32.mrf.mxu0
        %v10887 = vadd.f32 %v10798, %v10886
        %10888 = vmatmul.bf16.gmra.mxu0 %v10124
        %v10889 = vpop.f32.mrf.mxu0
        %v10890 = vadd.f32 %v10801, %v10889
        %v10891 = vpop.f32.mrf.mxu0
        %v10892 = vadd.f32 %v10803, %v10891
        %10893 = vmatmul.bf16.gmra.mxu0 %v10133
        %v10894 = vpop.f32.mrf.mxu0
        %v10895 = vadd.f32 %v10806, %v10894
        %v10896 = vpop.f32.mrf.mxu0
        %v10897 = vadd.f32 %v10808, %v10896
        %10898 = vmatmul.bf16.gmra.mxu0 %v10142
        %v10899 = vpop.f32.mrf.mxu0
        %v10900 = vadd.f32 %v10811, %v10899
        %v10901 = vpop.f32.mrf.mxu0
        %v10902 = vadd.f32 %v10813, %v10901
        %10903 = vdwg.mxu0
        %10904 = vmatpush.bf16.msra.mxu0 %v10605
        %10905 = vmatpush.bf16.msra.mxu0 %v10604
        %10906 = vmatpush.bf16.msra.mxu0 %v10603
        %10907 = vmatpush.bf16.msra.mxu0 %v10602
        %10908 = vmatpush.bf16.msra.mxu0 %v10601
        %10909 = vmatpush.bf16.msra.mxu0 %v10600
        %10910 = vmatpush.bf16.msra.mxu0 %v10599
        %10911 = vmatpush.bf16.msra.mxu0 %v10598
        %10912 = vmatmul.bf16.gmra.mxu0 %v10008
        %v10913 = vpop.f32.mrf.mxu0
        %v10914 = vadd.f32 %v10825, %v10913
        %v10915 = vpop.f32.mrf.mxu0
        %v10916 = vadd.f32 %v10827, %v10915
        %10917 = vmatmul.bf16.gmra.mxu0 %v10017
        %v10918 = vpop.f32.mrf.mxu0
        %v10919 = vadd.f32 %v10830, %v10918
        %v10920 = vpop.f32.mrf.mxu0
        %v10921 = vadd.f32 %v10832, %v10920
        %10922 = vmatmul.bf16.gmra.mxu0 %v10026
        %v10923 = vpop.f32.mrf.mxu0
        %v10924 = vadd.f32 %v10835, %v10923
        %v10925 = vpop.f32.mrf.mxu0
        %v10926 = vadd.f32 %v10837, %v10925
        %10927 = vmatmul.bf16.gmra.mxu0 %v10035
        %v10928 = vpop.f32.mrf.mxu0
        %v10929 = vadd.f32 %v10840, %v10928
        %v10930 = vpop.f32.mrf.mxu0
        %v10931 = vadd.f32 %v10842, %v10930
        %10932 = vmatmul.bf16.gmra.mxu0 %v10044
        %v10933 = vpop.f32.mrf.mxu0
        %v10934 = vadd.f32 %v10845, %v10933
        %v10935 = vpop.f32.mrf.mxu0
        %v10936 = vadd.f32 %v10847, %v10935
        %10937 = vmatmul.bf16.gmra.mxu0 %v10053
        %v10938 = vpop.f32.mrf.mxu0
        %v10939 = vadd.f32 %v10850, %v10938
        %v10940 = vpop.f32.mrf.mxu0
        %v10941 = vadd.f32 %v10852, %v10940
        %10942 = vmatmul.bf16.gmra.mxu0 %v10062
        %v10943 = vpop.f32.mrf.mxu0
        %v10944 = vadd.f32 %v10855, %v10943
        %v10945 = vpop.f32.mrf.mxu0
        %v10946 = vadd.f32 %v10857, %v10945
        %10947 = vmatmul.bf16.gmra.mxu0 %v10071
        %v10948 = vpop.f32.mrf.mxu0
        %v10949 = vadd.f32 %v10860, %v10948
        %v10950 = vpop.f32.mrf.mxu0
        %v10951 = vadd.f32 %v10862, %v10950
        %10952 = vmatmul.bf16.gmra.mxu0 %v10080
        %v10953 = vpop.f32.mrf.mxu0
        %v10954 = vadd.f32 %v10865, %v10953
        %v10955 = vpop.f32.mrf.mxu0
        %v10956 = vadd.f32 %v10867, %v10955
        %10957 = vmatmul.bf16.gmra.mxu0 %v10089
        %v10958 = vpop.f32.mrf.mxu0
        %v10959 = vadd.f32 %v10870, %v10958
        %v10960 = vpop.f32.mrf.mxu0
        %v10961 = vadd.f32 %v10872, %v10960
        %10962 = vmatmul.bf16.gmra.mxu0 %v10098
        %v10963 = vpop.f32.mrf.mxu0
        %v10964 = vadd.f32 %v10875, %v10963
        %v10965 = vpop.f32.mrf.mxu0
        %v10966 = vadd.f32 %v10877, %v10965
        %10967 = vmatmul.bf16.gmra.mxu0 %v10107
        %v10968 = vpop.f32.mrf.mxu0
        %v10969 = vadd.f32 %v10880, %v10968
        %v10970 = vpop.f32.mrf.mxu0
        %v10971 = vadd.f32 %v10882, %v10970
        %10972 = vmatmul.bf16.gmra.mxu0 %v10116
        %v10973 = vpop.f32.mrf.mxu0
        %v10974 = vadd.f32 %v10885, %v10973
        %v10975 = vpop.f32.mrf.mxu0
        %v10976 = vadd.f32 %v10887, %v10975
        %10977 = vmatmul.bf16.gmra.mxu0 %v10125
        %v10978 = vpop.f32.mrf.mxu0
        %v10979 = vadd.f32 %v10890, %v10978
        %v10980 = vpop.f32.mrf.mxu0
        %v10981 = vadd.f32 %v10892, %v10980
        %10982 = vmatmul.bf16.gmra.mxu0 %v10134
        %v10983 = vpop.f32.mrf.mxu0
        %v10984 = vadd.f32 %v10895, %v10983
        %v10985 = vpop.f32.mrf.mxu0
        %v10986 = vadd.f32 %v10897, %v10985
        %10987 = vmatmul.bf16.gmra.mxu0 %v10143
        %v10988 = vpop.f32.mrf.mxu0
        %v10989 = vadd.f32 %v10900, %v10988
        %v10990 = vpop.f32.mrf.mxu0
        %v10991 = vadd.f32 %v10902, %v10990
        %10992 = vdwg.mxu0
        %10993 = vmatpush.bf16.msra.mxu0 %v10613
        %10994 = vmatpush.bf16.msra.mxu0 %v10612
        %10995 = vmatpush.bf16.msra.mxu0 %v10611
        %10996 = vmatpush.bf16.msra.mxu0 %v10610
        %10997 = vmatpush.bf16.msra.mxu0 %v10609
        %10998 = vmatpush.bf16.msra.mxu0 %v10608
        %10999 = vmatpush.bf16.msra.mxu0 %v10607
        %11000 = vmatpush.bf16.msra.mxu0 %v10606
        %11001 = vmatmul.bf16.gmra.mxu0 %v10009
        %v11002 = vpop.f32.mrf.mxu0
        %v11003 = vadd.f32 %v10914, %v11002
        %v11004 = vpop.f32.mrf.mxu0
        %v11005 = vadd.f32 %v10916, %v11004
        %11006 = vmatmul.bf16.gmra.mxu0 %v10018
        %v11007 = vpop.f32.mrf.mxu0
        %v11008 = vadd.f32 %v10919, %v11007
        %v11009 = vpop.f32.mrf.mxu0
        %v11010 = vadd.f32 %v10921, %v11009
        %11011 = vmatmul.bf16.gmra.mxu0 %v10027
        %v11012 = vpop.f32.mrf.mxu0
        %v11013 = vadd.f32 %v10924, %v11012
        %v11014 = vpop.f32.mrf.mxu0
        %v11015 = vadd.f32 %v10926, %v11014
        %11016 = vmatmul.bf16.gmra.mxu0 %v10036
        %v11017 = vpop.f32.mrf.mxu0
        %v11018 = vadd.f32 %v10929, %v11017
        %v11019 = vpop.f32.mrf.mxu0
        %v11020 = vadd.f32 %v10931, %v11019
        %11021 = vmatmul.bf16.gmra.mxu0 %v10045
        %v11022 = vpop.f32.mrf.mxu0
        %v11023 = vadd.f32 %v10934, %v11022
        %v11024 = vpop.f32.mrf.mxu0
        %v11025 = vadd.f32 %v10936, %v11024
        %11026 = vmatmul.bf16.gmra.mxu0 %v10054
        %v11027 = vpop.f32.mrf.mxu0
        %v11028 = vadd.f32 %v10939, %v11027
        %v11029 = vpop.f32.mrf.mxu0
        %v11030 = vadd.f32 %v10941, %v11029
        %11031 = vmatmul.bf16.gmra.mxu0 %v10063
        %v11032 = vpop.f32.mrf.mxu0
        %v11033 = vadd.f32 %v10944, %v11032
        %v11034 = vpop.f32.mrf.mxu0
        %v11035 = vadd.f32 %v10946, %v11034
        %11036 = vmatmul.bf16.gmra.mxu0 %v10072
        %v11037 = vpop.f32.mrf.mxu0
        %v11038 = vadd.f32 %v10949, %v11037
        %v11039 = vpop.f32.mrf.mxu0
        %v11040 = vadd.f32 %v10951, %v11039
        %11041 = vmatmul.bf16.gmra.mxu0 %v10081
        %v11042 = vpop.f32.mrf.mxu0
        %v11043 = vadd.f32 %v10954, %v11042
        %v11044 = vpop.f32.mrf.mxu0
        %v11045 = vadd.f32 %v10956, %v11044
        %11046 = vmatmul.bf16.gmra.mxu0 %v10090
        %v11047 = vpop.f32.mrf.mxu0
        %v11048 = vadd.f32 %v10959, %v11047
        %v11049 = vpop.f32.mrf.mxu0
        %v11050 = vadd.f32 %v10961, %v11049
        %11051 = vmatmul.bf16.gmra.mxu0 %v10099
        %v11052 = vpop.f32.mrf.mxu0
        %v11053 = vadd.f32 %v10964, %v11052
        %v11054 = vpop.f32.mrf.mxu0
        %v11055 = vadd.f32 %v10966, %v11054
        %11056 = vmatmul.bf16.gmra.mxu0 %v10108
        %v11057 = vpop.f32.mrf.mxu0
        %v11058 = vadd.f32 %v10969, %v11057
        %v11059 = vpop.f32.mrf.mxu0
        %v11060 = vadd.f32 %v10971, %v11059
        %11061 = vmatmul.bf16.gmra.mxu0 %v10117
        %v11062 = vpop.f32.mrf.mxu0
        %v11063 = vadd.f32 %v10974, %v11062
        %v11064 = vpop.f32.mrf.mxu0
        %v11065 = vadd.f32 %v10976, %v11064
        %11066 = vmatmul.bf16.gmra.mxu0 %v10126
        %v11067 = vpop.f32.mrf.mxu0
        %v11068 = vadd.f32 %v10979, %v11067
        %v11069 = vpop.f32.mrf.mxu0
        %v11070 = vadd.f32 %v10981, %v11069
        %11071 = vmatmul.bf16.gmra.mxu0 %v10135
        %v11072 = vpop.f32.mrf.mxu0
        %v11073 = vadd.f32 %v10984, %v11072
        %v11074 = vpop.f32.mrf.mxu0
        %v11075 = vadd.f32 %v10986, %v11074
        %11076 = vmatmul.bf16.gmra.mxu0 %v10144
        %v11077 = vpop.f32.mrf.mxu0
        %v11078 = vadd.f32 %v10989, %v11077
        %v11079 = vpop.f32.mrf.mxu0
        %v11080 = vadd.f32 %v10991, %v11079
        %11081 = vdwg.mxu0
        %11082 = vmatpush.bf16.msra.mxu0 %v10621
        %11083 = vmatpush.bf16.msra.mxu0 %v10620
        %11084 = vmatpush.bf16.msra.mxu0 %v10619
        %11085 = vmatpush.bf16.msra.mxu0 %v10618
        %11086 = vmatpush.bf16.msra.mxu0 %v10617
        %11087 = vmatpush.bf16.msra.mxu0 %v10616
        %11088 = vmatpush.bf16.msra.mxu0 %v10615
        %11089 = vmatpush.bf16.msra.mxu0 %v10614
        %11090 = vmatmul.bf16.gmra.mxu0 %v10010
        %v11091 = vpop.f32.mrf.mxu0
        %v11092 = vadd.f32 %v11003, %v11091
        %v11093 = vpop.f32.mrf.mxu0
        %v11094 = vadd.f32 %v11005, %v11093
        %11095 = vmatmul.bf16.gmra.mxu0 %v10019
        %v11096 = vpop.f32.mrf.mxu0
        %v11097 = vadd.f32 %v11008, %v11096
        %v11098 = vpop.f32.mrf.mxu0
        %v11099 = vadd.f32 %v11010, %v11098
        %11100 = vmatmul.bf16.gmra.mxu0 %v10028
        %v11101 = vpop.f32.mrf.mxu0
        %v11102 = vadd.f32 %v11013, %v11101
        %v11103 = vpop.f32.mrf.mxu0
        %v11104 = vadd.f32 %v11015, %v11103
        %11105 = vmatmul.bf16.gmra.mxu0 %v10037
        %v11106 = vpop.f32.mrf.mxu0
        %v11107 = vadd.f32 %v11018, %v11106
        %v11108 = vpop.f32.mrf.mxu0
        %v11109 = vadd.f32 %v11020, %v11108
        %11110 = vmatmul.bf16.gmra.mxu0 %v10046
        %v11111 = vpop.f32.mrf.mxu0
        %v11112 = vadd.f32 %v11023, %v11111
        %v11113 = vpop.f32.mrf.mxu0
        %v11114 = vadd.f32 %v11025, %v11113
        %11115 = vmatmul.bf16.gmra.mxu0 %v10055
        %v11116 = vpop.f32.mrf.mxu0
        %v11117 = vadd.f32 %v11028, %v11116
        %v11118 = vpop.f32.mrf.mxu0
        %v11119 = vadd.f32 %v11030, %v11118
        %11120 = vmatmul.bf16.gmra.mxu0 %v10064
        %v11121 = vpop.f32.mrf.mxu0
        %v11122 = vadd.f32 %v11033, %v11121
        %v11123 = vpop.f32.mrf.mxu0
        %v11124 = vadd.f32 %v11035, %v11123
        %11125 = vmatmul.bf16.gmra.mxu0 %v10073
        %v11126 = vpop.f32.mrf.mxu0
        %v11127 = vadd.f32 %v11038, %v11126
        %v11128 = vpop.f32.mrf.mxu0
        %v11129 = vadd.f32 %v11040, %v11128
        %11130 = vmatmul.bf16.gmra.mxu0 %v10082
        %v11131 = vpop.f32.mrf.mxu0
        %v11132 = vadd.f32 %v11043, %v11131
        %v11133 = vpop.f32.mrf.mxu0
        %v11134 = vadd.f32 %v11045, %v11133
        %11135 = vmatmul.bf16.gmra.mxu0 %v10091
        %v11136 = vpop.f32.mrf.mxu0
        %v11137 = vadd.f32 %v11048, %v11136
        %v11138 = vpop.f32.mrf.mxu0
        %v11139 = vadd.f32 %v11050, %v11138
        %11140 = vmatmul.bf16.gmra.mxu0 %v10100
        %v11141 = vpop.f32.mrf.mxu0
        %v11142 = vadd.f32 %v11053, %v11141
        %v11143 = vpop.f32.mrf.mxu0
        %v11144 = vadd.f32 %v11055, %v11143
        %11145 = vmatmul.bf16.gmra.mxu0 %v10109
        %v11146 = vpop.f32.mrf.mxu0
        %v11147 = vadd.f32 %v11058, %v11146
        %v11148 = vpop.f32.mrf.mxu0
        %v11149 = vadd.f32 %v11060, %v11148
        %11150 = vmatmul.bf16.gmra.mxu0 %v10118
        %v11151 = vpop.f32.mrf.mxu0
        %v11152 = vadd.f32 %v11063, %v11151
        %v11153 = vpop.f32.mrf.mxu0
        %v11154 = vadd.f32 %v11065, %v11153
        %11155 = vmatmul.bf16.gmra.mxu0 %v10127
        %v11156 = vpop.f32.mrf.mxu0
        %v11157 = vadd.f32 %v11068, %v11156
        %v11158 = vpop.f32.mrf.mxu0
        %v11159 = vadd.f32 %v11070, %v11158
        %11160 = vmatmul.bf16.gmra.mxu0 %v10136
        %v11161 = vpop.f32.mrf.mxu0
        %v11162 = vadd.f32 %v11073, %v11161
        %v11163 = vpop.f32.mrf.mxu0
        %v11164 = vadd.f32 %v11075, %v11163
        %11165 = vmatmul.bf16.gmra.mxu0 %v10145
        %v11166 = vpop.f32.mrf.mxu0
        %v11167 = vadd.f32 %v11078, %v11166
        %v11168 = vpop.f32.mrf.mxu0
        %v11169 = vadd.f32 %v11080, %v11168
        %11170 = vdwg.mxu0
        %11171 = vmatpush.bf16.msra.mxu0 %v10629
        %11172 = vmatpush.bf16.msra.mxu0 %v10628
        %11173 = vmatpush.bf16.msra.mxu0 %v10627
        %11174 = vmatpush.bf16.msra.mxu0 %v10626
        %11175 = vmatpush.bf16.msra.mxu0 %v10625
        %11176 = vmatpush.bf16.msra.mxu0 %v10624
        %11177 = vmatpush.bf16.msra.mxu0 %v10623
        %11178 = vmatpush.bf16.msra.mxu0 %v10622
        %11179 = vmatmul.bf16.gmra.mxu0 %v10011
        %v11180 = vpop.f32.mrf.mxu0
        %v11181 = vadd.f32 %v11092, %v11180
        %v11182 = vpop.f32.mrf.mxu0
        %v11183 = vadd.f32 %v11094, %v11182
        %11184 = vmatmul.bf16.gmra.mxu0 %v10020
        %v11185 = vpop.f32.mrf.mxu0
        %v11186 = vadd.f32 %v11097, %v11185
        %v11187 = vpop.f32.mrf.mxu0
        %v11188 = vadd.f32 %v11099, %v11187
        %11189 = vmatmul.bf16.gmra.mxu0 %v10029
        %v11190 = vpop.f32.mrf.mxu0
        %v11191 = vadd.f32 %v11102, %v11190
        %v11192 = vpop.f32.mrf.mxu0
        %v11193 = vadd.f32 %v11104, %v11192
        %11194 = vmatmul.bf16.gmra.mxu0 %v10038
        %v11195 = vpop.f32.mrf.mxu0
        %v11196 = vadd.f32 %v11107, %v11195
        %v11197 = vpop.f32.mrf.mxu0
        %v11198 = vadd.f32 %v11109, %v11197
        %11199 = vmatmul.bf16.gmra.mxu0 %v10047
        %v11200 = vpop.f32.mrf.mxu0
        %v11201 = vadd.f32 %v11112, %v11200
        %v11202 = vpop.f32.mrf.mxu0
        %v11203 = vadd.f32 %v11114, %v11202
        %11204 = vmatmul.bf16.gmra.mxu0 %v10056
        %v11205 = vpop.f32.mrf.mxu0
        %v11206 = vadd.f32 %v11117, %v11205
        %v11207 = vpop.f32.mrf.mxu0
        %v11208 = vadd.f32 %v11119, %v11207
        %11209 = vmatmul.bf16.gmra.mxu0 %v10065
        %v11210 = vpop.f32.mrf.mxu0
        %v11211 = vadd.f32 %v11122, %v11210
        %v11212 = vpop.f32.mrf.mxu0
        %v11213 = vadd.f32 %v11124, %v11212
        %11214 = vmatmul.bf16.gmra.mxu0 %v10074
        %v11215 = vpop.f32.mrf.mxu0
        %v11216 = vadd.f32 %v11127, %v11215
        %v11217 = vpop.f32.mrf.mxu0
        %v11218 = vadd.f32 %v11129, %v11217
        %11219 = vmatmul.bf16.gmra.mxu0 %v10083
        %v11220 = vpop.f32.mrf.mxu0
        %v11221 = vadd.f32 %v11132, %v11220
        %v11222 = vpop.f32.mrf.mxu0
        %v11223 = vadd.f32 %v11134, %v11222
        %11224 = vmatmul.bf16.gmra.mxu0 %v10092
        %v11225 = vpop.f32.mrf.mxu0
        %v11226 = vadd.f32 %v11137, %v11225
        %v11227 = vpop.f32.mrf.mxu0
        %v11228 = vadd.f32 %v11139, %v11227
        %11229 = vmatmul.bf16.gmra.mxu0 %v10101
        %v11230 = vpop.f32.mrf.mxu0
        %v11231 = vadd.f32 %v11142, %v11230
        %v11232 = vpop.f32.mrf.mxu0
        %v11233 = vadd.f32 %v11144, %v11232
        %11234 = vmatmul.bf16.gmra.mxu0 %v10110
        %v11235 = vpop.f32.mrf.mxu0
        %v11236 = vadd.f32 %v11147, %v11235
        %v11237 = vpop.f32.mrf.mxu0
        %v11238 = vadd.f32 %v11149, %v11237
        %11239 = vmatmul.bf16.gmra.mxu0 %v10119
        %v11240 = vpop.f32.mrf.mxu0
        %v11241 = vadd.f32 %v11152, %v11240
        %v11242 = vpop.f32.mrf.mxu0
        %v11243 = vadd.f32 %v11154, %v11242
        %11244 = vmatmul.bf16.gmra.mxu0 %v10128
        %v11245 = vpop.f32.mrf.mxu0
        %v11246 = vadd.f32 %v11157, %v11245
        %v11247 = vpop.f32.mrf.mxu0
        %v11248 = vadd.f32 %v11159, %v11247
        %11249 = vmatmul.bf16.gmra.mxu0 %v10137
        %v11250 = vpop.f32.mrf.mxu0
        %v11251 = vadd.f32 %v11162, %v11250
        %v11252 = vpop.f32.mrf.mxu0
        %v11253 = vadd.f32 %v11164, %v11252
        %11254 = vmatmul.bf16.gmra.mxu0 %v10146
        %v11255 = vpop.f32.mrf.mxu0
        %v11256 = vadd.f32 %v11167, %v11255
        %v11257 = vpop.f32.mrf.mxu0
        %v11258 = vadd.f32 %v11169, %v11257
        %11259 = vdwg.mxu0
        %11260 = vmatpush.bf16.msra.mxu0 %v10637
        %11261 = vmatpush.bf16.msra.mxu0 %v10636
        %11262 = vmatpush.bf16.msra.mxu0 %v10635
        %11263 = vmatpush.bf16.msra.mxu0 %v10634
        %11264 = vmatpush.bf16.msra.mxu0 %v10633
        %11265 = vmatpush.bf16.msra.mxu0 %v10632
        %11266 = vmatpush.bf16.msra.mxu0 %v10631
        %11267 = vmatpush.bf16.msra.mxu0 %v10630
        %11268 = vmatmul.bf16.gmra.mxu0 %v10012
        %v11269 = vpop.f32.mrf.mxu0
        %v11270 = vadd.f32 %v11181, %v11269
        %v11271 = vpop.f32.mrf.mxu0
        %v11272 = vadd.f32 %v11183, %v11271
        %11273 = vmatmul.bf16.gmra.mxu0 %v10021
        %v11274 = vpop.f32.mrf.mxu0
        %v11275 = vadd.f32 %v11186, %v11274
        %v11276 = vpop.f32.mrf.mxu0
        %v11277 = vadd.f32 %v11188, %v11276
        %11278 = vmatmul.bf16.gmra.mxu0 %v10030
        %v11279 = vpop.f32.mrf.mxu0
        %v11280 = vadd.f32 %v11191, %v11279
        %v11281 = vpop.f32.mrf.mxu0
        %v11282 = vadd.f32 %v11193, %v11281
        %11283 = vmatmul.bf16.gmra.mxu0 %v10039
        %v11284 = vpop.f32.mrf.mxu0
        %v11285 = vadd.f32 %v11196, %v11284
        %v11286 = vpop.f32.mrf.mxu0
        %v11287 = vadd.f32 %v11198, %v11286
        %11288 = vmatmul.bf16.gmra.mxu0 %v10048
        %v11289 = vpop.f32.mrf.mxu0
        %v11290 = vadd.f32 %v11201, %v11289
        %v11291 = vpop.f32.mrf.mxu0
        %v11292 = vadd.f32 %v11203, %v11291
        %11293 = vmatmul.bf16.gmra.mxu0 %v10057
        %v11294 = vpop.f32.mrf.mxu0
        %v11295 = vadd.f32 %v11206, %v11294
        %v11296 = vpop.f32.mrf.mxu0
        %v11297 = vadd.f32 %v11208, %v11296
        %11298 = vmatmul.bf16.gmra.mxu0 %v10066
        %v11299 = vpop.f32.mrf.mxu0
        %v11300 = vadd.f32 %v11211, %v11299
        %v11301 = vpop.f32.mrf.mxu0
        %v11302 = vadd.f32 %v11213, %v11301
        %11303 = vmatmul.bf16.gmra.mxu0 %v10075
        %v11304 = vpop.f32.mrf.mxu0
        %v11305 = vadd.f32 %v11216, %v11304
        %v11306 = vpop.f32.mrf.mxu0
        %v11307 = vadd.f32 %v11218, %v11306
        %11308 = vmatmul.bf16.gmra.mxu0 %v10084
        %v11309 = vpop.f32.mrf.mxu0
        %v11310 = vadd.f32 %v11221, %v11309
        %v11311 = vpop.f32.mrf.mxu0
        %v11312 = vadd.f32 %v11223, %v11311
        %11313 = vmatmul.bf16.gmra.mxu0 %v10093
        %v11314 = vpop.f32.mrf.mxu0
        %v11315 = vadd.f32 %v11226, %v11314
        %v11316 = vpop.f32.mrf.mxu0
        %v11317 = vadd.f32 %v11228, %v11316
        %11318 = vmatmul.bf16.gmra.mxu0 %v10102
        %v11319 = vpop.f32.mrf.mxu0
        %v11320 = vadd.f32 %v11231, %v11319
        %v11321 = vpop.f32.mrf.mxu0
        %v11322 = vadd.f32 %v11233, %v11321
        %11323 = vmatmul.bf16.gmra.mxu0 %v10111
        %v11324 = vpop.f32.mrf.mxu0
        %v11325 = vadd.f32 %v11236, %v11324
        %v11326 = vpop.f32.mrf.mxu0
        %v11327 = vadd.f32 %v11238, %v11326
        %11328 = vmatmul.bf16.gmra.mxu0 %v10120
        %v11329 = vpop.f32.mrf.mxu0
        %v11330 = vadd.f32 %v11241, %v11329
        %v11331 = vpop.f32.mrf.mxu0
        %v11332 = vadd.f32 %v11243, %v11331
        %11333 = vmatmul.bf16.gmra.mxu0 %v10129
        %v11334 = vpop.f32.mrf.mxu0
        %v11335 = vadd.f32 %v11246, %v11334
        %v11336 = vpop.f32.mrf.mxu0
        %v11337 = vadd.f32 %v11248, %v11336
        %11338 = vmatmul.bf16.gmra.mxu0 %v10138
        %v11339 = vpop.f32.mrf.mxu0
        %v11340 = vadd.f32 %v11251, %v11339
        %v11341 = vpop.f32.mrf.mxu0
        %v11342 = vadd.f32 %v11253, %v11341
        %11343 = vmatmul.bf16.gmra.mxu0 %v10147
        %v11344 = vpop.f32.mrf.mxu0
        %v11345 = vadd.f32 %v11256, %v11344
        %v11346 = vpop.f32.mrf.mxu0
        %v11347 = vadd.f32 %v11258, %v11346
        %11348 = vdwg.mxu0
        %11349 = vmatpush.bf16.msra.mxu0 %v10645
        %11350 = vmatpush.bf16.msra.mxu0 %v10644
        %11351 = vmatpush.bf16.msra.mxu0 %v10643
        %11352 = vmatpush.bf16.msra.mxu0 %v10642
        %11353 = vmatpush.bf16.msra.mxu0 %v10641
        %11354 = vmatpush.bf16.msra.mxu0 %v10640
        %11355 = vmatpush.bf16.msra.mxu0 %v10639
        %11356 = vmatpush.bf16.msra.mxu0 %v10638
        %11357 = vmatmul.bf16.gmra.mxu0 %v10013
        %v11358 = vpop.f32.mrf.mxu0
        %v11359 = vadd.f32 %v11270, %v11358
        %v11360 = vpop.f32.mrf.mxu0
        %v11361 = vadd.f32 %v11272, %v11360
        %11362 = vmatmul.bf16.gmra.mxu0 %v10022
        %v11363 = vpop.f32.mrf.mxu0
        %v11364 = vadd.f32 %v11275, %v11363
        %v11365 = vpop.f32.mrf.mxu0
        %v11366 = vadd.f32 %v11277, %v11365
        %11367 = vmatmul.bf16.gmra.mxu0 %v10031
        %v11368 = vpop.f32.mrf.mxu0
        %v11369 = vadd.f32 %v11280, %v11368
        %v11370 = vpop.f32.mrf.mxu0
        %v11371 = vadd.f32 %v11282, %v11370
        %11372 = vmatmul.bf16.gmra.mxu0 %v10040
        %v11373 = vpop.f32.mrf.mxu0
        %v11374 = vadd.f32 %v11285, %v11373
        %v11375 = vpop.f32.mrf.mxu0
        %v11376 = vadd.f32 %v11287, %v11375
        %11377 = vmatmul.bf16.gmra.mxu0 %v10049
        %v11378 = vpop.f32.mrf.mxu0
        %v11379 = vadd.f32 %v11290, %v11378
        %v11380 = vpop.f32.mrf.mxu0
        %v11381 = vadd.f32 %v11292, %v11380
        %11382 = vmatmul.bf16.gmra.mxu0 %v10058
        %v11383 = vpop.f32.mrf.mxu0
        %v11384 = vadd.f32 %v11295, %v11383
        %v11385 = vpop.f32.mrf.mxu0
        %v11386 = vadd.f32 %v11297, %v11385
        %11387 = vmatmul.bf16.gmra.mxu0 %v10067
        %v11388 = vpop.f32.mrf.mxu0
        %v11389 = vadd.f32 %v11300, %v11388
        %v11390 = vpop.f32.mrf.mxu0
        %v11391 = vadd.f32 %v11302, %v11390
        %11392 = vmatmul.bf16.gmra.mxu0 %v10076
        %v11393 = vpop.f32.mrf.mxu0
        %v11394 = vadd.f32 %v11305, %v11393
        %v11395 = vpop.f32.mrf.mxu0
        %v11396 = vadd.f32 %v11307, %v11395
        %11397 = vmatmul.bf16.gmra.mxu0 %v10085
        %v11398 = vpop.f32.mrf.mxu0
        %v11399 = vadd.f32 %v11310, %v11398
        %v11400 = vpop.f32.mrf.mxu0
        %v11401 = vadd.f32 %v11312, %v11400
        %11402 = vmatmul.bf16.gmra.mxu0 %v10094
        %v11403 = vpop.f32.mrf.mxu0
        %v11404 = vadd.f32 %v11315, %v11403
        %v11405 = vpop.f32.mrf.mxu0
        %v11406 = vadd.f32 %v11317, %v11405
        %11407 = vmatmul.bf16.gmra.mxu0 %v10103
        %v11408 = vpop.f32.mrf.mxu0
        %v11409 = vadd.f32 %v11320, %v11408
        %v11410 = vpop.f32.mrf.mxu0
        %v11411 = vadd.f32 %v11322, %v11410
        %11412 = vmatmul.bf16.gmra.mxu0 %v10112
        %v11413 = vpop.f32.mrf.mxu0
        %v11414 = vadd.f32 %v11325, %v11413
        %v11415 = vpop.f32.mrf.mxu0
        %v11416 = vadd.f32 %v11327, %v11415
        %11417 = vmatmul.bf16.gmra.mxu0 %v10121
        %v11418 = vpop.f32.mrf.mxu0
        %v11419 = vadd.f32 %v11330, %v11418
        %v11420 = vpop.f32.mrf.mxu0
        %v11421 = vadd.f32 %v11332, %v11420
        %11422 = vmatmul.bf16.gmra.mxu0 %v10130
        %v11423 = vpop.f32.mrf.mxu0
        %v11424 = vadd.f32 %v11335, %v11423
        %v11425 = vpop.f32.mrf.mxu0
        %v11426 = vadd.f32 %v11337, %v11425
        %11427 = vmatmul.bf16.gmra.mxu0 %v10139
        %v11428 = vpop.f32.mrf.mxu0
        %v11429 = vadd.f32 %v11340, %v11428
        %v11430 = vpop.f32.mrf.mxu0
        %v11431 = vadd.f32 %v11342, %v11430
        %11432 = vmatmul.bf16.gmra.mxu0 %v10148
        %v11433 = vpop.f32.mrf.mxu0
        %v11434 = vadd.f32 %v11345, %v11433
        %v11435 = vpop.f32.mrf.mxu0
        %v11436 = vadd.f32 %v11347, %v11435
        %11437 = vdwg.mxu0
        %11438 = vmatpush.bf16.msra.mxu0 %v10653
        %11439 = vmatpush.bf16.msra.mxu0 %v10652
        %11440 = vmatpush.bf16.msra.mxu0 %v10651
        %11441 = vmatpush.bf16.msra.mxu0 %v10650
        %11442 = vmatpush.bf16.msra.mxu0 %v10649
        %11443 = vmatpush.bf16.msra.mxu0 %v10648
        %11444 = vmatpush.bf16.msra.mxu0 %v10647
        %11445 = vmatpush.bf16.msra.mxu0 %v10646
        %11446 = vmatmul.bf16.gmra.mxu0 %v10014
        %v11447 = vpop.f32.mrf.mxu0
        %v11448 = vadd.f32 %v11359, %v11447
        %v11449 = vpop.f32.mrf.mxu0
        %v11450 = vadd.f32 %v11361, %v11449
        %11451 = vmatmul.bf16.gmra.mxu0 %v10023
        %v11452 = vpop.f32.mrf.mxu0
        %v11453 = vadd.f32 %v11364, %v11452
        %v11454 = vpop.f32.mrf.mxu0
        %v11455 = vadd.f32 %v11366, %v11454
        %11456 = vmatmul.bf16.gmra.mxu0 %v10032
        %v11457 = vpop.f32.mrf.mxu0
        %v11458 = vadd.f32 %v11369, %v11457
        %v11459 = vpop.f32.mrf.mxu0
        %v11460 = vadd.f32 %v11371, %v11459
        %11461 = vmatmul.bf16.gmra.mxu0 %v10041
        %v11462 = vpop.f32.mrf.mxu0
        %v11463 = vadd.f32 %v11374, %v11462
        %v11464 = vpop.f32.mrf.mxu0
        %v11465 = vadd.f32 %v11376, %v11464
        %11466 = vmatmul.bf16.gmra.mxu0 %v10050
        %v11467 = vpop.f32.mrf.mxu0
        %v11468 = vadd.f32 %v11379, %v11467
        %v11469 = vpop.f32.mrf.mxu0
        %v11470 = vadd.f32 %v11381, %v11469
        %11471 = vmatmul.bf16.gmra.mxu0 %v10059
        %v11472 = vpop.f32.mrf.mxu0
        %v11473 = vadd.f32 %v11384, %v11472
        %v11474 = vpop.f32.mrf.mxu0
        %v11475 = vadd.f32 %v11386, %v11474
        %11476 = vmatmul.bf16.gmra.mxu0 %v10068
        %v11477 = vpop.f32.mrf.mxu0
        %v11478 = vadd.f32 %v11389, %v11477
        %v11479 = vpop.f32.mrf.mxu0
        %v11480 = vadd.f32 %v11391, %v11479
        %11481 = vmatmul.bf16.gmra.mxu0 %v10077
        %v11482 = vpop.f32.mrf.mxu0
        %v11483 = vadd.f32 %v11394, %v11482
        %v11484 = vpop.f32.mrf.mxu0
        %v11485 = vadd.f32 %v11396, %v11484
        %11486 = vmatmul.bf16.gmra.mxu0 %v10086
        %v11487 = vpop.f32.mrf.mxu0
        %v11488 = vadd.f32 %v11399, %v11487
        %v11489 = vpop.f32.mrf.mxu0
        %v11490 = vadd.f32 %v11401, %v11489
        %11491 = vmatmul.bf16.gmra.mxu0 %v10095
        %v11492 = vpop.f32.mrf.mxu0
        %v11493 = vadd.f32 %v11404, %v11492
        %v11494 = vpop.f32.mrf.mxu0
        %v11495 = vadd.f32 %v11406, %v11494
        %11496 = vmatmul.bf16.gmra.mxu0 %v10104
        %v11497 = vpop.f32.mrf.mxu0
        %v11498 = vadd.f32 %v11409, %v11497
        %v11499 = vpop.f32.mrf.mxu0
        %v11500 = vadd.f32 %v11411, %v11499
        %11501 = vmatmul.bf16.gmra.mxu0 %v10113
        %v11502 = vpop.f32.mrf.mxu0
        %v11503 = vadd.f32 %v11414, %v11502
        %v11504 = vpop.f32.mrf.mxu0
        %v11505 = vadd.f32 %v11416, %v11504
        %11506 = vmatmul.bf16.gmra.mxu0 %v10122
        %v11507 = vpop.f32.mrf.mxu0
        %v11508 = vadd.f32 %v11419, %v11507
        %v11509 = vpop.f32.mrf.mxu0
        %v11510 = vadd.f32 %v11421, %v11509
        %11511 = vmatmul.bf16.gmra.mxu0 %v10131
        %v11512 = vpop.f32.mrf.mxu0
        %v11513 = vadd.f32 %v11424, %v11512
        %v11514 = vpop.f32.mrf.mxu0
        %v11515 = vadd.f32 %v11426, %v11514
        %11516 = vmatmul.bf16.gmra.mxu0 %v10140
        %v11517 = vpop.f32.mrf.mxu0
        %v11518 = vadd.f32 %v11429, %v11517
        %v11519 = vpop.f32.mrf.mxu0
        %v11520 = vadd.f32 %v11431, %v11519
        %11521 = vmatmul.bf16.gmra.mxu0 %v10149
        %v11522 = vpop.f32.mrf.mxu0
        %v11523 = vadd.f32 %v11434, %v11522
        %v11524 = vpop.f32.mrf.mxu0
        %v11525 = vadd.f32 %v11436, %v11524
        %11526 = vdwg.mxu0
        %v11527 = vadd.f32 %v452, %v11448
        %v11528 = vadd.f32 %v453, %v11450
        %v11529 = vadd.f32 %v454, %v11453
        %v11530 = vadd.f32 %v455, %v11455
        %v11531 = vadd.f32 %v456, %v11458
        %v11532 = vadd.f32 %v457, %v11460
        %v11533 = vadd.f32 %v458, %v11463
        %v11534 = vadd.f32 %v459, %v11465
        %v11535 = vadd.f32 %v460, %v11468
        %v11536 = vadd.f32 %v461, %v11470
        %v11537 = vadd.f32 %v462, %v11473
        %v11538 = vadd.f32 %v463, %v11475
        %v11539 = vadd.f32 %v464, %v11478
        %v11540 = vadd.f32 %v465, %v11480
        %v11541 = vadd.f32 %v466, %v11483
        %v11542 = vadd.f32 %v467, %v11485
        %v11543 = vadd.f32 %v468, %v11488
        %v11544 = vadd.f32 %v469, %v11490
        %v11545 = vadd.f32 %v470, %v11493
        %v11546 = vadd.f32 %v471, %v11495
        %v11547 = vadd.f32 %v472, %v11498
        %v11548 = vadd.f32 %v473, %v11500
        %v11549 = vadd.f32 %v474, %v11503
        %v11550 = vadd.f32 %v475, %v11505
        %v11551 = vadd.f32 %v476, %v11508
        %v11552 = vadd.f32 %v477, %v11510
        %v11553 = vadd.f32 %v478, %v11513
        %v11554 = vadd.f32 %v479, %v11515
        %v11555 = vadd.f32 %v480, %v11518
        %v11556 = vadd.f32 %v481, %v11520
        %v11557 = vadd.f32 %v482, %v11523
        %v11558 = vadd.f32 %v483, %v11525
        %v11559 = vmul.f32 %v11527, %v11527
        %v11560 = vmul.f32 %v11528, %v11528
        %v11561 = vmul.f32 %v11529, %v11529
        %v11562 = vmul.f32 %v11530, %v11530
        %v11563 = vmul.f32 %v11531, %v11531
        %v11564 = vmul.f32 %v11532, %v11532
        %v11565 = vmul.f32 %v11533, %v11533
        %v11566 = vmul.f32 %v11534, %v11534
        %v11567 = vmul.f32 %v11535, %v11535
        %v11568 = vmul.f32 %v11536, %v11536
        %v11569 = vmul.f32 %v11537, %v11537
        %v11570 = vmul.f32 %v11538, %v11538
        %v11571 = vmul.f32 %v11539, %v11539
        %v11572 = vmul.f32 %v11540, %v11540
        %v11573 = vmul.f32 %v11541, %v11541
        %v11574 = vmul.f32 %v11542, %v11542
        %v11575 = vmul.f32 %v11543, %v11543
        %v11576 = vmul.f32 %v11544, %v11544
        %v11577 = vmul.f32 %v11545, %v11545
        %v11578 = vmul.f32 %v11546, %v11546
        %v11579 = vmul.f32 %v11547, %v11547
        %v11580 = vmul.f32 %v11548, %v11548
        %v11581 = vmul.f32 %v11549, %v11549
        %v11582 = vmul.f32 %v11550, %v11550
        %v11583 = vmul.f32 %v11551, %v11551
        %v11584 = vmul.f32 %v11552, %v11552
        %v11585 = vmul.f32 %v11553, %v11553
        %v11586 = vmul.f32 %v11554, %v11554
        %v11587 = vmul.f32 %v11555, %v11555
        %v11588 = vmul.f32 %v11556, %v11556
        %v11589 = vmul.f32 %v11557, %v11557
        %v11590 = vmul.f32 %v11558, %v11558
        %v11591 = vpack.c.bf16 %v11560, %v11559
        %v11592 = vpack.c.bf16 %v11562, %v11561
        %v11593 = vpack.c.bf16 %v11564, %v11563
        %v11594 = vpack.c.bf16 %v11566, %v11565
        %v11595 = vpack.c.bf16 %v11568, %v11567
        %v11596 = vpack.c.bf16 %v11570, %v11569
        %v11597 = vpack.c.bf16 %v11572, %v11571
        %v11598 = vpack.c.bf16 %v11574, %v11573
        %v11599 = vpack.c.bf16 %v11576, %v11575
        %v11600 = vpack.c.bf16 %v11578, %v11577
        %v11601 = vpack.c.bf16 %v11580, %v11579
        %v11602 = vpack.c.bf16 %v11582, %v11581
        %v11603 = vpack.c.bf16 %v11584, %v11583
        %v11604 = vpack.c.bf16 %v11586, %v11585
        %v11605 = vpack.c.bf16 %v11588, %v11587
        %v11606 = vpack.c.bf16 %v11590, %v11589
        %v11607 = vld [vmem:[%s7] sm:$0xf]
        %v11608 = vld [vmem:[%s7 + $0x4] sm:$0xf]
        %v11609 = vld [vmem:[%s7 + $0x8] sm:$0xf]
        %v11610 = vld [vmem:[%s7 + $0xc] sm:$0xf]
        %v11611 = vld [vmem:[%s7 + $0x10] sm:$0xf]
        %v11612 = vld [vmem:[%s7 + $0x14] sm:$0xf]
        %v11613 = vld [vmem:[%s7 + $0x18] sm:$0xf]
        %v11614 = vld [vmem:[%s7 + $0x1c] sm:$0xf]
        %v11615 = vld [vmem:[%s7 + $0x20] sm:$0xf]
        %v11616 = vld [vmem:[%s7 + $0x24] sm:$0xf]
        %v11617 = vld [vmem:[%s7 + $0x28] sm:$0xf]
        %v11618 = vld [vmem:[%s7 + $0x2c] sm:$0xf]
        %v11619 = vld [vmem:[%s7 + $0x30] sm:$0xf]
        %v11620 = vld [vmem:[%s7 + $0x34] sm:$0xf]
        %v11621 = vld [vmem:[%s7 + $0x38] sm:$0xf]
        %v11622 = vld [vmem:[%s7 + $0x3c] sm:$0xf]
        %v11623 = vld [vmem:[%s8] sm:$0x1]
        %v11625 = vperm.slane %v11623, 0
        %v11643 = vunpack.c.l.b16 %v11607
        %v11644 = vunpack.c.l.b16 %v11608
        %v11645 = vunpack.c.l.b16 %v11609
        %v11646 = vunpack.c.l.b16 %v11610
        %v11647 = vunpack.c.l.b16 %v11611
        %v11648 = vunpack.c.l.b16 %v11612
        %v11649 = vunpack.c.l.b16 %v11613
        %v11650 = vunpack.c.l.b16 %v11614
        %v11651 = vunpack.c.l.b16 %v11615
        %v11652 = vunpack.c.l.b16 %v11616
        %v11653 = vunpack.c.l.b16 %v11617
        %v11654 = vunpack.c.l.b16 %v11618
        %v11655 = vunpack.c.l.b16 %v11619
        %v11656 = vunpack.c.l.b16 %v11620
        %v11657 = vunpack.c.l.b16 %v11621
        %v11658 = vunpack.c.l.b16 %v11622
        %v11659 = vpack.c.b16 %v11644, %v11643
        %v11660 = vpack.c.b16 %v11646, %v11645
        %v11661 = vpack.c.b16 %v11648, %v11647
        %v11662 = vpack.c.b16 %v11650, %v11649
        %v11663 = vpack.c.b16 %v11652, %v11651
        %v11664 = vpack.c.b16 %v11654, %v11653
        %v11665 = vpack.c.b16 %v11656, %v11655
        %v11666 = vpack.c.b16 %v11658, %v11657
        %11675 = vmatpush.bf16.msra.mxu0 %v11666
        %11676 = vmatpush.bf16.msra.mxu0 %v11665
        %11677 = vmatpush.bf16.msra.mxu0 %v11664
        %11678 = vmatpush.bf16.msra.mxu0 %v11663
        %11679 = vmatpush.bf16.msra.mxu0 %v11662
        %11680 = vmatpush.bf16.msra.mxu0 %v11661
        %11681 = vmatpush.bf16.msra.mxu0 %v11660
        %11682 = vmatpush.bf16.msra.mxu0 %v11659
        %11683 = vmatmul.bf16.gmra.mxu0 %v11591
        %v11684 = vpop.f32.mrf.mxu0
        %v11685 = vadd.f32 %v11625, %v11684
        %v11686 = vpop.f32.mrf.mxu0
        %v11687 = vadd.f32 %v11625, %v11686
        %11688 = vmatmul.bf16.gmra.mxu0 %v11592
        %v11689 = vpop.f32.mrf.mxu0
        %v11690 = vadd.f32 %v11625, %v11689
        %v11691 = vpop.f32.mrf.mxu0
        %v11692 = vadd.f32 %v11625, %v11691
        %11693 = vmatmul.bf16.gmra.mxu0 %v11593
        %v11694 = vpop.f32.mrf.mxu0
        %v11695 = vadd.f32 %v11625, %v11694
        %v11696 = vpop.f32.mrf.mxu0
        %v11697 = vadd.f32 %v11625, %v11696
        %11698 = vmatmul.bf16.gmra.mxu0 %v11594
        %v11699 = vpop.f32.mrf.mxu0
        %v11700 = vadd.f32 %v11625, %v11699
        %v11701 = vpop.f32.mrf.mxu0
        %v11702 = vadd.f32 %v11625, %v11701
        %11703 = vmatmul.bf16.gmra.mxu0 %v11595
        %v11704 = vpop.f32.mrf.mxu0
        %v11705 = vadd.f32 %v11625, %v11704
        %v11706 = vpop.f32.mrf.mxu0
        %v11707 = vadd.f32 %v11625, %v11706
        %11708 = vmatmul.bf16.gmra.mxu0 %v11596
        %v11709 = vpop.f32.mrf.mxu0
        %v11710 = vadd.f32 %v11625, %v11709
        %v11711 = vpop.f32.mrf.mxu0
        %v11712 = vadd.f32 %v11625, %v11711
        %11713 = vmatmul.bf16.gmra.mxu0 %v11597
        %v11714 = vpop.f32.mrf.mxu0
        %v11715 = vadd.f32 %v11625, %v11714
        %v11716 = vpop.f32.mrf.mxu0
        %v11717 = vadd.f32 %v11625, %v11716
        %11718 = vmatmul.bf16.gmra.mxu0 %v11598
        %v11719 = vpop.f32.mrf.mxu0
        %v11720 = vadd.f32 %v11625, %v11719
        %v11721 = vpop.f32.mrf.mxu0
        %v11722 = vadd.f32 %v11625, %v11721
        %11723 = vmatmul.bf16.gmra.mxu0 %v11599
        %v11724 = vpop.f32.mrf.mxu0
        %v11725 = vadd.f32 %v11625, %v11724
        %v11726 = vpop.f32.mrf.mxu0
        %v11727 = vadd.f32 %v11625, %v11726
        %11728 = vmatmul.bf16.gmra.mxu0 %v11600
        %v11729 = vpop.f32.mrf.mxu0
        %v11730 = vadd.f32 %v11625, %v11729
        %v11731 = vpop.f32.mrf.mxu0
        %v11732 = vadd.f32 %v11625, %v11731
        %11733 = vmatmul.bf16.gmra.mxu0 %v11601
        %v11734 = vpop.f32.mrf.mxu0
        %v11735 = vadd.f32 %v11625, %v11734
        %v11736 = vpop.f32.mrf.mxu0
        %v11737 = vadd.f32 %v11625, %v11736
        %11738 = vmatmul.bf16.gmra.mxu0 %v11602
        %v11739 = vpop.f32.mrf.mxu0
        %v11740 = vadd.f32 %v11625, %v11739
        %v11741 = vpop.f32.mrf.mxu0
        %v11742 = vadd.f32 %v11625, %v11741
        %11743 = vmatmul.bf16.gmra.mxu0 %v11603
        %v11744 = vpop.f32.mrf.mxu0
        %v11745 = vadd.f32 %v11625, %v11744
        %v11746 = vpop.f32.mrf.mxu0
        %v11747 = vadd.f32 %v11625, %v11746
        %11748 = vmatmul.bf16.gmra.mxu0 %v11604
        %v11749 = vpop.f32.mrf.mxu0
        %v11750 = vadd.f32 %v11625, %v11749
        %v11751 = vpop.f32.mrf.mxu0
        %v11752 = vadd.f32 %v11625, %v11751
        %11753 = vmatmul.bf16.gmra.mxu0 %v11605
        %v11754 = vpop.f32.mrf.mxu0
        %v11755 = vadd.f32 %v11625, %v11754
        %v11756 = vpop.f32.mrf.mxu0
        %v11757 = vadd.f32 %v11625, %v11756
        %11758 = vmatmul.bf16.gmra.mxu0 %v11606
        %v11759 = vpop.f32.mrf.mxu0
        %v11760 = vadd.f32 %v11625, %v11759
        %v11761 = vpop.f32.mrf.mxu0
        %v11762 = vadd.f32 %v11625, %v11761
        %11763 = vdwg.mxu0
        %v11764 = vrsqrt.pop %v11685
        %v11765 = vmul.f32 %v11764, %v11685
        %v11766 = vmul.f32 %v11765, %v11764
        %v11767 = vmul.f32 0.5, %v11766
        %v11768 = vsub.f32 1.5, %v11767
        %v11769 = vmul.f32 %v11764, %v11768
        %vm11770 = vweird.f32 %v11685
        %vm11771 = vweird.f32 %v11764
        %vm11772 = vmor %vm11770, %vm11771
        %v11773 = vsel %vm11772, %v11764, %v11769
        %v11774 = vrsqrt.pop %v11687
        %v11775 = vmul.f32 %v11774, %v11687
        %v11776 = vmul.f32 %v11775, %v11774
        %v11777 = vmul.f32 0.5, %v11776
        %v11778 = vsub.f32 1.5, %v11777
        %v11779 = vmul.f32 %v11774, %v11778
        %vm11780 = vweird.f32 %v11687
        %vm11781 = vweird.f32 %v11774
        %vm11782 = vmor %vm11780, %vm11781
        %v11783 = vsel %vm11782, %v11774, %v11779
        %v11784 = vrsqrt.pop %v11690
        %v11785 = vmul.f32 %v11784, %v11690
        %v11786 = vmul.f32 %v11785, %v11784
        %v11787 = vmul.f32 0.5, %v11786
        %v11788 = vsub.f32 1.5, %v11787
        %v11789 = vmul.f32 %v11784, %v11788
        %vm11790 = vweird.f32 %v11690
        %vm11791 = vweird.f32 %v11784
        %vm11792 = vmor %vm11790, %vm11791
        %v11793 = vsel %vm11792, %v11784, %v11789
        %v11794 = vrsqrt.pop %v11692
        %v11795 = vmul.f32 %v11794, %v11692
        %v11796 = vmul.f32 %v11795, %v11794
        %v11797 = vmul.f32 0.5, %v11796
        %v11798 = vsub.f32 1.5, %v11797
        %v11799 = vmul.f32 %v11794, %v11798
        %vm11800 = vweird.f32 %v11692
        %vm11801 = vweird.f32 %v11794
        %vm11802 = vmor %vm11800, %vm11801
        %v11803 = vsel %vm11802, %v11794, %v11799
        %v11804 = vrsqrt.pop %v11695
        %v11805 = vmul.f32 %v11804, %v11695
        %v11806 = vmul.f32 %v11805, %v11804
        %v11807 = vmul.f32 0.5, %v11806
        %v11808 = vsub.f32 1.5, %v11807
        %v11809 = vmul.f32 %v11804, %v11808
        %vm11810 = vweird.f32 %v11695
        %vm11811 = vweird.f32 %v11804
        %vm11812 = vmor %vm11810, %vm11811
        %v11813 = vsel %vm11812, %v11804, %v11809
        %v11814 = vrsqrt.pop %v11697
        %v11815 = vmul.f32 %v11814, %v11697
        %v11816 = vmul.f32 %v11815, %v11814
        %v11817 = vmul.f32 0.5, %v11816
        %v11818 = vsub.f32 1.5, %v11817
        %v11819 = vmul.f32 %v11814, %v11818
        %vm11820 = vweird.f32 %v11697
        %vm11821 = vweird.f32 %v11814
        %vm11822 = vmor %vm11820, %vm11821
        %v11823 = vsel %vm11822, %v11814, %v11819
        %v11824 = vrsqrt.pop %v11700
        %v11825 = vmul.f32 %v11824, %v11700
        %v11826 = vmul.f32 %v11825, %v11824
        %v11827 = vmul.f32 0.5, %v11826
        %v11828 = vsub.f32 1.5, %v11827
        %v11829 = vmul.f32 %v11824, %v11828
        %vm11830 = vweird.f32 %v11700
        %vm11831 = vweird.f32 %v11824
        %vm11832 = vmor %vm11830, %vm11831
        %v11833 = vsel %vm11832, %v11824, %v11829
        %v11834 = vrsqrt.pop %v11702
        %v11835 = vmul.f32 %v11834, %v11702
        %v11836 = vmul.f32 %v11835, %v11834
        %v11837 = vmul.f32 0.5, %v11836
        %v11838 = vsub.f32 1.5, %v11837
        %v11839 = vmul.f32 %v11834, %v11838
        %vm11840 = vweird.f32 %v11702
        %vm11841 = vweird.f32 %v11834
        %vm11842 = vmor %vm11840, %vm11841
        %v11843 = vsel %vm11842, %v11834, %v11839
        %v11844 = vrsqrt.pop %v11705
        %v11845 = vmul.f32 %v11844, %v11705
        %v11846 = vmul.f32 %v11845, %v11844
        %v11847 = vmul.f32 0.5, %v11846
        %v11848 = vsub.f32 1.5, %v11847
        %v11849 = vmul.f32 %v11844, %v11848
        %vm11850 = vweird.f32 %v11705
        %vm11851 = vweird.f32 %v11844
        %vm11852 = vmor %vm11850, %vm11851
        %v11853 = vsel %vm11852, %v11844, %v11849
        %v11854 = vrsqrt.pop %v11707
        %v11855 = vmul.f32 %v11854, %v11707
        %v11856 = vmul.f32 %v11855, %v11854
        %v11857 = vmul.f32 0.5, %v11856
        %v11858 = vsub.f32 1.5, %v11857
        %v11859 = vmul.f32 %v11854, %v11858
        %vm11860 = vweird.f32 %v11707
        %vm11861 = vweird.f32 %v11854
        %vm11862 = vmor %vm11860, %vm11861
        %v11863 = vsel %vm11862, %v11854, %v11859
        %v11864 = vrsqrt.pop %v11710
        %v11865 = vmul.f32 %v11864, %v11710
        %v11866 = vmul.f32 %v11865, %v11864
        %v11867 = vmul.f32 0.5, %v11866
        %v11868 = vsub.f32 1.5, %v11867
        %v11869 = vmul.f32 %v11864, %v11868
        %vm11870 = vweird.f32 %v11710
        %vm11871 = vweird.f32 %v11864
        %vm11872 = vmor %vm11870, %vm11871
        %v11873 = vsel %vm11872, %v11864, %v11869
        %v11874 = vrsqrt.pop %v11712
        %v11875 = vmul.f32 %v11874, %v11712
        %v11876 = vmul.f32 %v11875, %v11874
        %v11877 = vmul.f32 0.5, %v11876
        %v11878 = vsub.f32 1.5, %v11877
        %v11879 = vmul.f32 %v11874, %v11878
        %vm11880 = vweird.f32 %v11712
        %vm11881 = vweird.f32 %v11874
        %vm11882 = vmor %vm11880, %vm11881
        %v11883 = vsel %vm11882, %v11874, %v11879
        %v11884 = vrsqrt.pop %v11715
        %v11885 = vmul.f32 %v11884, %v11715
        %v11886 = vmul.f32 %v11885, %v11884
        %v11887 = vmul.f32 0.5, %v11886
        %v11888 = vsub.f32 1.5, %v11887
        %v11889 = vmul.f32 %v11884, %v11888
        %vm11890 = vweird.f32 %v11715
        %vm11891 = vweird.f32 %v11884
        %vm11892 = vmor %vm11890, %vm11891
        %v11893 = vsel %vm11892, %v11884, %v11889
        %v11894 = vrsqrt.pop %v11717
        %v11895 = vmul.f32 %v11894, %v11717
        %v11896 = vmul.f32 %v11895, %v11894
        %v11897 = vmul.f32 0.5, %v11896
        %v11898 = vsub.f32 1.5, %v11897
        %v11899 = vmul.f32 %v11894, %v11898
        %vm11900 = vweird.f32 %v11717
        %vm11901 = vweird.f32 %v11894
        %vm11902 = vmor %vm11900, %vm11901
        %v11903 = vsel %vm11902, %v11894, %v11899
        %v11904 = vrsqrt.pop %v11720
        %v11905 = vmul.f32 %v11904, %v11720
        %v11906 = vmul.f32 %v11905, %v11904
        %v11907 = vmul.f32 0.5, %v11906
        %v11908 = vsub.f32 1.5, %v11907
        %v11909 = vmul.f32 %v11904, %v11908
        %vm11910 = vweird.f32 %v11720
        %vm11911 = vweird.f32 %v11904
        %vm11912 = vmor %vm11910, %vm11911
        %v11913 = vsel %vm11912, %v11904, %v11909
        %v11914 = vrsqrt.pop %v11722
        %v11915 = vmul.f32 %v11914, %v11722
        %v11916 = vmul.f32 %v11915, %v11914
        %v11917 = vmul.f32 0.5, %v11916
        %v11918 = vsub.f32 1.5, %v11917
        %v11919 = vmul.f32 %v11914, %v11918
        %vm11920 = vweird.f32 %v11722
        %vm11921 = vweird.f32 %v11914
        %vm11922 = vmor %vm11920, %vm11921
        %v11923 = vsel %vm11922, %v11914, %v11919
        %v11924 = vrsqrt.pop %v11725
        %v11925 = vmul.f32 %v11924, %v11725
        %v11926 = vmul.f32 %v11925, %v11924
        %v11927 = vmul.f32 0.5, %v11926
        %v11928 = vsub.f32 1.5, %v11927
        %v11929 = vmul.f32 %v11924, %v11928
        %vm11930 = vweird.f32 %v11725
        %vm11931 = vweird.f32 %v11924
        %vm11932 = vmor %vm11930, %vm11931
        %v11933 = vsel %vm11932, %v11924, %v11929
        %v11934 = vrsqrt.pop %v11727
        %v11935 = vmul.f32 %v11934, %v11727
        %v11936 = vmul.f32 %v11935, %v11934
        %v11937 = vmul.f32 0.5, %v11936
        %v11938 = vsub.f32 1.5, %v11937
        %v11939 = vmul.f32 %v11934, %v11938
        %vm11940 = vweird.f32 %v11727
        %vm11941 = vweird.f32 %v11934
        %vm11942 = vmor %vm11940, %vm11941
        %v11943 = vsel %vm11942, %v11934, %v11939
        %v11944 = vrsqrt.pop %v11730
        %v11945 = vmul.f32 %v11944, %v11730
        %v11946 = vmul.f32 %v11945, %v11944
        %v11947 = vmul.f32 0.5, %v11946
        %v11948 = vsub.f32 1.5, %v11947
        %v11949 = vmul.f32 %v11944, %v11948
        %vm11950 = vweird.f32 %v11730
        %vm11951 = vweird.f32 %v11944
        %vm11952 = vmor %vm11950, %vm11951
        %v11953 = vsel %vm11952, %v11944, %v11949
        %v11954 = vrsqrt.pop %v11732
        %v11955 = vmul.f32 %v11954, %v11732
        %v11956 = vmul.f32 %v11955, %v11954
        %v11957 = vmul.f32 0.5, %v11956
        %v11958 = vsub.f32 1.5, %v11957
        %v11959 = vmul.f32 %v11954, %v11958
        %vm11960 = vweird.f32 %v11732
        %vm11961 = vweird.f32 %v11954
        %vm11962 = vmor %vm11960, %vm11961
        %v11963 = vsel %vm11962, %v11954, %v11959
        %v11964 = vrsqrt.pop %v11735
        %v11965 = vmul.f32 %v11964, %v11735
        %v11966 = vmul.f32 %v11965, %v11964
        %v11967 = vmul.f32 0.5, %v11966
        %v11968 = vsub.f32 1.5, %v11967
        %v11969 = vmul.f32 %v11964, %v11968
        %vm11970 = vweird.f32 %v11735
        %vm11971 = vweird.f32 %v11964
        %vm11972 = vmor %vm11970, %vm11971
        %v11973 = vsel %vm11972, %v11964, %v11969
        %v11974 = vrsqrt.pop %v11737
        %v11975 = vmul.f32 %v11974, %v11737
        %v11976 = vmul.f32 %v11975, %v11974
        %v11977 = vmul.f32 0.5, %v11976
        %v11978 = vsub.f32 1.5, %v11977
        %v11979 = vmul.f32 %v11974, %v11978
        %vm11980 = vweird.f32 %v11737
        %vm11981 = vweird.f32 %v11974
        %vm11982 = vmor %vm11980, %vm11981
        %v11983 = vsel %vm11982, %v11974, %v11979
        %v11984 = vrsqrt.pop %v11740
        %v11985 = vmul.f32 %v11984, %v11740
        %v11986 = vmul.f32 %v11985, %v11984
        %v11987 = vmul.f32 0.5, %v11986
        %v11988 = vsub.f32 1.5, %v11987
        %v11989 = vmul.f32 %v11984, %v11988
        %vm11990 = vweird.f32 %v11740
        %vm11991 = vweird.f32 %v11984
        %vm11992 = vmor %vm11990, %vm11991
        %v11993 = vsel %vm11992, %v11984, %v11989
        %v11994 = vrsqrt.pop %v11742
        %v11995 = vmul.f32 %v11994, %v11742
        %v11996 = vmul.f32 %v11995, %v11994
        %v11997 = vmul.f32 0.5, %v11996
        %v11998 = vsub.f32 1.5, %v11997
        %v11999 = vmul.f32 %v11994, %v11998
        %vm12000 = vweird.f32 %v11742
        %vm12001 = vweird.f32 %v11994
        %vm12002 = vmor %vm12000, %vm12001
        %v12003 = vsel %vm12002, %v11994, %v11999
        %v12004 = vrsqrt.pop %v11745
        %v12005 = vmul.f32 %v12004, %v11745
        %v12006 = vmul.f32 %v12005, %v12004
        %v12007 = vmul.f32 0.5, %v12006
        %v12008 = vsub.f32 1.5, %v12007
        %v12009 = vmul.f32 %v12004, %v12008
        %vm12010 = vweird.f32 %v11745
        %vm12011 = vweird.f32 %v12004
        %vm12012 = vmor %vm12010, %vm12011
        %v12013 = vsel %vm12012, %v12004, %v12009
        %v12014 = vrsqrt.pop %v11747
        %v12015 = vmul.f32 %v12014, %v11747
        %v12016 = vmul.f32 %v12015, %v12014
        %v12017 = vmul.f32 0.5, %v12016
        %v12018 = vsub.f32 1.5, %v12017
        %v12019 = vmul.f32 %v12014, %v12018
        %vm12020 = vweird.f32 %v11747
        %vm12021 = vweird.f32 %v12014
        %vm12022 = vmor %vm12020, %vm12021
        %v12023 = vsel %vm12022, %v12014, %v12019
        %v12024 = vrsqrt.pop %v11750
        %v12025 = vmul.f32 %v12024, %v11750
        %v12026 = vmul.f32 %v12025, %v12024
        %v12027 = vmul.f32 0.5, %v12026
        %v12028 = vsub.f32 1.5, %v12027
        %v12029 = vmul.f32 %v12024, %v12028
        %vm12030 = vweird.f32 %v11750
        %vm12031 = vweird.f32 %v12024
        %vm12032 = vmor %vm12030, %vm12031
        %v12033 = vsel %vm12032, %v12024, %v12029
        %v12034 = vrsqrt.pop %v11752
        %v12035 = vmul.f32 %v12034, %v11752
        %v12036 = vmul.f32 %v12035, %v12034
        %v12037 = vmul.f32 0.5, %v12036
        %v12038 = vsub.f32 1.5, %v12037
        %v12039 = vmul.f32 %v12034, %v12038
        %vm12040 = vweird.f32 %v11752
        %vm12041 = vweird.f32 %v12034
        %vm12042 = vmor %vm12040, %vm12041
        %v12043 = vsel %vm12042, %v12034, %v12039
        %v12044 = vrsqrt.pop %v11755
        %v12045 = vmul.f32 %v12044, %v11755
        %v12046 = vmul.f32 %v12045, %v12044
        %v12047 = vmul.f32 0.5, %v12046
        %v12048 = vsub.f32 1.5, %v12047
        %v12049 = vmul.f32 %v12044, %v12048
        %vm12050 = vweird.f32 %v11755
        %vm12051 = vweird.f32 %v12044
        %vm12052 = vmor %vm12050, %vm12051
        %v12053 = vsel %vm12052, %v12044, %v12049
        %v12054 = vrsqrt.pop %v11757
        %v12055 = vmul.f32 %v12054, %v11757
        %v12056 = vmul.f32 %v12055, %v12054
        %v12057 = vmul.f32 0.5, %v12056
        %v12058 = vsub.f32 1.5, %v12057
        %v12059 = vmul.f32 %v12054, %v12058
        %vm12060 = vweird.f32 %v11757
        %vm12061 = vweird.f32 %v12054
        %vm12062 = vmor %vm12060, %vm12061
        %v12063 = vsel %vm12062, %v12054, %v12059
        %v12064 = vrsqrt.pop %v11760
        %v12065 = vmul.f32 %v12064, %v11760
        %v12066 = vmul.f32 %v12065, %v12064
        %v12067 = vmul.f32 0.5, %v12066
        %v12068 = vsub.f32 1.5, %v12067
        %v12069 = vmul.f32 %v12064, %v12068
        %vm12070 = vweird.f32 %v11760
        %vm12071 = vweird.f32 %v12064
        %vm12072 = vmor %vm12070, %vm12071
        %v12073 = vsel %vm12072, %v12064, %v12069
        %v12074 = vrsqrt.pop %v11762
        %v12075 = vmul.f32 %v12074, %v11762
        %v12076 = vmul.f32 %v12075, %v12074
        %v12077 = vmul.f32 0.5, %v12076
        %v12078 = vsub.f32 1.5, %v12077
        %v12079 = vmul.f32 %v12074, %v12078
        %vm12080 = vweird.f32 %v11762
        %vm12081 = vweird.f32 %v12074
        %vm12082 = vmor %vm12080, %vm12081
        %v12083 = vsel %vm12082, %v12074, %v12079
        %v12084 = vmul.f32 %v11527, %v11773
        %v12085 = vmul.f32 %v11528, %v11783
        %v12086 = vmul.f32 %v11529, %v11793
        %v12087 = vmul.f32 %v11530, %v11803
        %v12088 = vmul.f32 %v11531, %v11813
        %v12089 = vmul.f32 %v11532, %v11823
        %v12090 = vmul.f32 %v11533, %v11833
        %v12091 = vmul.f32 %v11534, %v11843
        %v12092 = vmul.f32 %v11535, %v11853
        %v12093 = vmul.f32 %v11536, %v11863
        %v12094 = vmul.f32 %v11537, %v11873
        %v12095 = vmul.f32 %v11538, %v11883
        %v12096 = vmul.f32 %v11539, %v11893
        %v12097 = vmul.f32 %v11540, %v11903
        %v12098 = vmul.f32 %v11541, %v11913
        %v12099 = vmul.f32 %v11542, %v11923
        %v12100 = vmul.f32 %v11543, %v11933
        %v12101 = vmul.f32 %v11544, %v11943
        %v12102 = vmul.f32 %v11545, %v11953
        %v12103 = vmul.f32 %v11546, %v11963
        %v12104 = vmul.f32 %v11547, %v11973
        %v12105 = vmul.f32 %v11548, %v11983
        %v12106 = vmul.f32 %v11549, %v11993
        %v12107 = vmul.f32 %v11550, %v12003
        %v12108 = vmul.f32 %v11551, %v12013
        %v12109 = vmul.f32 %v11552, %v12023
        %v12110 = vmul.f32 %v11553, %v12033
        %v12111 = vmul.f32 %v11554, %v12043
        %v12112 = vmul.f32 %v11555, %v12053
        %v12113 = vmul.f32 %v11556, %v12063
        %v12114 = vmul.f32 %v11557, %v12073
        %v12115 = vmul.f32 %v11558, %v12083
        %12116 = vst [vmem:[%s325] sm:$0xff] %v12084
        %12117 = vst [vmem:[%s325 + $0x8] sm:$0xff] %v12085
        %12118 = vst [vmem:[%s325 + $0x10] sm:$0xff] %v12086
        %12119 = vst [vmem:[%s325 + $0x18] sm:$0xff] %v12087
        %12120 = vst [vmem:[%s325 + $0x20] sm:$0xff] %v12088
        %12121 = vst [vmem:[%s325 + $0x28] sm:$0xff] %v12089
        %12122 = vst [vmem:[%s325 + $0x30] sm:$0xff] %v12090
        %12123 = vst [vmem:[%s325 + $0x38] sm:$0xff] %v12091
        %12124 = vst [vmem:[%s325 + $0x40] sm:$0xff] %v12092
        %12125 = vst [vmem:[%s325 + $0x48] sm:$0xff] %v12093
        %12126 = vst [vmem:[%s325 + $0x50] sm:$0xff] %v12094
        %12127 = vst [vmem:[%s325 + $0x58] sm:$0xff] %v12095
        %12128 = vst [vmem:[%s325 + $0x60] sm:$0xff] %v12096
        %12129 = vst [vmem:[%s325 + $0x68] sm:$0xff] %v12097
        %12130 = vst [vmem:[%s325 + $0x70] sm:$0xff] %v12098
        %12131 = vst [vmem:[%s325 + $0x78] sm:$0xff] %v12099
        %12132 = vst [vmem:[%s325 + $0x80] sm:$0xff] %v12100
        %12133 = vst [vmem:[%s325 + $0x88] sm:$0xff] %v12101
        %12134 = vst [vmem:[%s325 + $0x90] sm:$0xff] %v12102
        %12135 = vst [vmem:[%s325 + $0x98] sm:$0xff] %v12103
        %12136 = vst [vmem:[%s325 + $0xa0] sm:$0xff] %v12104
        %12137 = vst [vmem:[%s325 + $0xa8] sm:$0xff] %v12105
        %12138 = vst [vmem:[%s325 + $0xb0] sm:$0xff] %v12106
        %12139 = vst [vmem:[%s325 + $0xb8] sm:$0xff] %v12107
        %12140 = vst [vmem:[%s325 + $0xc0] sm:$0xff] %v12108
        %12141 = vst [vmem:[%s325 + $0xc8] sm:$0xff] %v12109
        %12142 = vst [vmem:[%s325 + $0xd0] sm:$0xff] %v12110
        %12143 = vst [vmem:[%s325 + $0xd8] sm:$0xff] %v12111
        %12144 = vst [vmem:[%s325 + $0xe0] sm:$0xff] %v12112
        %12145 = vst [vmem:[%s325 + $0xe8] sm:$0xff] %v12113
        %12146 = vst [vmem:[%s325 + $0xf0] sm:$0xff] %v12114
        %12147 = vst [vmem:[%s325 + $0xf8] sm:$0xff] %v12115
        %s12148 = sand.u32 %s225, 1
        %s12149 = scalar_lea.sflag [#allocation5], %s12148
        %s12150 = sand.u32 %s225, 1
        %s12151 = smul.addr %s12150, 256
        %s12152 = scalar_lea.vmem [#allocation4], %s12151
        // Predicated region
        $region57: #{res_gdn_forward.1} parent=55 // pred_check
          %p12153 = pneg %p235
        $region58: #{res_gdn_forward.1} parent=55 // pred_check_branch
          %12155 = sbr.rel (%p12153) target = $region60
        $region59: #{res_gdn_forward.1} parent=55 // pred_region
          %12157 = vsyncadd %s12149, 0
          %s12158 = smul.addr %s23, 32
          %s12159 = smul.addr %s12158, 8
          %s12160 = scalar_lea.hbm %s9, %s12159
          %s12161 = sshll.u32 %s12152, 4
          %s12162 = int_to_ptr.vmem [resolvable:$true] %s12161
          %s12163 = sshll.u32 %s12160, 4
          %s12164 = int_to_ptr.hbm [resolvable:$true] %s12163
          %12169 = dma.vmem_to_hbm [thread:$0]  %s12162, 4096, %s12164, %s12149, 128, 128, 8
        $region60: #{res_gdn_forward.1} parent=55 // pred_fallthru
          _
      $region56: #{res_gdn_forward.1} parent=5 // pred_fallthru
        _
      %p12170 = scmp.le.s32.totalorder 2, %s18
      // Predicated region
      $region61: #{res_gdn_forward.1} parent=5 // pred_check
        %p12171 = pneg %p12170
      $region62: #{res_gdn_forward.1} parent=5 // pred_check_branch
        %12173 = sbr.rel (%p12171) target = $region64
      $region63: #{res_gdn_forward.1} parent=5 // pred_region
        %s12174 = ssub.s32 %s18, 2
        // Predicated region
        $region65: #{res_gdn_forward.1} parent=63 // pred_check
          %p12175 = pneg %p241
        $region66: #{res_gdn_forward.1} parent=63 // pred_check_branch
          %12177 = sbr.rel (%p12175) target = $region68
        $region67: #{res_gdn_forward.1} parent=63 // pred_region
          %s12178 = sand.u32 %s226, 1
          %s12179 = scalar_lea.sflag [#allocation5], %s12178
          %s12180 = sand.u32 %s226, 1
          %s12181 = smul.addr %s12180, 256
          %s12182 = scalar_lea.vmem [#allocation4], %s12181
          %12184 = dma.done %s12179, 4096
        $region68: #{res_gdn_forward.1} parent=63 // pred_fallthru
          _
      $region64: #{res_gdn_forward.1} parent=5 // pred_fallthru
        _
    $region6: #{res_gdn_forward.1} parent=1 // loop_footer
      %s22 = sadd.s32 1, %s18
    $region7: #{res_gdn_forward.1} parent=1 // loop_footer_branch
      %17 = sbr.rel target = $region3
    $region8: #{res_gdn_forward.1} parent=1 // loop_exit
      _
    %12185 = vsyncpa [#allocation5], 1
    %s12186 = scalar_lea.sflag [#allocation5], 1
    %12187 = vsyncpa %s12186, 1

</llo_original>
